<compile_context>
chip_gen: v5e
topology: v5e:2x2
jax: 0.10.0
libtpu: 0.0.40
codegen_flags: <defaults>
</compile_context>

<pallas_src>
import math
import functools

import jax
import jax.numpy as jnp
from jax.experimental import pallas as pl
from jax.experimental.pallas import tpu as pltpu


# ----------------------------------------------------------------------------
# BlockSpec helpers
# ----------------------------------------------------------------------------
def _full(shape):
    """Full-array spec for a grid=(1,) call."""
    return pl.BlockSpec(shape, lambda i, n=len(shape): (0,) * n)


def _shared(shape):
    """Full-array spec replicated across a grid=(B,) call (weights)."""
    return pl.BlockSpec(shape, lambda b, n=len(shape): (0,) * n)


def _batched(shape):
    """Per-batch slice (1, ...) of a (B, ...) array for grid=(B,)."""
    return pl.BlockSpec((1,) + tuple(shape[1:]),
                        lambda b, n=len(shape) - 1: (b,) + (0,) * n)


# ----------------------------------------------------------------------------
# In-kernel building blocks
# ----------------------------------------------------------------------------
def _ln(x, g, b, eps=1e-5):
    mu = jnp.mean(x, axis=-1, keepdims=True)
    var = jnp.mean((x - mu) ** 2, axis=-1, keepdims=True)
    return (x - mu) * jax.lax.rsqrt(var + eps) * g + b


def _attn_core(q_all, k_all, v_all, wo, bo, n_heads, causal):
    """Multi-head attention on 2D (L, D)/(S, D) operands, fully in-kernel."""
    L, D = q_all.shape
    S = k_all.shape[0]
    E = D // n_heads
    scale = 1.0 / math.sqrt(E)
    outs = []
    for h in range(n_heads):                       # unrolled, H is small
        sl = slice(h * E, (h + 1) * E)
        qh, kh, vh = q_all[:, sl], k_all[:, sl], v_all[:, sl]
        s = jnp.dot(qh, kh.T, preferred_element_type=jnp.float32) * scale
        if causal:
            row = jax.lax.broadcasted_iota(jnp.int32, (L, S), 0)
            col = jax.lax.broadcasted_iota(jnp.int32, (L, S), 1)
            s = jnp.where(col > row, -1e30, s)
        p = jax.nn.softmax(s, axis=-1)
        outs.append(jnp.dot(p, vh, preferred_element_type=jnp.float32))
    o = jnp.concatenate(outs, axis=-1)             # (L, D)
    return jnp.dot(o, wo, preferred_element_type=jnp.float32) + bo


# ----------------------------------------------------------------------------
# Embedding kernel  (token conv (im2col) + temporal linear + positional enc)
# ----------------------------------------------------------------------------
def _embed_kernel(xc_ref, xm_ref, pe_ref, tw_ref, mw_ref, o_ref):
    y = jnp.dot(xc_ref[...], tw_ref[...], preferred_element_type=jnp.float32)
    y = y + jnp.dot(xm_ref[...], mw_ref[...], preferred_element_type=jnp.float32)
    o_ref[...] = y + pe_ref[...]


def pallas_embed(x, x_mark, token_w, temp_w, pe):
    B, L, C = x.shape
    D = token_w.shape[1]
    M = x_mark.shape[-1]
    # circular im2col for Conv1d(kernel=3, padding=1, padding_mode='circular')
    xc = jnp.concatenate([jnp.roll(x, 1, axis=1), x, jnp.roll(x, -1, axis=1)], axis=-1)
    xc = xc.reshape(B * L, 3 * C)
    xm = x_mark.reshape(B * L, M)
    pe_t = jnp.tile(pe, (B, 1))                    # (B*L, D)
    out = pl.pallas_call(
        _embed_kernel,
        out_shape=jax.ShapeDtypeStruct((B * L, D), jnp.float32),
        grid=(1,),
        in_specs=[_full((B * L, 3 * C)), _full((B * L, M)), _full((B * L, D)),
                  _full((3 * C, D)), _full((M, D))],
        out_specs=_full((B * L, D)),
    )(xc, xm, pe_t, token_w, temp_w)
    return out.reshape(B, L, D)


# ----------------------------------------------------------------------------
# Fused encoder layer kernel
# ----------------------------------------------------------------------------
def _enc_layer_kernel(x_ref, wqkv_ref, bqkv_ref, wo_ref, bo_ref,
                      g1_ref, b1_ref, w1_ref, bb1_ref, w2_ref, bb2_ref,
                      g2_ref, b2_ref, gf_ref, bf_ref, o_ref,
                      *, n_heads, final_norm):
    x = x_ref[0]                                   # (L, D)
    D = x.shape[-1]
    qkv = jnp.dot(x, wqkv_ref[...], preferred_element_type=jnp.float32) + bqkv_ref[...]
    attn = _attn_core(qkv[:, :D], qkv[:, D:2 * D], qkv[:, 2 * D:],
                      wo_ref[...], bo_ref[...], n_heads, causal=False)
    x = _ln(x + attn, g1_ref[...], b1_ref[...])
    h = jnp.maximum(jnp.dot(x, w1_ref[...], preferred_element_type=jnp.float32)
                    + bb1_ref[...], 0.0)
    y = jnp.dot(h, w2_ref[...], preferred_element_type=jnp.float32) + bb2_ref[...]
    x = _ln(x + y, g2_ref[...], b2_ref[...])
    if final_norm:
        x = _ln(x, gf_ref[...], bf_ref[...])
    o_ref[0] = x


def pallas_enc_layer(x, lp, fin_g, fin_b, n_heads, final_norm):
    B, L, D = x.shape
    dff = lp["w1"].shape[1]
    ap = lp["attn"]
    wqkv = jnp.concatenate([ap["wq"], ap["wk"], ap["wv"]], axis=1)
    bqkv = jnp.concatenate([ap["bq"], ap["bk"], ap["bv"]], axis=1)
    return pl.pallas_call(
        functools.partial(_enc_layer_kernel, n_heads=n_heads, final_norm=final_norm),
        out_shape=jax.ShapeDtypeStruct((B, L, D), jnp.float32),
        grid=(B,),
        in_specs=[_batched((B, L, D)),
                  _shared((D, 3 * D)), _shared((1, 3 * D)),
                  _shared((D, D)), _shared((1, D)),
                  _shared((1, D)), _shared((1, D)),
                  _shared((D, dff)), _shared((1, dff)),
                  _shared((dff, D)), _shared((1, D)),
                  _shared((1, D)), _shared((1, D)),
                  _shared((1, D)), _shared((1, D))],
        out_specs=_batched((B, L, D)),
        compiler_params=pltpu.CompilerParams(dimension_semantics=("parallel",)),
    )(x, wqkv, bqkv, ap["wo"], ap["bo"],
      lp["ln1_g"], lp["ln1_b"], lp["w1"], lp["b1"], lp["w2"], lp["b2"],
      lp["ln2_g"], lp["ln2_b"], fin_g, fin_b)


# ----------------------------------------------------------------------------
# Fused decoder layer kernel
# ----------------------------------------------------------------------------
def _dec_layer_kernel(x_ref, cross_ref,
                      s_wqkv_ref, s_bqkv_ref, s_wo_ref, s_bo_ref,
                      c_wq_ref, c_bq_ref, c_wkv_ref, c_bkv_ref, c_wo_ref, c_bo_ref,
                      g1_ref, b1_ref, g2_ref, b2_ref,
                      w1_ref, bb1_ref, w2_ref, bb2_ref,
                      g3_ref, b3_ref, gf_ref, bf_ref, o_ref,
                      *, n_heads, final_norm):
    x = x_ref[0]                                   # (L, D)
    cross = cross_ref[0]                           # (S, D)
    D = x.shape[-1]
    # causal self-attention
    qkv = jnp.dot(x, s_wqkv_ref[...], preferred_element_type=jnp.float32) + s_bqkv_ref[...]
    attn = _attn_core(qkv[:, :D], qkv[:, D:2 * D], qkv[:, 2 * D:],
                      s_wo_ref[...], s_bo_ref[...], n_heads, causal=True)
    x = _ln(x + attn, g1_ref[...], b1_ref[...])
    # cross attention
    q = jnp.dot(x, c_wq_ref[...], preferred_element_type=jnp.float32) + c_bq_ref[...]
    kv = jnp.dot(cross, c_wkv_ref[...], preferred_element_type=jnp.float32) + c_bkv_ref[...]
    attn = _attn_core(q, kv[:, :D], kv[:, D:],
                      c_wo_ref[...], c_bo_ref[...], n_heads, causal=False)
    x = _ln(x + attn, g2_ref[...], b2_ref[...])
    # FFN
    h = jnp.maximum(jnp.dot(x, w1_ref[...], preferred_element_type=jnp.float32)
                    + bb1_ref[...], 0.0)
    y = jnp.dot(h, w2_ref[...], preferred_element_type=jnp.float32) + bb2_ref[...]
    x = _ln(x + y, g3_ref[...], b3_ref[...])
    if final_norm:
        x = _ln(x, gf_ref[...], bf_ref[...])
    o_ref[0] = x


def pallas_dec_layer(x, cross, lp, fin_g, fin_b, n_heads, final_norm):
    B, L, D = x.shape
    S = cross.shape[1]
    dff = lp["w1"].shape[1]
    sa, ca = lp["self_attn"], lp["cross_attn"]
    s_wqkv = jnp.concatenate([sa["wq"], sa["wk"], sa["wv"]], axis=1)
    s_bqkv = jnp.concatenate([sa["bq"], sa["bk"], sa["bv"]], axis=1)
    c_wkv = jnp.concatenate([ca["wk"], ca["wv"]], axis=1)
    c_bkv = jnp.concatenate([ca["bk"], ca["bv"]], axis=1)
    return pl.pallas_call(
        functools.partial(_dec_layer_kernel, n_heads=n_heads, final_norm=final_norm),
        out_shape=jax.ShapeDtypeStruct((B, L, D), jnp.float32),
        grid=(B,),
        in_specs=[_batched((B, L, D)), _batched((B, S, D)),
                  _shared((D, 3 * D)), _shared((1, 3 * D)),
                  _shared((D, D)), _shared((1, D)),
                  _shared((D, D)), _shared((1, D)),
                  _shared((D, 2 * D)), _shared((1, 2 * D)),
                  _shared((D, D)), _shared((1, D)),
                  _shared((1, D)), _shared((1, D)),
                  _shared((1, D)), _shared((1, D)),
                  _shared((D, dff)), _shared((1, dff)),
                  _shared((dff, D)), _shared((1, D)),
                  _shared((1, D)), _shared((1, D)),
                  _shared((1, D)), _shared((1, D))],
        out_specs=_batched((B, L, D)),
        compiler_params=pltpu.CompilerParams(dimension_semantics=("parallel",)),
    )(x, cross, s_wqkv, s_bqkv, sa["wo"], sa["bo"],
      ca["wq"], ca["bq"], c_wkv, c_bkv, ca["wo"], ca["bo"],
      lp["ln1_g"], lp["ln1_b"], lp["ln2_g"], lp["ln2_b"],
      lp["w1"], lp["b1"], lp["w2"], lp["b2"],
      lp["ln3_g"], lp["ln3_b"], fin_g, fin_b)


# ----------------------------------------------------------------------------
# Fused RevIN-norm + DenseRMoK experts + mixture + RevIN-denorm kernel
# ----------------------------------------------------------------------------
_MH_CONST = 2.0 / (math.sqrt(3.0) * math.pi ** 0.25)
_BN_EVAL = 1.0 / math.sqrt(1.0 + 1e-5)     # eval BatchNorm1d (running 0/1, affine 1/0)


def _drmok_kernel(x_ref, rw_ref, rb_ref, rwi_ref, gw_ref, gb_ref,
                  t1c_ref, t1b_ref, t2c_ref, t2b_ref,
                  w1s_ref, w1t_ref, w1w_ref,
                  w2s_ref, w2t_ref, w2w_ref, o_ref):
    x = x_ref[...]                                 # (B*N, L), channel rows
    # RevIN 'norm' along the lane (time) axis
    mean = jnp.mean(x, axis=-1, keepdims=True)
    var = jnp.mean((x - mean) ** 2, axis=-1, keepdims=True)
    std = jnp.sqrt(var + 1e-5)
    xn = (x - mean) / std
    xn = xn * rw_ref[...] + rb_ref[...]            # per-row affine

    # gating
    logits = jnp.dot(xn, gw_ref[...], preferred_element_type=jnp.float32) + gb_ref[...]
    score = jax.nn.softmax(logits, axis=-1)        # (B*N, 4)

    def taylor(c_ref, b_ref):                      # coeffs stored as (3, L, P)
        y = jnp.sum(c_ref[0], axis=0, keepdims=True)                       # x^0 term
        y = y + jnp.dot(xn, c_ref[1], preferred_element_type=jnp.float32)  # x^1
        y = y + jnp.dot(xn * xn, c_ref[2], preferred_element_type=jnp.float32)  # x^2
        return y + b_ref[...]

    def wave(s_ref, t_ref, w_ref):                 # params (P, L), mexican-hat wavelet
        xs = (xn[:, None, :] - t_ref[...][None, :, :]) / s_ref[...][None, :, :]
        wav = _MH_CONST * (xs * xs - 1.0) * jnp.exp(-0.5 * xs * xs)
        return jnp.sum(wav * w_ref[...][None, :, :], axis=2) * _BN_EVAL

    e1 = taylor(t1c_ref, t1b_ref)
    e2 = taylor(t2c_ref, t2b_ref)
    e3 = wave(w1s_ref, w1t_ref, w1w_ref)
    e4 = wave(w2s_ref, w2t_ref, w2w_ref)
    pred = (e1 * score[:, 0:1] + e2 * score[:, 1:2] +
            e3 * score[:, 2:3] + e4 * score[:, 3:4])                        # (B*N, P)

    # RevIN 'denorm' (reciprocal of (w + eps) precomputed in glue)
    pred = (pred - rb_ref[...]) * rwi_ref[...]
    pred = pred * std + mean
    o_ref[...] = pred


def pallas_drmok(xr, rw, rb, rwi, rp):
    BN, L = xr.shape
    P = rp["t1_bias"].shape[1]
    return pl.pallas_call(
        _drmok_kernel,
        out_shape=jax.ShapeDtypeStruct((BN, P), jnp.float32),
        grid=(1,),
        in_specs=[_full((BN, L)), _full((BN, 1)), _full((BN, 1)), _full((BN, 1)),
                  _full((L, 4)), _full((1, 4)),
                  _full((3, L, P)), _full((1, P)),
                  _full((3, L, P)), _full((1, P)),
                  _full((P, L)), _full((P, L)), _full((P, L)),
                  _full((P, L)), _full((P, L)), _full((P, L))],
        out_specs=_full((BN, P)),
    )(xr, rw, rb, rwi, rp["gate_w"], rp["gate_b"],
      rp["t1_coef"], rp["t1_bias"], rp["t2_coef"], rp["t2_bias"],
      rp["w1_scale"], rp["w1_trans"], rp["w1_ww"],
      rp["w2_scale"], rp["w2_trans"], rp["w2_ww"])


# ----------------------------------------------------------------------------
# Tail kernel: decoder projection of last pred_len rows + add DRMoK prediction
# ----------------------------------------------------------------------------
def _tail_kernel(dec_ref, pw_ref, pb_ref, pred_ref, o_ref, *, pred_len):
    dec = dec_ref[0]                               # (L_dec, D)
    dslice = dec[dec.shape[0] - pred_len:, :]      # (P, D) static slice
    proj = jnp.dot(dslice, pw_ref[...], preferred_element_type=jnp.float32) + pb_ref[...]
    o_ref[0] = proj + pred_ref[0]                  # (P, c_out)


def pallas_tail(dec_out, proj_w, proj_b, pred, pred_len):
    B, Ld, D = dec_out.shape
    C = proj_w.shape[1]
    N = pred.shape[2]
    return pl.pallas_call(
        functools.partial(_tail_kernel, pred_len=pred_len),
        out_shape=jax.ShapeDtypeStruct((B, pred_len, C), jnp.float32),
        grid=(B,),
        in_specs=[_batched((B, Ld, D)), _shared((D, C)), _shared((1, C)),
                  _batched((B, pred_len, N))],
        out_specs=_batched((B, pred_len, C)),
        compiler_params=pltpu.CompilerParams(dimension_semantics=("parallel",)),
    )(dec_out, proj_w, proj_b, pred)


# ----------------------------------------------------------------------------
# parameter init (deterministic, synthetic)
# ----------------------------------------------------------------------------
class KeyGen:
    def __init__(self, key):
        self.key = key

    def __call__(self):
        self.key, sub = jax.random.split(self.key)
        return sub


def nrm(key, shape, scale=0.02):
    return scale * jax.random.normal(key, shape, jnp.float32)


def init_attn(kg, D):
    return dict(
        wq=nrm(kg(), (D, D)), bq=jnp.zeros((1, D), jnp.float32),
        wk=nrm(kg(), (D, D)), bk=jnp.zeros((1, D), jnp.float32),
        wv=nrm(kg(), (D, D)), bv=jnp.zeros((1, D), jnp.float32),
        wo=nrm(kg(), (D, D)), bo=jnp.zeros((1, D), jnp.float32),
    )


def init_params(cfg, seed=42):
    kg = KeyGen(jax.random.PRNGKey(seed))
    D, dff = cfg["d_model"], cfg["d_ff"]
    L, P, N = cfg["seq_len"], cfg["pred_len"], cfg["enc_in"]
    mark = cfg["mark_dim"]

    def enc_layer():
        return dict(
            attn=init_attn(kg, D),
            ln1_g=jnp.ones((1, D), jnp.float32), ln1_b=jnp.zeros((1, D), jnp.float32),
            ln2_g=jnp.ones((1, D), jnp.float32), ln2_b=jnp.zeros((1, D), jnp.float32),
            w1=nrm(kg(), (D, dff)), b1=jnp.zeros((1, dff), jnp.float32),
            w2=nrm(kg(), (dff, D)), b2=jnp.zeros((1, D), jnp.float32),
        )

    def dec_layer():
        d = enc_layer()
        d["self_attn"] = d.pop("attn")
        d["cross_attn"] = init_attn(kg, D)
        d["ln3_g"] = jnp.ones((1, D), jnp.float32)
        d["ln3_b"] = jnp.zeros((1, D), jnp.float32)
        return d

    bound = 1.0 / math.sqrt(L)
    params = dict(
        enc_emb=dict(token_w=nrm(kg(), (3 * cfg["enc_in"], D), 0.1),
                     temp_w=nrm(kg(), (mark, D), 0.1)),
        dec_emb=dict(token_w=nrm(kg(), (3 * cfg["dec_in"], D), 0.1),
                     temp_w=nrm(kg(), (mark, D), 0.1)),
        encoder=dict(layers=[enc_layer() for _ in range(cfg["e_layers"])],
                     norm_g=jnp.ones((1, D), jnp.float32),
                     norm_b=jnp.zeros((1, D), jnp.float32)),
        decoder=dict(layers=[dec_layer() for _ in range(cfg["d_layers"])],
                     norm_g=jnp.ones((1, D), jnp.float32),
                     norm_b=jnp.zeros((1, D), jnp.float32),
                     proj_w=nrm(kg(), (D, cfg["c_out"])),
                     proj_b=jnp.zeros((1, cfg["c_out"]), jnp.float32)),
        drmok=dict(
            rev_w=jnp.ones((1, 1, N), jnp.float32),
            rev_b=jnp.zeros((1, 1, N), jnp.float32),
            gate_w=nrm(kg(), (L, 4), 0.1),
            gate_b=jnp.zeros((1, 4), jnp.float32),
            t1_coef=0.01 * jax.random.normal(kg(), (3, L, P), jnp.float32),
            t1_bias=jnp.zeros((1, P), jnp.float32),
            t2_coef=0.01 * jax.random.normal(kg(), (3, L, P), jnp.float32),
            t2_bias=jnp.zeros((1, P), jnp.float32),
            w1_scale=jnp.ones((P, L), jnp.float32),
            w1_trans=jnp.zeros((P, L), jnp.float32),
            w1_ww=jax.random.uniform(kg(), (P, L), jnp.float32, -bound, bound),
            w2_scale=jnp.ones((P, L), jnp.float32),
            w2_trans=jnp.zeros((P, L), jnp.float32),
            w2_ww=jax.random.uniform(kg(), (P, L), jnp.float32, -bound, bound),
        ),
    )
    return params


# ----------------------------------------------------------------------------
# model forward (glue in JAX, compute in Pallas)
# ----------------------------------------------------------------------------
def positional_encoding(L, D):
    pos = jnp.arange(L, dtype=jnp.float32)[:, None]
    div = jnp.exp(jnp.arange(0, D, 2, dtype=jnp.float32) * (-math.log(10000.0) / D))
    pe = jnp.zeros((L, D), jnp.float32)
    pe = pe.at[:, 0::2].set(jnp.sin(pos * div))
    pe = pe.at[:, 1::2].set(jnp.cos(pos * div))
    return pe


def model_forward(params, x_enc, x_mark_enc, x_dec, x_mark_dec, cfg):
    D, H, P = cfg["d_model"], cfg["n_heads"], cfg["pred_len"]
    dec_len = cfg["label_len"] + cfg["pred_len"]

    # ----- embeddings -----
    enc_out = pallas_embed(x_enc, x_mark_enc, params["enc_emb"]["token_w"],
                           params["enc_emb"]["temp_w"], positional_encoding(cfg["seq_len"], D))
    dec_out = pallas_embed(x_dec, x_mark_dec, params["dec_emb"]["token_w"],
                           params["dec_emb"]["temp_w"], positional_encoding(dec_len, D))

    # ----- encoder -----
    ep = params["encoder"]
    n_enc = len(ep["layers"])
    for li, lp in enumerate(ep["layers"]):
        enc_out = pallas_enc_layer(enc_out, lp, ep["norm_g"], ep["norm_b"],
                                   n_heads=H, final_norm=(li == n_enc - 1))

    # ----- decoder -----
    dp = params["decoder"]
    n_dec = len(dp["layers"])
    for li, lp in enumerate(dp["layers"]):
        dec_out = pallas_dec_layer(dec_out, enc_out, lp, dp["norm_g"], dp["norm_b"],
                                   n_heads=H, final_norm=(li == n_dec - 1))

    # ----- DenseRMoK (fused RevIN norm + experts + denorm) -----
    rp = params["drmok"]
    B, L, N = x_enc.shape
    xr = x_enc.transpose(0, 2, 1).reshape(B * N, L)          # channel rows
    rw = jnp.tile(rp["rev_w"].reshape(N, 1), (B, 1))          # (B*N, 1)
    rb = jnp.tile(rp["rev_b"].reshape(N, 1), (B, 1))
    rwi = jnp.tile(1.0 / (rp["rev_w"].reshape(N, 1) + 1e-5), (B, 1))
    pred = pallas_drmok(xr, rw, rb, rwi, rp)                  # (B*N, P), denormalized
    pred = pred.reshape(B, N, P).transpose(0, 2, 1)           # (B, P, N) glue

    # ----- projection of last pred_len decoder rows + add DRMoK prediction -----
    return pallas_tail(dec_out, dp["proj_w"], dp["proj_b"], pred, P)


# ----------------------------------------------------------------------------
# main
# ----------------------------------------------------------------------------
if __name__ == "__main__":
    cfg = dict(seq_len=16, label_len=8, pred_len=8,
               enc_in=4, dec_in=4, c_out=4,
               d_model=32, n_heads=4, e_layers=1, d_layers=1, d_ff=64,
               mark_dim=4)

    params = init_params(cfg, seed=42)

    key = jax.random.PRNGKey(0)
    k1, k2, k3, k4 = jax.random.split(key, 4)
    B = 2
    x_enc = jax.random.normal(k1, (B, cfg["seq_len"], cfg["enc_in"]), jnp.float32)
    x_mark_enc = jax.random.normal(k2, (B, cfg["seq_len"], cfg["mark_dim"]), jnp.float32)
    dec_len = cfg["label_len"] + cfg["pred_len"]
    x_dec = jax.random.normal(k3, (B, dec_len, cfg["dec_in"]), jnp.float32)
    x_mark_dec = jax.random.normal(k4, (B, dec_len, cfg["mark_dim"]), jnp.float32)

    fwd = jax.jit(functools.partial(model_forward, cfg=cfg))
    out = fwd(params, x_enc, x_mark_enc, x_dec, x_mark_dec)
    out = jax.block_until_ready(out)
    assert out.shape == (B, cfg["pred_len"], cfg["c_out"])
    print("KERNEL_OK")
</pallas_src>

<mosaic_0001>
module attributes {stable_mosaic.version = 11 : i64} {
  func.func @_embed_kernel(%arg0: i32, %arg1: memref<32x12xf32, #tpu.memory_space<vmem>>, %arg2: memref<32x4xf32, #tpu.memory_space<vmem>>, %arg3: memref<32x32xf32, #tpu.memory_space<vmem>>, %arg4: memref<12x32xf32, #tpu.memory_space<vmem>>, %arg5: memref<4x32xf32, #tpu.memory_space<vmem>>, %arg6: memref<32x32xf32, #tpu.memory_space<vmem>>) attributes {dimension_semantics = [#tpu.dimension_semantics<arbitrary>], iteration_bounds = array<i64: 1>, scalar_prefetch = 0 : i64, scratch_operands = 0 : i64, tpu.core_type = #tpu.core_type<tc>, window_params = [{pipeline_mode = #tpu.pipeline_mode<synchronous>, transform_indices = @transform_0, window_bounds = array<i64: 32, 12>}, {pipeline_mode = #tpu.pipeline_mode<synchronous>, transform_indices = @transform_1, window_bounds = array<i64: 32, 4>}, {pipeline_mode = #tpu.pipeline_mode<synchronous>, transform_indices = @transform_2, window_bounds = array<i64: 32, 32>}, {pipeline_mode = #tpu.pipeline_mode<synchronous>, transform_indices = @transform_3, window_bounds = array<i64: 12, 32>}, {pipeline_mode = #tpu.pipeline_mode<synchronous>, transform_indices = @transform_4, window_bounds = array<i64: 4, 32>}, {pipeline_mode = #tpu.pipeline_mode<synchronous>, transform_indices = @transform_5, window_bounds = array<i64: 32, 32>}]} {
    %c0 = arith.constant 0 : index
    %c0_0 = arith.constant 0 : index
    %0 = vector.load %arg1[%c0, %c0_0] : memref<32x12xf32, #tpu.memory_space<vmem>>, vector<32x12xf32>
    %c0_1 = arith.constant 0 : index
    %c0_2 = arith.constant 0 : index
    %1 = vector.load %arg4[%c0_1, %c0_2] : memref<12x32xf32, #tpu.memory_space<vmem>>, vector<12x32xf32>
    %cst = arith.constant dense<0.000000e+00> : vector<32x32xf32>
    %2 = tpu.matmul %0, %1, %cst {dimension_numbers = #tpu.dot_dimension_numbers<[1], [0], [0], [1], [0, 0, 1, 1], [], []>} : vector<32x12xf32>, vector<12x32xf32>, vector<32x32xf32> -> vector<32x32xf32>
    %c0_3 = arith.constant 0 : index
    %c0_4 = arith.constant 0 : index
    %3 = vector.load %arg2[%c0_3, %c0_4] : memref<32x4xf32, #tpu.memory_space<vmem>>, vector<32x4xf32>
    %c0_5 = arith.constant 0 : index
    %c0_6 = arith.constant 0 : index
    %4 = vector.load %arg5[%c0_5, %c0_6] : memref<4x32xf32, #tpu.memory_space<vmem>>, vector<4x32xf32>
    %cst_7 = arith.constant dense<0.000000e+00> : vector<32x32xf32>
    %5 = tpu.matmul %3, %4, %cst_7 {dimension_numbers = #tpu.dot_dimension_numbers<[1], [0], [0], [1], [0, 0, 1, 1], [], []>} : vector<32x4xf32>, vector<4x32xf32>, vector<32x32xf32> -> vector<32x32xf32>
    %6 = arith.addf %2, %5 : vector<32x32xf32>
    %c0_8 = arith.constant 0 : index
    %c0_9 = arith.constant 0 : index
    %7 = vector.load %arg3[%c0_8, %c0_9] : memref<32x32xf32, #tpu.memory_space<vmem>>, vector<32x32xf32>
    %8 = arith.addf %6, %7 : vector<32x32xf32>
    %c0_10 = arith.constant 0 : index
    %c0_11 = arith.constant 0 : index
    %9 = vector.load %arg6[%c0_10, %c0_11] : memref<32x32xf32, #tpu.memory_space<vmem>>, vector<32x32xf32>
    tpu.vector_store %arg6[%c0_10, %c0_11], %8 {strides = array<i32>} : memref<32x32xf32, #tpu.memory_space<vmem>>, vector<32x32xf32>,
    return
  }
  func.func @transform_0(%arg0: i32) -> (i32, i32) {
    %c0_i32 = arith.constant 0 : i32
    %c0_i32_0 = arith.constant 0 : i32
    %c0_i32_1 = arith.constant 0 : i32
    return %c0_i32, %c0_i32_0 : i32, i32
  }
  func.func @transform_1(%arg0: i32) -> (i32, i32) {
    %c0_i32 = arith.constant 0 : i32
    %c0_i32_0 = arith.constant 0 : i32
    %c0_i32_1 = arith.constant 0 : i32
    return %c0_i32, %c0_i32_0 : i32, i32
  }
  func.func @transform_2(%arg0: i32) -> (i32, i32) {
    %c0_i32 = arith.constant 0 : i32
    %c0_i32_0 = arith.constant 0 : i32
    %c0_i32_1 = arith.constant 0 : i32
    return %c0_i32, %c0_i32_0 : i32, i32
  }
  func.func @transform_3(%arg0: i32) -> (i32, i32) {
    %c0_i32 = arith.constant 0 : i32
    %c0_i32_0 = arith.constant 0 : i32
    %c0_i32_1 = arith.constant 0 : i32
    return %c0_i32, %c0_i32_0 : i32, i32
  }
  func.func @transform_4(%arg0: i32) -> (i32, i32) {
    %c0_i32 = arith.constant 0 : i32
    %c0_i32_0 = arith.constant 0 : i32
    %c0_i32_1 = arith.constant 0 : i32
    return %c0_i32, %c0_i32_0 : i32, i32
  }
  func.func @transform_5(%arg0: i32) -> (i32, i32) {
    %c0_i32 = arith.constant 0 : i32
    %c0_i32_0 = arith.constant 0 : i32
    %c0_i32_1 = arith.constant 0 : i32
    return %c0_i32, %c0_i32_0 : i32, i32
  }
}

module attributes {stable_mosaic.version = 11 : i64} {
  func.func @_dec_layer_kernel(%arg0: i32, %arg1: memref<1x16x32xf32, #tpu.memory_space<vmem>>, %arg2: memref<1x16x32xf32, #tpu.memory_space<vmem>>, %arg3: memref<32x96xf32, #tpu.memory_space<vmem>>, %arg4: memref<1x96xf32, #tpu.memory_space<vmem>>, %arg5: memref<32x32xf32, #tpu.memory_space<vmem>>, %arg6: memref<1x32xf32, #tpu.memory_space<vmem>>, %arg7: memref<32x32xf32, #tpu.memory_space<vmem>>, %arg8: memref<1x32xf32, #tpu.memory_space<vmem>>, %arg9: memref<32x64xf32, #tpu.memory_space<vmem>>, %arg10: memref<1x64xf32, #tpu.memory_space<vmem>>, %arg11: memref<32x32xf32, #tpu.memory_space<vmem>>, %arg12: memref<1x32xf32, #tpu.memory_space<vmem>>, %arg13: memref<1x32xf32, #tpu.memory_space<vmem>>, %arg14: memref<1x32xf32, #tpu.memory_space<vmem>>, %arg15: memref<1x32xf32, #tpu.memory_space<vmem>>, %arg16: memref<1x32xf32, #tpu.memory_space<vmem>>, %arg17: memref<32x64xf32, #tpu.memory_space<vmem>>, %arg18: memref<1x64xf32, #tpu.memory_space<vmem>>, %arg19: memref<64x32xf32, #tpu.memory_space<vmem>>, %arg20: memref<1x32xf32, #tpu.memory_space<vmem>>, %arg21: memref<1x32xf32, #tpu.memory_space<vmem>>, %arg22: memref<1x32xf32, #tpu.memory_space<vmem>>, %arg23: memref<1x32xf32, #tpu.memory_space<vmem>>, %arg24: memref<1x32xf32, #tpu.memory_space<vmem>>, %arg25: memref<1x16x32xf32, #tpu.memory_space<vmem>>) attributes {dimension_semantics = [#tpu.dimension_semantics<parallel>], iteration_bounds = array<i64: 2>, scalar_prefetch = 0 : i64, scratch_operands = 0 : i64, tpu.core_type = #tpu.core_type<tc>, window_params = [{transform_indices = @transform_0, window_bounds = array<i64: 1, 16, 32>}, {transform_indices = @transform_1, window_bounds = array<i64: 1, 16, 32>}, {pipeline_mode = #tpu.pipeline_mode<synchronous>, transform_indices = @transform_2, window_bounds = array<i64: 32, 96>}, {pipeline_mode = #tpu.pipeline_mode<synchronous>, transform_indices = @transform_3, window_bounds = array<i64: 1, 96>}, {pipeline_mode = #tpu.pipeline_mode<synchronous>, transform_indices = @transform_4, window_bounds = array<i64: 32, 32>}, {pipeline_mode = #tpu.pipeline_mode<synchronous>, transform_indices = @transform_5, window_bounds = array<i64: 1, 32>}, {pipeline_mode = #tpu.pipeline_mode<synchronous>, transform_indices = @transform_6, window_bounds = array<i64: 32, 32>}, {pipeline_mode = #tpu.pipeline_mode<synchronous>, transform_indices = @transform_7, window_bounds = array<i64: 1, 32>}, {pipeline_mode = #tpu.pipeline_mode<synchronous>, transform_indices = @transform_8, window_bounds = array<i64: 32, 64>}, {pipeline_mode = #tpu.pipeline_mode<synchronous>, transform_indices = @transform_9, window_bounds = array<i64: 1, 64>}, {pipeline_mode = #tpu.pipeline_mode<synchronous>, transform_indices = @transform_10, window_bounds = array<i64: 32, 32>}, {pipeline_mode = #tpu.pipeline_mode<synchronous>, transform_indices = @transform_11, window_bounds = array<i64: 1, 32>}, {pipeline_mode = #tpu.pipeline_mode<synchronous>, transform_indices = @transform_12, window_bounds = array<i64: 1, 32>}, {pipeline_mode = #tpu.pipeline_mode<synchronous>, transform_indices = @transform_13, window_bounds = array<i64: 1, 32>}, {pipeline_mode = #tpu.pipeline_mode<synchronous>, transform_indices = @transform_14, window_bounds = array<i64: 1, 32>}, {pipeline_mode = #tpu.pipeline_mode<synchronous>, transform_indices = @transform_15, window_bounds = array<i64: 1, 32>}, {pipeline_mode = #tpu.pipeline_mode<synchronous>, transform_indices = @transform_16, window_bounds = array<i64: 32, 64>}, {pipeline_mode = #tpu.pipeline_mode<synchronous>, transform_indices = @transform_17, window_bounds = array<i64: 1, 64>}, {pipeline_mode = #tpu.pipeline_mode<synchronous>, transform_indices = @transform_18, window_bounds = array<i64: 64, 32>}, {pipeline_mode = #tpu.pipeline_mode<synchronous>, transform_indices = @transform_19, window_bounds = array<i64: 1, 32>}, {pipeline_mode = #tpu.pipeline_mode<synchronous>, transform_indices = @transform_20, window_bounds = array<i64: 1, 32>}, {pipeline_mode = #tpu.pipeline_mode<synchronous>, transform_indices = @transform_21, window_bounds = array<i64: 1, 32>}, {pipeline_mode = #tpu.pipeline_mode<synchronous>, transform_indices = @transform_22, window_bounds = array<i64: 1, 32>}, {pipeline_mode = #tpu.pipeline_mode<synchronous>, transform_indices = @transform_23, window_bounds = array<i64: 1, 32>}, {transform_indices = @transform_24, window_bounds = array<i64: 1, 16, 32>}]} {
    %c0 = arith.constant 0 : index
    %c0_0 = arith.constant 0 : index
    %c0_1 = arith.constant 0 : index
    %0 = vector.load %arg1[%c0, %c0_0, %c0_1] : memref<1x16x32xf32, #tpu.memory_space<vmem>>, vector<1x16x32xf32>
    %1 = vector.shape_cast %0 : vector<1x16x32xf32> to vector<16x32xf32>
    %c0_2 = arith.constant 0 : index
    %c0_3 = arith.constant 0 : index
    %c0_4 = arith.constant 0 : index
    %2 = vector.load %arg2[%c0_2, %c0_3, %c0_4] : memref<1x16x32xf32, #tpu.memory_space<vmem>>, vector<1x16x32xf32>
    %3 = vector.shape_cast %2 : vector<1x16x32xf32> to vector<16x32xf32>
    %c0_5 = arith.constant 0 : index
    %c0_6 = arith.constant 0 : index
    %4 = vector.load %arg3[%c0_5, %c0_6] : memref<32x96xf32, #tpu.memory_space<vmem>>, vector<32x96xf32>
    %cst = arith.constant dense<0.000000e+00> : vector<16x96xf32>
    %5 = tpu.matmul %1, %4, %cst {dimension_numbers = #tpu.dot_dimension_numbers<[1], [0], [0], [1], [0, 0, 1, 1], [], []>} : vector<16x32xf32>, vector<32x96xf32>, vector<16x96xf32> -> vector<16x96xf32>
    %c0_7 = arith.constant 0 : index
    %c0_8 = arith.constant 0 : index
    %6 = vector.load %arg4[%c0_7, %c0_8] : memref<1x96xf32, #tpu.memory_space<vmem>>, vector<1x96xf32>
    %7 = vector.broadcast %6 : vector<1x96xf32> to vector<16x96xf32>
    %8 = arith.addf %5, %7 : vector<16x96xf32>
    %9 = vector.extract_strided_slice %8 {offsets = [0, 0], sizes = [16, 32], strides = [1, 1]} : vector<16x96xf32> to vector<16x32xf32>
    %10 = vector.extract_strided_slice %8 {offsets = [0, 32], sizes = [16, 32], strides = [1, 1]} : vector<16x96xf32> to vector<16x32xf32>
    %11 = vector.extract_strided_slice %8 {offsets = [0, 64], sizes = [16, 32], strides = [1, 1]} : vector<16x96xf32> to vector<16x32xf32>
    %c0_9 = arith.constant 0 : index
    %c0_10 = arith.constant 0 : index
    %12 = vector.load %arg5[%c0_9, %c0_10] : memref<32x32xf32, #tpu.memory_space<vmem>>, vector<32x32xf32>
    %c0_11 = arith.constant 0 : index
    %c0_12 = arith.constant 0 : index
    %13 = vector.load %arg6[%c0_11, %c0_12] : memref<1x32xf32, #tpu.memory_space<vmem>>, vector<1x32xf32>
    %14 = vector.extract_strided_slice %9 {offsets = [0, 0], sizes = [16, 8], strides = [1, 1]} : vector<16x32xf32> to vector<16x8xf32>
    %15 = vector.extract_strided_slice %10 {offsets = [0, 0], sizes = [16, 8], strides = [1, 1]} : vector<16x32xf32> to vector<16x8xf32>
    %16 = vector.extract_strided_slice %11 {offsets = [0, 0], sizes = [16, 8], strides = [1, 1]} : vector<16x32xf32> to vector<16x8xf32>
    %17 = tpu.transpose %15, [1, 0] : vector<16x8xf32> -> vector<8x16xf32>
    %cst_13 = arith.constant dense<0.000000e+00> : vector<16x16xf32>
    %18 = tpu.matmul %14, %17, %cst_13 {dimension_numbers = #tpu.dot_dimension_numbers<[1], [0], [0], [1], [0, 0, 1, 1], [], []>} : vector<16x8xf32>, vector<8x16xf32>, vector<16x16xf32> -> vector<16x16xf32>
    %cst_14 = arith.constant 0.353553385 : f32
    %19 = vector.broadcast %cst_14 : f32 to vector<16x16xf32>
    %20 = arith.mulf %18, %19 : vector<16x16xf32>
    %21 = tpu.iota {dimensions = array<i32: 0>} : vector<16x16xi32>
    %22 = tpu.iota {dimensions = array<i32: 1>} : vector<16x16xi32>
    %23 = arith.cmpi sgt, %22, %21 : vector<16x16xi32>
    %cst_15 = arith.constant -1.000000e+30 : f32
    %24 = vector.broadcast %cst_15 : f32 to vector<16x16xf32>
    %25 = arith.select %23, %24, %20 : vector<16x16xi1>, vector<16x16xf32>
    %cst_16 = arith.constant dense<0xFF800000> : vector<16xf32>
    %26 = vector.multi_reduction <maximumf>, %25, %cst_16 [1] : vector<16x16xf32> to vector<16xf32>
    %cst_17 = arith.constant 0xFF800000 : f32
    %27 = vector.broadcast %cst_17 : f32 to vector<16xf32>
    %28 = arith.maximumf %27, %26 : vector<16xf32>
    %29 = vector.shape_cast %28 : vector<16xf32> to vector<16x1xf32>
    %30 = vector.broadcast %29 : vector<16x1xf32> to vector<16x16xf32>
    %31 = arith.subf %25, %30 : vector<16x16xf32>
    %32 = math.exp %31 : vector<16x16xf32>
    %cst_18 = arith.constant dense<0.000000e+00> : vector<16xf32>
    %33 = vector.multi_reduction <add>, %32, %cst_18 [1] : vector<16x16xf32> to vector<16xf32>
    %34 = vector.shape_cast %33 : vector<16xf32> to vector<16x1xf32>
    %35 = vector.broadcast %34 : vector<16x1xf32> to vector<16x16xf32>
    %36 = arith.divf %32, %35 : vector<16x16xf32>
    %cst_19 = arith.constant dense<0.000000e+00> : vector<16x8xf32>
    %37 = tpu.matmul %36, %16, %cst_19 {dimension_numbers = #tpu.dot_dimension_numbers<[1], [0], [0], [1], [0, 0, 1, 1], [], []>} : vector<16x16xf32>, vector<16x8xf32>, vector<16x8xf32> -> vector<16x8xf32>
    %38 = vector.extract_strided_slice %9 {offsets = [0, 8], sizes = [16, 8], strides = [1, 1]} : vector<16x32xf32> to vector<16x8xf32>
    %39 = vector.extract_strided_slice %10 {offsets = [0, 8], sizes = [16, 8], strides = [1, 1]} : vector<16x32xf32> to vector<16x8xf32>
    %40 = vector.extract_strided_slice %11 {offsets = [0, 8], sizes = [16, 8], strides = [1, 1]} : vector<16x32xf32> to vector<16x8xf32>
    %41 = tpu.transpose %39, [1, 0] : vector<16x8xf32> -> vector<8x16xf32>
    %cst_20 = arith.constant dense<0.000000e+00> : vector<16x16xf32>
    %42 = tpu.matmul %38, %41, %cst_20 {dimension_numbers = #tpu.dot_dimension_numbers<[1], [0], [0], [1], [0, 0, 1, 1], [], []>} : vector<16x8xf32>, vector<8x16xf32>, vector<16x16xf32> -> vector<16x16xf32>
    %cst_21 = arith.constant 0.353553385 : f32
    %43 = vector.broadcast %cst_21 : f32 to vector<16x16xf32>
    %44 = arith.mulf %42, %43 : vector<16x16xf32>
    %45 = tpu.iota {dimensions = array<i32: 0>} : vector<16x16xi32>
    %46 = tpu.iota {dimensions = array<i32: 1>} : vector<16x16xi32>
    %47 = arith.cmpi sgt, %46, %45 : vector<16x16xi32>
    %cst_22 = arith.constant -1.000000e+30 : f32
    %48 = vector.broadcast %cst_22 : f32 to vector<16x16xf32>
    %49 = arith.select %47, %48, %44 : vector<16x16xi1>, vector<16x16xf32>
    %cst_23 = arith.constant dense<0xFF800000> : vector<16xf32>
    %50 = vector.multi_reduction <maximumf>, %49, %cst_23 [1] : vector<16x16xf32> to vector<16xf32>
    %cst_24 = arith.constant 0xFF800000 : f32
    %51 = vector.broadcast %cst_24 : f32 to vector<16xf32>
    %52 = arith.maximumf %51, %50 : vector<16xf32>
    %53 = vector.shape_cast %52 : vector<16xf32> to vector<16x1xf32>
    %54 = vector.broadcast %53 : vector<16x1xf32> to vector<16x16xf32>
    %55 = arith.subf %49, %54 : vector<16x16xf32>
    %56 = math.exp %55 : vector<16x16xf32>
    %cst_25 = arith.constant dense<0.000000e+00> : vector<16xf32>
    %57 = vector.multi_reduction <add>, %56, %cst_25 [1] : vector<16x16xf32> to vector<16xf32>
    %58 = vector.shape_cast %57 : vector<16xf32> to vector<16x1xf32>
    %59 = vector.broadcast %58 : vector<16x1xf32> to vector<16x16xf32>
    %60 = arith.divf %56, %59 : vector<16x16xf32>
    %cst_26 = arith.constant dense<0.000000e+00> : vector<16x8xf32>
    %61 = tpu.matmul %60, %40, %cst_26 {dimension_numbers = #tpu.dot_dimension_numbers<[1], [0], [0], [1], [0, 0, 1, 1], [], []>} : vector<16x16xf32>, vector<16x8xf32>, vector<16x8xf32> -> vector<16x8xf32>
    %62 = vector.extract_strided_slice %9 {offsets = [0, 16], sizes = [16, 8], strides = [1, 1]} : vector<16x32xf32> to vector<16x8xf32>
    %63 = vector.extract_strided_slice %10 {offsets = [0, 16], sizes = [16, 8], strides = [1, 1]} : vector<16x32xf32> to vector<16x8xf32>
    %64 = vector.extract_strided_slice %11 {offsets = [0, 16], sizes = [16, 8], strides = [1, 1]} : vector<16x32xf32> to vector<16x8xf32>
    %65 = tpu.transpose %63, [1, 0] : vector<16x8xf32> -> vector<8x16xf32>
    %cst_27 = arith.constant dense<0.000000e+00> : vector<16x16xf32>
    %66 = tpu.matmul %62, %65, %cst_27 {dimension_numbers = #tpu.dot_dimension_numbers<[1], [0], [0], [1], [0, 0, 1, 1], [], []>} : vector<16x8xf32>, vector<8x16xf32>, vector<16x16xf32> -> vector<16x16xf32>
    %cst_28 = arith.constant 0.353553385 : f32
    %67 = vector.broadcast %cst_28 : f32 to vector<16x16xf32>
    %68 = arith.mulf %66, %67 : vector<16x16xf32>
    %69 = tpu.iota {dimensions = array<i32: 0>} : vector<16x16xi32>
    %70 = tpu.iota {dimensions = array<i32: 1>} : vector<16x16xi32>
    %71 = arith.cmpi sgt, %70, %69 : vector<16x16xi32>
    %cst_29 = arith.constant -1.000000e+30 : f32
    %72 = vector.broadcast %cst_29 : f32 to vector<16x16xf32>
    %73 = arith.select %71, %72, %68 : vector<16x16xi1>, vector<16x16xf32>
    %cst_30 = arith.constant dense<0xFF800000> : vector<16xf32>
    %74 = vector.multi_reduction <maximumf>, %73, %cst_30 [1] : vector<16x16xf32> to vector<16xf32>
    %cst_31 = arith.constant 0xFF800000 : f32
    %75 = vector.broadcast %cst_31 : f32 to vector<16xf32>
    %76 = arith.maximumf %75, %74 : vector<16xf32>
    %77 = vector.shape_cast %76 : vector<16xf32> to vector<16x1xf32>
    %78 = vector.broadcast %77 : vector<16x1xf32> to vector<16x16xf32>
    %79 = arith.subf %73, %78 : vector<16x16xf32>
    %80 = math.exp %79 : vector<16x16xf32>
    %cst_32 = arith.constant dense<0.000000e+00> : vector<16xf32>
    %81 = vector.multi_reduction <add>, %80, %cst_32 [1] : vector<16x16xf32> to vector<16xf32>
    %82 = vector.shape_cast %81 : vector<16xf32> to vector<16x1xf32>
    %83 = vector.broadcast %82 : vector<16x1xf32> to vector<16x16xf32>
    %84 = arith.divf %80, %83 : vector<16x16xf32>
    %cst_33 = arith.constant dense<0.000000e+00> : vector<16x8xf32>
    %85 = tpu.matmul %84, %64, %cst_33 {dimension_numbers = #tpu.dot_dimension_numbers<[1], [0], [0], [1], [0, 0, 1, 1], [], []>} : vector<16x16xf32>, vector<16x8xf32>, vector<16x8xf32> -> vector<16x8xf32>
    %86 = vector.extract_strided_slice %9 {offsets = [0, 24], sizes = [16, 8], strides = [1, 1]} : vector<16x32xf32> to vector<16x8xf32>
    %87 = vector.extract_strided_slice %10 {offsets = [0, 24], sizes = [16, 8], strides = [1, 1]} : vector<16x32xf32> to vector<16x8xf32>
    %88 = vector.extract_strided_slice %11 {offsets = [0, 24], sizes = [16, 8], strides = [1, 1]} : vector<16x32xf32> to vector<16x8xf32>
    %89 = tpu.transpose %87, [1, 0] : vector<16x8xf32> -> vector<8x16xf32>
    %cst_34 = arith.constant dense<0.000000e+00> : vector<16x16xf32>
    %90 = tpu.matmul %86, %89, %cst_34 {dimension_numbers = #tpu.dot_dimension_numbers<[1], [0], [0], [1], [0, 0, 1, 1], [], []>} : vector<16x8xf32>, vector<8x16xf32>, vector<16x16xf32> -> vector<16x16xf32>
    %cst_35 = arith.constant 0.353553385 : f32
    %91 = vector.broadcast %cst_35 : f32 to vector<16x16xf32>
    %92 = arith.mulf %90, %91 : vector<16x16xf32>
    %93 = tpu.iota {dimensions = array<i32: 0>} : vector<16x16xi32>
    %94 = tpu.iota {dimensions = array<i32: 1>} : vector<16x16xi32>
    %95 = arith.cmpi sgt, %94, %93 : vector<16x16xi32>
    %cst_36 = arith.constant -1.000000e+30 : f32
    %96 = vector.broadcast %cst_36 : f32 to vector<16x16xf32>
    %97 = arith.select %95, %96, %92 : vector<16x16xi1>, vector<16x16xf32>
    %cst_37 = arith.constant dense<0xFF800000> : vector<16xf32>
    %98 = vector.multi_reduction <maximumf>, %97, %cst_37 [1] : vector<16x16xf32> to vector<16xf32>
    %cst_38 = arith.constant 0xFF800000 : f32
    %99 = vector.broadcast %cst_38 : f32 to vector<16xf32>
    %100 = arith.maximumf %99, %98 : vector<16xf32>
    %101 = vector.shape_cast %100 : vector<16xf32> to vector<16x1xf32>
    %102 = vector.broadcast %101 : vector<16x1xf32> to vector<16x16xf32>
    %103 = arith.subf %97, %102 : vector<16x16xf32>
    %104 = math.exp %103 : vector<16x16xf32>
    %cst_39 = arith.constant dense<0.000000e+00> : vector<16xf32>
    %105 = vector.multi_reduction <add>, %104, %cst_39 [1] : vector<16x16xf32> to vector<16xf32>
    %106 = vector.shape_cast %105 : vector<16xf32> to vector<16x1xf32>
    %107 = vector.broadcast %106 : vector<16x1xf32> to vector<16x16xf32>
    %108 = arith.divf %104, %107 : vector<16x16xf32>
    %cst_40 = arith.constant dense<0.000000e+00> : vector<16x8xf32>
    %109 = tpu.matmul %108, %88, %cst_40 {dimension_numbers = #tpu.dot_dimension_numbers<[1], [0], [0], [1], [0, 0, 1, 1], [], []>} : vector<16x16xf32>, vector<16x8xf32>, vector<16x8xf32> -> vector<16x8xf32>
    %110 = tpu.concatenate %37, %61, %85, %109 in 1 : vector<16x8xf32>, vector<16x8xf32>, vector<16x8xf32>, vector<16x8xf32> -> vector<16x32xf32>
    %cst_41 = arith.constant dense<0.000000e+00> : vector<16x32xf32>
    %111 = tpu.matmul %110, %12, %cst_41 {dimension_numbers = #tpu.dot_dimension_numbers<[1], [0], [0], [1], [0, 0, 1, 1], [], []>} : vector<16x32xf32>, vector<32x32xf32>, vector<16x32xf32> -> vector<16x32xf32>
    %112 = vector.broadcast %13 : vector<1x32xf32> to vector<16x32xf32>
    %113 = arith.addf %111, %112 : vector<16x32xf32>
    %114 = arith.addf %1, %113 : vector<16x32xf32>
    %c0_42 = arith.constant 0 : index
    %c0_43 = arith.constant 0 : index
    %115 = vector.load %arg13[%c0_42, %c0_43] : memref<1x32xf32, #tpu.memory_space<vmem>>, vector<1x32xf32>
    %c0_44 = arith.constant 0 : index
    %c0_45 = arith.constant 0 : index
    %116 = vector.load %arg14[%c0_44, %c0_45] : memref<1x32xf32, #tpu.memory_space<vmem>>, vector<1x32xf32>
    %cst_46 = arith.constant dense<0.000000e+00> : vector<16xf32>
    %117 = vector.multi_reduction <add>, %114, %cst_46 [1] : vector<16x32xf32> to vector<16xf32>
    %118 = vector.shape_cast %117 : vector<16xf32> to vector<16x1xf32>
    %cst_47 = arith.constant 3.200000e+01 : f32
    %119 = vector.broadcast %cst_47 : f32 to vector<16x1xf32>
    %120 = arith.divf %118, %119 : vector<16x1xf32>
    %121 = vector.broadcast %120 : vector<16x1xf32> to vector<16x32xf32>
    %122 = arith.subf %114, %121 : vector<16x32xf32>
    %123 = arith.mulf %122, %122 : vector<16x32xf32>
    %cst_48 = arith.constant dense<0.000000e+00> : vector<16xf32>
    %124 = vector.multi_reduction <add>, %123, %cst_48 [1] : vector<16x32xf32> to vector<16xf32>
    %125 = vector.shape_cast %124 : vector<16xf32> to vector<16x1xf32>
    %cst_49 = arith.constant 3.200000e+01 : f32
    %126 = vector.broadcast %cst_49 : f32 to vector<16x1xf32>
    %127 = arith.divf %125, %126 : vector<16x1xf32>
    %128 = vector.broadcast %120 : vector<16x1xf32> to vector<16x32xf32>
    %129 = arith.subf %114, %128 : vector<16x32xf32>
    %cst_50 = arith.constant 9.99999974E-6 : f32
    %130 = vector.broadcast %cst_50 : f32 to vector<16x1xf32>
    %131 = arith.addf %127, %130 : vector<16x1xf32>
    %132 = math.rsqrt %131 : vector<16x1xf32>
    %133 = vector.broadcast %132 : vector<16x1xf32> to vector<16x32xf32>
    %134 = arith.mulf %129, %133 : vector<16x32xf32>
    %135 = vector.broadcast %115 : vector<1x32xf32> to vector<16x32xf32>
    %136 = arith.mulf %134, %135 : vector<16x32xf32>
    %137 = vector.broadcast %116 : vector<1x32xf32> to vector<16x32xf32>
    %138 = arith.addf %136, %137 : vector<16x32xf32>
    %c0_51 = arith.constant 0 : index
    %c0_52 = arith.constant 0 : index
    %139 = vector.load %arg7[%c0_51, %c0_52] : memref<32x32xf32, #tpu.memory_space<vmem>>, vector<32x32xf32>
    %cst_53 = arith.constant dense<0.000000e+00> : vector<16x32xf32>
    %140 = tpu.matmul %138, %139, %cst_53 {dimension_numbers = #tpu.dot_dimension_numbers<[1], [0], [0], [1], [0, 0, 1, 1], [], []>} : vector<16x32xf32>, vector<32x32xf32>, vector<16x32xf32> -> vector<16x32xf32>
    %c0_54 = arith.constant 0 : index
    %c0_55 = arith.constant 0 : index
    %141 = vector.load %arg8[%c0_54, %c0_55] : memref<1x32xf32, #tpu.memory_space<vmem>>, vector<1x32xf32>
    %142 = vector.broadcast %141 : vector<1x32xf32> to vector<16x32xf32>
    %143 = arith.addf %140, %142 : vector<16x32xf32>
    %c0_56 = arith.constant 0 : index
    %c0_57 = arith.constant 0 : index
    %144 = vector.load %arg9[%c0_56, %c0_57] : memref<32x64xf32, #tpu.memory_space<vmem>>, vector<32x64xf32>
    %cst_58 = arith.constant dense<0.000000e+00> : vector<16x64xf32>
    %145 = tpu.matmul %3, %144, %cst_58 {dimension_numbers = #tpu.dot_dimension_numbers<[1], [0], [0], [1], [0, 0, 1, 1], [], []>} : vector<16x32xf32>, vector<32x64xf32>, vector<16x64xf32> -> vector<16x64xf32>
    %c0_59 = arith.constant 0 : index
    %c0_60 = arith.constant 0 : index
    %146 = vector.load %arg10[%c0_59, %c0_60] : memref<1x64xf32, #tpu.memory_space<vmem>>, vector<1x64xf32>
    %147 = vector.broadcast %146 : vector<1x64xf32> to vector<16x64xf32>
    %148 = arith.addf %145, %147 : vector<16x64xf32>
    %149 = vector.extract_strided_slice %148 {offsets = [0, 0], sizes = [16, 32], strides = [1, 1]} : vector<16x64xf32> to vector<16x32xf32>
    %150 = vector.extract_strided_slice %148 {offsets = [0, 32], sizes = [16, 32], strides = [1, 1]} : vector<16x64xf32> to vector<16x32xf32>
    %c0_61 = arith.constant 0 : index
    %c0_62 = arith.constant 0 : index
    %151 = vector.load %arg11[%c0_61, %c0_62] : memref<32x32xf32, #tpu.memory_space<vmem>>, vector<32x32xf32>
    %c0_63 = arith.constant 0 : index
    %c0_64 = arith.constant 0 : index
    %152 = vector.load %arg12[%c0_63, %c0_64] : memref<1x32xf32, #tpu.memory_space<vmem>>, vector<1x32xf32>
    %153 = vector.extract_strided_slice %143 {offsets = [0, 0], sizes = [16, 8], strides = [1, 1]} : vector<16x32xf32> to vector<16x8xf32>
    %154 = vector.extract_strided_slice %149 {offsets = [0, 0], sizes = [16, 8], strides = [1, 1]} : vector<16x32xf32> to vector<16x8xf32>
    %155 = vector.extract_strided_slice %150 {offsets = [0, 0], sizes = [16, 8], strides = [1, 1]} : vector<16x32xf32> to vector<16x8xf32>
    %156 = tpu.transpose %154, [1, 0] : vector<16x8xf32> -> vector<8x16xf32>
    %cst_65 = arith.constant dense<0.000000e+00> : vector<16x16xf32>
    %157 = tpu.matmul %153, %156, %cst_65 {dimension_numbers = #tpu.dot_dimension_numbers<[1], [0], [0], [1], [0, 0, 1, 1], [], []>} : vector<16x8xf32>, vector<8x16xf32>, vector<16x16xf32> -> vector<16x16xf32>
    %cst_66 = arith.constant 0.353553385 : f32
    %158 = vector.broadcast %cst_66 : f32 to vector<16x16xf32>
    %159 = arith.mulf %157, %158 : vector<16x16xf32>
    %cst_67 = arith.constant dense<0xFF800000> : vector<16xf32>
    %160 = vector.multi_reduction <maximumf>, %159, %cst_67 [1] : vector<16x16xf32> to vector<16xf32>
    %cst_68 = arith.constant 0xFF800000 : f32
    %161 = vector.broadcast %cst_68 : f32 to vector<16xf32>
    %162 = arith.maximumf %161, %160 : vector<16xf32>
    %163 = vector.shape_cast %162 : vector<16xf32> to vector<16x1xf32>
    %164 = vector.broadcast %163 : vector<16x1xf32> to vector<16x16xf32>
    %165 = arith.subf %159, %164 : vector<16x16xf32>
    %166 = math.exp %165 : vector<16x16xf32>
    %cst_69 = arith.constant dense<0.000000e+00> : vector<16xf32>
    %167 = vector.multi_reduction <add>, %166, %cst_69 [1] : vector<16x16xf32> to vector<16xf32>
    %168 = vector.shape_cast %167 : vector<16xf32> to vector<16x1xf32>
    %169 = vector.broadcast %168 : vector<16x1xf32> to vector<16x16xf32>
    %170 = arith.divf %166, %169 : vector<16x16xf32>
    %cst_70 = arith.constant dense<0.000000e+00> : vector<16x8xf32>
    %171 = tpu.matmul %170, %155, %cst_70 {dimension_numbers = #tpu.dot_dimension_numbers<[1], [0], [0], [1], [0, 0, 1, 1], [], []>} : vector<16x16xf32>, vector<16x8xf32>, vector<16x8xf32> -> vector<16x8xf32>
    %172 = vector.extract_strided_slice %143 {offsets = [0, 8], sizes = [16, 8], strides = [1, 1]} : vector<16x32xf32> to vector<16x8xf32>
    %173 = vector.extract_strided_slice %149 {offsets = [0, 8], sizes = [16, 8], strides = [1, 1]} : vector<16x32xf32> to vector<16x8xf32>
    %174 = vector.extract_strided_slice %150 {offsets = [0, 8], sizes = [16, 8], strides = [1, 1]} : vector<16x32xf32> to vector<16x8xf32>
    %175 = tpu.transpose %173, [1, 0] : vector<16x8xf32> -> vector<8x16xf32>
    %cst_71 = arith.constant dense<0.000000e+00> : vector<16x16xf32>
    %176 = tpu.matmul %172, %175, %cst_71 {dimension_numbers = #tpu.dot_dimension_numbers<[1], [0], [0], [1], [0, 0, 1, 1], [], []>} : vector<16x8xf32>, vector<8x16xf32>, vector<16x16xf32> -> vector<16x16xf32>
    %cst_72 = arith.constant 0.353553385 : f32
    %177 = vector.broadcast %cst_72 : f32 to vector<16x16xf32>
    %178 = arith.mulf %176, %177 : vector<16x16xf32>
    %cst_73 = arith.constant dense<0xFF800000> : vector<16xf32>
    %179 = vector.multi_reduction <maximumf>, %178, %cst_73 [1] : vector<16x16xf32> to vector<16xf32>
    %cst_74 = arith.constant 0xFF800000 : f32
    %180 = vector.broadcast %cst_74 : f32 to vector<16xf32>
    %181 = arith.maximumf %180, %179 : vector<16xf32>
    %182 = vector.shape_cast %181 : vector<16xf32> to vector<16x1xf32>
    %183 = vector.broadcast %182 : vector<16x1xf32> to vector<16x16xf32>
    %184 = arith.subf %178, %183 : vector<16x16xf32>
    %185 = math.exp %184 : vector<16x16xf32>
    %cst_75 = arith.constant dense<0.000000e+00> : vector<16xf32>
    %186 = vector.multi_reduction <add>, %185, %cst_75 [1] : vector<16x16xf32> to vector<16xf32>
    %187 = vector.shape_cast %186 : vector<16xf32> to vector<16x1xf32>
    %188 = vector.broadcast %187 : vector<16x1xf32> to vector<16x16xf32>
    %189 = arith.divf %185, %188 : vector<16x16xf32>
    %cst_76 = arith.constant dense<0.000000e+00> : vector<16x8xf32>
    %190 = tpu.matmul %189, %174, %cst_76 {dimension_numbers = #tpu.dot_dimension_numbers<[1], [0], [0], [1], [0, 0, 1, 1], [], []>} : vector<16x16xf32>, vector<16x8xf32>, vector<16x8xf32> -> vector<16x8xf32>
    %191 = vector.extract_strided_slice %143 {offsets = [0, 16], sizes = [16, 8], strides = [1, 1]} : vector<16x32xf32> to vector<16x8xf32>
    %192 = vector.extract_strided_slice %149 {offsets = [0, 16], sizes = [16, 8], strides = [1, 1]} : vector<16x32xf32> to vector<16x8xf32>
    %193 = vector.extract_strided_slice %150 {offsets = [0, 16], sizes = [16, 8], strides = [1, 1]} : vector<16x32xf32> to vector<16x8xf32>
    %194 = tpu.transpose %192, [1, 0] : vector<16x8xf32> -> vector<8x16xf32>
    %cst_77 = arith.constant dense<0.000000e+00> : vector<16x16xf32>
    %195 = tpu.matmul %191, %194, %cst_77 {dimension_numbers = #tpu.dot_dimension_numbers<[1], [0], [0], [1], [0, 0, 1, 1], [], []>} : vector<16x8xf32>, vector<8x16xf32>, vector<16x16xf32> -> vector<16x16xf32>
    %cst_78 = arith.constant 0.353553385 : f32
    %196 = vector.broadcast %cst_78 : f32 to vector<16x16xf32>
    %197 = arith.mulf %195, %196 : vector<16x16xf32>
    %cst_79 = arith.constant dense<0xFF800000> : vector<16xf32>
    %198 = vector.multi_reduction <maximumf>, %197, %cst_79 [1] : vector<16x16xf32> to vector<16xf32>
    %cst_80 = arith.constant 0xFF800000 : f32
    %199 = vector.broadcast %cst_80 : f32 to vector<16xf32>
    %200 = arith.maximumf %199, %198 : vector<16xf32>
    %201 = vector.shape_cast %200 : vector<16xf32> to vector<16x1xf32>
    %202 = vector.broadcast %201 : vector<16x1xf32> to vector<16x16xf32>
    %203 = arith.subf %197, %202 : vector<16x16xf32>
    %204 = math.exp %203 : vector<16x16xf32>
    %cst_81 = arith.constant dense<0.000000e+00> : vector<16xf32>
    %205 = vector.multi_reduction <add>, %204, %cst_81 [1] : vector<16x16xf32> to vector<16xf32>
    %206 = vector.shape_cast %205 : vector<16xf32> to vector<16x1xf32>
    %207 = vector.broadcast %206 : vector<16x1xf32> to vector<16x16xf32>
    %208 = arith.divf %204, %207 : vector<16x16xf32>
    %cst_82 = arith.constant dense<0.000000e+00> : vector<16x8xf32>
    %209 = tpu.matmul %208, %193, %cst_82 {dimension_numbers = #tpu.dot_dimension_numbers<[1], [0], [0], [1], [0, 0, 1, 1], [], []>} : vector<16x16xf32>, vector<16x8xf32>, vector<16x8xf32> -> vector<16x8xf32>
    %210 = vector.extract_strided_slice %143 {offsets = [0, 24], sizes = [16, 8], strides = [1, 1]} : vector<16x32xf32> to vector<16x8xf32>
    %211 = vector.extract_strided_slice %149 {offsets = [0, 24], sizes = [16, 8], strides = [1, 1]} : vector<16x32xf32> to vector<16x8xf32>
    %212 = vector.extract_strided_slice %150 {offsets = [0, 24], sizes = [16, 8], strides = [1, 1]} : vector<16x32xf32> to vector<16x8xf32>
    %213 = tpu.transpose %211, [1, 0] : vector<16x8xf32> -> vector<8x16xf32>
    %cst_83 = arith.constant dense<0.000000e+00> : vector<16x16xf32>
    %214 = tpu.matmul %210, %213, %cst_83 {dimension_numbers = #tpu.dot_dimension_numbers<[1], [0], [0], [1], [0, 0, 1, 1], [], []>} : vector<16x8xf32>, vector<8x16xf32>, vector<16x16xf32> -> vector<16x16xf32>
    %cst_84 = arith.constant 0.353553385 : f32
    %215 = vector.broadcast %cst_84 : f32 to vector<16x16xf32>
    %216 = arith.mulf %214, %215 : vector<16x16xf32>
    %cst_85 = arith.constant dense<0xFF800000> : vector<16xf32>
    %217 = vector.multi_reduction <maximumf>, %216, %cst_85 [1] : vector<16x16xf32> to vector<16xf32>
    %cst_86 = arith.constant 0xFF800000 : f32
    %218 = vector.broadcast %cst_86 : f32 to vector<16xf32>
    %219 = arith.maximumf %218, %217 : vector<16xf32>
    %220 = vector.shape_cast %219 : vector<16xf32> to vector<16x1xf32>
    %221 = vector.broadcast %220 : vector<16x1xf32> to vector<16x16xf32>
    %222 = arith.subf %216, %221 : vector<16x16xf32>
    %223 = math.exp %222 : vector<16x16xf32>
    %cst_87 = arith.constant dense<0.000000e+00> : vector<16xf32>
    %224 = vector.multi_reduction <add>, %223, %cst_87 [1] : vector<16x16xf32> to vector<16xf32>
    %225 = vector.shape_cast %224 : vector<16xf32> to vector<16x1xf32>
    %226 = vector.broadcast %225 : vector<16x1xf32> to vector<16x16xf32>
    %227 = arith.divf %223, %226 : vector<16x16xf32>
    %cst_88 = arith.constant dense<0.000000e+00> : vector<16x8xf32>
    %228 = tpu.matmul %227, %212, %cst_88 {dimension_numbers = #tpu.dot_dimension_numbers<[1], [0], [0], [1], [0, 0, 1, 1], [], []>} : vector<16x16xf32>, vector<16x8xf32>, vector<16x8xf32> -> vector<16x8xf32>
    %229 = tpu.concatenate %171, %190, %209, %228 in 1 : vector<16x8xf32>, vector<16x8xf32>, vector<16x8xf32>, vector<16x8xf32> -> vector<16x32xf32>
    %cst_89 = arith.constant dense<0.000000e+00> : vector<16x32xf32>
    %230 = tpu.matmul %229, %151, %cst_89 {dimension_numbers = #tpu.dot_dimension_numbers<[1], [0], [0], [1], [0, 0, 1, 1], [], []>} : vector<16x32xf32>, vector<32x32xf32>, vector<16x32xf32> -> vector<16x32xf32>
    %231 = vector.broadcast %152 : vector<1x32xf32> to vector<16x32xf32>
    %232 = arith.addf %230, %231 : vector<16x32xf32>
    %233 = arith.addf %138, %232 : vector<16x32xf32>
    %c0_90 = arith.constant 0 : index
    %c0_91 = arith.constant 0 : index
    %234 = vector.load %arg15[%c0_90, %c0_91] : memref<1x32xf32, #tpu.memory_space<vmem>>, vector<1x32xf32>
    %c0_92 = arith.constant 0 : index
    %c0_93 = arith.constant 0 : index
    %235 = vector.load %arg16[%c0_92, %c0_93] : memref<1x32xf32, #tpu.memory_space<vmem>>, vector<1x32xf32>
    %cst_94 = arith.constant dense<0.000000e+00> : vector<16xf32>
    %236 = vector.multi_reduction <add>, %233, %cst_94 [1] : vector<16x32xf32> to vector<16xf32>
    %237 = vector.shape_cast %236 : vector<16xf32> to vector<16x1xf32>
    %cst_95 = arith.constant 3.200000e+01 : f32
    %238 = vector.broadcast %cst_95 : f32 to vector<16x1xf32>
    %239 = arith.divf %237, %238 : vector<16x1xf32>
    %240 = vector.broadcast %239 : vector<16x1xf32> to vector<16x32xf32>
    %241 = arith.subf %233, %240 : vector<16x32xf32>
    %242 = arith.mulf %241, %241 : vector<16x32xf32>
    %cst_96 = arith.constant dense<0.000000e+00> : vector<16xf32>
    %243 = vector.multi_reduction <add>, %242, %cst_96 [1] : vector<16x32xf32> to vector<16xf32>
    %244 = vector.shape_cast %243 : vector<16xf32> to vector<16x1xf32>
    %cst_97 = arith.constant 3.200000e+01 : f32
    %245 = vector.broadcast %cst_97 : f32 to vector<16x1xf32>
    %246 = arith.divf %244, %245 : vector<16x1xf32>
    %247 = vector.broadcast %239 : vector<16x1xf32> to vector<16x32xf32>
    %248 = arith.subf %233, %247 : vector<16x32xf32>
    %cst_98 = arith.constant 9.99999974E-6 : f32
    %249 = vector.broadcast %cst_98 : f32 to vector<16x1xf32>
    %250 = arith.addf %246, %249 : vector<16x1xf32>
    %251 = math.rsqrt %250 : vector<16x1xf32>
    %252 = vector.broadcast %251 : vector<16x1xf32> to vector<16x32xf32>
    %253 = arith.mulf %248, %252 : vector<16x32xf32>
    %254 = vector.broadcast %234 : vector<1x32xf32> to vector<16x32xf32>
    %255 = arith.mulf %253, %254 : vector<16x32xf32>
    %256 = vector.broadcast %235 : vector<1x32xf32> to vector<16x32xf32>
    %257 = arith.addf %255, %256 : vector<16x32xf32>
    %c0_99 = arith.constant 0 : index
    %c0_100 = arith.constant 0 : index
    %258 = vector.load %arg17[%c0_99, %c0_100] : memref<32x64xf32, #tpu.memory_space<vmem>>, vector<32x64xf32>
    %cst_101 = arith.constant dense<0.000000e+00> : vector<16x64xf32>
    %259 = tpu.matmul %257, %258, %cst_101 {dimension_numbers = #tpu.dot_dimension_numbers<[1], [0], [0], [1], [0, 0, 1, 1], [], []>} : vector<16x32xf32>, vector<32x64xf32>, vector<16x64xf32> -> vector<16x64xf32>
    %c0_102 = arith.constant 0 : index
    %c0_103 = arith.constant 0 : index
    %260 = vector.load %arg18[%c0_102, %c0_103] : memref<1x64xf32, #tpu.memory_space<vmem>>, vector<1x64xf32>
    %261 = vector.broadcast %260 : vector<1x64xf32> to vector<16x64xf32>
    %262 = arith.addf %259, %261 : vector<16x64xf32>
    %cst_104 = arith.constant 0.000000e+00 : f32
    %263 = vector.broadcast %cst_104 : f32 to vector<16x64xf32>
    %264 = arith.maximumf %262, %263 : vector<16x64xf32>
    %c0_105 = arith.constant 0 : index
    %c0_106 = arith.constant 0 : index
    %265 = vector.load %arg19[%c0_105, %c0_106] : memref<64x32xf32, #tpu.memory_space<vmem>>, vector<64x32xf32>
    %cst_107 = arith.constant dense<0.000000e+00> : vector<16x32xf32>
    %266 = tpu.matmul %264, %265, %cst_107 {dimension_numbers = #tpu.dot_dimension_numbers<[1], [0], [0], [1], [0, 0, 1, 1], [], []>} : vector<16x64xf32>, vector<64x32xf32>, vector<16x32xf32> -> vector<16x32xf32>
    %c0_108 = arith.constant 0 : index
    %c0_109 = arith.constant 0 : index
    %267 = vector.load %arg20[%c0_108, %c0_109] : memref<1x32xf32, #tpu.memory_space<vmem>>, vector<1x32xf32>
    %268 = vector.broadcast %267 : vector<1x32xf32> to vector<16x32xf32>
    %269 = arith.addf %266, %268 : vector<16x32xf32>
    %270 = arith.addf %257, %269 : vector<16x32xf32>
    %c0_110 = arith.constant 0 : index
    %c0_111 = arith.constant 0 : index
    %271 = vector.load %arg21[%c0_110, %c0_111] : memref<1x32xf32, #tpu.memory_space<vmem>>, vector<1x32xf32>
    %c0_112 = arith.constant 0 : index
    %c0_113 = arith.constant 0 : index
    %272 = vector.load %arg22[%c0_112, %c0_113] : memref<1x32xf32, #tpu.memory_space<vmem>>, vector<1x32xf32>
    %cst_114 = arith.constant dense<0.000000e+00> : vector<16xf32>
    %273 = vector.multi_reduction <add>, %270, %cst_114 [1] : vector<16x32xf32> to vector<16xf32>
    %274 = vector.shape_cast %273 : vector<16xf32> to vector<16x1xf32>
    %cst_115 = arith.constant 3.200000e+01 : f32
    %275 = vector.broadcast %cst_115 : f32 to vector<16x1xf32>
    %276 = arith.divf %274, %275 : vector<16x1xf32>
    %277 = vector.broadcast %276 : vector<16x1xf32> to vector<16x32xf32>
    %278 = arith.subf %270, %277 : vector<16x32xf32>
    %279 = arith.mulf %278, %278 : vector<16x32xf32>
    %cst_116 = arith.constant dense<0.000000e+00> : vector<16xf32>
    %280 = vector.multi_reduction <add>, %279, %cst_116 [1] : vector<16x32xf32> to vector<16xf32>
    %281 = vector.shape_cast %280 : vector<16xf32> to vector<16x1xf32>
    %cst_117 = arith.constant 3.200000e+01 : f32
    %282 = vector.broadcast %cst_117 : f32 to vector<16x1xf32>
    %283 = arith.divf %281, %282 : vector<16x1xf32>
    %284 = vector.broadcast %276 : vector<16x1xf32> to vector<16x32xf32>
    %285 = arith.subf %270, %284 : vector<16x32xf32>
    %cst_118 = arith.constant 9.99999974E-6 : f32
    %286 = vector.broadcast %cst_118 : f32 to vector<16x1xf32>
    %287 = arith.addf %283, %286 : vector<16x1xf32>
    %288 = math.rsqrt %287 : vector<16x1xf32>
    %289 = vector.broadcast %288 : vector<16x1xf32> to vector<16x32xf32>
    %290 = arith.mulf %285, %289 : vector<16x32xf32>
    %291 = vector.broadcast %271 : vector<1x32xf32> to vector<16x32xf32>
    %292 = arith.mulf %290, %291 : vector<16x32xf32>
    %293 = vector.broadcast %272 : vector<1x32xf32> to vector<16x32xf32>
    %294 = arith.addf %292, %293 : vector<16x32xf32>
    %c0_119 = arith.constant 0 : index
    %c0_120 = arith.constant 0 : index
    %295 = vector.load %arg23[%c0_119, %c0_120] : memref<1x32xf32, #tpu.memory_space<vmem>>, vector<1x32xf32>
    %c0_121 = arith.constant 0 : index
    %c0_122 = arith.constant 0 : index
    %296 = vector.load %arg24[%c0_121, %c0_122] : memref<1x32xf32, #tpu.memory_space<vmem>>, vector<1x32xf32>
    %cst_123 = arith.constant dense<0.000000e+00> : vector<16xf32>
    %297 = vector.multi_reduction <add>, %294, %cst_123 [1] : vector<16x32xf32> to vector<16xf32>
    %298 = vector.shape_cast %297 : vector<16xf32> to vector<16x1xf32>
    %cst_124 = arith.constant 3.200000e+01 : f32
    %299 = vector.broadcast %cst_124 : f32 to vector<16x1xf32>
    %300 = arith.divf %298, %299 : vector<16x1xf32>
    %301 = vector.broadcast %300 : vector<16x1xf32> to vector<16x32xf32>
    %302 = arith.subf %294, %301 : vector<16x32xf32>
    %303 = arith.mulf %302, %302 : vector<16x32xf32>
    %cst_125 = arith.constant dense<0.000000e+00> : vector<16xf32>
    %304 = vector.multi_reduction <add>, %303, %cst_125 [1] : vector<16x32xf32> to vector<16xf32>
    %305 = vector.shape_cast %304 : vector<16xf32> to vector<16x1xf32>
    %cst_126 = arith.constant 3.200000e+01 : f32
    %306 = vector.broadcast %cst_126 : f32 to vector<16x1xf32>
    %307 = arith.divf %305, %306 : vector<16x1xf32>
    %308 = vector.broadcast %300 : vector<16x1xf32> to vector<16x32xf32>
    %309 = arith.subf %294, %308 : vector<16x32xf32>
    %cst_127 = arith.constant 9.99999974E-6 : f32
    %310 = vector.broadcast %cst_127 : f32 to vector<16x1xf32>
    %311 = arith.addf %307, %310 : vector<16x1xf32>
    %312 = math.rsqrt %311 : vector<16x1xf32>
    %313 = vector.broadcast %312 : vector<16x1xf32> to vector<16x32xf32>
    %314 = arith.mulf %309, %313 : vector<16x32xf32>
    %315 = vector.broadcast %295 : vector<1x32xf32> to vector<16x32xf32>
    %316 = arith.mulf %314, %315 : vector<16x32xf32>
    %317 = vector.broadcast %296 : vector<1x32xf32> to vector<16x32xf32>
    %318 = arith.addf %316, %317 : vector<16x32xf32>
    %c0_128 = arith.constant 0 : index
    %c0_129 = arith.constant 0 : index
    %c0_130 = arith.constant 0 : index
    %319 = vector.load %arg25[%c0_128, %c0_129, %c0_130] : memref<1x16x32xf32, #tpu.memory_space<vmem>>, vector<1x16x32xf32>
    %320 = vector.shape_cast %319 : vector<1x16x32xf32> to vector<16x32xf32>
    %321 = vector.shape_cast %318 : vector<16x32xf32> to vector<1x16x32xf32>
    tpu.vector_store %arg25[%c0_128, %c0_129, %c0_130], %321 {strides = array<i32>} : memref<1x16x32xf32, #tpu.memory_space<vmem>>, vector<1x16x32xf32>,
    return
  }
  func.func @transform_0(%arg0: i32) -> (i32, i32, i32) {
    %c0_i32 = arith.constant 0 : i32
    %c0_i32_0 = arith.constant 0 : i32
    %c0_i32_1 = arith.constant 0 : i32
    return %arg0, %c0_i32, %c0_i32_0 : i32, i32, i32
  }
  func.func @transform_1(%arg0: i32) -> (i32, i32, i32) {
    %c0_i32 = arith.constant 0 : i32
    %c0_i32_0 = arith.constant 0 : i32
    %c0_i32_1 = arith.constant 0 : i32
    return %arg0, %c0_i32, %c0_i32_0 : i32, i32, i32
  }
  func.func @transform_2(%arg0: i32) -> (i32, i32) {
    %c0_i32 = arith.constant 0 : i32
    %c0_i32_0 = arith.constant 0 : i32
    %c0_i32_1 = arith.constant 0 : i32
    return %c0_i32, %c0_i32_0 : i32, i32
  }
  func.func @transform_3(%arg0: i32) -> (i32, i32) {
    %c0_i32 = arith.constant 0 : i32
    %c0_i32_0 = arith.constant 0 : i32
    %c0_i32_1 = arith.constant 0 : i32
    return %c0_i32, %c0_i32_0 : i32, i32
  }
  func.func @transform_4(%arg0: i32) -> (i32, i32) {
    %c0_i32 = arith.constant 0 : i32
    %c0_i32_0 = arith.constant 0 : i32
    %c0_i32_1 = arith.constant 0 : i32
    return %c0_i32, %c0_i32_0 : i32, i32
  }
  func.func @transform_5(%arg0: i32) -> (i32, i32) {
    %c0_i32 = arith.constant 0 : i32
    %c0_i32_0 = arith.constant 0 : i32
    %c0_i32_1 = arith.constant 0 : i32
    return %c0_i32, %c0_i32_0 : i32, i32
  }
  func.func @transform_6(%arg0: i32) -> (i32, i32) {
    %c0_i32 = arith.constant 0 : i32
    %c0_i32_0 = arith.constant 0 : i32
    %c0_i32_1 = arith.constant 0 : i32
    return %c0_i32, %c0_i32_0 : i32, i32
  }
  func.func @transform_7(%arg0: i32) -> (i32, i32) {
    %c0_i32 = arith.constant 0 : i32
    %c0_i32_0 = arith.constant 0 : i32
    %c0_i32_1 = arith.constant 0 : i32
    return %c0_i32, %c0_i32_0 : i32, i32
  }
  func.func @transform_8(%arg0: i32) -> (i32, i32) {
    %c0_i32 = arith.constant 0 : i32
    %c0_i32_0 = arith.constant 0 : i32
    %c0_i32_1 = arith.constant 0 : i32
    return %c0_i32, %c0_i32_0 : i32, i32
  }
  func.func @transform_9(%arg0: i32) -> (i32, i32) {
    %c0_i32 = arith.constant 0 : i32
    %c0_i32_0 = arith.constant 0 : i32
    %c0_i32_1 = arith.constant 0 : i32
    return %c0_i32, %c0_i32_0 : i32, i32
  }
  func.func @transform_10(%arg0: i32) -> (i32, i32) {
    %c0_i32 = arith.constant 0 : i32
    %c0_i32_0 = arith.constant 0 : i32
    %c0_i32_1 = arith.constant 0 : i32
    return %c0_i32, %c0_i32_0 : i32, i32
  }
  func.func @transform_11(%arg0: i32) -> (i32, i32) {
    %c0_i32 = arith.constant 0 : i32
    %c0_i32_0 = arith.constant 0 : i32
    %c0_i32_1 = arith.constant 0 : i32
    return %c0_i32, %c0_i32_0 : i32, i32
  }
  func.func @transform_12(%arg0: i32) -> (i32, i32) {
    %c0_i32 = arith.constant 0 : i32
    %c0_i32_0 = arith.constant 0 : i32
    %c0_i32_1 = arith.constant 0 : i32
    return %c0_i32, %c0_i32_0 : i32, i32
  }
  func.func @transform_13(%arg0: i32) -> (i32, i32) {
    %c0_i32 = arith.constant 0 : i32
    %c0_i32_0 = arith.constant 0 : i32
    %c0_i32_1 = arith.constant 0 : i32
    return %c0_i32, %c0_i32_0 : i32, i32
  }
  func.func @transform_14(%arg0: i32) -> (i32, i32) {
    %c0_i32 = arith.constant 0 : i32
    %c0_i32_0 = arith.constant 0 : i32
    %c0_i32_1 = arith.constant 0 : i32
    return %c0_i32, %c0_i32_0 : i32, i32
  }
  func.func @transform_15(%arg0: i32) -> (i32, i32) {
    %c0_i32 = arith.constant 0 : i32
    %c0_i32_0 = arith.constant 0 : i32
    %c0_i32_1 = arith.constant 0 : i32
    return %c0_i32, %c0_i32_0 : i32, i32
  }
  func.func @transform_16(%arg0: i32) -> (i32, i32) {
    %c0_i32 = arith.constant 0 : i32
    %c0_i32_0 = arith.constant 0 : i32
    %c0_i32_1 = arith.constant 0 : i32
    return %c0_i32, %c0_i32_0 : i32, i32
  }
  func.func @transform_17(%arg0: i32) -> (i32, i32) {
    %c0_i32 = arith.constant 0 : i32
    %c0_i32_0 = arith.constant 0 : i32
    %c0_i32_1 = arith.constant 0 : i32
    return %c0_i32, %c0_i32_0 : i32, i32
  }
  func.func @transform_18(%arg0: i32) -> (i32, i32) {
    %c0_i32 = arith.constant 0 : i32
    %c0_i32_0 = arith.constant 0 : i32
    %c0_i32_1 = arith.constant 0 : i32
    return %c0_i32, %c0_i32_0 : i32, i32
  }
  func.func @transform_19(%arg0: i32) -> (i32, i32) {
    %c0_i32 = arith.constant 0 : i32
    %c0_i32_0 = arith.constant 0 : i32
    %c0_i32_1 = arith.constant 0 : i32
    return %c0_i32, %c0_i32_0 : i32, i32
  }
  func.func @transform_20(%arg0: i32) -> (i32, i32) {
    %c0_i32 = arith.constant 0 : i32
    %c0_i32_0 = arith.constant 0 : i32
    %c0_i32_1 = arith.constant 0 : i32
    return %c0_i32, %c0_i32_0 : i32, i32
  }
  func.func @transform_21(%arg0: i32) -> (i32, i32) {
    %c0_i32 = arith.constant 0 : i32
    %c0_i32_0 = arith.constant 0 : i32
    %c0_i32_1 = arith.constant 0 : i32
    return %c0_i32, %c0_i32_0 : i32, i32
  }
  func.func @transform_22(%arg0: i32) -> (i32, i32) {
    %c0_i32 = arith.constant 0 : i32
    %c0_i32_0 = arith.constant 0 : i32
    %c0_i32_1 = arith.constant 0 : i32
    return %c0_i32, %c0_i32_0 : i32, i32
  }
  func.func @transform_23(%arg0: i32) -> (i32, i32) {
    %c0_i32 = arith.constant 0 : i32
    %c0_i32_0 = arith.constant 0 : i32
    %c0_i32_1 = arith.constant 0 : i32
    return %c0_i32, %c0_i32_0 : i32, i32
  }
  func.func @transform_24(%arg0: i32) -> (i32, i32, i32) {
    %c0_i32 = arith.constant 0 : i32
    %c0_i32_0 = arith.constant 0 : i32
    %c0_i32_1 = arith.constant 0 : i32
    return %arg0, %c0_i32, %c0_i32_0 : i32, i32, i32
  }
}

module attributes {stable_mosaic.version = 11 : i64} {
  func.func @_enc_layer_kernel(%arg0: i32, %arg1: memref<1x16x32xf32, #tpu.memory_space<vmem>>, %arg2: memref<32x96xf32, #tpu.memory_space<vmem>>, %arg3: memref<1x96xf32, #tpu.memory_space<vmem>>, %arg4: memref<32x32xf32, #tpu.memory_space<vmem>>, %arg5: memref<1x32xf32, #tpu.memory_space<vmem>>, %arg6: memref<1x32xf32, #tpu.memory_space<vmem>>, %arg7: memref<1x32xf32, #tpu.memory_space<vmem>>, %arg8: memref<32x64xf32, #tpu.memory_space<vmem>>, %arg9: memref<1x64xf32, #tpu.memory_space<vmem>>, %arg10: memref<64x32xf32, #tpu.memory_space<vmem>>, %arg11: memref<1x32xf32, #tpu.memory_space<vmem>>, %arg12: memref<1x32xf32, #tpu.memory_space<vmem>>, %arg13: memref<1x32xf32, #tpu.memory_space<vmem>>, %arg14: memref<1x32xf32, #tpu.memory_space<vmem>>, %arg15: memref<1x32xf32, #tpu.memory_space<vmem>>, %arg16: memref<1x16x32xf32, #tpu.memory_space<vmem>>) attributes {dimension_semantics = [#tpu.dimension_semantics<parallel>], iteration_bounds = array<i64: 2>, scalar_prefetch = 0 : i64, scratch_operands = 0 : i64, tpu.core_type = #tpu.core_type<tc>, window_params = [{transform_indices = @transform_0, window_bounds = array<i64: 1, 16, 32>}, {pipeline_mode = #tpu.pipeline_mode<synchronous>, transform_indices = @transform_1, window_bounds = array<i64: 32, 96>}, {pipeline_mode = #tpu.pipeline_mode<synchronous>, transform_indices = @transform_2, window_bounds = array<i64: 1, 96>}, {pipeline_mode = #tpu.pipeline_mode<synchronous>, transform_indices = @transform_3, window_bounds = array<i64: 32, 32>}, {pipeline_mode = #tpu.pipeline_mode<synchronous>, transform_indices = @transform_4, window_bounds = array<i64: 1, 32>}, {pipeline_mode = #tpu.pipeline_mode<synchronous>, transform_indices = @transform_5, window_bounds = array<i64: 1, 32>}, {pipeline_mode = #tpu.pipeline_mode<synchronous>, transform_indices = @transform_6, window_bounds = array<i64: 1, 32>}, {pipeline_mode = #tpu.pipeline_mode<synchronous>, transform_indices = @transform_7, window_bounds = array<i64: 32, 64>}, {pipeline_mode = #tpu.pipeline_mode<synchronous>, transform_indices = @transform_8, window_bounds = array<i64: 1, 64>}, {pipeline_mode = #tpu.pipeline_mode<synchronous>, transform_indices = @transform_9, window_bounds = array<i64: 64, 32>}, {pipeline_mode = #tpu.pipeline_mode<synchronous>, transform_indices = @transform_10, window_bounds = array<i64: 1, 32>}, {pipeline_mode = #tpu.pipeline_mode<synchronous>, transform_indices = @transform_11, window_bounds = array<i64: 1, 32>}, {pipeline_mode = #tpu.pipeline_mode<synchronous>, transform_indices = @transform_12, window_bounds = array<i64: 1, 32>}, {pipeline_mode = #tpu.pipeline_mode<synchronous>, transform_indices = @transform_13, window_bounds = array<i64: 1, 32>}, {pipeline_mode = #tpu.pipeline_mode<synchronous>, transform_indices = @transform_14, window_bounds = array<i64: 1, 32>}, {transform_indices = @transform_15, window_bounds = array<i64: 1, 16, 32>}]} {
    %c0 = arith.constant 0 : index
    %c0_0 = arith.constant 0 : index
    %c0_1 = arith.constant 0 : index
    %0 = vector.load %arg1[%c0, %c0_0, %c0_1] : memref<1x16x32xf32, #tpu.memory_space<vmem>>, vector<1x16x32xf32>
    %1 = vector.shape_cast %0 : vector<1x16x32xf32> to vector<16x32xf32>
    %c0_2 = arith.constant 0 : index
    %c0_3 = arith.constant 0 : index
    %2 = vector.load %arg2[%c0_2, %c0_3] : memref<32x96xf32, #tpu.memory_space<vmem>>, vector<32x96xf32>
    %cst = arith.constant dense<0.000000e+00> : vector<16x96xf32>
    %3 = tpu.matmul %1, %2, %cst {dimension_numbers = #tpu.dot_dimension_numbers<[1], [0], [0], [1], [0, 0, 1, 1], [], []>} : vector<16x32xf32>, vector<32x96xf32>, vector<16x96xf32> -> vector<16x96xf32>
    %c0_4 = arith.constant 0 : index
    %c0_5 = arith.constant 0 : index
    %4 = vector.load %arg3[%c0_4, %c0_5] : memref<1x96xf32, #tpu.memory_space<vmem>>, vector<1x96xf32>
    %5 = vector.broadcast %4 : vector<1x96xf32> to vector<16x96xf32>
    %6 = arith.addf %3, %5 : vector<16x96xf32>
    %7 = vector.extract_strided_slice %6 {offsets = [0, 0], sizes = [16, 32], strides = [1, 1]} : vector<16x96xf32> to vector<16x32xf32>
    %8 = vector.extract_strided_slice %6 {offsets = [0, 32], sizes = [16, 32], strides = [1, 1]} : vector<16x96xf32> to vector<16x32xf32>
    %9 = vector.extract_strided_slice %6 {offsets = [0, 64], sizes = [16, 32], strides = [1, 1]} : vector<16x96xf32> to vector<16x32xf32>
    %c0_6 = arith.constant 0 : index
    %c0_7 = arith.constant 0 : index
    %10 = vector.load %arg4[%c0_6, %c0_7] : memref<32x32xf32, #tpu.memory_space<vmem>>, vector<32x32xf32>
    %c0_8 = arith.constant 0 : index
    %c0_9 = arith.constant 0 : index
    %11 = vector.load %arg5[%c0_8, %c0_9] : memref<1x32xf32, #tpu.memory_space<vmem>>, vector<1x32xf32>
    %12 = vector.extract_strided_slice %7 {offsets = [0, 0], sizes = [16, 8], strides = [1, 1]} : vector<16x32xf32> to vector<16x8xf32>
    %13 = vector.extract_strided_slice %8 {offsets = [0, 0], sizes = [16, 8], strides = [1, 1]} : vector<16x32xf32> to vector<16x8xf32>
    %14 = vector.extract_strided_slice %9 {offsets = [0, 0], sizes = [16, 8], strides = [1, 1]} : vector<16x32xf32> to vector<16x8xf32>
    %15 = tpu.transpose %13, [1, 0] : vector<16x8xf32> -> vector<8x16xf32>
    %cst_10 = arith.constant dense<0.000000e+00> : vector<16x16xf32>
    %16 = tpu.matmul %12, %15, %cst_10 {dimension_numbers = #tpu.dot_dimension_numbers<[1], [0], [0], [1], [0, 0, 1, 1], [], []>} : vector<16x8xf32>, vector<8x16xf32>, vector<16x16xf32> -> vector<16x16xf32>
    %cst_11 = arith.constant 0.353553385 : f32
    %17 = vector.broadcast %cst_11 : f32 to vector<16x16xf32>
    %18 = arith.mulf %16, %17 : vector<16x16xf32>
    %cst_12 = arith.constant dense<0xFF800000> : vector<16xf32>
    %19 = vector.multi_reduction <maximumf>, %18, %cst_12 [1] : vector<16x16xf32> to vector<16xf32>
    %cst_13 = arith.constant 0xFF800000 : f32
    %20 = vector.broadcast %cst_13 : f32 to vector<16xf32>
    %21 = arith.maximumf %20, %19 : vector<16xf32>
    %22 = vector.shape_cast %21 : vector<16xf32> to vector<16x1xf32>
    %23 = vector.broadcast %22 : vector<16x1xf32> to vector<16x16xf32>
    %24 = arith.subf %18, %23 : vector<16x16xf32>
    %25 = math.exp %24 : vector<16x16xf32>
    %cst_14 = arith.constant dense<0.000000e+00> : vector<16xf32>
    %26 = vector.multi_reduction <add>, %25, %cst_14 [1] : vector<16x16xf32> to vector<16xf32>
    %27 = vector.shape_cast %26 : vector<16xf32> to vector<16x1xf32>
    %28 = vector.broadcast %27 : vector<16x1xf32> to vector<16x16xf32>
    %29 = arith.divf %25, %28 : vector<16x16xf32>
    %cst_15 = arith.constant dense<0.000000e+00> : vector<16x8xf32>
    %30 = tpu.matmul %29, %14, %cst_15 {dimension_numbers = #tpu.dot_dimension_numbers<[1], [0], [0], [1], [0, 0, 1, 1], [], []>} : vector<16x16xf32>, vector<16x8xf32>, vector<16x8xf32> -> vector<16x8xf32>
    %31 = vector.extract_strided_slice %7 {offsets = [0, 8], sizes = [16, 8], strides = [1, 1]} : vector<16x32xf32> to vector<16x8xf32>
    %32 = vector.extract_strided_slice %8 {offsets = [0, 8], sizes = [16, 8], strides = [1, 1]} : vector<16x32xf32> to vector<16x8xf32>
    %33 = vector.extract_strided_slice %9 {offsets = [0, 8], sizes = [16, 8], strides = [1, 1]} : vector<16x32xf32> to vector<16x8xf32>
    %34 = tpu.transpose %32, [1, 0] : vector<16x8xf32> -> vector<8x16xf32>
    %cst_16 = arith.constant dense<0.000000e+00> : vector<16x16xf32>
    %35 = tpu.matmul %31, %34, %cst_16 {dimension_numbers = #tpu.dot_dimension_numbers<[1], [0], [0], [1], [0, 0, 1, 1], [], []>} : vector<16x8xf32>, vector<8x16xf32>, vector<16x16xf32> -> vector<16x16xf32>
    %cst_17 = arith.constant 0.353553385 : f32
    %36 = vector.broadcast %cst_17 : f32 to vector<16x16xf32>
    %37 = arith.mulf %35, %36 : vector<16x16xf32>
    %cst_18 = arith.constant dense<0xFF800000> : vector<16xf32>
    %38 = vector.multi_reduction <maximumf>, %37, %cst_18 [1] : vector<16x16xf32> to vector<16xf32>
    %cst_19 = arith.constant 0xFF800000 : f32
    %39 = vector.broadcast %cst_19 : f32 to vector<16xf32>
    %40 = arith.maximumf %39, %38 : vector<16xf32>
    %41 = vector.shape_cast %40 : vector<16xf32> to vector<16x1xf32>
    %42 = vector.broadcast %41 : vector<16x1xf32> to vector<16x16xf32>
    %43 = arith.subf %37, %42 : vector<16x16xf32>
    %44 = math.exp %43 : vector<16x16xf32>
    %cst_20 = arith.constant dense<0.000000e+00> : vector<16xf32>
    %45 = vector.multi_reduction <add>, %44, %cst_20 [1] : vector<16x16xf32> to vector<16xf32>
    %46 = vector.shape_cast %45 : vector<16xf32> to vector<16x1xf32>
    %47 = vector.broadcast %46 : vector<16x1xf32> to vector<16x16xf32>
    %48 = arith.divf %44, %47 : vector<16x16xf32>
    %cst_21 = arith.constant dense<0.000000e+00> : vector<16x8xf32>
    %49 = tpu.matmul %48, %33, %cst_21 {dimension_numbers = #tpu.dot_dimension_numbers<[1], [0], [0], [1], [0, 0, 1, 1], [], []>} : vector<16x16xf32>, vector<16x8xf32>, vector<16x8xf32> -> vector<16x8xf32>
    %50 = vector.extract_strided_slice %7 {offsets = [0, 16], sizes = [16, 8], strides = [1, 1]} : vector<16x32xf32> to vector<16x8xf32>
    %51 = vector.extract_strided_slice %8 {offsets = [0, 16], sizes = [16, 8], strides = [1, 1]} : vector<16x32xf32> to vector<16x8xf32>
    %52 = vector.extract_strided_slice %9 {offsets = [0, 16], sizes = [16, 8], strides = [1, 1]} : vector<16x32xf32> to vector<16x8xf32>
    %53 = tpu.transpose %51, [1, 0] : vector<16x8xf32> -> vector<8x16xf32>
    %cst_22 = arith.constant dense<0.000000e+00> : vector<16x16xf32>
    %54 = tpu.matmul %50, %53, %cst_22 {dimension_numbers = #tpu.dot_dimension_numbers<[1], [0], [0], [1], [0, 0, 1, 1], [], []>} : vector<16x8xf32>, vector<8x16xf32>, vector<16x16xf32> -> vector<16x16xf32>
    %cst_23 = arith.constant 0.353553385 : f32
    %55 = vector.broadcast %cst_23 : f32 to vector<16x16xf32>
    %56 = arith.mulf %54, %55 : vector<16x16xf32>
    %cst_24 = arith.constant dense<0xFF800000> : vector<16xf32>
    %57 = vector.multi_reduction <maximumf>, %56, %cst_24 [1] : vector<16x16xf32> to vector<16xf32>
    %cst_25 = arith.constant 0xFF800000 : f32
    %58 = vector.broadcast %cst_25 : f32 to vector<16xf32>
    %59 = arith.maximumf %58, %57 : vector<16xf32>
    %60 = vector.shape_cast %59 : vector<16xf32> to vector<16x1xf32>
    %61 = vector.broadcast %60 : vector<16x1xf32> to vector<16x16xf32>
    %62 = arith.subf %56, %61 : vector<16x16xf32>
    %63 = math.exp %62 : vector<16x16xf32>
    %cst_26 = arith.constant dense<0.000000e+00> : vector<16xf32>
    %64 = vector.multi_reduction <add>, %63, %cst_26 [1] : vector<16x16xf32> to vector<16xf32>
    %65 = vector.shape_cast %64 : vector<16xf32> to vector<16x1xf32>
    %66 = vector.broadcast %65 : vector<16x1xf32> to vector<16x16xf32>
    %67 = arith.divf %63, %66 : vector<16x16xf32>
    %cst_27 = arith.constant dense<0.000000e+00> : vector<16x8xf32>
    %68 = tpu.matmul %67, %52, %cst_27 {dimension_numbers = #tpu.dot_dimension_numbers<[1], [0], [0], [1], [0, 0, 1, 1], [], []>} : vector<16x16xf32>, vector<16x8xf32>, vector<16x8xf32> -> vector<16x8xf32>
    %69 = vector.extract_strided_slice %7 {offsets = [0, 24], sizes = [16, 8], strides = [1, 1]} : vector<16x32xf32> to vector<16x8xf32>
    %70 = vector.extract_strided_slice %8 {offsets = [0, 24], sizes = [16, 8], strides = [1, 1]} : vector<16x32xf32> to vector<16x8xf32>
    %71 = vector.extract_strided_slice %9 {offsets = [0, 24], sizes = [16, 8], strides = [1, 1]} : vector<16x32xf32> to vector<16x8xf32>
    %72 = tpu.transpose %70, [1, 0] : vector<16x8xf32> -> vector<8x16xf32>
    %cst_28 = arith.constant dense<0.000000e+00> : vector<16x16xf32>
    %73 = tpu.matmul %69, %72, %cst_28 {dimension_numbers = #tpu.dot_dimension_numbers<[1], [0], [0], [1], [0, 0, 1, 1], [], []>} : vector<16x8xf32>, vector<8x16xf32>, vector<16x16xf32> -> vector<16x16xf32>
    %cst_29 = arith.constant 0.353553385 : f32
    %74 = vector.broadcast %cst_29 : f32 to vector<16x16xf32>
    %75 = arith.mulf %73, %74 : vector<16x16xf32>
    %cst_30 = arith.constant dense<0xFF800000> : vector<16xf32>
    %76 = vector.multi_reduction <maximumf>, %75, %cst_30 [1] : vector<16x16xf32> to vector<16xf32>
    %cst_31 = arith.constant 0xFF800000 : f32
    %77 = vector.broadcast %cst_31 : f32 to vector<16xf32>
    %78 = arith.maximumf %77, %76 : vector<16xf32>
    %79 = vector.shape_cast %78 : vector<16xf32> to vector<16x1xf32>
    %80 = vector.broadcast %79 : vector<16x1xf32> to vector<16x16xf32>
    %81 = arith.subf %75, %80 : vector<16x16xf32>
    %82 = math.exp %81 : vector<16x16xf32>
    %cst_32 = arith.constant dense<0.000000e+00> : vector<16xf32>
    %83 = vector.multi_reduction <add>, %82, %cst_32 [1] : vector<16x16xf32> to vector<16xf32>
    %84 = vector.shape_cast %83 : vector<16xf32> to vector<16x1xf32>
    %85 = vector.broadcast %84 : vector<16x1xf32> to vector<16x16xf32>
    %86 = arith.divf %82, %85 : vector<16x16xf32>
    %cst_33 = arith.constant dense<0.000000e+00> : vector<16x8xf32>
    %87 = tpu.matmul %86, %71, %cst_33 {dimension_numbers = #tpu.dot_dimension_numbers<[1], [0], [0], [1], [0, 0, 1, 1], [], []>} : vector<16x16xf32>, vector<16x8xf32>, vector<16x8xf32> -> vector<16x8xf32>
    %88 = tpu.concatenate %30, %49, %68, %87 in 1 : vector<16x8xf32>, vector<16x8xf32>, vector<16x8xf32>, vector<16x8xf32> -> vector<16x32xf32>
    %cst_34 = arith.constant dense<0.000000e+00> : vector<16x32xf32>
    %89 = tpu.matmul %88, %10, %cst_34 {dimension_numbers = #tpu.dot_dimension_numbers<[1], [0], [0], [1], [0, 0, 1, 1], [], []>} : vector<16x32xf32>, vector<32x32xf32>, vector<16x32xf32> -> vector<16x32xf32>
    %90 = vector.broadcast %11 : vector<1x32xf32> to vector<16x32xf32>
    %91 = arith.addf %89, %90 : vector<16x32xf32>
    %92 = arith.addf %1, %91 : vector<16x32xf32>
    %c0_35 = arith.constant 0 : index
    %c0_36 = arith.constant 0 : index
    %93 = vector.load %arg6[%c0_35, %c0_36] : memref<1x32xf32, #tpu.memory_space<vmem>>, vector<1x32xf32>
    %c0_37 = arith.constant 0 : index
    %c0_38 = arith.constant 0 : index
    %94 = vector.load %arg7[%c0_37, %c0_38] : memref<1x32xf32, #tpu.memory_space<vmem>>, vector<1x32xf32>
    %cst_39 = arith.constant dense<0.000000e+00> : vector<16xf32>
    %95 = vector.multi_reduction <add>, %92, %cst_39 [1] : vector<16x32xf32> to vector<16xf32>
    %96 = vector.shape_cast %95 : vector<16xf32> to vector<16x1xf32>
    %cst_40 = arith.constant 3.200000e+01 : f32
    %97 = vector.broadcast %cst_40 : f32 to vector<16x1xf32>
    %98 = arith.divf %96, %97 : vector<16x1xf32>
    %99 = vector.broadcast %98 : vector<16x1xf32> to vector<16x32xf32>
    %100 = arith.subf %92, %99 : vector<16x32xf32>
    %101 = arith.mulf %100, %100 : vector<16x32xf32>
    %cst_41 = arith.constant dense<0.000000e+00> : vector<16xf32>
    %102 = vector.multi_reduction <add>, %101, %cst_41 [1] : vector<16x32xf32> to vector<16xf32>
    %103 = vector.shape_cast %102 : vector<16xf32> to vector<16x1xf32>
    %cst_42 = arith.constant 3.200000e+01 : f32
    %104 = vector.broadcast %cst_42 : f32 to vector<16x1xf32>
    %105 = arith.divf %103, %104 : vector<16x1xf32>
    %106 = vector.broadcast %98 : vector<16x1xf32> to vector<16x32xf32>
    %107 = arith.subf %92, %106 : vector<16x32xf32>
    %cst_43 = arith.constant 9.99999974E-6 : f32
    %108 = vector.broadcast %cst_43 : f32 to vector<16x1xf32>
    %109 = arith.addf %105, %108 : vector<16x1xf32>
    %110 = math.rsqrt %109 : vector<16x1xf32>
    %111 = vector.broadcast %110 : vector<16x1xf32> to vector<16x32xf32>
    %112 = arith.mulf %107, %111 : vector<16x32xf32>
    %113 = vector.broadcast %93 : vector<1x32xf32> to vector<16x32xf32>
    %114 = arith.mulf %112, %113 : vector<16x32xf32>
    %115 = vector.broadcast %94 : vector<1x32xf32> to vector<16x32xf32>
    %116 = arith.addf %114, %115 : vector<16x32xf32>
    %c0_44 = arith.constant 0 : index
    %c0_45 = arith.constant 0 : index
    %117 = vector.load %arg8[%c0_44, %c0_45] : memref<32x64xf32, #tpu.memory_space<vmem>>, vector<32x64xf32>
    %cst_46 = arith.constant dense<0.000000e+00> : vector<16x64xf32>
    %118 = tpu.matmul %116, %117, %cst_46 {dimension_numbers = #tpu.dot_dimension_numbers<[1], [0], [0], [1], [0, 0, 1, 1], [], []>} : vector<16x32xf32>, vector<32x64xf32>, vector<16x64xf32> -> vector<16x64xf32>
    %c0_47 = arith.constant 0 : index
    %c0_48 = arith.constant 0 : index
    %119 = vector.load %arg9[%c0_47, %c0_48] : memref<1x64xf32, #tpu.memory_space<vmem>>, vector<1x64xf32>
    %120 = vector.broadcast %119 : vector<1x64xf32> to vector<16x64xf32>
    %121 = arith.addf %118, %120 : vector<16x64xf32>
    %cst_49 = arith.constant 0.000000e+00 : f32
    %122 = vector.broadcast %cst_49 : f32 to vector<16x64xf32>
    %123 = arith.maximumf %121, %122 : vector<16x64xf32>
    %c0_50 = arith.constant 0 : index
    %c0_51 = arith.constant 0 : index
    %124 = vector.load %arg10[%c0_50, %c0_51] : memref<64x32xf32, #tpu.memory_space<vmem>>, vector<64x32xf32>
    %cst_52 = arith.constant dense<0.000000e+00> : vector<16x32xf32>
    %125 = tpu.matmul %123, %124, %cst_52 {dimension_numbers = #tpu.dot_dimension_numbers<[1], [0], [0], [1], [0, 0, 1, 1], [], []>} : vector<16x64xf32>, vector<64x32xf32>, vector<16x32xf32> -> vector<16x32xf32>
    %c0_53 = arith.constant 0 : index
    %c0_54 = arith.constant 0 : index
    %126 = vector.load %arg11[%c0_53, %c0_54] : memref<1x32xf32, #tpu.memory_space<vmem>>, vector<1x32xf32>
    %127 = vector.broadcast %126 : vector<1x32xf32> to vector<16x32xf32>
    %128 = arith.addf %125, %127 : vector<16x32xf32>
    %129 = arith.addf %116, %128 : vector<16x32xf32>
    %c0_55 = arith.constant 0 : index
    %c0_56 = arith.constant 0 : index
    %130 = vector.load %arg12[%c0_55, %c0_56] : memref<1x32xf32, #tpu.memory_space<vmem>>, vector<1x32xf32>
    %c0_57 = arith.constant 0 : index
    %c0_58 = arith.constant 0 : index
    %131 = vector.load %arg13[%c0_57, %c0_58] : memref<1x32xf32, #tpu.memory_space<vmem>>, vector<1x32xf32>
    %cst_59 = arith.constant dense<0.000000e+00> : vector<16xf32>
    %132 = vector.multi_reduction <add>, %129, %cst_59 [1] : vector<16x32xf32> to vector<16xf32>
    %133 = vector.shape_cast %132 : vector<16xf32> to vector<16x1xf32>
    %cst_60 = arith.constant 3.200000e+01 : f32
    %134 = vector.broadcast %cst_60 : f32 to vector<16x1xf32>
    %135 = arith.divf %133, %134 : vector<16x1xf32>
    %136 = vector.broadcast %135 : vector<16x1xf32> to vector<16x32xf32>
    %137 = arith.subf %129, %136 : vector<16x32xf32>
    %138 = arith.mulf %137, %137 : vector<16x32xf32>
    %cst_61 = arith.constant dense<0.000000e+00> : vector<16xf32>
    %139 = vector.multi_reduction <add>, %138, %cst_61 [1] : vector<16x32xf32> to vector<16xf32>
    %140 = vector.shape_cast %139 : vector<16xf32> to vector<16x1xf32>
    %cst_62 = arith.constant 3.200000e+01 : f32
    %141 = vector.broadcast %cst_62 : f32 to vector<16x1xf32>
    %142 = arith.divf %140, %141 : vector<16x1xf32>
    %143 = vector.broadcast %135 : vector<16x1xf32> to vector<16x32xf32>
    %144 = arith.subf %129, %143 : vector<16x32xf32>
    %cst_63 = arith.constant 9.99999974E-6 : f32
    %145 = vector.broadcast %cst_63 : f32 to vector<16x1xf32>
    %146 = arith.addf %142, %145 : vector<16x1xf32>
    %147 = math.rsqrt %146 : vector<16x1xf32>
    %148 = vector.broadcast %147 : vector<16x1xf32> to vector<16x32xf32>
    %149 = arith.mulf %144, %148 : vector<16x32xf32>
    %150 = vector.broadcast %130 : vector<1x32xf32> to vector<16x32xf32>
    %151 = arith.mulf %149, %150 : vector<16x32xf32>
    %152 = vector.broadcast %131 : vector<1x32xf32> to vector<16x32xf32>
    %153 = arith.addf %151, %152 : vector<16x32xf32>
    %c0_64 = arith.constant 0 : index
    %c0_65 = arith.constant 0 : index
    %154 = vector.load %arg14[%c0_64, %c0_65] : memref<1x32xf32, #tpu.memory_space<vmem>>, vector<1x32xf32>
    %c0_66 = arith.constant 0 : index
    %c0_67 = arith.constant 0 : index
    %155 = vector.load %arg15[%c0_66, %c0_67] : memref<1x32xf32, #tpu.memory_space<vmem>>, vector<1x32xf32>
    %cst_68 = arith.constant dense<0.000000e+00> : vector<16xf32>
    %156 = vector.multi_reduction <add>, %153, %cst_68 [1] : vector<16x32xf32> to vector<16xf32>
    %157 = vector.shape_cast %156 : vector<16xf32> to vector<16x1xf32>
    %cst_69 = arith.constant 3.200000e+01 : f32
    %158 = vector.broadcast %cst_69 : f32 to vector<16x1xf32>
    %159 = arith.divf %157, %158 : vector<16x1xf32>
    %160 = vector.broadcast %159 : vector<16x1xf32> to vector<16x32xf32>
    %161 = arith.subf %153, %160 : vector<16x32xf32>
    %162 = arith.mulf %161, %161 : vector<16x32xf32>
    %cst_70 = arith.constant dense<0.000000e+00> : vector<16xf32>
    %163 = vector.multi_reduction <add>, %162, %cst_70 [1] : vector<16x32xf32> to vector<16xf32>
    %164 = vector.shape_cast %163 : vector<16xf32> to vector<16x1xf32>
    %cst_71 = arith.constant 3.200000e+01 : f32
    %165 = vector.broadcast %cst_71 : f32 to vector<16x1xf32>
    %166 = arith.divf %164, %165 : vector<16x1xf32>
    %167 = vector.broadcast %159 : vector<16x1xf32> to vector<16x32xf32>
    %168 = arith.subf %153, %167 : vector<16x32xf32>
    %cst_72 = arith.constant 9.99999974E-6 : f32
    %169 = vector.broadcast %cst_72 : f32 to vector<16x1xf32>
    %170 = arith.addf %166, %169 : vector<16x1xf32>
    %171 = math.rsqrt %170 : vector<16x1xf32>
    %172 = vector.broadcast %171 : vector<16x1xf32> to vector<16x32xf32>
    %173 = arith.mulf %168, %172 : vector<16x32xf32>
    %174 = vector.broadcast %154 : vector<1x32xf32> to vector<16x32xf32>
    %175 = arith.mulf %173, %174 : vector<16x32xf32>
    %176 = vector.broadcast %155 : vector<1x32xf32> to vector<16x32xf32>
    %177 = arith.addf %175, %176 : vector<16x32xf32>
    %c0_73 = arith.constant 0 : index
    %c0_74 = arith.constant 0 : index
    %c0_75 = arith.constant 0 : index
    %178 = vector.load %arg16[%c0_73, %c0_74, %c0_75] : memref<1x16x32xf32, #tpu.memory_space<vmem>>, vector<1x16x32xf32>
    %179 = vector.shape_cast %178 : vector<1x16x32xf32> to vector<16x32xf32>
    %180 = vector.shape_cast %177 : vector<16x32xf32> to vector<1x16x32xf32>
    tpu.vector_store %arg16[%c0_73, %c0_74, %c0_75], %180 {strides = array<i32>} : memref<1x16x32xf32, #tpu.memory_space<vmem>>, vector<1x16x32xf32>,
    return
  }
  func.func @transform_0(%arg0: i32) -> (i32, i32, i32) {
    %c0_i32 = arith.constant 0 : i32
    %c0_i32_0 = arith.constant 0 : i32
    %c0_i32_1 = arith.constant 0 : i32
    return %arg0, %c0_i32, %c0_i32_0 : i32, i32, i32
  }
  func.func @transform_1(%arg0: i32) -> (i32, i32) {
    %c0_i32 = arith.constant 0 : i32
    %c0_i32_0 = arith.constant 0 : i32
    %c0_i32_1 = arith.constant 0 : i32
    return %c0_i32, %c0_i32_0 : i32, i32
  }
  func.func @transform_2(%arg0: i32) -> (i32, i32) {
    %c0_i32 = arith.constant 0 : i32
    %c0_i32_0 = arith.constant 0 : i32
    %c0_i32_1 = arith.constant 0 : i32
    return %c0_i32, %c0_i32_0 : i32, i32
  }
  func.func @transform_3(%arg0: i32) -> (i32, i32) {
    %c0_i32 = arith.constant 0 : i32
    %c0_i32_0 = arith.constant 0 : i32
    %c0_i32_1 = arith.constant 0 : i32
    return %c0_i32, %c0_i32_0 : i32, i32
  }
  func.func @transform_4(%arg0: i32) -> (i32, i32) {
    %c0_i32 = arith.constant 0 : i32
    %c0_i32_0 = arith.constant 0 : i32
    %c0_i32_1 = arith.constant 0 : i32
    return %c0_i32, %c0_i32_0 : i32, i32
  }
  func.func @transform_5(%arg0: i32) -> (i32, i32) {
    %c0_i32 = arith.constant 0 : i32
    %c0_i32_0 = arith.constant 0 : i32
    %c0_i32_1 = arith.constant 0 : i32
    return %c0_i32, %c0_i32_0 : i32, i32
  }
  func.func @transform_6(%arg0: i32) -> (i32, i32) {
    %c0_i32 = arith.constant 0 : i32
    %c0_i32_0 = arith.constant 0 : i32
    %c0_i32_1 = arith.constant 0 : i32
    return %c0_i32, %c0_i32_0 : i32, i32
  }
  func.func @transform_7(%arg0: i32) -> (i32, i32) {
    %c0_i32 = arith.constant 0 : i32
    %c0_i32_0 = arith.constant 0 : i32
    %c0_i32_1 = arith.constant 0 : i32
    return %c0_i32, %c0_i32_0 : i32, i32
  }
  func.func @transform_8(%arg0: i32) -> (i32, i32) {
    %c0_i32 = arith.constant 0 : i32
    %c0_i32_0 = arith.constant 0 : i32
    %c0_i32_1 = arith.constant 0 : i32
    return %c0_i32, %c0_i32_0 : i32, i32
  }
  func.func @transform_9(%arg0: i32) -> (i32, i32) {
    %c0_i32 = arith.constant 0 : i32
    %c0_i32_0 = arith.constant 0 : i32
    %c0_i32_1 = arith.constant 0 : i32
    return %c0_i32, %c0_i32_0 : i32, i32
  }
  func.func @transform_10(%arg0: i32) -> (i32, i32) {
    %c0_i32 = arith.constant 0 : i32
    %c0_i32_0 = arith.constant 0 : i32
    %c0_i32_1 = arith.constant 0 : i32
    return %c0_i32, %c0_i32_0 : i32, i32
  }
  func.func @transform_11(%arg0: i32) -> (i32, i32) {
    %c0_i32 = arith.constant 0 : i32
    %c0_i32_0 = arith.constant 0 : i32
    %c0_i32_1 = arith.constant 0 : i32
    return %c0_i32, %c0_i32_0 : i32, i32
  }
  func.func @transform_12(%arg0: i32) -> (i32, i32) {
    %c0_i32 = arith.constant 0 : i32
    %c0_i32_0 = arith.constant 0 : i32
    %c0_i32_1 = arith.constant 0 : i32
    return %c0_i32, %c0_i32_0 : i32, i32
  }
  func.func @transform_13(%arg0: i32) -> (i32, i32) {
    %c0_i32 = arith.constant 0 : i32
    %c0_i32_0 = arith.constant 0 : i32
    %c0_i32_1 = arith.constant 0 : i32
    return %c0_i32, %c0_i32_0 : i32, i32
  }
  func.func @transform_14(%arg0: i32) -> (i32, i32) {
    %c0_i32 = arith.constant 0 : i32
    %c0_i32_0 = arith.constant 0 : i32
    %c0_i32_1 = arith.constant 0 : i32
    return %c0_i32, %c0_i32_0 : i32, i32
  }
  func.func @transform_15(%arg0: i32) -> (i32, i32, i32) {
    %c0_i32 = arith.constant 0 : i32
    %c0_i32_0 = arith.constant 0 : i32
    %c0_i32_1 = arith.constant 0 : i32
    return %arg0, %c0_i32, %c0_i32_0 : i32, i32, i32
  }
}

module attributes {stable_mosaic.version = 11 : i64} {
  func.func @_drmok_kernel(%arg0: i32, %arg1: memref<8x16xf32, #tpu.memory_space<vmem>>, %arg2: memref<8x1xf32, #tpu.memory_space<vmem>>, %arg3: memref<8x1xf32, #tpu.memory_space<vmem>>, %arg4: memref<8x1xf32, #tpu.memory_space<vmem>>, %arg5: memref<16x4xf32, #tpu.memory_space<vmem>>, %arg6: memref<1x4xf32, #tpu.memory_space<vmem>>, %arg7: memref<3x16x8xf32, #tpu.memory_space<vmem>>, %arg8: memref<1x8xf32, #tpu.memory_space<vmem>>, %arg9: memref<3x16x8xf32, #tpu.memory_space<vmem>>, %arg10: memref<1x8xf32, #tpu.memory_space<vmem>>, %arg11: memref<8x16xf32, #tpu.memory_space<vmem>>, %arg12: memref<8x16xf32, #tpu.memory_space<vmem>>, %arg13: memref<8x16xf32, #tpu.memory_space<vmem>>, %arg14: memref<8x16xf32, #tpu.memory_space<vmem>>, %arg15: memref<8x16xf32, #tpu.memory_space<vmem>>, %arg16: memref<8x16xf32, #tpu.memory_space<vmem>>, %arg17: memref<8x8xf32, #tpu.memory_space<vmem>>) attributes {dimension_semantics = [#tpu.dimension_semantics<arbitrary>], iteration_bounds = array<i64: 1>, scalar_prefetch = 0 : i64, scratch_operands = 0 : i64, tpu.core_type = #tpu.core_type<tc>, window_params = [{pipeline_mode = #tpu.pipeline_mode<synchronous>, transform_indices = @transform_0, window_bounds = array<i64: 8, 16>}, {pipeline_mode = #tpu.pipeline_mode<synchronous>, transform_indices = @transform_1, window_bounds = array<i64: 8, 1>}, {pipeline_mode = #tpu.pipeline_mode<synchronous>, transform_indices = @transform_2, window_bounds = array<i64: 8, 1>}, {pipeline_mode = #tpu.pipeline_mode<synchronous>, transform_indices = @transform_3, window_bounds = array<i64: 8, 1>}, {pipeline_mode = #tpu.pipeline_mode<synchronous>, transform_indices = @transform_4, window_bounds = array<i64: 16, 4>}, {pipeline_mode = #tpu.pipeline_mode<synchronous>, transform_indices = @transform_5, window_bounds = array<i64: 1, 4>}, {pipeline_mode = #tpu.pipeline_mode<synchronous>, transform_indices = @transform_6, window_bounds = array<i64: 3, 16, 8>}, {pipeline_mode = #tpu.pipeline_mode<synchronous>, transform_indices = @transform_7, window_bounds = array<i64: 1, 8>}, {pipeline_mode = #tpu.pipeline_mode<synchronous>, transform_indices = @transform_8, window_bounds = array<i64: 3, 16, 8>}, {pipeline_mode = #tpu.pipeline_mode<synchronous>, transform_indices = @transform_9, window_bounds = array<i64: 1, 8>}, {pipeline_mode = #tpu.pipeline_mode<synchronous>, transform_indices = @transform_10, window_bounds = array<i64: 8, 16>}, {pipeline_mode = #tpu.pipeline_mode<synchronous>, transform_indices = @transform_11, window_bounds = array<i64: 8, 16>}, {pipeline_mode = #tpu.pipeline_mode<synchronous>, transform_indices = @transform_12, window_bounds = array<i64: 8, 16>}, {pipeline_mode = #tpu.pipeline_mode<synchronous>, transform_indices = @transform_13, window_bounds = array<i64: 8, 16>}, {pipeline_mode = #tpu.pipeline_mode<synchronous>, transform_indices = @transform_14, window_bounds = array<i64: 8, 16>}, {pipeline_mode = #tpu.pipeline_mode<synchronous>, transform_indices = @transform_15, window_bounds = array<i64: 8, 16>}, {pipeline_mode = #tpu.pipeline_mode<synchronous>, transform_indices = @transform_16, window_bounds = array<i64: 8, 8>}]} {
    %c0 = arith.constant 0 : index
    %c0_0 = arith.constant 0 : index
    %0 = vector.load %arg1[%c0, %c0_0] : memref<8x16xf32, #tpu.memory_space<vmem>>, vector<8x16xf32>
    %cst = arith.constant dense<0.000000e+00> : vector<8xf32>
    %1 = vector.multi_reduction <add>, %0, %cst [1] : vector<8x16xf32> to vector<8xf32>
    %2 = vector.shape_cast %1 : vector<8xf32> to vector<8x1xf32>
    %cst_1 = arith.constant 1.600000e+01 : f32
    %3 = vector.broadcast %cst_1 : f32 to vector<8x1xf32>
    %4 = arith.divf %2, %3 : vector<8x1xf32>
    %5 = vector.broadcast %4 : vector<8x1xf32> to vector<8x16xf32>
    %6 = arith.subf %0, %5 : vector<8x16xf32>
    %7 = arith.mulf %6, %6 : vector<8x16xf32>
    %cst_2 = arith.constant dense<0.000000e+00> : vector<8xf32>
    %8 = vector.multi_reduction <add>, %7, %cst_2 [1] : vector<8x16xf32> to vector<8xf32>
    %9 = vector.shape_cast %8 : vector<8xf32> to vector<8x1xf32>
    %cst_3 = arith.constant 1.600000e+01 : f32
    %10 = vector.broadcast %cst_3 : f32 to vector<8x1xf32>
    %11 = arith.divf %9, %10 : vector<8x1xf32>
    %cst_4 = arith.constant 9.99999974E-6 : f32
    %12 = vector.broadcast %cst_4 : f32 to vector<8x1xf32>
    %13 = arith.addf %11, %12 : vector<8x1xf32>
    %14 = math.sqrt %13 : vector<8x1xf32>
    %15 = vector.broadcast %4 : vector<8x1xf32> to vector<8x16xf32>
    %16 = arith.subf %0, %15 : vector<8x16xf32>
    %17 = vector.broadcast %14 : vector<8x1xf32> to vector<8x16xf32>
    %18 = arith.divf %16, %17 : vector<8x16xf32>
    %c0_5 = arith.constant 0 : index
    %c0_6 = arith.constant 0 : index
    %19 = vector.load %arg2[%c0_5, %c0_6] : memref<8x1xf32, #tpu.memory_space<vmem>>, vector<8x1xf32>
    %20 = vector.broadcast %19 : vector<8x1xf32> to vector<8x16xf32>
    %21 = arith.mulf %18, %20 : vector<8x16xf32>
    %c0_7 = arith.constant 0 : index
    %c0_8 = arith.constant 0 : index
    %22 = vector.load %arg3[%c0_7, %c0_8] : memref<8x1xf32, #tpu.memory_space<vmem>>, vector<8x1xf32>
    %23 = vector.broadcast %22 : vector<8x1xf32> to vector<8x16xf32>
    %24 = arith.addf %21, %23 : vector<8x16xf32>
    %c0_9 = arith.constant 0 : index
    %c0_10 = arith.constant 0 : index
    %25 = vector.load %arg5[%c0_9, %c0_10] : memref<16x4xf32, #tpu.memory_space<vmem>>, vector<16x4xf32>
    %cst_11 = arith.constant dense<0.000000e+00> : vector<8x4xf32>
    %26 = tpu.matmul %24, %25, %cst_11 {dimension_numbers = #tpu.dot_dimension_numbers<[1], [0], [0], [1], [0, 0, 1, 1], [], []>} : vector<8x16xf32>, vector<16x4xf32>, vector<8x4xf32> -> vector<8x4xf32>
    %c0_12 = arith.constant 0 : index
    %c0_13 = arith.constant 0 : index
    %27 = vector.load %arg6[%c0_12, %c0_13] : memref<1x4xf32, #tpu.memory_space<vmem>>, vector<1x4xf32>
    %28 = vector.broadcast %27 : vector<1x4xf32> to vector<8x4xf32>
    %29 = arith.addf %26, %28 : vector<8x4xf32>
    %cst_14 = arith.constant dense<0xFF800000> : vector<8xf32>
    %30 = vector.multi_reduction <maximumf>, %29, %cst_14 [1] : vector<8x4xf32> to vector<8xf32>
    %cst_15 = arith.constant 0xFF800000 : f32
    %31 = vector.broadcast %cst_15 : f32 to vector<8xf32>
    %32 = arith.maximumf %31, %30 : vector<8xf32>
    %33 = vector.shape_cast %32 : vector<8xf32> to vector<8x1xf32>
    %34 = vector.broadcast %33 : vector<8x1xf32> to vector<8x4xf32>
    %35 = arith.subf %29, %34 : vector<8x4xf32>
    %36 = math.exp %35 : vector<8x4xf32>
    %cst_16 = arith.constant dense<0.000000e+00> : vector<8xf32>
    %37 = vector.multi_reduction <add>, %36, %cst_16 [1] : vector<8x4xf32> to vector<8xf32>
    %38 = vector.shape_cast %37 : vector<8xf32> to vector<8x1xf32>
    %39 = vector.broadcast %38 : vector<8x1xf32> to vector<8x4xf32>
    %40 = arith.divf %36, %39 : vector<8x4xf32>
    %c0_17 = arith.constant 0 : index
    %c0_18 = arith.constant 0 : index
    %c0_19 = arith.constant 0 : index
    %41 = vector.load %arg7[%c0_17, %c0_18, %c0_19] : memref<3x16x8xf32, #tpu.memory_space<vmem>>, vector<1x16x8xf32>
    %42 = vector.shape_cast %41 : vector<1x16x8xf32> to vector<16x8xf32>
    %cst_20 = arith.constant dense<0.000000e+00> : vector<8xf32>
    %43 = vector.multi_reduction <add>, %42, %cst_20 [0] : vector<16x8xf32> to vector<8xf32>
    %44 = vector.shape_cast %43 : vector<8xf32> to vector<1x8xf32>
    %c1 = arith.constant 1 : index
    %c0_21 = arith.constant 0 : index
    %c0_22 = arith.constant 0 : index
    %45 = vector.load %arg7[%c1, %c0_21, %c0_22] : memref<3x16x8xf32, #tpu.memory_space<vmem>>, vector<1x16x8xf32>
    %46 = vector.shape_cast %45 : vector<1x16x8xf32> to vector<16x8xf32>
    %cst_23 = arith.constant dense<0.000000e+00> : vector<8x8xf32>
    %47 = tpu.matmul %24, %46, %cst_23 {dimension_numbers = #tpu.dot_dimension_numbers<[1], [0], [0], [1], [0, 0, 1, 1], [], []>} : vector<8x16xf32>, vector<16x8xf32>, vector<8x8xf32> -> vector<8x8xf32>
    %48 = vector.broadcast %44 : vector<1x8xf32> to vector<8x8xf32>
    %49 = arith.addf %48, %47 : vector<8x8xf32>
    %50 = arith.mulf %24, %24 : vector<8x16xf32>
    %c2 = arith.constant 2 : index
    %c0_24 = arith.constant 0 : index
    %c0_25 = arith.constant 0 : index
    %51 = vector.load %arg7[%c2, %c0_24, %c0_25] : memref<3x16x8xf32, #tpu.memory_space<vmem>>, vector<1x16x8xf32>
    %52 = vector.shape_cast %51 : vector<1x16x8xf32> to vector<16x8xf32>
    %cst_26 = arith.constant dense<0.000000e+00> : vector<8x8xf32>
    %53 = tpu.matmul %50, %52, %cst_26 {dimension_numbers = #tpu.dot_dimension_numbers<[1], [0], [0], [1], [0, 0, 1, 1], [], []>} : vector<8x16xf32>, vector<16x8xf32>, vector<8x8xf32> -> vector<8x8xf32>
    %54 = arith.addf %49, %53 : vector<8x8xf32>
    %c0_27 = arith.constant 0 : index
    %c0_28 = arith.constant 0 : index
    %55 = vector.load %arg8[%c0_27, %c0_28] : memref<1x8xf32, #tpu.memory_space<vmem>>, vector<1x8xf32>
    %56 = vector.broadcast %55 : vector<1x8xf32> to vector<8x8xf32>
    %57 = arith.addf %54, %56 : vector<8x8xf32>
    %c0_29 = arith.constant 0 : index
    %c0_30 = arith.constant 0 : index
    %c0_31 = arith.constant 0 : index
    %58 = vector.load %arg9[%c0_29, %c0_30, %c0_31] : memref<3x16x8xf32, #tpu.memory_space<vmem>>, vector<1x16x8xf32>
    %59 = vector.shape_cast %58 : vector<1x16x8xf32> to vector<16x8xf32>
    %cst_32 = arith.constant dense<0.000000e+00> : vector<8xf32>
    %60 = vector.multi_reduction <add>, %59, %cst_32 [0] : vector<16x8xf32> to vector<8xf32>
    %61 = vector.shape_cast %60 : vector<8xf32> to vector<1x8xf32>
    %c1_33 = arith.constant 1 : index
    %c0_34 = arith.constant 0 : index
    %c0_35 = arith.constant 0 : index
    %62 = vector.load %arg9[%c1_33, %c0_34, %c0_35] : memref<3x16x8xf32, #tpu.memory_space<vmem>>, vector<1x16x8xf32>
    %63 = vector.shape_cast %62 : vector<1x16x8xf32> to vector<16x8xf32>
    %cst_36 = arith.constant dense<0.000000e+00> : vector<8x8xf32>
    %64 = tpu.matmul %24, %63, %cst_36 {dimension_numbers = #tpu.dot_dimension_numbers<[1], [0], [0], [1], [0, 0, 1, 1], [], []>} : vector<8x16xf32>, vector<16x8xf32>, vector<8x8xf32> -> vector<8x8xf32>
    %65 = vector.broadcast %61 : vector<1x8xf32> to vector<8x8xf32>
    %66 = arith.addf %65, %64 : vector<8x8xf32>
    %67 = arith.mulf %24, %24 : vector<8x16xf32>
    %c2_37 = arith.constant 2 : index
    %c0_38 = arith.constant 0 : index
    %c0_39 = arith.constant 0 : index
    %68 = vector.load %arg9[%c2_37, %c0_38, %c0_39] : memref<3x16x8xf32, #tpu.memory_space<vmem>>, vector<1x16x8xf32>
    %69 = vector.shape_cast %68 : vector<1x16x8xf32> to vector<16x8xf32>
    %cst_40 = arith.constant dense<0.000000e+00> : vector<8x8xf32>
    %70 = tpu.matmul %67, %69, %cst_40 {dimension_numbers = #tpu.dot_dimension_numbers<[1], [0], [0], [1], [0, 0, 1, 1], [], []>} : vector<8x16xf32>, vector<16x8xf32>, vector<8x8xf32> -> vector<8x8xf32>
    %71 = arith.addf %66, %70 : vector<8x8xf32>
    %c0_41 = arith.constant 0 : index
    %c0_42 = arith.constant 0 : index
    %72 = vector.load %arg10[%c0_41, %c0_42] : memref<1x8xf32, #tpu.memory_space<vmem>>, vector<1x8xf32>
    %73 = vector.broadcast %72 : vector<1x8xf32> to vector<8x8xf32>
    %74 = arith.addf %71, %73 : vector<8x8xf32>
    %75 = vector.shape_cast %24 : vector<8x16xf32> to vector<8x1x16xf32>
    %c0_43 = arith.constant 0 : index
    %c0_44 = arith.constant 0 : index
    %76 = vector.load %arg12[%c0_43, %c0_44] : memref<8x16xf32, #tpu.memory_space<vmem>>, vector<8x16xf32>
    %77 = vector.shape_cast %76 : vector<8x16xf32> to vector<1x8x16xf32>
    %78 = vector.broadcast %75 : vector<8x1x16xf32> to vector<8x8x16xf32>
    %79 = vector.broadcast %77 : vector<1x8x16xf32> to vector<8x8x16xf32>
    %80 = arith.subf %78, %79 : vector<8x8x16xf32>
    %c0_45 = arith.constant 0 : index
    %c0_46 = arith.constant 0 : index
    %81 = vector.load %arg11[%c0_45, %c0_46] : memref<8x16xf32, #tpu.memory_space<vmem>>, vector<8x16xf32>
    %82 = vector.shape_cast %81 : vector<8x16xf32> to vector<1x8x16xf32>
    %83 = vector.broadcast %82 : vector<1x8x16xf32> to vector<8x8x16xf32>
    %84 = arith.divf %80, %83 : vector<8x8x16xf32>
    %85 = arith.mulf %84, %84 : vector<8x8x16xf32>
    %cst_47 = arith.constant 1.000000e+00 : f32
    %86 = vector.broadcast %cst_47 : f32 to vector<8x8x16xf32>
    %87 = arith.subf %85, %86 : vector<8x8x16xf32>
    %cst_48 = arith.constant 0.867325068 : f32
    %88 = vector.broadcast %cst_48 : f32 to vector<8x8x16xf32>
    %89 = arith.mulf %88, %87 : vector<8x8x16xf32>
    %cst_49 = arith.constant -5.000000e-01 : f32
    %90 = vector.broadcast %cst_49 : f32 to vector<8x8x16xf32>
    %91 = arith.mulf %90, %84 : vector<8x8x16xf32>
    %92 = arith.mulf %91, %84 : vector<8x8x16xf32>
    %93 = math.exp %92 : vector<8x8x16xf32>
    %94 = arith.mulf %89, %93 : vector<8x8x16xf32>
    %c0_50 = arith.constant 0 : index
    %c0_51 = arith.constant 0 : index
    %95 = vector.load %arg13[%c0_50, %c0_51] : memref<8x16xf32, #tpu.memory_space<vmem>>, vector<8x16xf32>
    %96 = vector.shape_cast %95 : vector<8x16xf32> to vector<1x8x16xf32>
    %97 = vector.broadcast %96 : vector<1x8x16xf32> to vector<8x8x16xf32>
    %98 = arith.mulf %94, %97 : vector<8x8x16xf32>
    %cst_52 = arith.constant dense<0.000000e+00> : vector<8x8xf32>
    %99 = vector.multi_reduction <add>, %98, %cst_52 [2] : vector<8x8x16xf32> to vector<8x8xf32>
    %cst_53 = arith.constant 0.999994993 : f32
    %100 = vector.broadcast %cst_53 : f32 to vector<8x8xf32>
    %101 = arith.mulf %99, %100 : vector<8x8xf32>
    %102 = vector.shape_cast %24 : vector<8x16xf32> to vector<8x1x16xf32>
    %c0_54 = arith.constant 0 : index
    %c0_55 = arith.constant 0 : index
    %103 = vector.load %arg15[%c0_54, %c0_55] : memref<8x16xf32, #tpu.memory_space<vmem>>, vector<8x16xf32>
    %104 = vector.shape_cast %103 : vector<8x16xf32> to vector<1x8x16xf32>
    %105 = vector.broadcast %102 : vector<8x1x16xf32> to vector<8x8x16xf32>
    %106 = vector.broadcast %104 : vector<1x8x16xf32> to vector<8x8x16xf32>
    %107 = arith.subf %105, %106 : vector<8x8x16xf32>
    %c0_56 = arith.constant 0 : index
    %c0_57 = arith.constant 0 : index
    %108 = vector.load %arg14[%c0_56, %c0_57] : memref<8x16xf32, #tpu.memory_space<vmem>>, vector<8x16xf32>
    %109 = vector.shape_cast %108 : vector<8x16xf32> to vector<1x8x16xf32>
    %110 = vector.broadcast %109 : vector<1x8x16xf32> to vector<8x8x16xf32>
    %111 = arith.divf %107, %110 : vector<8x8x16xf32>
    %112 = arith.mulf %111, %111 : vector<8x8x16xf32>
    %cst_58 = arith.constant 1.000000e+00 : f32
    %113 = vector.broadcast %cst_58 : f32 to vector<8x8x16xf32>
    %114 = arith.subf %112, %113 : vector<8x8x16xf32>
    %cst_59 = arith.constant 0.867325068 : f32
    %115 = vector.broadcast %cst_59 : f32 to vector<8x8x16xf32>
    %116 = arith.mulf %115, %114 : vector<8x8x16xf32>
    %cst_60 = arith.constant -5.000000e-01 : f32
    %117 = vector.broadcast %cst_60 : f32 to vector<8x8x16xf32>
    %118 = arith.mulf %117, %111 : vector<8x8x16xf32>
    %119 = arith.mulf %118, %111 : vector<8x8x16xf32>
    %120 = math.exp %119 : vector<8x8x16xf32>
    %121 = arith.mulf %116, %120 : vector<8x8x16xf32>
    %c0_61 = arith.constant 0 : index
    %c0_62 = arith.constant 0 : index
    %122 = vector.load %arg16[%c0_61, %c0_62] : memref<8x16xf32, #tpu.memory_space<vmem>>, vector<8x16xf32>
    %123 = vector.shape_cast %122 : vector<8x16xf32> to vector<1x8x16xf32>
    %124 = vector.broadcast %123 : vector<1x8x16xf32> to vector<8x8x16xf32>
    %125 = arith.mulf %121, %124 : vector<8x8x16xf32>
    %cst_63 = arith.constant dense<0.000000e+00> : vector<8x8xf32>
    %126 = vector.multi_reduction <add>, %125, %cst_63 [2] : vector<8x8x16xf32> to vector<8x8xf32>
    %cst_64 = arith.constant 0.999994993 : f32
    %127 = vector.broadcast %cst_64 : f32 to vector<8x8xf32>
    %128 = arith.mulf %126, %127 : vector<8x8xf32>
    %129 = vector.extract_strided_slice %40 {offsets = [0, 0], sizes = [8, 1], strides = [1, 1]} : vector<8x4xf32> to vector<8x1xf32>
    %130 = vector.broadcast %129 : vector<8x1xf32> to vector<8x8xf32>
    %131 = arith.mulf %57, %130 : vector<8x8xf32>
    %132 = vector.extract_strided_slice %40 {offsets = [0, 1], sizes = [8, 1], strides = [1, 1]} : vector<8x4xf32> to vector<8x1xf32>
    %133 = vector.broadcast %132 : vector<8x1xf32> to vector<8x8xf32>
    %134 = arith.mulf %74, %133 : vector<8x8xf32>
    %135 = arith.addf %131, %134 : vector<8x8xf32>
    %136 = vector.extract_strided_slice %40 {offsets = [0, 2], sizes = [8, 1], strides = [1, 1]} : vector<8x4xf32> to vector<8x1xf32>
    %137 = vector.broadcast %136 : vector<8x1xf32> to vector<8x8xf32>
    %138 = arith.mulf %101, %137 : vector<8x8xf32>
    %139 = arith.addf %135, %138 : vector<8x8xf32>
    %140 = vector.extract_strided_slice %40 {offsets = [0, 3], sizes = [8, 1], strides = [1, 1]} : vector<8x4xf32> to vector<8x1xf32>
    %141 = vector.broadcast %140 : vector<8x1xf32> to vector<8x8xf32>
    %142 = arith.mulf %128, %141 : vector<8x8xf32>
    %143 = arith.addf %139, %142 : vector<8x8xf32>
    %c0_65 = arith.constant 0 : index
    %c0_66 = arith.constant 0 : index
    %144 = vector.load %arg3[%c0_65, %c0_66] : memref<8x1xf32, #tpu.memory_space<vmem>>, vector<8x1xf32>
    %145 = vector.broadcast %144 : vector<8x1xf32> to vector<8x8xf32>
    %146 = arith.subf %143, %145 : vector<8x8xf32>
    %c0_67 = arith.constant 0 : index
    %c0_68 = arith.constant 0 : index
    %147 = vector.load %arg4[%c0_67, %c0_68] : memref<8x1xf32, #tpu.memory_space<vmem>>, vector<8x1xf32>
    %148 = vector.broadcast %147 : vector<8x1xf32> to vector<8x8xf32>
    %149 = arith.mulf %146, %148 : vector<8x8xf32>
    %150 = vector.broadcast %14 : vector<8x1xf32> to vector<8x8xf32>
    %151 = arith.mulf %149, %150 : vector<8x8xf32>
    %152 = vector.broadcast %4 : vector<8x1xf32> to vector<8x8xf32>
    %153 = arith.addf %151, %152 : vector<8x8xf32>
    %c0_69 = arith.constant 0 : index
    %c0_70 = arith.constant 0 : index
    %154 = vector.load %arg17[%c0_69, %c0_70] : memref<8x8xf32, #tpu.memory_space<vmem>>, vector<8x8xf32>
    tpu.vector_store %arg17[%c0_69, %c0_70], %153 {strides = array<i32>} : memref<8x8xf32, #tpu.memory_space<vmem>>, vector<8x8xf32>,
    return
  }
  func.func @transform_0(%arg0: i32) -> (i32, i32) {
    %c0_i32 = arith.constant 0 : i32
    %c0_i32_0 = arith.constant 0 : i32
    %c0_i32_1 = arith.constant 0 : i32
    return %c0_i32, %c0_i32_0 : i32, i32
  }
  func.func @transform_1(%arg0: i32) -> (i32, i32) {
    %c0_i32 = arith.constant 0 : i32
    %c0_i32_0 = arith.constant 0 : i32
    %c0_i32_1 = arith.constant 0 : i32
    return %c0_i32, %c0_i32_0 : i32, i32
  }
  func.func @transform_2(%arg0: i32) -> (i32, i32) {
    %c0_i32 = arith.constant 0 : i32
    %c0_i32_0 = arith.constant 0 : i32
    %c0_i32_1 = arith.constant 0 : i32
    return %c0_i32, %c0_i32_0 : i32, i32
  }
  func.func @transform_3(%arg0: i32) -> (i32, i32) {
    %c0_i32 = arith.constant 0 : i32
    %c0_i32_0 = arith.constant 0 : i32
    %c0_i32_1 = arith.constant 0 : i32
    return %c0_i32, %c0_i32_0 : i32, i32
  }
  func.func @transform_4(%arg0: i32) -> (i32, i32) {
    %c0_i32 = arith.constant 0 : i32
    %c0_i32_0 = arith.constant 0 : i32
    %c0_i32_1 = arith.constant 0 : i32
    return %c0_i32, %c0_i32_0 : i32, i32
  }
  func.func @transform_5(%arg0: i32) -> (i32, i32) {
    %c0_i32 = arith.constant 0 : i32
    %c0_i32_0 = arith.constant 0 : i32
    %c0_i32_1 = arith.constant 0 : i32
    return %c0_i32, %c0_i32_0 : i32, i32
  }
  func.func @transform_6(%arg0: i32) -> (i32, i32, i32) {
    %c0_i32 = arith.constant 0 : i32
    %c0_i32_0 = arith.constant 0 : i32
    %c0_i32_1 = arith.constant 0 : i32
    %c0_i32_2 = arith.constant 0 : i32
    return %c0_i32, %c0_i32_0, %c0_i32_1 : i32, i32, i32
  }
  func.func @transform_7(%arg0: i32) -> (i32, i32) {
    %c0_i32 = arith.constant 0 : i32
    %c0_i32_0 = arith.constant 0 : i32
    %c0_i32_1 = arith.constant 0 : i32
    return %c0_i32, %c0_i32_0 : i32, i32
  }
  func.func @transform_8(%arg0: i32) -> (i32, i32, i32) {
    %c0_i32 = arith.constant 0 : i32
    %c0_i32_0 = arith.constant 0 : i32
    %c0_i32_1 = arith.constant 0 : i32
    %c0_i32_2 = arith.constant 0 : i32
    return %c0_i32, %c0_i32_0, %c0_i32_1 : i32, i32, i32
  }
  func.func @transform_9(%arg0: i32) -> (i32, i32) {
    %c0_i32 = arith.constant 0 : i32
    %c0_i32_0 = arith.constant 0 : i32
    %c0_i32_1 = arith.constant 0 : i32
    return %c0_i32, %c0_i32_0 : i32, i32
  }
  func.func @transform_10(%arg0: i32) -> (i32, i32) {
    %c0_i32 = arith.constant 0 : i32
    %c0_i32_0 = arith.constant 0 : i32
    %c0_i32_1 = arith.constant 0 : i32
    return %c0_i32, %c0_i32_0 : i32, i32
  }
  func.func @transform_11(%arg0: i32) -> (i32, i32) {
    %c0_i32 = arith.constant 0 : i32
    %c0_i32_0 = arith.constant 0 : i32
    %c0_i32_1 = arith.constant 0 : i32
    return %c0_i32, %c0_i32_0 : i32, i32
  }
  func.func @transform_12(%arg0: i32) -> (i32, i32) {
    %c0_i32 = arith.constant 0 : i32
    %c0_i32_0 = arith.constant 0 : i32
    %c0_i32_1 = arith.constant 0 : i32
    return %c0_i32, %c0_i32_0 : i32, i32
  }
  func.func @transform_13(%arg0: i32) -> (i32, i32) {
    %c0_i32 = arith.constant 0 : i32
    %c0_i32_0 = arith.constant 0 : i32
    %c0_i32_1 = arith.constant 0 : i32
    return %c0_i32, %c0_i32_0 : i32, i32
  }
  func.func @transform_14(%arg0: i32) -> (i32, i32) {
    %c0_i32 = arith.constant 0 : i32
    %c0_i32_0 = arith.constant 0 : i32
    %c0_i32_1 = arith.constant 0 : i32
    return %c0_i32, %c0_i32_0 : i32, i32
  }
  func.func @transform_15(%arg0: i32) -> (i32, i32) {
    %c0_i32 = arith.constant 0 : i32
    %c0_i32_0 = arith.constant 0 : i32
    %c0_i32_1 = arith.constant 0 : i32
    return %c0_i32, %c0_i32_0 : i32, i32
  }
  func.func @transform_16(%arg0: i32) -> (i32, i32) {
    %c0_i32 = arith.constant 0 : i32
    %c0_i32_0 = arith.constant 0 : i32
    %c0_i32_1 = arith.constant 0 : i32
    return %c0_i32, %c0_i32_0 : i32, i32
  }
}

module attributes {stable_mosaic.version = 11 : i64} {
  func.func @_tail_kernel(%arg0: i32, %arg1: memref<1x16x32xf32, #tpu.memory_space<vmem>>, %arg2: memref<32x4xf32, #tpu.memory_space<vmem>>, %arg3: memref<1x4xf32, #tpu.memory_space<vmem>>, %arg4: memref<1x8x4xf32, #tpu.memory_space<vmem>>, %arg5: memref<1x8x4xf32, #tpu.memory_space<vmem>>) attributes {dimension_semantics = [#tpu.dimension_semantics<parallel>], iteration_bounds = array<i64: 2>, scalar_prefetch = 0 : i64, scratch_operands = 0 : i64, tpu.core_type = #tpu.core_type<tc>, window_params = [{transform_indices = @transform_0, window_bounds = array<i64: 1, 16, 32>}, {pipeline_mode = #tpu.pipeline_mode<synchronous>, transform_indices = @transform_1, window_bounds = array<i64: 32, 4>}, {pipeline_mode = #tpu.pipeline_mode<synchronous>, transform_indices = @transform_2, window_bounds = array<i64: 1, 4>}, {transform_indices = @transform_3, window_bounds = array<i64: 1, 8, 4>}, {transform_indices = @transform_4, window_bounds = array<i64: 1, 8, 4>}]} {
    %c0 = arith.constant 0 : index
    %c0_0 = arith.constant 0 : index
    %c0_1 = arith.constant 0 : index
    %0 = vector.load %arg1[%c0, %c0_0, %c0_1] : memref<1x16x32xf32, #tpu.memory_space<vmem>>, vector<1x16x32xf32>
    %1 = vector.shape_cast %0 : vector<1x16x32xf32> to vector<16x32xf32>
    %2 = vector.extract_strided_slice %1 {offsets = [8, 0], sizes = [8, 32], strides = [1, 1]} : vector<16x32xf32> to vector<8x32xf32>
    %c0_2 = arith.constant 0 : index
    %c0_3 = arith.constant 0 : index
    %3 = vector.load %arg2[%c0_2, %c0_3] : memref<32x4xf32, #tpu.memory_space<vmem>>, vector<32x4xf32>
    %cst = arith.constant dense<0.000000e+00> : vector<8x4xf32>
    %4 = tpu.matmul %2, %3, %cst {dimension_numbers = #tpu.dot_dimension_numbers<[1], [0], [0], [1], [0, 0, 1, 1], [], []>} : vector<8x32xf32>, vector<32x4xf32>, vector<8x4xf32> -> vector<8x4xf32>
    %c0_4 = arith.constant 0 : index
    %c0_5 = arith.constant 0 : index
    %5 = vector.load %arg3[%c0_4, %c0_5] : memref<1x4xf32, #tpu.memory_space<vmem>>, vector<1x4xf32>
    %6 = vector.broadcast %5 : vector<1x4xf32> to vector<8x4xf32>
    %7 = arith.addf %4, %6 : vector<8x4xf32>
    %c0_6 = arith.constant 0 : index
    %c0_7 = arith.constant 0 : index
    %c0_8 = arith.constant 0 : index
    %8 = vector.load %arg4[%c0_6, %c0_7, %c0_8] : memref<1x8x4xf32, #tpu.memory_space<vmem>>, vector<1x8x4xf32>
    %9 = vector.shape_cast %8 : vector<1x8x4xf32> to vector<8x4xf32>
    %10 = arith.addf %7, %9 : vector<8x4xf32>
    %c0_9 = arith.constant 0 : index
    %c0_10 = arith.constant 0 : index
    %c0_11 = arith.constant 0 : index
    %11 = vector.load %arg5[%c0_9, %c0_10, %c0_11] : memref<1x8x4xf32, #tpu.memory_space<vmem>>, vector<1x8x4xf32>
    %12 = vector.shape_cast %11 : vector<1x8x4xf32> to vector<8x4xf32>
    %13 = vector.shape_cast %10 : vector<8x4xf32> to vector<1x8x4xf32>
    tpu.vector_store %arg5[%c0_9, %c0_10, %c0_11], %13 {strides = array<i32>} : memref<1x8x4xf32, #tpu.memory_space<vmem>>, vector<1x8x4xf32>,
    return
  }
  func.func @transform_0(%arg0: i32) -> (i32, i32, i32) {
    %c0_i32 = arith.constant 0 : i32
    %c0_i32_0 = arith.constant 0 : i32
    %c0_i32_1 = arith.constant 0 : i32
    return %arg0, %c0_i32, %c0_i32_0 : i32, i32, i32
  }
  func.func @transform_1(%arg0: i32) -> (i32, i32) {
    %c0_i32 = arith.constant 0 : i32
    %c0_i32_0 = arith.constant 0 : i32
    %c0_i32_1 = arith.constant 0 : i32
    return %c0_i32, %c0_i32_0 : i32, i32
  }
  func.func @transform_2(%arg0: i32) -> (i32, i32) {
    %c0_i32 = arith.constant 0 : i32
    %c0_i32_0 = arith.constant 0 : i32
    %c0_i32_1 = arith.constant 0 : i32
    return %c0_i32, %c0_i32_0 : i32, i32
  }
  func.func @transform_3(%arg0: i32) -> (i32, i32, i32) {
    %c0_i32 = arith.constant 0 : i32
    %c0_i32_0 = arith.constant 0 : i32
    %c0_i32_1 = arith.constant 0 : i32
    return %arg0, %c0_i32, %c0_i32_0 : i32, i32, i32
  }
  func.func @transform_4(%arg0: i32) -> (i32, i32, i32) {
    %c0_i32 = arith.constant 0 : i32
    %c0_i32_0 = arith.constant 0 : i32
    %c0_i32_1 = arith.constant 0 : i32
    return %arg0, %c0_i32, %c0_i32_0 : i32, i32, i32
  }
}

</mosaic_0001>

<llo_original>
// kernel: model_forward.6
$region0: #{model_forward.6}
  #allocation0 [shape = 'u32[]', space=smem, size = 0x4, offset = 0x4, fixed_abs, tag = 'smem constant byte address 0x4 - core index']
  #allocation1 [shape = 'u32[72,128]{1,0:T(1,128)}', space=vmem, size = 0x9000, scoped, tag = 'internal scratch']
  %s0 = inlined_call_operand.vmem [shape: f32[32,12], index: 0, kind: input, shape index: {}]
  %s1 = inlined_call_operand.vmem [shape: f32[32,4], index: 1, kind: input, shape index: {}]
  %s2 = inlined_call_operand.vmem [shape: f32[32,32], index: 2, kind: input, shape index: {}]
  %s3 = inlined_call_operand.vmem [shape: f32[12,32], index: 3, kind: input, shape index: {}]
  %s4 = inlined_call_operand.vmem [shape: f32[4,32], index: 4, kind: input, shape index: {}]
  %s5 = inlined_call_operand.vmem [shape: f32[32,32], index: 5, kind: output, shape index: {}]
  %s6 = sld [smem:[#allocation0]]
  $region30: #{model_forward.6} parent=0
    _
  %s8 = ssub.s32 1, %s6
  %s9 = scalar_select 0, %s8, %s6
  // Predicated region
  $region2: #{model_forward.6} parent=0 // pred_check
    _
  $region3: #{model_forward.6} parent=0 // pred_check_branch
    %11 = sbr.rel (0) target = $region5
  $region4: #{model_forward.6} parent=0 // pred_region
    _
  $region5: #{model_forward.6} parent=0 // pred_fallthru
    _
  // Predicated region
  $region6: #{model_forward.6} parent=0 // pred_check
    _
  $region7: #{model_forward.6} parent=0 // pred_check_branch
    %13 = sbr.rel (0) target = $region9
  $region8: #{model_forward.6} parent=0 // pred_region
    _
  $region9: #{model_forward.6} parent=0 // pred_fallthru
    _
  // Predicated region
  $region10: #{model_forward.6} parent=0 // pred_check
    _
  $region11: #{model_forward.6} parent=0 // pred_check_branch
    %15 = sbr.rel (0) target = $region13
  $region12: #{model_forward.6} parent=0 // pred_region
    _
  $region13: #{model_forward.6} parent=0 // pred_fallthru
    _
  // Predicated region
  $region14: #{model_forward.6} parent=0 // pred_check
    _
  $region15: #{model_forward.6} parent=0 // pred_check_branch
    %17 = sbr.rel (0) target = $region17
  $region16: #{model_forward.6} parent=0 // pred_region
    _
  $region17: #{model_forward.6} parent=0 // pred_fallthru
    _
  // Predicated region
  $region18: #{model_forward.6} parent=0 // pred_check
    _
  $region19: #{model_forward.6} parent=0 // pred_check_branch
    %19 = sbr.rel (0) target = $region21
  $region20: #{model_forward.6} parent=0 // pred_region
    _
  $region21: #{model_forward.6} parent=0 // pred_fallthru
    _
  %v20 = vld [vmem:[%s0] sm:$0xff]
  %v21 = vld [vmem:[%s0 + $0x8] sm:$0xff]
  %v22 = vld [vmem:[%s0 + $0x10] sm:$0xff]
  %v23 = vld [vmem:[%s0 + $0x18] sm:$0xff]
  %v24 = vld [vmem:[%s3] sm:$0xff]
  %v25 = vld [vmem:[%s3 + $0x8] sm:$0xf]
  %v26 = vld [vmem:[%s1] sm:$0xff]
  %v27 = vld [vmem:[%s1 + $0x8] sm:$0xff]
  %v28 = vld [vmem:[%s1 + $0x10] sm:$0xff]
  %v29 = vld [vmem:[%s1 + $0x18] sm:$0xff]
  %v30 = vld [vmem:[%s4] sm:$0xf]
  %vm31 = vcmask 31744
  %v33 = vsel %vm31, %v26, 0
  %v36 = vsel %vm31, %v27, 0
  %v39 = vsel %vm31, %v28, 0
  %v42 = vsel %vm31, %v29, 0
  %vm44 = vcmask 1043456
  %v46 = vsel %vm44, %v30, 0
  %48 = vmatpush.msra.mxu0 0.0
  %49 = vmatpush.msra.mxu0 0.0
  %50 = vmatpush.msra.mxu0 0.0
  %51 = vmatpush.msra.mxu0 0.0
  %52 = vmatpush.msra.mxu0 0.0
  %53 = vmatpush.msra.mxu0 0.0
  %54 = vmatpush.msra.mxu0 0.0
  %55 = vmatpush.msra.mxu0 0.0
  %56 = vmatpush.msra.mxu0 0.0
  %57 = vmatpush.msra.mxu0 0.0
  %58 = vmatpush.msra.mxu0 0.0
  %59 = vmatpush.msra.mxu0 0.0
  %60 = vmatpush.msra.mxu0 0.0
  %61 = vmatpush.msra.mxu0 0.0
  %62 = vmatpush.msra.mxu0 0.0
  %63 = vmatpush.msra.mxu0 %v46
  %64 = vmatmul.f32.gmra.mxu0 %v33
  %v65 = vpop.f32.mrf.mxu0
  %v66 = vadd.f32 0.0, %v65
  %67 = vmatmul.f32.gmra.mxu0 %v36
  %v68 = vpop.f32.mrf.mxu0
  %v69 = vadd.f32 0.0, %v68
  %70 = vmatmul.f32.gmra.mxu0 %v39
  %v71 = vpop.f32.mrf.mxu0
  %v72 = vadd.f32 0.0, %v71
  %73 = vmatmul.f32.gmra.mxu0 %v42
  %v74 = vpop.f32.mrf.mxu0
  %v75 = vadd.f32 0.0, %v74
  %76 = vdwg.mxu0
  %vm77 = vcmask 97280
  %v79 = vsel %vm77, %v20, 0
  %v82 = vsel %vm77, %v21, 0
  %v85 = vsel %vm77, %v22, 0
  %v88 = vsel %vm77, %v23, 0
  %v91 = vsel %vm44, %v25, 0
  %93 = vmatpush.msra.mxu0 0.0
  %94 = vmatpush.msra.mxu0 0.0
  %95 = vmatpush.msra.mxu0 0.0
  %96 = vmatpush.msra.mxu0 0.0
  %97 = vmatpush.msra.mxu0 0.0
  %98 = vmatpush.msra.mxu0 0.0
  %99 = vmatpush.msra.mxu0 0.0
  %100 = vmatpush.msra.mxu0 0.0
  %101 = vmatpush.msra.mxu0 0.0
  %102 = vmatpush.msra.mxu0 0.0
  %103 = vmatpush.msra.mxu0 0.0
  %104 = vmatpush.msra.mxu0 0.0
  %105 = vmatpush.msra.mxu0 0.0
  %106 = vmatpush.msra.mxu0 0.0
  %107 = vmatpush.msra.mxu0 %v91
  %108 = vmatpush.msra.mxu0 %v24
  %109 = vmatmul.f32.gmra.mxu0 %v79
  %v110 = vpop.f32.mrf.mxu0
  %v111 = vadd.f32 %v66, %v110
  %112 = vmatmul.f32.gmra.mxu0 %v82
  %v113 = vpop.f32.mrf.mxu0
  %v114 = vadd.f32 %v69, %v113
  %115 = vmatmul.f32.gmra.mxu0 %v85
  %v116 = vpop.f32.mrf.mxu0
  %v117 = vadd.f32 %v72, %v116
  %118 = vmatmul.f32.gmra.mxu0 %v88
  %v119 = vpop.f32.mrf.mxu0
  %v120 = vadd.f32 %v75, %v119
  %121 = vdwg.mxu0
  %v122 = vld [vmem:[%s2] sm:$0xff]
  %v123 = vld [vmem:[%s2 + $0x8] sm:$0xff]
  %v124 = vld [vmem:[%s2 + $0x10] sm:$0xff]
  %v125 = vld [vmem:[%s2 + $0x18] sm:$0xff]
  %v126 = vadd.f32 %v111, %v122
  %v127 = vadd.f32 %v114, %v123
  %v128 = vadd.f32 %v117, %v124
  %v129 = vadd.f32 %v120, %v125
  %vm130 = vcmask 261120
  %131 = vst.msk [vmem:[%s5] sm:$0xff] %vm130, %v126
  %132 = vst.msk [vmem:[%s5 + $0x8] sm:$0xff] %vm130, %v127
  %133 = vst.msk [vmem:[%s5 + $0x10] sm:$0xff] %vm130, %v128
  %134 = vst.msk [vmem:[%s5 + $0x18] sm:$0xff] %vm130, %v129
  // Predicated region
  $region22: #{model_forward.6} parent=0 // pred_check
    _
  $region23: #{model_forward.6} parent=0 // pred_check_branch
    %136 = sbr.rel (0) target = $region25
  $region24: #{model_forward.6} parent=0 // pred_region
    _
  $region25: #{model_forward.6} parent=0 // pred_fallthru
    _
  // Predicated region
  $region26: #{model_forward.6} parent=0 // pred_check
    _
  $region27: #{model_forward.6} parent=0 // pred_check_branch
    %138 = sbr.rel (0) target = $region29
  $region28: #{model_forward.6} parent=0 // pred_region
    _
  $region29: #{model_forward.6} parent=0 // pred_fallthru
    _

// kernel: model_forward.8
$region0: #{model_forward.8}
  #allocation0 [shape = 'u32[]', space=smem, size = 0x4, offset = 0x4, fixed_abs, tag = 'smem constant byte address 0x4 - core index']
  #allocation1 [shape = 'u32[72,128]{1,0:T(1,128)}', space=vmem, size = 0x9000, scoped, tag = 'internal scratch']
  %s0 = inlined_call_operand.vmem [shape: f32[2,16,32], index: 0, kind: input, shape index: {}]
  %s1 = inlined_call_operand.vmem [shape: f32[32,96], index: 1, kind: input, shape index: {}]
  %s2 = inlined_call_operand.vmem [shape: f32[1,96], index: 2, kind: input, shape index: {}]
  %s3 = inlined_call_operand.vmem [shape: f32[32,32], index: 3, kind: input, shape index: {}]
  %s4 = inlined_call_operand.vmem [shape: f32[1,32], index: 4, kind: input, shape index: {}]
  %s5 = inlined_call_operand.vmem [shape: f32[1,32], index: 5, kind: input, shape index: {}]
  %s6 = inlined_call_operand.vmem [shape: f32[1,32], index: 6, kind: input, shape index: {}]
  %s7 = inlined_call_operand.vmem [shape: f32[32,64], index: 7, kind: input, shape index: {}]
  %s8 = inlined_call_operand.vmem [shape: f32[1,64], index: 8, kind: input, shape index: {}]
  %s9 = inlined_call_operand.vmem [shape: f32[64,32], index: 9, kind: input, shape index: {}]
  %s10 = inlined_call_operand.vmem [shape: f32[1,32], index: 10, kind: input, shape index: {}]
  %s11 = inlined_call_operand.vmem [shape: f32[1,32], index: 11, kind: input, shape index: {}]
  %s12 = inlined_call_operand.vmem [shape: f32[1,32], index: 12, kind: input, shape index: {}]
  %s13 = inlined_call_operand.vmem [shape: f32[1,32], index: 13, kind: input, shape index: {}]
  %s14 = inlined_call_operand.vmem [shape: f32[1,32], index: 14, kind: input, shape index: {}]
  %s15 = inlined_call_operand.vmem [shape: f32[2,16,32], index: 15, kind: output, shape index: {}]
  %s16 = sld [smem:[#allocation0]]
  $region93: #{model_forward.8} parent=0
    _
  %s18 = ssub.s32 1, %s16
  %s19 = scalar_select 0, %s18, %s16
  loop: start=0, step=1, limit=4
  $region2: #{model_forward.8} parent=0 // loop_pre_header
    _
  $region3: #{model_forward.8} parent=0 // loop_header
    %s21 = sphi 0, %s25
    %p22 = scmp.ge.s32.totalorder %s21, 4
    %s31 = sphi 0, %s33
    %s34 = sphi 0, %s31
    %s35 = sphi 0, %s34
    %s51 = sphi 0, %s35
    %s55 = sphi 0, %s55
    %s57 = sphi 0, %s55
    %s58 = sphi 0, %s57
    %s72 = sphi 0, %s58
    %s76 = sphi 0, %s76
    %s78 = sphi 0, %s76
    %s79 = sphi 0, %s78
    %s93 = sphi 0, %s79
    %s97 = sphi 0, %s97
    %s99 = sphi 0, %s97
    %s100 = sphi 0, %s99
    %s114 = sphi 0, %s100
    %s118 = sphi 0, %s118
    %s120 = sphi 0, %s118
    %s121 = sphi 0, %s120
    %s135 = sphi 0, %s121
    %s139 = sphi 0, %s139
    %s141 = sphi 0, %s139
    %s142 = sphi 0, %s141
    %s156 = sphi 0, %s142
    %s160 = sphi 0, %s160
    %s162 = sphi 0, %s160
    %s163 = sphi 0, %s162
    %s177 = sphi 0, %s163
    %s181 = sphi 0, %s181
    %s183 = sphi 0, %s181
    %s184 = sphi 0, %s183
    %s198 = sphi 0, %s184
    %s202 = sphi 0, %s202
    %s204 = sphi 0, %s202
    %s205 = sphi 0, %s204
    %s219 = sphi 0, %s205
    %s223 = sphi 0, %s223
    %s225 = sphi 0, %s223
    %s226 = sphi 0, %s225
    %s240 = sphi 0, %s226
    %s244 = sphi 0, %s244
    %s246 = sphi 0, %s244
    %s247 = sphi 0, %s246
    %s261 = sphi 0, %s247
    %s265 = sphi 0, %s265
    %s267 = sphi 0, %s265
    %s268 = sphi 0, %s267
    %s282 = sphi 0, %s268
    %s286 = sphi 0, %s286
    %s288 = sphi 0, %s286
    %s289 = sphi 0, %s288
    %s303 = sphi 0, %s289
    %s307 = sphi 0, %s307
    %s309 = sphi 0, %s307
    %s310 = sphi 0, %s309
    %s324 = sphi 0, %s310
    %s328 = sphi 0, %s328
    %s330 = sphi 0, %s328
    %s331 = sphi 0, %s330
    %s345 = sphi 0, %s331
    %s351 = sphi 0, %s353
    %s354 = sphi 0, %s351
    %s355 = sphi 0, %s354
    %s371 = sphi 0, %s355
  $region4: #{model_forward.8} parent=0 // loop_header_branch
    %24 = sbr.rel (%p22) target = $region8
  $region5: #{model_forward.8} parent=0 // loop_body
    %s26 = ssub.s32 %s21, 1
    %s27 = ssub.s32 %s21, 2
    %s28 = sadd.s32 %s21, 1
    %s29 = ssub.s32 %s21, %s28
    %p30 = scmp.eq.s32.totalorder %s29, 0
    %s32 = sadd.s32 %s31, 1
    %s33 = scalar_select %p30, %s31, %s32
    %p36 = pneg %p30
    %p37 = scmp.eq.s32.totalorder %s21, 1
    %p38 = por %p36, %p37
    %p39 = scmp.ne.s32.totalorder %s31, %s34
    %p40 = scmp.eq.s32.totalorder %s21, 0
    %p41 = por %p39, %p40
    %p42 = scmp.ne.s32.totalorder %s31, %s34
    %p43 = scmp.eq.s32.totalorder %s26, 1
    %p44 = por %p42, %p43
    %p45 = scmp.ne.s32.totalorder %s34, %s35
    %p46 = scmp.eq.s32.totalorder %s26, 0
    %p47 = por %p45, %p46
    %p48 = scmp.ne.s32.totalorder %s34, %s35
    %p49 = scmp.eq.s32.totalorder %s27, 1
    %p50 = por %p48, %p49
    %p52 = scmp.ne.s32.totalorder %s35, %s51
    %p53 = scmp.eq.s32.totalorder %s27, 0
    %p54 = por %p52, %p53
    %s56 = sadd.s32 %s55, 1
    %p59 = scmp.eq.s32.totalorder %s21, 1
    %p60 = scmp.ne.s32.totalorder %s55, %s57
    %p61 = scmp.eq.s32.totalorder %s21, 0
    %p62 = por %p60, %p61
    %p63 = scmp.ne.s32.totalorder %s55, %s57
    %p64 = scmp.eq.s32.totalorder %s26, 1
    %p65 = por %p63, %p64
    %p66 = scmp.ne.s32.totalorder %s57, %s58
    %p67 = scmp.eq.s32.totalorder %s26, 0
    %p68 = por %p66, %p67
    %p69 = scmp.ne.s32.totalorder %s57, %s58
    %p70 = scmp.eq.s32.totalorder %s27, 1
    %p71 = por %p69, %p70
    %p73 = scmp.ne.s32.totalorder %s58, %s72
    %p74 = scmp.eq.s32.totalorder %s27, 0
    %p75 = por %p73, %p74
    %s77 = sadd.s32 %s76, 1
    %p80 = scmp.eq.s32.totalorder %s21, 1
    %p81 = scmp.ne.s32.totalorder %s76, %s78
    %p82 = scmp.eq.s32.totalorder %s21, 0
    %p83 = por %p81, %p82
    %p84 = scmp.ne.s32.totalorder %s76, %s78
    %p85 = scmp.eq.s32.totalorder %s26, 1
    %p86 = por %p84, %p85
    %p87 = scmp.ne.s32.totalorder %s78, %s79
    %p88 = scmp.eq.s32.totalorder %s26, 0
    %p89 = por %p87, %p88
    %p90 = scmp.ne.s32.totalorder %s78, %s79
    %p91 = scmp.eq.s32.totalorder %s27, 1
    %p92 = por %p90, %p91
    %p94 = scmp.ne.s32.totalorder %s79, %s93
    %p95 = scmp.eq.s32.totalorder %s27, 0
    %p96 = por %p94, %p95
    %s98 = sadd.s32 %s97, 1
    %p101 = scmp.eq.s32.totalorder %s21, 1
    %p102 = scmp.ne.s32.totalorder %s97, %s99
    %p103 = scmp.eq.s32.totalorder %s21, 0
    %p104 = por %p102, %p103
    %p105 = scmp.ne.s32.totalorder %s97, %s99
    %p106 = scmp.eq.s32.totalorder %s26, 1
    %p107 = por %p105, %p106
    %p108 = scmp.ne.s32.totalorder %s99, %s100
    %p109 = scmp.eq.s32.totalorder %s26, 0
    %p110 = por %p108, %p109
    %p111 = scmp.ne.s32.totalorder %s99, %s100
    %p112 = scmp.eq.s32.totalorder %s27, 1
    %p113 = por %p111, %p112
    %p115 = scmp.ne.s32.totalorder %s100, %s114
    %p116 = scmp.eq.s32.totalorder %s27, 0
    %p117 = por %p115, %p116
    %s119 = sadd.s32 %s118, 1
    %p122 = scmp.eq.s32.totalorder %s21, 1
    %p123 = scmp.ne.s32.totalorder %s118, %s120
    %p124 = scmp.eq.s32.totalorder %s21, 0
    %p125 = por %p123, %p124
    %p126 = scmp.ne.s32.totalorder %s118, %s120
    %p127 = scmp.eq.s32.totalorder %s26, 1
    %p128 = por %p126, %p127
    %p129 = scmp.ne.s32.totalorder %s120, %s121
    %p130 = scmp.eq.s32.totalorder %s26, 0
    %p131 = por %p129, %p130
    %p132 = scmp.ne.s32.totalorder %s120, %s121
    %p133 = scmp.eq.s32.totalorder %s27, 1
    %p134 = por %p132, %p133
    %p136 = scmp.ne.s32.totalorder %s121, %s135
    %p137 = scmp.eq.s32.totalorder %s27, 0
    %p138 = por %p136, %p137
    %s140 = sadd.s32 %s139, 1
    %p143 = scmp.eq.s32.totalorder %s21, 1
    %p144 = scmp.ne.s32.totalorder %s139, %s141
    %p145 = scmp.eq.s32.totalorder %s21, 0
    %p146 = por %p144, %p145
    %p147 = scmp.ne.s32.totalorder %s139, %s141
    %p148 = scmp.eq.s32.totalorder %s26, 1
    %p149 = por %p147, %p148
    %p150 = scmp.ne.s32.totalorder %s141, %s142
    %p151 = scmp.eq.s32.totalorder %s26, 0
    %p152 = por %p150, %p151
    %p153 = scmp.ne.s32.totalorder %s141, %s142
    %p154 = scmp.eq.s32.totalorder %s27, 1
    %p155 = por %p153, %p154
    %p157 = scmp.ne.s32.totalorder %s142, %s156
    %p158 = scmp.eq.s32.totalorder %s27, 0
    %p159 = por %p157, %p158
    %s161 = sadd.s32 %s160, 1
    %p164 = scmp.eq.s32.totalorder %s21, 1
    %p165 = scmp.ne.s32.totalorder %s160, %s162
    %p166 = scmp.eq.s32.totalorder %s21, 0
    %p167 = por %p165, %p166
    %p168 = scmp.ne.s32.totalorder %s160, %s162
    %p169 = scmp.eq.s32.totalorder %s26, 1
    %p170 = por %p168, %p169
    %p171 = scmp.ne.s32.totalorder %s162, %s163
    %p172 = scmp.eq.s32.totalorder %s26, 0
    %p173 = por %p171, %p172
    %p174 = scmp.ne.s32.totalorder %s162, %s163
    %p175 = scmp.eq.s32.totalorder %s27, 1
    %p176 = por %p174, %p175
    %p178 = scmp.ne.s32.totalorder %s163, %s177
    %p179 = scmp.eq.s32.totalorder %s27, 0
    %p180 = por %p178, %p179
    %s182 = sadd.s32 %s181, 1
    %p185 = scmp.eq.s32.totalorder %s21, 1
    %p186 = scmp.ne.s32.totalorder %s181, %s183
    %p187 = scmp.eq.s32.totalorder %s21, 0
    %p188 = por %p186, %p187
    %p189 = scmp.ne.s32.totalorder %s181, %s183
    %p190 = scmp.eq.s32.totalorder %s26, 1
    %p191 = por %p189, %p190
    %p192 = scmp.ne.s32.totalorder %s183, %s184
    %p193 = scmp.eq.s32.totalorder %s26, 0
    %p194 = por %p192, %p193
    %p195 = scmp.ne.s32.totalorder %s183, %s184
    %p196 = scmp.eq.s32.totalorder %s27, 1
    %p197 = por %p195, %p196
    %p199 = scmp.ne.s32.totalorder %s184, %s198
    %p200 = scmp.eq.s32.totalorder %s27, 0
    %p201 = por %p199, %p200
    %s203 = sadd.s32 %s202, 1
    %p206 = scmp.eq.s32.totalorder %s21, 1
    %p207 = scmp.ne.s32.totalorder %s202, %s204
    %p208 = scmp.eq.s32.totalorder %s21, 0
    %p209 = por %p207, %p208
    %p210 = scmp.ne.s32.totalorder %s202, %s204
    %p211 = scmp.eq.s32.totalorder %s26, 1
    %p212 = por %p210, %p211
    %p213 = scmp.ne.s32.totalorder %s204, %s205
    %p214 = scmp.eq.s32.totalorder %s26, 0
    %p215 = por %p213, %p214
    %p216 = scmp.ne.s32.totalorder %s204, %s205
    %p217 = scmp.eq.s32.totalorder %s27, 1
    %p218 = por %p216, %p217
    %p220 = scmp.ne.s32.totalorder %s205, %s219
    %p221 = scmp.eq.s32.totalorder %s27, 0
    %p222 = por %p220, %p221
    %s224 = sadd.s32 %s223, 1
    %p227 = scmp.eq.s32.totalorder %s21, 1
    %p228 = scmp.ne.s32.totalorder %s223, %s225
    %p229 = scmp.eq.s32.totalorder %s21, 0
    %p230 = por %p228, %p229
    %p231 = scmp.ne.s32.totalorder %s223, %s225
    %p232 = scmp.eq.s32.totalorder %s26, 1
    %p233 = por %p231, %p232
    %p234 = scmp.ne.s32.totalorder %s225, %s226
    %p235 = scmp.eq.s32.totalorder %s26, 0
    %p236 = por %p234, %p235
    %p237 = scmp.ne.s32.totalorder %s225, %s226
    %p238 = scmp.eq.s32.totalorder %s27, 1
    %p239 = por %p237, %p238
    %p241 = scmp.ne.s32.totalorder %s226, %s240
    %p242 = scmp.eq.s32.totalorder %s27, 0
    %p243 = por %p241, %p242
    %s245 = sadd.s32 %s244, 1
    %p248 = scmp.eq.s32.totalorder %s21, 1
    %p249 = scmp.ne.s32.totalorder %s244, %s246
    %p250 = scmp.eq.s32.totalorder %s21, 0
    %p251 = por %p249, %p250
    %p252 = scmp.ne.s32.totalorder %s244, %s246
    %p253 = scmp.eq.s32.totalorder %s26, 1
    %p254 = por %p252, %p253
    %p255 = scmp.ne.s32.totalorder %s246, %s247
    %p256 = scmp.eq.s32.totalorder %s26, 0
    %p257 = por %p255, %p256
    %p258 = scmp.ne.s32.totalorder %s246, %s247
    %p259 = scmp.eq.s32.totalorder %s27, 1
    %p260 = por %p258, %p259
    %p262 = scmp.ne.s32.totalorder %s247, %s261
    %p263 = scmp.eq.s32.totalorder %s27, 0
    %p264 = por %p262, %p263
    %s266 = sadd.s32 %s265, 1
    %p269 = scmp.eq.s32.totalorder %s21, 1
    %p270 = scmp.ne.s32.totalorder %s265, %s267
    %p271 = scmp.eq.s32.totalorder %s21, 0
    %p272 = por %p270, %p271
    %p273 = scmp.ne.s32.totalorder %s265, %s267
    %p274 = scmp.eq.s32.totalorder %s26, 1
    %p275 = por %p273, %p274
    %p276 = scmp.ne.s32.totalorder %s267, %s268
    %p277 = scmp.eq.s32.totalorder %s26, 0
    %p278 = por %p276, %p277
    %p279 = scmp.ne.s32.totalorder %s267, %s268
    %p280 = scmp.eq.s32.totalorder %s27, 1
    %p281 = por %p279, %p280
    %p283 = scmp.ne.s32.totalorder %s268, %s282
    %p284 = scmp.eq.s32.totalorder %s27, 0
    %p285 = por %p283, %p284
    %s287 = sadd.s32 %s286, 1
    %p290 = scmp.eq.s32.totalorder %s21, 1
    %p291 = scmp.ne.s32.totalorder %s286, %s288
    %p292 = scmp.eq.s32.totalorder %s21, 0
    %p293 = por %p291, %p292
    %p294 = scmp.ne.s32.totalorder %s286, %s288
    %p295 = scmp.eq.s32.totalorder %s26, 1
    %p296 = por %p294, %p295
    %p297 = scmp.ne.s32.totalorder %s288, %s289
    %p298 = scmp.eq.s32.totalorder %s26, 0
    %p299 = por %p297, %p298
    %p300 = scmp.ne.s32.totalorder %s288, %s289
    %p301 = scmp.eq.s32.totalorder %s27, 1
    %p302 = por %p300, %p301
    %p304 = scmp.ne.s32.totalorder %s289, %s303
    %p305 = scmp.eq.s32.totalorder %s27, 0
    %p306 = por %p304, %p305
    %s308 = sadd.s32 %s307, 1
    %p311 = scmp.eq.s32.totalorder %s21, 1
    %p312 = scmp.ne.s32.totalorder %s307, %s309
    %p313 = scmp.eq.s32.totalorder %s21, 0
    %p314 = por %p312, %p313
    %p315 = scmp.ne.s32.totalorder %s307, %s309
    %p316 = scmp.eq.s32.totalorder %s26, 1
    %p317 = por %p315, %p316
    %p318 = scmp.ne.s32.totalorder %s309, %s310
    %p319 = scmp.eq.s32.totalorder %s26, 0
    %p320 = por %p318, %p319
    %p321 = scmp.ne.s32.totalorder %s309, %s310
    %p322 = scmp.eq.s32.totalorder %s27, 1
    %p323 = por %p321, %p322
    %p325 = scmp.ne.s32.totalorder %s310, %s324
    %p326 = scmp.eq.s32.totalorder %s27, 0
    %p327 = por %p325, %p326
    %s329 = sadd.s32 %s328, 1
    %p332 = scmp.eq.s32.totalorder %s21, 1
    %p333 = scmp.ne.s32.totalorder %s328, %s330
    %p334 = scmp.eq.s32.totalorder %s21, 0
    %p335 = por %p333, %p334
    %p336 = scmp.ne.s32.totalorder %s328, %s330
    %p337 = scmp.eq.s32.totalorder %s26, 1
    %p338 = por %p336, %p337
    %p339 = scmp.ne.s32.totalorder %s330, %s331
    %p340 = scmp.eq.s32.totalorder %s26, 0
    %p341 = por %p339, %p340
    %p342 = scmp.ne.s32.totalorder %s330, %s331
    %p343 = scmp.eq.s32.totalorder %s27, 1
    %p344 = por %p342, %p343
    %p346 = scmp.ne.s32.totalorder %s331, %s345
    %p347 = scmp.eq.s32.totalorder %s27, 0
    %p348 = por %p346, %p347
    %s349 = ssub.s32 %s21, %s28
    %p350 = scmp.eq.s32.totalorder %s349, 0
    %s352 = sadd.s32 %s351, 1
    %s353 = scalar_select %p350, %s351, %s352
    %p356 = pneg %p350
    %p357 = scmp.eq.s32.totalorder %s21, 1
    %p358 = por %p356, %p357
    %p359 = scmp.ne.s32.totalorder %s351, %s354
    %p360 = scmp.eq.s32.totalorder %s21, 0
    %p361 = por %p359, %p360
    %p362 = scmp.ne.s32.totalorder %s351, %s354
    %p363 = scmp.eq.s32.totalorder %s26, 1
    %p364 = por %p362, %p363
    %p365 = scmp.ne.s32.totalorder %s354, %s355
    %p366 = scmp.eq.s32.totalorder %s26, 0
    %p367 = por %p365, %p366
    %p368 = scmp.ne.s32.totalorder %s354, %s355
    %p369 = scmp.eq.s32.totalorder %s27, 1
    %p370 = por %p368, %p369
    %p372 = scmp.ne.s32.totalorder %s355, %s371
    %p373 = scmp.eq.s32.totalorder %s27, 0
    %p374 = por %p372, %p373
    %p375 = scmp.le.s32.totalorder 1, %s21
    %p376 = scmp.lt.s32.totalorder %s21, 3
    %p377 = pnand %p375, %p376
    %p378 = pneg %p377
    // Predicated region
    $region9: #{model_forward.8} parent=5 // pred_check
      _
    $region10: #{model_forward.8} parent=5 // pred_check_branch
      %380 = sbr.rel (%p377) target = $region12
    $region11: #{model_forward.8} parent=5 // pred_region
      %s381 = ssub.s32 %s21, 1
      // Predicated region
      $region13: #{model_forward.8} parent=11 // pred_check
        %p382 = pneg %p68
      $region14: #{model_forward.8} parent=11 // pred_check_branch
        %384 = sbr.rel (%p382) target = $region16
      $region15: #{model_forward.8} parent=11 // pred_region
        _
      $region16: #{model_forward.8} parent=11 // pred_fallthru
        _
      // Predicated region
      $region17: #{model_forward.8} parent=11 // pred_check
        %p385 = pneg %p89
      $region18: #{model_forward.8} parent=11 // pred_check_branch
        %387 = sbr.rel (%p385) target = $region20
      $region19: #{model_forward.8} parent=11 // pred_region
        _
      $region20: #{model_forward.8} parent=11 // pred_fallthru
        _
      // Predicated region
      $region21: #{model_forward.8} parent=11 // pred_check
        %p388 = pneg %p110
      $region22: #{model_forward.8} parent=11 // pred_check_branch
        %390 = sbr.rel (%p388) target = $region24
      $region23: #{model_forward.8} parent=11 // pred_region
        _
      $region24: #{model_forward.8} parent=11 // pred_fallthru
        _
      // Predicated region
      $region25: #{model_forward.8} parent=11 // pred_check
        %p391 = pneg %p131
      $region26: #{model_forward.8} parent=11 // pred_check_branch
        %393 = sbr.rel (%p391) target = $region28
      $region27: #{model_forward.8} parent=11 // pred_region
        _
      $region28: #{model_forward.8} parent=11 // pred_fallthru
        _
      // Predicated region
      $region29: #{model_forward.8} parent=11 // pred_check
        %p394 = pneg %p152
      $region30: #{model_forward.8} parent=11 // pred_check_branch
        %396 = sbr.rel (%p394) target = $region32
      $region31: #{model_forward.8} parent=11 // pred_region
        _
      $region32: #{model_forward.8} parent=11 // pred_fallthru
        _
      // Predicated region
      $region33: #{model_forward.8} parent=11 // pred_check
        %p397 = pneg %p173
      $region34: #{model_forward.8} parent=11 // pred_check_branch
        %399 = sbr.rel (%p397) target = $region36
      $region35: #{model_forward.8} parent=11 // pred_region
        _
      $region36: #{model_forward.8} parent=11 // pred_fallthru
        _
      // Predicated region
      $region37: #{model_forward.8} parent=11 // pred_check
        %p400 = pneg %p194
      $region38: #{model_forward.8} parent=11 // pred_check_branch
        %402 = sbr.rel (%p400) target = $region40
      $region39: #{model_forward.8} parent=11 // pred_region
        _
      $region40: #{model_forward.8} parent=11 // pred_fallthru
        _
      // Predicated region
      $region41: #{model_forward.8} parent=11 // pred_check
        %p403 = pneg %p215
      $region42: #{model_forward.8} parent=11 // pred_check_branch
        %405 = sbr.rel (%p403) target = $region44
      $region43: #{model_forward.8} parent=11 // pred_region
        _
      $region44: #{model_forward.8} parent=11 // pred_fallthru
        _
      // Predicated region
      $region45: #{model_forward.8} parent=11 // pred_check
        %p406 = pneg %p236
      $region46: #{model_forward.8} parent=11 // pred_check_branch
        %408 = sbr.rel (%p406) target = $region48
      $region47: #{model_forward.8} parent=11 // pred_region
        _
      $region48: #{model_forward.8} parent=11 // pred_fallthru
        _
      // Predicated region
      $region49: #{model_forward.8} parent=11 // pred_check
        %p409 = pneg %p257
      $region50: #{model_forward.8} parent=11 // pred_check_branch
        %411 = sbr.rel (%p409) target = $region52
      $region51: #{model_forward.8} parent=11 // pred_region
        _
      $region52: #{model_forward.8} parent=11 // pred_fallthru
        _
      // Predicated region
      $region53: #{model_forward.8} parent=11 // pred_check
        %p412 = pneg %p278
      $region54: #{model_forward.8} parent=11 // pred_check_branch
        %414 = sbr.rel (%p412) target = $region56
      $region55: #{model_forward.8} parent=11 // pred_region
        _
      $region56: #{model_forward.8} parent=11 // pred_fallthru
        _
      // Predicated region
      $region57: #{model_forward.8} parent=11 // pred_check
        %p415 = pneg %p299
      $region58: #{model_forward.8} parent=11 // pred_check_branch
        %417 = sbr.rel (%p415) target = $region60
      $region59: #{model_forward.8} parent=11 // pred_region
        _
      $region60: #{model_forward.8} parent=11 // pred_fallthru
        _
      // Predicated region
      $region61: #{model_forward.8} parent=11 // pred_check
        %p418 = pneg %p320
      $region62: #{model_forward.8} parent=11 // pred_check_branch
        %420 = sbr.rel (%p418) target = $region64
      $region63: #{model_forward.8} parent=11 // pred_region
        _
      $region64: #{model_forward.8} parent=11 // pred_fallthru
        _
      // Predicated region
      $region65: #{model_forward.8} parent=11 // pred_check
        %p421 = pneg %p341
      $region66: #{model_forward.8} parent=11 // pred_check_branch
        %423 = sbr.rel (%p421) target = $region68
      $region67: #{model_forward.8} parent=11 // pred_region
        _
      $region68: #{model_forward.8} parent=11 // pred_fallthru
        _
    $region12: #{model_forward.8} parent=5 // pred_fallthru
      _
    %p424 = scmp.lt.s32.totalorder %s21, 2
    // Predicated region
    $region69: #{model_forward.8} parent=5 // pred_check
      %p425 = pneg %p424
    $region70: #{model_forward.8} parent=5 // pred_check_branch
      %427 = sbr.rel (%p425) target = $region72
    $region71: #{model_forward.8} parent=5 // pred_region
      // Predicated region
      $region73: #{model_forward.8} parent=71 // pred_check
        %p428 = pneg %p41
      $region74: #{model_forward.8} parent=71 // pred_check_branch
        %430 = sbr.rel (%p428) target = $region76
      $region75: #{model_forward.8} parent=71 // pred_region
        %p431 = scmp.lt.s32.totalorder %s21, 1
        %s432 = scalar_select %p431, %s21, 1
        %s433 = smul.addr %s432, 2
        %s434 = smul.addr %s433, 8
        %s435 = scalar_lea.vmem %s0, %s434
      $region76: #{model_forward.8} parent=71 // pred_fallthru
        _
    $region72: #{model_forward.8} parent=5 // pred_fallthru
      _
    %p436 = scmp.le.s32.totalorder 1, %s21
    %p437 = scmp.lt.s32.totalorder %s21, 3
    %p438 = pnand %p436, %p437
    %p439 = pneg %p438
    // Predicated region
    $region77: #{model_forward.8} parent=5 // pred_check
      _
    $region78: #{model_forward.8} parent=5 // pred_check_branch
      %441 = sbr.rel (%p438) target = $region80
    $region79: #{model_forward.8} parent=5 // pred_region
      %s442 = ssub.s32 %s21, 1
      %p443 = scmp.lt.s32.totalorder %s26, 1
      %s444 = scalar_select %p443, %s26, 1
      %s445 = smul.addr %s444, 2
      %s446 = smul.addr %s445, 8
      %s447 = scalar_lea.vmem %s0, %s446
      %p448 = pneg %p47
      %p449 = pneg %p44
      %p450 = pneg %p68
      %p451 = pneg %p65
      %p452 = pneg %p89
      %p453 = pneg %p86
      %p454 = pneg %p110
      %p455 = pneg %p107
      %p456 = pneg %p131
      %p457 = pneg %p128
      %p458 = pneg %p152
      %p459 = pneg %p149
      %p460 = pneg %p173
      %p461 = pneg %p170
      %p462 = pneg %p194
      %p463 = pneg %p191
      %p464 = pneg %p215
      %p465 = pneg %p212
      %p466 = pneg %p236
      %p467 = pneg %p233
      %p468 = pneg %p257
      %p469 = pneg %p254
      %p470 = pneg %p278
      %p471 = pneg %p275
      %p472 = pneg %p299
      %p473 = pneg %p296
      %p474 = pneg %p320
      %p475 = pneg %p317
      %p476 = pneg %p341
      %p477 = pneg %p338
      %p478 = pneg %p367
      %p479 = pneg %p364
      %p480 = scmp.lt.s32.totalorder %s26, 1
      %s481 = scalar_select %p480, %s26, 1
      %s482 = smul.addr %s481, 2
      %s483 = smul.addr %s482, 8
      %s484 = scalar_lea.vmem %s15, %s483
      %p485 = scmp.lt.s32.totalorder %s26, 1
      %s486 = scalar_select %p485, %s26, 1
      %s487 = smul.addr %s486, 2
      %s488 = smul.addr %s487, 8
      %s489 = scalar_lea.vmem %s0, %s488
      %p490 = scmp.lt.s32.totalorder %s26, 1
      %s491 = scalar_select %p490, %s26, 1
      %s492 = smul.addr %s491, 2
      %s493 = smul.addr %s492, 8
      %s494 = scalar_lea.vmem %s15, %s493
      %v495 = vld [vmem:[%s489] sm:$0xff]
      %v496 = vld [vmem:[%s489 + $0x8] sm:$0xff]
      %v497 = vld [vmem:[%s1] sm:$0xff]
      %v498 = vld [vmem:[%s1 + $0x8] sm:$0xff]
      %v499 = vld [vmem:[%s1 + $0x10] sm:$0xff]
      %v500 = vld [vmem:[%s1 + $0x18] sm:$0xff]
      %v501 = vld [vmem:[%s2] sm:$0x1]
      %v503 = vperm.slane %v501, 0
      %vm505 = vcmask 261120
      %v507 = vsel %vm505, %v495, 0
      %v510 = vsel %vm505, %v496, 0
      %512 = vmatpush.msra.mxu0 0.0
      %513 = vmatpush.msra.mxu0 0.0
      %514 = vmatpush.msra.mxu0 0.0
      %515 = vmatpush.msra.mxu0 0.0
      %516 = vmatpush.msra.mxu0 0.0
      %517 = vmatpush.msra.mxu0 0.0
      %518 = vmatpush.msra.mxu0 0.0
      %519 = vmatpush.msra.mxu0 0.0
      %520 = vmatpush.msra.mxu0 0.0
      %521 = vmatpush.msra.mxu0 0.0
      %522 = vmatpush.msra.mxu0 0.0
      %523 = vmatpush.msra.mxu0 0.0
      %524 = vmatpush.msra.mxu0 %v500
      %525 = vmatpush.msra.mxu0 %v499
      %526 = vmatpush.msra.mxu0 %v498
      %527 = vmatpush.msra.mxu0 %v497
      %528 = vmatmul.f32.gmra.mxu0 %v507
      %v529 = vpop.f32.mrf.mxu0
      %v530 = vadd.f32 %v503, %v529
      %531 = vmatmul.f32.gmra.mxu0 %v510
      %v532 = vpop.f32.mrf.mxu0
      %v533 = vadd.f32 %v503, %v532
      %534 = vdwg.mxu0
      %v535 = vld [vmem:[%s3] sm:$0xff]
      %v536 = vld [vmem:[%s3 + $0x8] sm:$0xff]
      %v537 = vld [vmem:[%s3 + $0x10] sm:$0xff]
      %v538 = vld [vmem:[%s3 + $0x18] sm:$0xff]
      %v539 = vld [vmem:[%s4] sm:$0x1]
      %542 = vrot.lane.b32.xlu0 %v530, 96
      %v543 = vpop.permute.xlu0 %542
      %544 = vrot.lane.b32.xlu0 %v533, 96
      %v545 = vpop.permute.xlu0 %544
      %vm546 = vcmask 64512
      %v547 = vsel %vm546, %v530, 0
      %v549 = vsel %vm546, %v533, 0
      %v551 = vsel %vm546, %v543, 0
      %v553 = vsel %vm546, %v545, 0
      %555 = vmatpush.xpose.msra.mxu0 0.0
      %556 = vmatpush.xpose.msra.mxu0 0.0
      %557 = vmatpush.xpose.msra.mxu0 0.0
      %558 = vmatpush.xpose.msra.mxu0 0.0
      %559 = vmatpush.xpose.msra.mxu0 0.0
      %560 = vmatpush.xpose.msra.mxu0 0.0
      %561 = vmatpush.xpose.msra.mxu0 0.0
      %562 = vmatpush.xpose.msra.mxu0 0.0
      %563 = vmatpush.xpose.msra.mxu0 0.0
      %564 = vmatpush.xpose.msra.mxu0 0.0
      %565 = vmatpush.xpose.msra.mxu0 0.0
      %566 = vmatpush.xpose.msra.mxu0 0.0
      %567 = vmatpush.xpose.msra.mxu0 0.0
      %568 = vmatpush.xpose.msra.mxu0 0.0
      %569 = vmatpush.xpose.msra.mxu0 %v553
      %570 = vmatpush.xpose.msra.mxu0 %v551
      %571 = vmatmul.f32.gmra.mxu0 %v547
      %v572 = vpop.f32.mrf.mxu0
      %v573 = vadd.f32 0.0, %v572
      %574 = vmatmul.f32.gmra.mxu0 %v549
      %v575 = vpop.f32.mrf.mxu0
      %v576 = vadd.f32 0.0, %v575
      %577 = vdwg.mxu0
      %v578 = vmul.f32 %v573, 0.35355338
      %v579 = vmul.f32 %v576, 0.35355338
      %vm580 = vcmask 130048
      %v581 = vsel %vm580, %v578, -inf
      %582 = vmax.xlane.f32.xlu0 %v581
      %v583 = vpop.xlane.xlu0 %582
      %v584 = vsel %vm580, %v579, -inf
      %585 = vmax.xlane.f32.xlu0 %v584
      %v586 = vpop.xlane.xlu0 %585
      %v587 = vsub.f32 %v578, %v583
      %v588 = vsub.f32 %v579, %v586
      %v589 = vmul.f32 %v587, 1.442695
      %v590 = vpow.pop %v589
      %v591 = vmul.f32 %v588, 1.442695
      %v592 = vpow.pop %v591
      %v593 = vsel %vm580, %v590, 0.0
      %594 = vadd.xlane.f32.xlu0 %v593
      %v595 = vpop.xlane.xlu0 %594
      %v596 = vsel %vm580, %v592, 0.0
      %597 = vadd.xlane.f32.xlu0 %v596
      %v598 = vpop.xlane.xlu0 %597
      %v599 = vrcp.pop %v595
      %v600 = vmul.f32 %v595, %v599
      %v601 = vsub.f32 1.0, %v600
      %v602 = vmul.f32 %v599, %v601
      %v603 = vadd.f32 %v599, %v602
      %vm604 = vweird.f32 %v595
      %vm605 = vweird.f32 %v599
      %vm606 = vmor %vm604, %vm605
      %v607 = vsel %vm606, %v599, %v603
      %v608 = vand.u32 2147483647, %v595
      %vm609 = vcmp.eq.f32.partialorder %v608, 8.507059e+37
      %v610 = vand.u32 %v595, 2147483648
      %v611 = vor.u32 1.1754944e-38, %v610
      %v612 = vsel %vm609, %v611, %v607
      %v613 = vmul.f32 %v590, %v612
      %v614 = vrcp.pop %v598
      %v615 = vmul.f32 %v598, %v614
      %v616 = vsub.f32 1.0, %v615
      %v617 = vmul.f32 %v614, %v616
      %v618 = vadd.f32 %v614, %v617
      %vm619 = vweird.f32 %v598
      %vm620 = vweird.f32 %v614
      %vm621 = vmor %vm619, %vm620
      %v622 = vsel %vm621, %v614, %v618
      %v623 = vand.u32 2147483647, %v598
      %vm624 = vcmp.eq.f32.partialorder %v623, 8.507059e+37
      %v625 = vand.u32 %v598, 2147483648
      %v626 = vor.u32 1.1754944e-38, %v625
      %v627 = vsel %vm624, %v626, %v622
      %v628 = vmul.f32 %v592, %v627
      %629 = vrot.lane.b32.xlu0 %v530, 64
      %v630 = vpop.permute.xlu0 %629
      %631 = vrot.lane.b32.xlu0 %v533, 64
      %v632 = vpop.permute.xlu0 %631
      %v636 = vsel %vm580, %v613, 0
      %v639 = vsel %vm580, %v628, 0
      %641 = vmatpush.msra.mxu0 0.0
      %642 = vmatpush.msra.mxu0 0.0
      %643 = vmatpush.msra.mxu0 0.0
      %644 = vmatpush.msra.mxu0 0.0
      %645 = vmatpush.msra.mxu0 0.0
      %646 = vmatpush.msra.mxu0 0.0
      %647 = vmatpush.msra.mxu0 0.0
      %648 = vmatpush.msra.mxu0 0.0
      %649 = vmatpush.msra.mxu0 0.0
      %650 = vmatpush.msra.mxu0 0.0
      %651 = vmatpush.msra.mxu0 0.0
      %652 = vmatpush.msra.mxu0 0.0
      %653 = vmatpush.msra.mxu0 0.0
      %654 = vmatpush.msra.mxu0 0.0
      %655 = vmatpush.msra.mxu0 %v632
      %656 = vmatpush.msra.mxu0 %v630
      %657 = vmatmul.f32.gmra.mxu0 %v636
      %v658 = vpop.f32.mrf.mxu0
      %v659 = vadd.f32 0.0, %v658
      %660 = vmatmul.f32.gmra.mxu0 %v639
      %v661 = vpop.f32.mrf.mxu0
      %v662 = vadd.f32 0.0, %v661
      %663 = vdwg.mxu0
      %664 = vrot.lane.b32.xlu0 %v530, 120
      %v665 = vpop.permute.xlu0 %664
      %666 = vrot.lane.b32.xlu0 %v533, 120
      %v667 = vpop.permute.xlu0 %666
      %668 = vrot.lane.b32.xlu0 %v530, 88
      %v669 = vpop.permute.xlu0 %668
      %670 = vrot.lane.b32.xlu0 %v533, 88
      %v671 = vpop.permute.xlu0 %670
      %v672 = vsel %vm546, %v665, 0
      %v674 = vsel %vm546, %v667, 0
      %v676 = vsel %vm546, %v669, 0
      %v678 = vsel %vm546, %v671, 0
      %680 = vmatpush.xpose.msra.mxu0 0.0
      %681 = vmatpush.xpose.msra.mxu0 0.0
      %682 = vmatpush.xpose.msra.mxu0 0.0
      %683 = vmatpush.xpose.msra.mxu0 0.0
      %684 = vmatpush.xpose.msra.mxu0 0.0
      %685 = vmatpush.xpose.msra.mxu0 0.0
      %686 = vmatpush.xpose.msra.mxu0 0.0
      %687 = vmatpush.xpose.msra.mxu0 0.0
      %688 = vmatpush.xpose.msra.mxu0 0.0
      %689 = vmatpush.xpose.msra.mxu0 0.0
      %690 = vmatpush.xpose.msra.mxu0 0.0
      %691 = vmatpush.xpose.msra.mxu0 0.0
      %692 = vmatpush.xpose.msra.mxu0 0.0
      %693 = vmatpush.xpose.msra.mxu0 0.0
      %694 = vmatpush.xpose.msra.mxu0 %v678
      %695 = vmatpush.xpose.msra.mxu0 %v676
      %696 = vmatmul.f32.gmra.mxu0 %v672
      %v697 = vpop.f32.mrf.mxu0
      %v698 = vadd.f32 0.0, %v697
      %699 = vmatmul.f32.gmra.mxu0 %v674
      %v700 = vpop.f32.mrf.mxu0
      %v701 = vadd.f32 0.0, %v700
      %702 = vdwg.mxu0
      %v703 = vmul.f32 %v698, 0.35355338
      %v704 = vmul.f32 %v701, 0.35355338
      %v705 = vsel %vm580, %v703, -inf
      %706 = vmax.xlane.f32.xlu0 %v705
      %v707 = vpop.xlane.xlu0 %706
      %v708 = vsel %vm580, %v704, -inf
      %709 = vmax.xlane.f32.xlu0 %v708
      %v710 = vpop.xlane.xlu0 %709
      %v711 = vsub.f32 %v703, %v707
      %v712 = vsub.f32 %v704, %v710
      %v713 = vmul.f32 %v711, 1.442695
      %v714 = vpow.pop %v713
      %v715 = vmul.f32 %v712, 1.442695
      %v716 = vpow.pop %v715
      %v717 = vsel %vm580, %v714, 0.0
      %718 = vadd.xlane.f32.xlu0 %v717
      %v719 = vpop.xlane.xlu0 %718
      %v720 = vsel %vm580, %v716, 0.0
      %721 = vadd.xlane.f32.xlu0 %v720
      %v722 = vpop.xlane.xlu0 %721
      %v723 = vrcp.pop %v719
      %v724 = vmul.f32 %v719, %v723
      %v725 = vsub.f32 1.0, %v724
      %v726 = vmul.f32 %v723, %v725
      %v727 = vadd.f32 %v723, %v726
      %vm728 = vweird.f32 %v719
      %vm729 = vweird.f32 %v723
      %vm730 = vmor %vm728, %vm729
      %v731 = vsel %vm730, %v723, %v727
      %v732 = vand.u32 2147483647, %v719
      %vm733 = vcmp.eq.f32.partialorder %v732, 8.507059e+37
      %v734 = vand.u32 %v719, 2147483648
      %v735 = vor.u32 1.1754944e-38, %v734
      %v736 = vsel %vm733, %v735, %v731
      %v737 = vmul.f32 %v714, %v736
      %v738 = vrcp.pop %v722
      %v739 = vmul.f32 %v722, %v738
      %v740 = vsub.f32 1.0, %v739
      %v741 = vmul.f32 %v738, %v740
      %v742 = vadd.f32 %v738, %v741
      %vm743 = vweird.f32 %v722
      %vm744 = vweird.f32 %v738
      %vm745 = vmor %vm743, %vm744
      %v746 = vsel %vm745, %v738, %v742
      %v747 = vand.u32 2147483647, %v722
      %vm748 = vcmp.eq.f32.partialorder %v747, 8.507059e+37
      %v749 = vand.u32 %v722, 2147483648
      %v750 = vor.u32 1.1754944e-38, %v749
      %v751 = vsel %vm748, %v750, %v746
      %v752 = vmul.f32 %v716, %v751
      %753 = vrot.lane.b32.xlu0 %v530, 56
      %v754 = vpop.permute.xlu0 %753
      %755 = vrot.lane.b32.xlu0 %v533, 56
      %v756 = vpop.permute.xlu0 %755
      %v760 = vsel %vm580, %v737, 0
      %v763 = vsel %vm580, %v752, 0
      %765 = vmatpush.msra.mxu0 0.0
      %766 = vmatpush.msra.mxu0 0.0
      %767 = vmatpush.msra.mxu0 0.0
      %768 = vmatpush.msra.mxu0 0.0
      %769 = vmatpush.msra.mxu0 0.0
      %770 = vmatpush.msra.mxu0 0.0
      %771 = vmatpush.msra.mxu0 0.0
      %772 = vmatpush.msra.mxu0 0.0
      %773 = vmatpush.msra.mxu0 0.0
      %774 = vmatpush.msra.mxu0 0.0
      %775 = vmatpush.msra.mxu0 0.0
      %776 = vmatpush.msra.mxu0 0.0
      %777 = vmatpush.msra.mxu0 0.0
      %778 = vmatpush.msra.mxu0 0.0
      %779 = vmatpush.msra.mxu0 %v756
      %780 = vmatpush.msra.mxu0 %v754
      %781 = vmatmul.f32.gmra.mxu0 %v760
      %v782 = vpop.f32.mrf.mxu0
      %v783 = vadd.f32 0.0, %v782
      %784 = vmatmul.f32.gmra.mxu0 %v763
      %v785 = vpop.f32.mrf.mxu0
      %v786 = vadd.f32 0.0, %v785
      %787 = vdwg.mxu0
      %788 = vrot.lane.b32.xlu0 %v530, 112
      %v789 = vpop.permute.xlu0 %788
      %790 = vrot.lane.b32.xlu0 %v533, 112
      %v791 = vpop.permute.xlu0 %790
      %792 = vrot.lane.b32.xlu0 %v530, 80
      %v793 = vpop.permute.xlu0 %792
      %794 = vrot.lane.b32.xlu0 %v533, 80
      %v795 = vpop.permute.xlu0 %794
      %v796 = vsel %vm546, %v789, 0
      %v798 = vsel %vm546, %v791, 0
      %v800 = vsel %vm546, %v793, 0
      %v802 = vsel %vm546, %v795, 0
      %804 = vmatpush.xpose.msra.mxu0 0.0
      %805 = vmatpush.xpose.msra.mxu0 0.0
      %806 = vmatpush.xpose.msra.mxu0 0.0
      %807 = vmatpush.xpose.msra.mxu0 0.0
      %808 = vmatpush.xpose.msra.mxu0 0.0
      %809 = vmatpush.xpose.msra.mxu0 0.0
      %810 = vmatpush.xpose.msra.mxu0 0.0
      %811 = vmatpush.xpose.msra.mxu0 0.0
      %812 = vmatpush.xpose.msra.mxu0 0.0
      %813 = vmatpush.xpose.msra.mxu0 0.0
      %814 = vmatpush.xpose.msra.mxu0 0.0
      %815 = vmatpush.xpose.msra.mxu0 0.0
      %816 = vmatpush.xpose.msra.mxu0 0.0
      %817 = vmatpush.xpose.msra.mxu0 0.0
      %818 = vmatpush.xpose.msra.mxu0 %v802
      %819 = vmatpush.xpose.msra.mxu0 %v800
      %820 = vmatmul.f32.gmra.mxu0 %v796
      %v821 = vpop.f32.mrf.mxu0
      %v822 = vadd.f32 0.0, %v821
      %823 = vmatmul.f32.gmra.mxu0 %v798
      %v824 = vpop.f32.mrf.mxu0
      %v825 = vadd.f32 0.0, %v824
      %826 = vdwg.mxu0
      %v827 = vmul.f32 %v822, 0.35355338
      %v828 = vmul.f32 %v825, 0.35355338
      %v829 = vsel %vm580, %v827, -inf
      %830 = vmax.xlane.f32.xlu0 %v829
      %v831 = vpop.xlane.xlu0 %830
      %v832 = vsel %vm580, %v828, -inf
      %833 = vmax.xlane.f32.xlu0 %v832
      %v834 = vpop.xlane.xlu0 %833
      %v835 = vsub.f32 %v827, %v831
      %v836 = vsub.f32 %v828, %v834
      %v837 = vmul.f32 %v835, 1.442695
      %v838 = vpow.pop %v837
      %v839 = vmul.f32 %v836, 1.442695
      %v840 = vpow.pop %v839
      %v841 = vsel %vm580, %v838, 0.0
      %842 = vadd.xlane.f32.xlu0 %v841
      %v843 = vpop.xlane.xlu0 %842
      %v844 = vsel %vm580, %v840, 0.0
      %845 = vadd.xlane.f32.xlu0 %v844
      %v846 = vpop.xlane.xlu0 %845
      %v847 = vrcp.pop %v843
      %v848 = vmul.f32 %v843, %v847
      %v849 = vsub.f32 1.0, %v848
      %v850 = vmul.f32 %v847, %v849
      %v851 = vadd.f32 %v847, %v850
      %vm852 = vweird.f32 %v843
      %vm853 = vweird.f32 %v847
      %vm854 = vmor %vm852, %vm853
      %v855 = vsel %vm854, %v847, %v851
      %v856 = vand.u32 2147483647, %v843
      %vm857 = vcmp.eq.f32.partialorder %v856, 8.507059e+37
      %v858 = vand.u32 %v843, 2147483648
      %v859 = vor.u32 1.1754944e-38, %v858
      %v860 = vsel %vm857, %v859, %v855
      %v861 = vmul.f32 %v838, %v860
      %v862 = vrcp.pop %v846
      %v863 = vmul.f32 %v846, %v862
      %v864 = vsub.f32 1.0, %v863
      %v865 = vmul.f32 %v862, %v864
      %v866 = vadd.f32 %v862, %v865
      %vm867 = vweird.f32 %v846
      %vm868 = vweird.f32 %v862
      %vm869 = vmor %vm867, %vm868
      %v870 = vsel %vm869, %v862, %v866
      %v871 = vand.u32 2147483647, %v846
      %vm872 = vcmp.eq.f32.partialorder %v871, 8.507059e+37
      %v873 = vand.u32 %v846, 2147483648
      %v874 = vor.u32 1.1754944e-38, %v873
      %v875 = vsel %vm872, %v874, %v870
      %v876 = vmul.f32 %v840, %v875
      %877 = vrot.lane.b32.xlu0 %v530, 48
      %v878 = vpop.permute.xlu0 %877
      %879 = vrot.lane.b32.xlu0 %v533, 48
      %v880 = vpop.permute.xlu0 %879
      %v884 = vsel %vm580, %v861, 0
      %v887 = vsel %vm580, %v876, 0
      %889 = vmatpush.msra.mxu0 0.0
      %890 = vmatpush.msra.mxu0 0.0
      %891 = vmatpush.msra.mxu0 0.0
      %892 = vmatpush.msra.mxu0 0.0
      %893 = vmatpush.msra.mxu0 0.0
      %894 = vmatpush.msra.mxu0 0.0
      %895 = vmatpush.msra.mxu0 0.0
      %896 = vmatpush.msra.mxu0 0.0
      %897 = vmatpush.msra.mxu0 0.0
      %898 = vmatpush.msra.mxu0 0.0
      %899 = vmatpush.msra.mxu0 0.0
      %900 = vmatpush.msra.mxu0 0.0
      %901 = vmatpush.msra.mxu0 0.0
      %902 = vmatpush.msra.mxu0 0.0
      %903 = vmatpush.msra.mxu0 %v880
      %904 = vmatpush.msra.mxu0 %v878
      %905 = vmatmul.f32.gmra.mxu0 %v884
      %v906 = vpop.f32.mrf.mxu0
      %v907 = vadd.f32 0.0, %v906
      %908 = vmatmul.f32.gmra.mxu0 %v887
      %v909 = vpop.f32.mrf.mxu0
      %v910 = vadd.f32 0.0, %v909
      %911 = vdwg.mxu0
      %912 = vrot.lane.b32.xlu0 %v530, 104
      %v913 = vpop.permute.xlu0 %912
      %914 = vrot.lane.b32.xlu0 %v533, 104
      %v915 = vpop.permute.xlu0 %914
      %916 = vrot.lane.b32.xlu0 %v530, 72
      %v917 = vpop.permute.xlu0 %916
      %918 = vrot.lane.b32.xlu0 %v533, 72
      %v919 = vpop.permute.xlu0 %918
      %v920 = vsel %vm546, %v913, 0
      %v922 = vsel %vm546, %v915, 0
      %v924 = vsel %vm546, %v917, 0
      %v926 = vsel %vm546, %v919, 0
      %928 = vmatpush.xpose.msra.mxu0 0.0
      %929 = vmatpush.xpose.msra.mxu0 0.0
      %930 = vmatpush.xpose.msra.mxu0 0.0
      %931 = vmatpush.xpose.msra.mxu0 0.0
      %932 = vmatpush.xpose.msra.mxu0 0.0
      %933 = vmatpush.xpose.msra.mxu0 0.0
      %934 = vmatpush.xpose.msra.mxu0 0.0
      %935 = vmatpush.xpose.msra.mxu0 0.0
      %936 = vmatpush.xpose.msra.mxu0 0.0
      %937 = vmatpush.xpose.msra.mxu0 0.0
      %938 = vmatpush.xpose.msra.mxu0 0.0
      %939 = vmatpush.xpose.msra.mxu0 0.0
      %940 = vmatpush.xpose.msra.mxu0 0.0
      %941 = vmatpush.xpose.msra.mxu0 0.0
      %942 = vmatpush.xpose.msra.mxu0 %v926
      %943 = vmatpush.xpose.msra.mxu0 %v924
      %944 = vmatmul.f32.gmra.mxu0 %v920
      %v945 = vpop.f32.mrf.mxu0
      %v946 = vadd.f32 0.0, %v945
      %947 = vmatmul.f32.gmra.mxu0 %v922
      %v948 = vpop.f32.mrf.mxu0
      %v949 = vadd.f32 0.0, %v948
      %950 = vdwg.mxu0
      %v951 = vmul.f32 %v946, 0.35355338
      %v952 = vmul.f32 %v949, 0.35355338
      %v953 = vsel %vm580, %v951, -inf
      %954 = vmax.xlane.f32.xlu0 %v953
      %v955 = vpop.xlane.xlu0 %954
      %v956 = vsel %vm580, %v952, -inf
      %957 = vmax.xlane.f32.xlu0 %v956
      %v958 = vpop.xlane.xlu0 %957
      %v959 = vsub.f32 %v951, %v955
      %v960 = vsub.f32 %v952, %v958
      %v961 = vmul.f32 %v959, 1.442695
      %v962 = vpow.pop %v961
      %v963 = vmul.f32 %v960, 1.442695
      %v964 = vpow.pop %v963
      %v965 = vsel %vm580, %v962, 0.0
      %966 = vadd.xlane.f32.xlu0 %v965
      %v967 = vpop.xlane.xlu0 %966
      %v968 = vsel %vm580, %v964, 0.0
      %969 = vadd.xlane.f32.xlu0 %v968
      %v970 = vpop.xlane.xlu0 %969
      %v971 = vrcp.pop %v967
      %v972 = vmul.f32 %v967, %v971
      %v973 = vsub.f32 1.0, %v972
      %v974 = vmul.f32 %v971, %v973
      %v975 = vadd.f32 %v971, %v974
      %vm976 = vweird.f32 %v967
      %vm977 = vweird.f32 %v971
      %vm978 = vmor %vm976, %vm977
      %v979 = vsel %vm978, %v971, %v975
      %v980 = vand.u32 2147483647, %v967
      %vm981 = vcmp.eq.f32.partialorder %v980, 8.507059e+37
      %v982 = vand.u32 %v967, 2147483648
      %v983 = vor.u32 1.1754944e-38, %v982
      %v984 = vsel %vm981, %v983, %v979
      %v985 = vmul.f32 %v962, %v984
      %v986 = vrcp.pop %v970
      %v987 = vmul.f32 %v970, %v986
      %v988 = vsub.f32 1.0, %v987
      %v989 = vmul.f32 %v986, %v988
      %v990 = vadd.f32 %v986, %v989
      %vm991 = vweird.f32 %v970
      %vm992 = vweird.f32 %v986
      %vm993 = vmor %vm991, %vm992
      %v994 = vsel %vm993, %v986, %v990
      %v995 = vand.u32 2147483647, %v970
      %vm996 = vcmp.eq.f32.partialorder %v995, 8.507059e+37
      %v997 = vand.u32 %v970, 2147483648
      %v998 = vor.u32 1.1754944e-38, %v997
      %v999 = vsel %vm996, %v998, %v994
      %v1000 = vmul.f32 %v964, %v999
      %1001 = vrot.lane.b32.xlu0 %v530, 40
      %v1002 = vpop.permute.xlu0 %1001
      %1003 = vrot.lane.b32.xlu0 %v533, 40
      %v1004 = vpop.permute.xlu0 %1003
      %v1008 = vsel %vm580, %v985, 0
      %v1011 = vsel %vm580, %v1000, 0
      %1013 = vmatpush.msra.mxu0 0.0
      %1014 = vmatpush.msra.mxu0 0.0
      %1015 = vmatpush.msra.mxu0 0.0
      %1016 = vmatpush.msra.mxu0 0.0
      %1017 = vmatpush.msra.mxu0 0.0
      %1018 = vmatpush.msra.mxu0 0.0
      %1019 = vmatpush.msra.mxu0 0.0
      %1020 = vmatpush.msra.mxu0 0.0
      %1021 = vmatpush.msra.mxu0 0.0
      %1022 = vmatpush.msra.mxu0 0.0
      %1023 = vmatpush.msra.mxu0 0.0
      %1024 = vmatpush.msra.mxu0 0.0
      %1025 = vmatpush.msra.mxu0 0.0
      %1026 = vmatpush.msra.mxu0 0.0
      %1027 = vmatpush.msra.mxu0 %v1004
      %1028 = vmatpush.msra.mxu0 %v1002
      %1029 = vmatmul.f32.gmra.mxu0 %v1008
      %v1030 = vpop.f32.mrf.mxu0
      %v1031 = vadd.f32 0.0, %v1030
      %1032 = vmatmul.f32.gmra.mxu0 %v1011
      %v1033 = vpop.f32.mrf.mxu0
      %v1034 = vadd.f32 0.0, %v1033
      %1035 = vdwg.mxu0
      %1038 = vrot.lane.b32.xlu0 %v783, 8
      %v1039 = vpop.permute.xlu0 %1038
      %1040 = vrot.lane.b32.xlu0 %v786, 8
      %v1041 = vpop.permute.xlu0 %1040
      %1046 = vrot.lane.b32.xlu0 %v907, 16
      %v1047 = vpop.permute.xlu0 %1046
      %1048 = vrot.lane.b32.xlu0 %v910, 16
      %v1049 = vpop.permute.xlu0 %1048
      %1054 = vrot.lane.b32.xlu0 %v1031, 24
      %v1055 = vpop.permute.xlu0 %1054
      %1056 = vrot.lane.b32.xlu0 %v1034, 24
      %v1057 = vpop.permute.xlu0 %1056
      %v1060 = vsel %vm546, %v659, %v1039
      %v1061 = vsel %vm546, %v662, %v1041
      %v1062 = vsel %vm580, %v1060, %v1047
      %v1063 = vsel %vm580, %v1061, %v1049
      %vm1064 = vcmask 195584
      %v1065 = vsel %vm1064, %v1062, %v1055
      %v1066 = vsel %vm1064, %v1063, %v1057
      %v1068 = vperm.slane %v539, 0
      %v1071 = vsel %vm505, %v1065, 0
      %v1074 = vsel %vm505, %v1066, 0
      %1076 = vmatpush.msra.mxu0 0.0
      %1077 = vmatpush.msra.mxu0 0.0
      %1078 = vmatpush.msra.mxu0 0.0
      %1079 = vmatpush.msra.mxu0 0.0
      %1080 = vmatpush.msra.mxu0 0.0
      %1081 = vmatpush.msra.mxu0 0.0
      %1082 = vmatpush.msra.mxu0 0.0
      %1083 = vmatpush.msra.mxu0 0.0
      %1084 = vmatpush.msra.mxu0 0.0
      %1085 = vmatpush.msra.mxu0 0.0
      %1086 = vmatpush.msra.mxu0 0.0
      %1087 = vmatpush.msra.mxu0 0.0
      %1088 = vmatpush.msra.mxu0 %v538
      %1089 = vmatpush.msra.mxu0 %v537
      %1090 = vmatpush.msra.mxu0 %v536
      %1091 = vmatpush.msra.mxu0 %v535
      %1092 = vmatmul.f32.gmra.mxu0 %v1071
      %v1093 = vpop.f32.mrf.mxu0
      %v1094 = vadd.f32 %v1068, %v1093
      %1095 = vmatmul.f32.gmra.mxu0 %v1074
      %v1096 = vpop.f32.mrf.mxu0
      %v1097 = vadd.f32 %v1068, %v1096
      %1098 = vdwg.mxu0
      %v1099 = vadd.f32 %v495, %v1094
      %v1100 = vadd.f32 %v496, %v1097
      %v1101 = vld [vmem:[%s5] sm:$0x1]
      %v1102 = vld [vmem:[%s6] sm:$0x1]
      %v1103 = vsel %vm505, %v1099, 0.0
      %1104 = vadd.xlane.f32.xlu0 %v1103
      %v1105 = vpop.xlane.xlu0 %1104
      %v1106 = vsel %vm505, %v1100, 0.0
      %1107 = vadd.xlane.f32.xlu0 %v1106
      %v1108 = vpop.xlane.xlu0 %1107
      %v1109 = vrcp.pop 32.0
      %v1110 = vmul.f32 32.0, %v1109
      %v1111 = vsub.f32 1.0, %v1110
      %v1112 = vmul.f32 %v1109, %v1111
      %v1113 = vadd.f32 %v1109, %v1112
      %vm1114 = vweird.f32 %v1109
      %v1115 = vsel %vm1114, %v1109, %v1113
      %v1116 = vmul.f32 %v1105, %v1115
      %v1117 = vmul.f32 %v1108, %v1115
      %v1118 = vsub.f32 %v1099, %v1116
      %v1119 = vsub.f32 %v1100, %v1117
      %v1120 = vmul.f32 %v1118, %v1118
      %v1121 = vmul.f32 %v1119, %v1119
      %v1122 = vsel %vm505, %v1120, 0.0
      %1123 = vadd.xlane.f32.xlu0 %v1122
      %v1124 = vpop.xlane.xlu0 %1123
      %v1125 = vsel %vm505, %v1121, 0.0
      %1126 = vadd.xlane.f32.xlu0 %v1125
      %v1127 = vpop.xlane.xlu0 %1126
      %v1128 = vmul.f32 %v1124, %v1115
      %v1129 = vmul.f32 %v1127, %v1115
      %v1130 = vadd.f32 %v1128, 1e-05
      %v1131 = vadd.f32 %v1129, 1e-05
      %v1132 = vrsqrt.pop %v1130
      %v1133 = vmul.f32 %v1132, %v1130
      %v1134 = vmul.f32 %v1133, %v1132
      %v1135 = vmul.f32 0.5, %v1134
      %v1136 = vsub.f32 1.5, %v1135
      %v1137 = vmul.f32 %v1132, %v1136
      %vm1138 = vweird.f32 %v1130
      %vm1139 = vweird.f32 %v1132
      %vm1140 = vmor %vm1138, %vm1139
      %v1141 = vsel %vm1140, %v1132, %v1137
      %v1142 = vrsqrt.pop %v1131
      %v1143 = vmul.f32 %v1142, %v1131
      %v1144 = vmul.f32 %v1143, %v1142
      %v1145 = vmul.f32 0.5, %v1144
      %v1146 = vsub.f32 1.5, %v1145
      %v1147 = vmul.f32 %v1142, %v1146
      %vm1148 = vweird.f32 %v1131
      %vm1149 = vweird.f32 %v1142
      %vm1150 = vmor %vm1148, %vm1149
      %v1151 = vsel %vm1150, %v1142, %v1147
      %v1152 = vmul.f32 %v1118, %v1141
      %v1153 = vmul.f32 %v1119, %v1151
      %v1155 = vperm.slane %v1101, 0
      %v1157 = vmul.f32 %v1152, %v1155
      %v1158 = vmul.f32 %v1153, %v1155
      %v1160 = vperm.slane %v1102, 0
      %v1162 = vadd.f32 %v1157, %v1160
      %v1163 = vadd.f32 %v1158, %v1160
      %v1164 = vld [vmem:[%s7] sm:$0xff]
      %v1165 = vld [vmem:[%s7 + $0x8] sm:$0xff]
      %v1166 = vld [vmem:[%s7 + $0x10] sm:$0xff]
      %v1167 = vld [vmem:[%s7 + $0x18] sm:$0xff]
      %v1168 = vld [vmem:[%s8] sm:$0x1]
      %v1170 = vperm.slane %v1168, 0
      %v1173 = vsel %vm505, %v1162, 0
      %v1176 = vsel %vm505, %v1163, 0
      %1178 = vmatpush.msra.mxu0 0.0
      %1179 = vmatpush.msra.mxu0 0.0
      %1180 = vmatpush.msra.mxu0 0.0
      %1181 = vmatpush.msra.mxu0 0.0
      %1182 = vmatpush.msra.mxu0 0.0
      %1183 = vmatpush.msra.mxu0 0.0
      %1184 = vmatpush.msra.mxu0 0.0
      %1185 = vmatpush.msra.mxu0 0.0
      %1186 = vmatpush.msra.mxu0 0.0
      %1187 = vmatpush.msra.mxu0 0.0
      %1188 = vmatpush.msra.mxu0 0.0
      %1189 = vmatpush.msra.mxu0 0.0
      %1190 = vmatpush.msra.mxu0 %v1167
      %1191 = vmatpush.msra.mxu0 %v1166
      %1192 = vmatpush.msra.mxu0 %v1165
      %1193 = vmatpush.msra.mxu0 %v1164
      %1194 = vmatmul.f32.gmra.mxu0 %v1173
      %v1195 = vpop.f32.mrf.mxu0
      %v1196 = vadd.f32 %v1170, %v1195
      %1197 = vmatmul.f32.gmra.mxu0 %v1176
      %v1198 = vpop.f32.mrf.mxu0
      %v1199 = vadd.f32 %v1170, %v1198
      %1200 = vdwg.mxu0
      %v1201 = vmax.f32 %v1196, 0.0
      %v1202 = vmax.f32 %v1199, 0.0
      %v1203 = vld [vmem:[%s9] sm:$0xff]
      %v1204 = vld [vmem:[%s9 + $0x8] sm:$0xff]
      %v1205 = vld [vmem:[%s9 + $0x10] sm:$0xff]
      %v1206 = vld [vmem:[%s9 + $0x18] sm:$0xff]
      %v1207 = vld [vmem:[%s9 + $0x20] sm:$0xff]
      %v1208 = vld [vmem:[%s9 + $0x28] sm:$0xff]
      %v1209 = vld [vmem:[%s9 + $0x30] sm:$0xff]
      %v1210 = vld [vmem:[%s9 + $0x38] sm:$0xff]
      %v1211 = vld [vmem:[%s10] sm:$0x1]
      %v1213 = vperm.slane %v1211, 0
      %vm1215 = vcmask 523264
      %v1217 = vsel %vm1215, %v1201, 0
      %v1220 = vsel %vm1215, %v1202, 0
      %1222 = vmatpush.msra.mxu0 0.0
      %1223 = vmatpush.msra.mxu0 0.0
      %1224 = vmatpush.msra.mxu0 0.0
      %1225 = vmatpush.msra.mxu0 0.0
      %1226 = vmatpush.msra.mxu0 0.0
      %1227 = vmatpush.msra.mxu0 0.0
      %1228 = vmatpush.msra.mxu0 0.0
      %1229 = vmatpush.msra.mxu0 0.0
      %1230 = vmatpush.msra.mxu0 %v1210
      %1231 = vmatpush.msra.mxu0 %v1209
      %1232 = vmatpush.msra.mxu0 %v1208
      %1233 = vmatpush.msra.mxu0 %v1207
      %1234 = vmatpush.msra.mxu0 %v1206
      %1235 = vmatpush.msra.mxu0 %v1205
      %1236 = vmatpush.msra.mxu0 %v1204
      %1237 = vmatpush.msra.mxu0 %v1203
      %1238 = vmatmul.f32.gmra.mxu0 %v1217
      %v1239 = vpop.f32.mrf.mxu0
      %v1240 = vadd.f32 %v1213, %v1239
      %1241 = vmatmul.f32.gmra.mxu0 %v1220
      %v1242 = vpop.f32.mrf.mxu0
      %v1243 = vadd.f32 %v1213, %v1242
      %1244 = vdwg.mxu0
      %v1245 = vadd.f32 %v1162, %v1240
      %v1246 = vadd.f32 %v1163, %v1243
      %v1247 = vld [vmem:[%s11] sm:$0x1]
      %v1248 = vld [vmem:[%s12] sm:$0x1]
      %v1249 = vsel %vm505, %v1245, 0.0
      %1250 = vadd.xlane.f32.xlu0 %v1249
      %v1251 = vpop.xlane.xlu0 %1250
      %v1252 = vsel %vm505, %v1246, 0.0
      %1253 = vadd.xlane.f32.xlu0 %v1252
      %v1254 = vpop.xlane.xlu0 %1253
      %v1255 = vmul.f32 %v1251, %v1115
      %v1256 = vmul.f32 %v1254, %v1115
      %v1257 = vsub.f32 %v1245, %v1255
      %v1258 = vsub.f32 %v1246, %v1256
      %v1259 = vmul.f32 %v1257, %v1257
      %v1260 = vmul.f32 %v1258, %v1258
      %v1261 = vsel %vm505, %v1259, 0.0
      %1262 = vadd.xlane.f32.xlu0 %v1261
      %v1263 = vpop.xlane.xlu0 %1262
      %v1264 = vsel %vm505, %v1260, 0.0
      %1265 = vadd.xlane.f32.xlu0 %v1264
      %v1266 = vpop.xlane.xlu0 %1265
      %v1267 = vmul.f32 %v1263, %v1115
      %v1268 = vmul.f32 %v1266, %v1115
      %v1269 = vadd.f32 %v1267, 1e-05
      %v1270 = vadd.f32 %v1268, 1e-05
      %v1271 = vrsqrt.pop %v1269
      %v1272 = vmul.f32 %v1271, %v1269
      %v1273 = vmul.f32 %v1272, %v1271
      %v1274 = vmul.f32 0.5, %v1273
      %v1275 = vsub.f32 1.5, %v1274
      %v1276 = vmul.f32 %v1271, %v1275
      %vm1277 = vweird.f32 %v1269
      %vm1278 = vweird.f32 %v1271
      %vm1279 = vmor %vm1277, %vm1278
      %v1280 = vsel %vm1279, %v1271, %v1276
      %v1281 = vrsqrt.pop %v1270
      %v1282 = vmul.f32 %v1281, %v1270
      %v1283 = vmul.f32 %v1282, %v1281
      %v1284 = vmul.f32 0.5, %v1283
      %v1285 = vsub.f32 1.5, %v1284
      %v1286 = vmul.f32 %v1281, %v1285
      %vm1287 = vweird.f32 %v1270
      %vm1288 = vweird.f32 %v1281
      %vm1289 = vmor %vm1287, %vm1288
      %v1290 = vsel %vm1289, %v1281, %v1286
      %v1291 = vmul.f32 %v1257, %v1280
      %v1292 = vmul.f32 %v1258, %v1290
      %v1294 = vperm.slane %v1247, 0
      %v1296 = vmul.f32 %v1291, %v1294
      %v1297 = vmul.f32 %v1292, %v1294
      %v1299 = vperm.slane %v1248, 0
      %v1301 = vadd.f32 %v1296, %v1299
      %v1302 = vadd.f32 %v1297, %v1299
      %v1303 = vld [vmem:[%s13] sm:$0x1]
      %v1304 = vld [vmem:[%s14] sm:$0x1]
      %v1305 = vsel %vm505, %v1301, 0.0
      %1306 = vadd.xlane.f32.xlu0 %v1305
      %v1307 = vpop.xlane.xlu0 %1306
      %v1308 = vsel %vm505, %v1302, 0.0
      %1309 = vadd.xlane.f32.xlu0 %v1308
      %v1310 = vpop.xlane.xlu0 %1309
      %v1311 = vmul.f32 %v1307, %v1115
      %v1312 = vmul.f32 %v1310, %v1115
      %v1313 = vsub.f32 %v1301, %v1311
      %v1314 = vsub.f32 %v1302, %v1312
      %v1315 = vmul.f32 %v1313, %v1313
      %v1316 = vmul.f32 %v1314, %v1314
      %v1317 = vsel %vm505, %v1315, 0.0
      %1318 = vadd.xlane.f32.xlu0 %v1317
      %v1319 = vpop.xlane.xlu0 %1318
      %v1320 = vsel %vm505, %v1316, 0.0
      %1321 = vadd.xlane.f32.xlu0 %v1320
      %v1322 = vpop.xlane.xlu0 %1321
      %v1323 = vmul.f32 %v1319, %v1115
      %v1324 = vmul.f32 %v1322, %v1115
      %v1325 = vadd.f32 %v1323, 1e-05
      %v1326 = vadd.f32 %v1324, 1e-05
      %v1327 = vrsqrt.pop %v1325
      %v1328 = vmul.f32 %v1327, %v1325
      %v1329 = vmul.f32 %v1328, %v1327
      %v1330 = vmul.f32 0.5, %v1329
      %v1331 = vsub.f32 1.5, %v1330
      %v1332 = vmul.f32 %v1327, %v1331
      %vm1333 = vweird.f32 %v1325
      %vm1334 = vweird.f32 %v1327
      %vm1335 = vmor %vm1333, %vm1334
      %v1336 = vsel %vm1335, %v1327, %v1332
      %v1337 = vrsqrt.pop %v1326
      %v1338 = vmul.f32 %v1337, %v1326
      %v1339 = vmul.f32 %v1338, %v1337
      %v1340 = vmul.f32 0.5, %v1339
      %v1341 = vsub.f32 1.5, %v1340
      %v1342 = vmul.f32 %v1337, %v1341
      %vm1343 = vweird.f32 %v1326
      %vm1344 = vweird.f32 %v1337
      %vm1345 = vmor %vm1343, %vm1344
      %v1346 = vsel %vm1345, %v1337, %v1342
      %v1347 = vmul.f32 %v1313, %v1336
      %v1348 = vmul.f32 %v1314, %v1346
      %v1350 = vperm.slane %v1303, 0
      %v1352 = vmul.f32 %v1347, %v1350
      %v1353 = vmul.f32 %v1348, %v1350
      %v1355 = vperm.slane %v1304, 0
      %v1357 = vadd.f32 %v1352, %v1355
      %v1358 = vadd.f32 %v1353, %v1355
      %1359 = vst.msk [vmem:[%s494] sm:$0xff] %vm505, %v1357
      %1360 = vst.msk [vmem:[%s494 + $0x8] sm:$0xff] %vm505, %v1358
      %p1361 = scmp.lt.s32.totalorder %s26, 1
      %s1362 = scalar_select %p1361, %s26, 1
      %s1363 = smul.addr %s1362, 2
      %s1364 = smul.addr %s1363, 8
      %s1365 = scalar_lea.vmem %s15, %s1364
      // Predicated region
      $region81: #{model_forward.8} parent=79 // pred_check
        %p1366 = pneg %p364
      $region82: #{model_forward.8} parent=79 // pred_check_branch
        %1368 = sbr.rel (%p1366) target = $region84
      $region83: #{model_forward.8} parent=79 // pred_region
        _
      $region84: #{model_forward.8} parent=79 // pred_fallthru
        _
    $region80: #{model_forward.8} parent=5 // pred_fallthru
      _
    %p1369 = scmp.le.s32.totalorder 2, %s21
    // Predicated region
    $region85: #{model_forward.8} parent=5 // pred_check
      %p1370 = pneg %p1369
    $region86: #{model_forward.8} parent=5 // pred_check_branch
      %1372 = sbr.rel (%p1370) target = $region88
    $region87: #{model_forward.8} parent=5 // pred_region
      %s1373 = ssub.s32 %s21, 2
      // Predicated region
      $region89: #{model_forward.8} parent=87 // pred_check
        %p1374 = pneg %p370
      $region90: #{model_forward.8} parent=87 // pred_check_branch
        %1376 = sbr.rel (%p1374) target = $region92
      $region91: #{model_forward.8} parent=87 // pred_region
        %p1377 = scmp.lt.s32.totalorder %s27, 1
        %s1378 = scalar_select %p1377, %s27, 1
        %s1379 = smul.addr %s1378, 2
        %s1380 = smul.addr %s1379, 8
        %s1381 = scalar_lea.vmem %s15, %s1380
      $region92: #{model_forward.8} parent=87 // pred_fallthru
        _
    $region88: #{model_forward.8} parent=5 // pred_fallthru
      _
  $region6: #{model_forward.8} parent=0 // loop_footer
    %s25 = sadd.s32 1, %s21
  $region7: #{model_forward.8} parent=0 // loop_footer_branch
    %20 = sbr.rel target = $region3
  $region8: #{model_forward.8} parent=0 // loop_exit
    _

// kernel: model_forward.9
$region0: #{model_forward.9}
  #allocation0 [shape = 'u32[]', space=smem, size = 0x4, offset = 0x4, fixed_abs, tag = 'smem constant byte address 0x4 - core index']
  #allocation1 [shape = 'u32[72,128]{1,0:T(1,128)}', space=vmem, size = 0x9000, scoped, tag = 'internal scratch']
  %s0 = inlined_call_operand.vmem [shape: f32[2,16,32], index: 0, kind: input, shape index: {}]
  %s1 = inlined_call_operand.vmem [shape: f32[2,16,32], index: 1, kind: input, shape index: {}]
  %s2 = inlined_call_operand.vmem [shape: f32[32,96], index: 2, kind: input, shape index: {}]
  %s3 = inlined_call_operand.vmem [shape: f32[1,96], index: 3, kind: input, shape index: {}]
  %s4 = inlined_call_operand.vmem [shape: f32[32,32], index: 4, kind: input, shape index: {}]
  %s5 = inlined_call_operand.vmem [shape: f32[1,32], index: 5, kind: input, shape index: {}]
  %s6 = inlined_call_operand.vmem [shape: f32[32,32], index: 6, kind: input, shape index: {}]
  %s7 = inlined_call_operand.vmem [shape: f32[1,32], index: 7, kind: input, shape index: {}]
  %s8 = inlined_call_operand.vmem [shape: f32[32,64], index: 8, kind: input, shape index: {}]
  %s9 = inlined_call_operand.vmem [shape: f32[1,64], index: 9, kind: input, shape index: {}]
  %s10 = inlined_call_operand.vmem [shape: f32[32,32], index: 10, kind: input, shape index: {}]
  %s11 = inlined_call_operand.vmem [shape: f32[1,32], index: 11, kind: input, shape index: {}]
  %s12 = inlined_call_operand.vmem [shape: f32[1,32], index: 12, kind: input, shape index: {}]
  %s13 = inlined_call_operand.vmem [shape: f32[1,32], index: 13, kind: input, shape index: {}]
  %s14 = inlined_call_operand.vmem [shape: f32[1,32], index: 14, kind: input, shape index: {}]
  %s15 = inlined_call_operand.vmem [shape: f32[1,32], index: 15, kind: input, shape index: {}]
  %s16 = inlined_call_operand.vmem [shape: f32[32,64], index: 16, kind: input, shape index: {}]
  %s17 = inlined_call_operand.vmem [shape: f32[1,64], index: 17, kind: input, shape index: {}]
  %s18 = inlined_call_operand.vmem [shape: f32[64,32], index: 18, kind: input, shape index: {}]
  %s19 = inlined_call_operand.vmem [shape: f32[1,32], index: 19, kind: input, shape index: {}]
  %s20 = inlined_call_operand.vmem [shape: f32[1,32], index: 20, kind: input, shape index: {}]
  %s21 = inlined_call_operand.vmem [shape: f32[1,32], index: 21, kind: input, shape index: {}]
  %s22 = inlined_call_operand.vmem [shape: f32[1,32], index: 22, kind: input, shape index: {}]
  %s23 = inlined_call_operand.vmem [shape: f32[1,32], index: 23, kind: input, shape index: {}]
  %s24 = inlined_call_operand.vmem [shape: f32[2,16,32], index: 24, kind: output, shape index: {}]
  %s25 = sld [smem:[#allocation0]]
  $region129: #{model_forward.9} parent=0
    _
  %s27 = ssub.s32 1, %s25
  %s28 = scalar_select 0, %s27, %s25
  loop: start=0, step=1, limit=4
  $region2: #{model_forward.9} parent=0 // loop_pre_header
    _
  $region3: #{model_forward.9} parent=0 // loop_header
    %s30 = sphi 0, %s34
    %p31 = scmp.ge.s32.totalorder %s30, 4
    %s40 = sphi 0, %s42
    %s43 = sphi 0, %s40
    %s44 = sphi 0, %s43
    %s60 = sphi 0, %s44
    %s66 = sphi 0, %s68
    %s69 = sphi 0, %s66
    %s70 = sphi 0, %s69
    %s86 = sphi 0, %s70
    %s90 = sphi 0, %s90
    %s92 = sphi 0, %s90
    %s93 = sphi 0, %s92
    %s107 = sphi 0, %s93
    %s111 = sphi 0, %s111
    %s113 = sphi 0, %s111
    %s114 = sphi 0, %s113
    %s128 = sphi 0, %s114
    %s132 = sphi 0, %s132
    %s134 = sphi 0, %s132
    %s135 = sphi 0, %s134
    %s149 = sphi 0, %s135
    %s153 = sphi 0, %s153
    %s155 = sphi 0, %s153
    %s156 = sphi 0, %s155
    %s170 = sphi 0, %s156
    %s174 = sphi 0, %s174
    %s176 = sphi 0, %s174
    %s177 = sphi 0, %s176
    %s191 = sphi 0, %s177
    %s195 = sphi 0, %s195
    %s197 = sphi 0, %s195
    %s198 = sphi 0, %s197
    %s212 = sphi 0, %s198
    %s216 = sphi 0, %s216
    %s218 = sphi 0, %s216
    %s219 = sphi 0, %s218
    %s233 = sphi 0, %s219
    %s237 = sphi 0, %s237
    %s239 = sphi 0, %s237
    %s240 = sphi 0, %s239
    %s254 = sphi 0, %s240
    %s258 = sphi 0, %s258
    %s260 = sphi 0, %s258
    %s261 = sphi 0, %s260
    %s275 = sphi 0, %s261
    %s279 = sphi 0, %s279
    %s281 = sphi 0, %s279
    %s282 = sphi 0, %s281
    %s296 = sphi 0, %s282
    %s300 = sphi 0, %s300
    %s302 = sphi 0, %s300
    %s303 = sphi 0, %s302
    %s317 = sphi 0, %s303
    %s321 = sphi 0, %s321
    %s323 = sphi 0, %s321
    %s324 = sphi 0, %s323
    %s338 = sphi 0, %s324
    %s342 = sphi 0, %s342
    %s344 = sphi 0, %s342
    %s345 = sphi 0, %s344
    %s359 = sphi 0, %s345
    %s363 = sphi 0, %s363
    %s365 = sphi 0, %s363
    %s366 = sphi 0, %s365
    %s380 = sphi 0, %s366
    %s384 = sphi 0, %s384
    %s386 = sphi 0, %s384
    %s387 = sphi 0, %s386
    %s401 = sphi 0, %s387
    %s405 = sphi 0, %s405
    %s407 = sphi 0, %s405
    %s408 = sphi 0, %s407
    %s422 = sphi 0, %s408
    %s426 = sphi 0, %s426
    %s428 = sphi 0, %s426
    %s429 = sphi 0, %s428
    %s443 = sphi 0, %s429
    %s447 = sphi 0, %s447
    %s449 = sphi 0, %s447
    %s450 = sphi 0, %s449
    %s464 = sphi 0, %s450
    %s468 = sphi 0, %s468
    %s470 = sphi 0, %s468
    %s471 = sphi 0, %s470
    %s485 = sphi 0, %s471
    %s489 = sphi 0, %s489
    %s491 = sphi 0, %s489
    %s492 = sphi 0, %s491
    %s506 = sphi 0, %s492
    %s510 = sphi 0, %s510
    %s512 = sphi 0, %s510
    %s513 = sphi 0, %s512
    %s527 = sphi 0, %s513
    %s531 = sphi 0, %s531
    %s533 = sphi 0, %s531
    %s534 = sphi 0, %s533
    %s548 = sphi 0, %s534
    %s554 = sphi 0, %s556
    %s557 = sphi 0, %s554
    %s558 = sphi 0, %s557
    %s574 = sphi 0, %s558
  $region4: #{model_forward.9} parent=0 // loop_header_branch
    %33 = sbr.rel (%p31) target = $region8
  $region5: #{model_forward.9} parent=0 // loop_body
    %s35 = ssub.s32 %s30, 1
    %s36 = ssub.s32 %s30, 2
    %s37 = sadd.s32 %s30, 1
    %s38 = ssub.s32 %s30, %s37
    %p39 = scmp.eq.s32.totalorder %s38, 0
    %s41 = sadd.s32 %s40, 1
    %s42 = scalar_select %p39, %s40, %s41
    %p45 = pneg %p39
    %p46 = scmp.eq.s32.totalorder %s30, 1
    %p47 = por %p45, %p46
    %p48 = scmp.ne.s32.totalorder %s40, %s43
    %p49 = scmp.eq.s32.totalorder %s30, 0
    %p50 = por %p48, %p49
    %p51 = scmp.ne.s32.totalorder %s40, %s43
    %p52 = scmp.eq.s32.totalorder %s35, 1
    %p53 = por %p51, %p52
    %p54 = scmp.ne.s32.totalorder %s43, %s44
    %p55 = scmp.eq.s32.totalorder %s35, 0
    %p56 = por %p54, %p55
    %p57 = scmp.ne.s32.totalorder %s43, %s44
    %p58 = scmp.eq.s32.totalorder %s36, 1
    %p59 = por %p57, %p58
    %p61 = scmp.ne.s32.totalorder %s44, %s60
    %p62 = scmp.eq.s32.totalorder %s36, 0
    %p63 = por %p61, %p62
    %s64 = ssub.s32 %s30, %s37
    %p65 = scmp.eq.s32.totalorder %s64, 0
    %s67 = sadd.s32 %s66, 1
    %s68 = scalar_select %p65, %s66, %s67
    %p71 = pneg %p65
    %p72 = scmp.eq.s32.totalorder %s30, 1
    %p73 = por %p71, %p72
    %p74 = scmp.ne.s32.totalorder %s66, %s69
    %p75 = scmp.eq.s32.totalorder %s30, 0
    %p76 = por %p74, %p75
    %p77 = scmp.ne.s32.totalorder %s66, %s69
    %p78 = scmp.eq.s32.totalorder %s35, 1
    %p79 = por %p77, %p78
    %p80 = scmp.ne.s32.totalorder %s69, %s70
    %p81 = scmp.eq.s32.totalorder %s35, 0
    %p82 = por %p80, %p81
    %p83 = scmp.ne.s32.totalorder %s69, %s70
    %p84 = scmp.eq.s32.totalorder %s36, 1
    %p85 = por %p83, %p84
    %p87 = scmp.ne.s32.totalorder %s70, %s86
    %p88 = scmp.eq.s32.totalorder %s36, 0
    %p89 = por %p87, %p88
    %s91 = sadd.s32 %s90, 1
    %p94 = scmp.eq.s32.totalorder %s30, 1
    %p95 = scmp.ne.s32.totalorder %s90, %s92
    %p96 = scmp.eq.s32.totalorder %s30, 0
    %p97 = por %p95, %p96
    %p98 = scmp.ne.s32.totalorder %s90, %s92
    %p99 = scmp.eq.s32.totalorder %s35, 1
    %p100 = por %p98, %p99
    %p101 = scmp.ne.s32.totalorder %s92, %s93
    %p102 = scmp.eq.s32.totalorder %s35, 0
    %p103 = por %p101, %p102
    %p104 = scmp.ne.s32.totalorder %s92, %s93
    %p105 = scmp.eq.s32.totalorder %s36, 1
    %p106 = por %p104, %p105
    %p108 = scmp.ne.s32.totalorder %s93, %s107
    %p109 = scmp.eq.s32.totalorder %s36, 0
    %p110 = por %p108, %p109
    %s112 = sadd.s32 %s111, 1
    %p115 = scmp.eq.s32.totalorder %s30, 1
    %p116 = scmp.ne.s32.totalorder %s111, %s113
    %p117 = scmp.eq.s32.totalorder %s30, 0
    %p118 = por %p116, %p117
    %p119 = scmp.ne.s32.totalorder %s111, %s113
    %p120 = scmp.eq.s32.totalorder %s35, 1
    %p121 = por %p119, %p120
    %p122 = scmp.ne.s32.totalorder %s113, %s114
    %p123 = scmp.eq.s32.totalorder %s35, 0
    %p124 = por %p122, %p123
    %p125 = scmp.ne.s32.totalorder %s113, %s114
    %p126 = scmp.eq.s32.totalorder %s36, 1
    %p127 = por %p125, %p126
    %p129 = scmp.ne.s32.totalorder %s114, %s128
    %p130 = scmp.eq.s32.totalorder %s36, 0
    %p131 = por %p129, %p130
    %s133 = sadd.s32 %s132, 1
    %p136 = scmp.eq.s32.totalorder %s30, 1
    %p137 = scmp.ne.s32.totalorder %s132, %s134
    %p138 = scmp.eq.s32.totalorder %s30, 0
    %p139 = por %p137, %p138
    %p140 = scmp.ne.s32.totalorder %s132, %s134
    %p141 = scmp.eq.s32.totalorder %s35, 1
    %p142 = por %p140, %p141
    %p143 = scmp.ne.s32.totalorder %s134, %s135
    %p144 = scmp.eq.s32.totalorder %s35, 0
    %p145 = por %p143, %p144
    %p146 = scmp.ne.s32.totalorder %s134, %s135
    %p147 = scmp.eq.s32.totalorder %s36, 1
    %p148 = por %p146, %p147
    %p150 = scmp.ne.s32.totalorder %s135, %s149
    %p151 = scmp.eq.s32.totalorder %s36, 0
    %p152 = por %p150, %p151
    %s154 = sadd.s32 %s153, 1
    %p157 = scmp.eq.s32.totalorder %s30, 1
    %p158 = scmp.ne.s32.totalorder %s153, %s155
    %p159 = scmp.eq.s32.totalorder %s30, 0
    %p160 = por %p158, %p159
    %p161 = scmp.ne.s32.totalorder %s153, %s155
    %p162 = scmp.eq.s32.totalorder %s35, 1
    %p163 = por %p161, %p162
    %p164 = scmp.ne.s32.totalorder %s155, %s156
    %p165 = scmp.eq.s32.totalorder %s35, 0
    %p166 = por %p164, %p165
    %p167 = scmp.ne.s32.totalorder %s155, %s156
    %p168 = scmp.eq.s32.totalorder %s36, 1
    %p169 = por %p167, %p168
    %p171 = scmp.ne.s32.totalorder %s156, %s170
    %p172 = scmp.eq.s32.totalorder %s36, 0
    %p173 = por %p171, %p172
    %s175 = sadd.s32 %s174, 1
    %p178 = scmp.eq.s32.totalorder %s30, 1
    %p179 = scmp.ne.s32.totalorder %s174, %s176
    %p180 = scmp.eq.s32.totalorder %s30, 0
    %p181 = por %p179, %p180
    %p182 = scmp.ne.s32.totalorder %s174, %s176
    %p183 = scmp.eq.s32.totalorder %s35, 1
    %p184 = por %p182, %p183
    %p185 = scmp.ne.s32.totalorder %s176, %s177
    %p186 = scmp.eq.s32.totalorder %s35, 0
    %p187 = por %p185, %p186
    %p188 = scmp.ne.s32.totalorder %s176, %s177
    %p189 = scmp.eq.s32.totalorder %s36, 1
    %p190 = por %p188, %p189
    %p192 = scmp.ne.s32.totalorder %s177, %s191
    %p193 = scmp.eq.s32.totalorder %s36, 0
    %p194 = por %p192, %p193
    %s196 = sadd.s32 %s195, 1
    %p199 = scmp.eq.s32.totalorder %s30, 1
    %p200 = scmp.ne.s32.totalorder %s195, %s197
    %p201 = scmp.eq.s32.totalorder %s30, 0
    %p202 = por %p200, %p201
    %p203 = scmp.ne.s32.totalorder %s195, %s197
    %p204 = scmp.eq.s32.totalorder %s35, 1
    %p205 = por %p203, %p204
    %p206 = scmp.ne.s32.totalorder %s197, %s198
    %p207 = scmp.eq.s32.totalorder %s35, 0
    %p208 = por %p206, %p207
    %p209 = scmp.ne.s32.totalorder %s197, %s198
    %p210 = scmp.eq.s32.totalorder %s36, 1
    %p211 = por %p209, %p210
    %p213 = scmp.ne.s32.totalorder %s198, %s212
    %p214 = scmp.eq.s32.totalorder %s36, 0
    %p215 = por %p213, %p214
    %s217 = sadd.s32 %s216, 1
    %p220 = scmp.eq.s32.totalorder %s30, 1
    %p221 = scmp.ne.s32.totalorder %s216, %s218
    %p222 = scmp.eq.s32.totalorder %s30, 0
    %p223 = por %p221, %p222
    %p224 = scmp.ne.s32.totalorder %s216, %s218
    %p225 = scmp.eq.s32.totalorder %s35, 1
    %p226 = por %p224, %p225
    %p227 = scmp.ne.s32.totalorder %s218, %s219
    %p228 = scmp.eq.s32.totalorder %s35, 0
    %p229 = por %p227, %p228
    %p230 = scmp.ne.s32.totalorder %s218, %s219
    %p231 = scmp.eq.s32.totalorder %s36, 1
    %p232 = por %p230, %p231
    %p234 = scmp.ne.s32.totalorder %s219, %s233
    %p235 = scmp.eq.s32.totalorder %s36, 0
    %p236 = por %p234, %p235
    %s238 = sadd.s32 %s237, 1
    %p241 = scmp.eq.s32.totalorder %s30, 1
    %p242 = scmp.ne.s32.totalorder %s237, %s239
    %p243 = scmp.eq.s32.totalorder %s30, 0
    %p244 = por %p242, %p243
    %p245 = scmp.ne.s32.totalorder %s237, %s239
    %p246 = scmp.eq.s32.totalorder %s35, 1
    %p247 = por %p245, %p246
    %p248 = scmp.ne.s32.totalorder %s239, %s240
    %p249 = scmp.eq.s32.totalorder %s35, 0
    %p250 = por %p248, %p249
    %p251 = scmp.ne.s32.totalorder %s239, %s240
    %p252 = scmp.eq.s32.totalorder %s36, 1
    %p253 = por %p251, %p252
    %p255 = scmp.ne.s32.totalorder %s240, %s254
    %p256 = scmp.eq.s32.totalorder %s36, 0
    %p257 = por %p255, %p256
    %s259 = sadd.s32 %s258, 1
    %p262 = scmp.eq.s32.totalorder %s30, 1
    %p263 = scmp.ne.s32.totalorder %s258, %s260
    %p264 = scmp.eq.s32.totalorder %s30, 0
    %p265 = por %p263, %p264
    %p266 = scmp.ne.s32.totalorder %s258, %s260
    %p267 = scmp.eq.s32.totalorder %s35, 1
    %p268 = por %p266, %p267
    %p269 = scmp.ne.s32.totalorder %s260, %s261
    %p270 = scmp.eq.s32.totalorder %s35, 0
    %p271 = por %p269, %p270
    %p272 = scmp.ne.s32.totalorder %s260, %s261
    %p273 = scmp.eq.s32.totalorder %s36, 1
    %p274 = por %p272, %p273
    %p276 = scmp.ne.s32.totalorder %s261, %s275
    %p277 = scmp.eq.s32.totalorder %s36, 0
    %p278 = por %p276, %p277
    %s280 = sadd.s32 %s279, 1
    %p283 = scmp.eq.s32.totalorder %s30, 1
    %p284 = scmp.ne.s32.totalorder %s279, %s281
    %p285 = scmp.eq.s32.totalorder %s30, 0
    %p286 = por %p284, %p285
    %p287 = scmp.ne.s32.totalorder %s279, %s281
    %p288 = scmp.eq.s32.totalorder %s35, 1
    %p289 = por %p287, %p288
    %p290 = scmp.ne.s32.totalorder %s281, %s282
    %p291 = scmp.eq.s32.totalorder %s35, 0
    %p292 = por %p290, %p291
    %p293 = scmp.ne.s32.totalorder %s281, %s282
    %p294 = scmp.eq.s32.totalorder %s36, 1
    %p295 = por %p293, %p294
    %p297 = scmp.ne.s32.totalorder %s282, %s296
    %p298 = scmp.eq.s32.totalorder %s36, 0
    %p299 = por %p297, %p298
    %s301 = sadd.s32 %s300, 1
    %p304 = scmp.eq.s32.totalorder %s30, 1
    %p305 = scmp.ne.s32.totalorder %s300, %s302
    %p306 = scmp.eq.s32.totalorder %s30, 0
    %p307 = por %p305, %p306
    %p308 = scmp.ne.s32.totalorder %s300, %s302
    %p309 = scmp.eq.s32.totalorder %s35, 1
    %p310 = por %p308, %p309
    %p311 = scmp.ne.s32.totalorder %s302, %s303
    %p312 = scmp.eq.s32.totalorder %s35, 0
    %p313 = por %p311, %p312
    %p314 = scmp.ne.s32.totalorder %s302, %s303
    %p315 = scmp.eq.s32.totalorder %s36, 1
    %p316 = por %p314, %p315
    %p318 = scmp.ne.s32.totalorder %s303, %s317
    %p319 = scmp.eq.s32.totalorder %s36, 0
    %p320 = por %p318, %p319
    %s322 = sadd.s32 %s321, 1
    %p325 = scmp.eq.s32.totalorder %s30, 1
    %p326 = scmp.ne.s32.totalorder %s321, %s323
    %p327 = scmp.eq.s32.totalorder %s30, 0
    %p328 = por %p326, %p327
    %p329 = scmp.ne.s32.totalorder %s321, %s323
    %p330 = scmp.eq.s32.totalorder %s35, 1
    %p331 = por %p329, %p330
    %p332 = scmp.ne.s32.totalorder %s323, %s324
    %p333 = scmp.eq.s32.totalorder %s35, 0
    %p334 = por %p332, %p333
    %p335 = scmp.ne.s32.totalorder %s323, %s324
    %p336 = scmp.eq.s32.totalorder %s36, 1
    %p337 = por %p335, %p336
    %p339 = scmp.ne.s32.totalorder %s324, %s338
    %p340 = scmp.eq.s32.totalorder %s36, 0
    %p341 = por %p339, %p340
    %s343 = sadd.s32 %s342, 1
    %p346 = scmp.eq.s32.totalorder %s30, 1
    %p347 = scmp.ne.s32.totalorder %s342, %s344
    %p348 = scmp.eq.s32.totalorder %s30, 0
    %p349 = por %p347, %p348
    %p350 = scmp.ne.s32.totalorder %s342, %s344
    %p351 = scmp.eq.s32.totalorder %s35, 1
    %p352 = por %p350, %p351
    %p353 = scmp.ne.s32.totalorder %s344, %s345
    %p354 = scmp.eq.s32.totalorder %s35, 0
    %p355 = por %p353, %p354
    %p356 = scmp.ne.s32.totalorder %s344, %s345
    %p357 = scmp.eq.s32.totalorder %s36, 1
    %p358 = por %p356, %p357
    %p360 = scmp.ne.s32.totalorder %s345, %s359
    %p361 = scmp.eq.s32.totalorder %s36, 0
    %p362 = por %p360, %p361
    %s364 = sadd.s32 %s363, 1
    %p367 = scmp.eq.s32.totalorder %s30, 1
    %p368 = scmp.ne.s32.totalorder %s363, %s365
    %p369 = scmp.eq.s32.totalorder %s30, 0
    %p370 = por %p368, %p369
    %p371 = scmp.ne.s32.totalorder %s363, %s365
    %p372 = scmp.eq.s32.totalorder %s35, 1
    %p373 = por %p371, %p372
    %p374 = scmp.ne.s32.totalorder %s365, %s366
    %p375 = scmp.eq.s32.totalorder %s35, 0
    %p376 = por %p374, %p375
    %p377 = scmp.ne.s32.totalorder %s365, %s366
    %p378 = scmp.eq.s32.totalorder %s36, 1
    %p379 = por %p377, %p378
    %p381 = scmp.ne.s32.totalorder %s366, %s380
    %p382 = scmp.eq.s32.totalorder %s36, 0
    %p383 = por %p381, %p382
    %s385 = sadd.s32 %s384, 1
    %p388 = scmp.eq.s32.totalorder %s30, 1
    %p389 = scmp.ne.s32.totalorder %s384, %s386
    %p390 = scmp.eq.s32.totalorder %s30, 0
    %p391 = por %p389, %p390
    %p392 = scmp.ne.s32.totalorder %s384, %s386
    %p393 = scmp.eq.s32.totalorder %s35, 1
    %p394 = por %p392, %p393
    %p395 = scmp.ne.s32.totalorder %s386, %s387
    %p396 = scmp.eq.s32.totalorder %s35, 0
    %p397 = por %p395, %p396
    %p398 = scmp.ne.s32.totalorder %s386, %s387
    %p399 = scmp.eq.s32.totalorder %s36, 1
    %p400 = por %p398, %p399
    %p402 = scmp.ne.s32.totalorder %s387, %s401
    %p403 = scmp.eq.s32.totalorder %s36, 0
    %p404 = por %p402, %p403
    %s406 = sadd.s32 %s405, 1
    %p409 = scmp.eq.s32.totalorder %s30, 1
    %p410 = scmp.ne.s32.totalorder %s405, %s407
    %p411 = scmp.eq.s32.totalorder %s30, 0
    %p412 = por %p410, %p411
    %p413 = scmp.ne.s32.totalorder %s405, %s407
    %p414 = scmp.eq.s32.totalorder %s35, 1
    %p415 = por %p413, %p414
    %p416 = scmp.ne.s32.totalorder %s407, %s408
    %p417 = scmp.eq.s32.totalorder %s35, 0
    %p418 = por %p416, %p417
    %p419 = scmp.ne.s32.totalorder %s407, %s408
    %p420 = scmp.eq.s32.totalorder %s36, 1
    %p421 = por %p419, %p420
    %p423 = scmp.ne.s32.totalorder %s408, %s422
    %p424 = scmp.eq.s32.totalorder %s36, 0
    %p425 = por %p423, %p424
    %s427 = sadd.s32 %s426, 1
    %p430 = scmp.eq.s32.totalorder %s30, 1
    %p431 = scmp.ne.s32.totalorder %s426, %s428
    %p432 = scmp.eq.s32.totalorder %s30, 0
    %p433 = por %p431, %p432
    %p434 = scmp.ne.s32.totalorder %s426, %s428
    %p435 = scmp.eq.s32.totalorder %s35, 1
    %p436 = por %p434, %p435
    %p437 = scmp.ne.s32.totalorder %s428, %s429
    %p438 = scmp.eq.s32.totalorder %s35, 0
    %p439 = por %p437, %p438
    %p440 = scmp.ne.s32.totalorder %s428, %s429
    %p441 = scmp.eq.s32.totalorder %s36, 1
    %p442 = por %p440, %p441
    %p444 = scmp.ne.s32.totalorder %s429, %s443
    %p445 = scmp.eq.s32.totalorder %s36, 0
    %p446 = por %p444, %p445
    %s448 = sadd.s32 %s447, 1
    %p451 = scmp.eq.s32.totalorder %s30, 1
    %p452 = scmp.ne.s32.totalorder %s447, %s449
    %p453 = scmp.eq.s32.totalorder %s30, 0
    %p454 = por %p452, %p453
    %p455 = scmp.ne.s32.totalorder %s447, %s449
    %p456 = scmp.eq.s32.totalorder %s35, 1
    %p457 = por %p455, %p456
    %p458 = scmp.ne.s32.totalorder %s449, %s450
    %p459 = scmp.eq.s32.totalorder %s35, 0
    %p460 = por %p458, %p459
    %p461 = scmp.ne.s32.totalorder %s449, %s450
    %p462 = scmp.eq.s32.totalorder %s36, 1
    %p463 = por %p461, %p462
    %p465 = scmp.ne.s32.totalorder %s450, %s464
    %p466 = scmp.eq.s32.totalorder %s36, 0
    %p467 = por %p465, %p466
    %s469 = sadd.s32 %s468, 1
    %p472 = scmp.eq.s32.totalorder %s30, 1
    %p473 = scmp.ne.s32.totalorder %s468, %s470
    %p474 = scmp.eq.s32.totalorder %s30, 0
    %p475 = por %p473, %p474
    %p476 = scmp.ne.s32.totalorder %s468, %s470
    %p477 = scmp.eq.s32.totalorder %s35, 1
    %p478 = por %p476, %p477
    %p479 = scmp.ne.s32.totalorder %s470, %s471
    %p480 = scmp.eq.s32.totalorder %s35, 0
    %p481 = por %p479, %p480
    %p482 = scmp.ne.s32.totalorder %s470, %s471
    %p483 = scmp.eq.s32.totalorder %s36, 1
    %p484 = por %p482, %p483
    %p486 = scmp.ne.s32.totalorder %s471, %s485
    %p487 = scmp.eq.s32.totalorder %s36, 0
    %p488 = por %p486, %p487
    %s490 = sadd.s32 %s489, 1
    %p493 = scmp.eq.s32.totalorder %s30, 1
    %p494 = scmp.ne.s32.totalorder %s489, %s491
    %p495 = scmp.eq.s32.totalorder %s30, 0
    %p496 = por %p494, %p495
    %p497 = scmp.ne.s32.totalorder %s489, %s491
    %p498 = scmp.eq.s32.totalorder %s35, 1
    %p499 = por %p497, %p498
    %p500 = scmp.ne.s32.totalorder %s491, %s492
    %p501 = scmp.eq.s32.totalorder %s35, 0
    %p502 = por %p500, %p501
    %p503 = scmp.ne.s32.totalorder %s491, %s492
    %p504 = scmp.eq.s32.totalorder %s36, 1
    %p505 = por %p503, %p504
    %p507 = scmp.ne.s32.totalorder %s492, %s506
    %p508 = scmp.eq.s32.totalorder %s36, 0
    %p509 = por %p507, %p508
    %s511 = sadd.s32 %s510, 1
    %p514 = scmp.eq.s32.totalorder %s30, 1
    %p515 = scmp.ne.s32.totalorder %s510, %s512
    %p516 = scmp.eq.s32.totalorder %s30, 0
    %p517 = por %p515, %p516
    %p518 = scmp.ne.s32.totalorder %s510, %s512
    %p519 = scmp.eq.s32.totalorder %s35, 1
    %p520 = por %p518, %p519
    %p521 = scmp.ne.s32.totalorder %s512, %s513
    %p522 = scmp.eq.s32.totalorder %s35, 0
    %p523 = por %p521, %p522
    %p524 = scmp.ne.s32.totalorder %s512, %s513
    %p525 = scmp.eq.s32.totalorder %s36, 1
    %p526 = por %p524, %p525
    %p528 = scmp.ne.s32.totalorder %s513, %s527
    %p529 = scmp.eq.s32.totalorder %s36, 0
    %p530 = por %p528, %p529
    %s532 = sadd.s32 %s531, 1
    %p535 = scmp.eq.s32.totalorder %s30, 1
    %p536 = scmp.ne.s32.totalorder %s531, %s533
    %p537 = scmp.eq.s32.totalorder %s30, 0
    %p538 = por %p536, %p537
    %p539 = scmp.ne.s32.totalorder %s531, %s533
    %p540 = scmp.eq.s32.totalorder %s35, 1
    %p541 = por %p539, %p540
    %p542 = scmp.ne.s32.totalorder %s533, %s534
    %p543 = scmp.eq.s32.totalorder %s35, 0
    %p544 = por %p542, %p543
    %p545 = scmp.ne.s32.totalorder %s533, %s534
    %p546 = scmp.eq.s32.totalorder %s36, 1
    %p547 = por %p545, %p546
    %p549 = scmp.ne.s32.totalorder %s534, %s548
    %p550 = scmp.eq.s32.totalorder %s36, 0
    %p551 = por %p549, %p550
    %s552 = ssub.s32 %s30, %s37
    %p553 = scmp.eq.s32.totalorder %s552, 0
    %s555 = sadd.s32 %s554, 1
    %s556 = scalar_select %p553, %s554, %s555
    %p559 = pneg %p553
    %p560 = scmp.eq.s32.totalorder %s30, 1
    %p561 = por %p559, %p560
    %p562 = scmp.ne.s32.totalorder %s554, %s557
    %p563 = scmp.eq.s32.totalorder %s30, 0
    %p564 = por %p562, %p563
    %p565 = scmp.ne.s32.totalorder %s554, %s557
    %p566 = scmp.eq.s32.totalorder %s35, 1
    %p567 = por %p565, %p566
    %p568 = scmp.ne.s32.totalorder %s557, %s558
    %p569 = scmp.eq.s32.totalorder %s35, 0
    %p570 = por %p568, %p569
    %p571 = scmp.ne.s32.totalorder %s557, %s558
    %p572 = scmp.eq.s32.totalorder %s36, 1
    %p573 = por %p571, %p572
    %p575 = scmp.ne.s32.totalorder %s558, %s574
    %p576 = scmp.eq.s32.totalorder %s36, 0
    %p577 = por %p575, %p576
    %p578 = scmp.le.s32.totalorder 1, %s30
    %p579 = scmp.lt.s32.totalorder %s30, 3
    %p580 = pnand %p578, %p579
    %p581 = pneg %p580
    // Predicated region
    $region9: #{model_forward.9} parent=5 // pred_check
      _
    $region10: #{model_forward.9} parent=5 // pred_check_branch
      %583 = sbr.rel (%p580) target = $region12
    $region11: #{model_forward.9} parent=5 // pred_region
      %s584 = ssub.s32 %s30, 1
      // Predicated region
      $region13: #{model_forward.9} parent=11 // pred_check
        %p585 = pneg %p103
      $region14: #{model_forward.9} parent=11 // pred_check_branch
        %587 = sbr.rel (%p585) target = $region16
      $region15: #{model_forward.9} parent=11 // pred_region
        _
      $region16: #{model_forward.9} parent=11 // pred_fallthru
        _
      // Predicated region
      $region17: #{model_forward.9} parent=11 // pred_check
        %p588 = pneg %p124
      $region18: #{model_forward.9} parent=11 // pred_check_branch
        %590 = sbr.rel (%p588) target = $region20
      $region19: #{model_forward.9} parent=11 // pred_region
        _
      $region20: #{model_forward.9} parent=11 // pred_fallthru
        _
      // Predicated region
      $region21: #{model_forward.9} parent=11 // pred_check
        %p591 = pneg %p145
      $region22: #{model_forward.9} parent=11 // pred_check_branch
        %593 = sbr.rel (%p591) target = $region24
      $region23: #{model_forward.9} parent=11 // pred_region
        _
      $region24: #{model_forward.9} parent=11 // pred_fallthru
        _
      // Predicated region
      $region25: #{model_forward.9} parent=11 // pred_check
        %p594 = pneg %p166
      $region26: #{model_forward.9} parent=11 // pred_check_branch
        %596 = sbr.rel (%p594) target = $region28
      $region27: #{model_forward.9} parent=11 // pred_region
        _
      $region28: #{model_forward.9} parent=11 // pred_fallthru
        _
      // Predicated region
      $region29: #{model_forward.9} parent=11 // pred_check
        %p597 = pneg %p187
      $region30: #{model_forward.9} parent=11 // pred_check_branch
        %599 = sbr.rel (%p597) target = $region32
      $region31: #{model_forward.9} parent=11 // pred_region
        _
      $region32: #{model_forward.9} parent=11 // pred_fallthru
        _
      // Predicated region
      $region33: #{model_forward.9} parent=11 // pred_check
        %p600 = pneg %p208
      $region34: #{model_forward.9} parent=11 // pred_check_branch
        %602 = sbr.rel (%p600) target = $region36
      $region35: #{model_forward.9} parent=11 // pred_region
        _
      $region36: #{model_forward.9} parent=11 // pred_fallthru
        _
      // Predicated region
      $region37: #{model_forward.9} parent=11 // pred_check
        %p603 = pneg %p229
      $region38: #{model_forward.9} parent=11 // pred_check_branch
        %605 = sbr.rel (%p603) target = $region40
      $region39: #{model_forward.9} parent=11 // pred_region
        _
      $region40: #{model_forward.9} parent=11 // pred_fallthru
        _
      // Predicated region
      $region41: #{model_forward.9} parent=11 // pred_check
        %p606 = pneg %p250
      $region42: #{model_forward.9} parent=11 // pred_check_branch
        %608 = sbr.rel (%p606) target = $region44
      $region43: #{model_forward.9} parent=11 // pred_region
        _
      $region44: #{model_forward.9} parent=11 // pred_fallthru
        _
      // Predicated region
      $region45: #{model_forward.9} parent=11 // pred_check
        %p609 = pneg %p271
      $region46: #{model_forward.9} parent=11 // pred_check_branch
        %611 = sbr.rel (%p609) target = $region48
      $region47: #{model_forward.9} parent=11 // pred_region
        _
      $region48: #{model_forward.9} parent=11 // pred_fallthru
        _
      // Predicated region
      $region49: #{model_forward.9} parent=11 // pred_check
        %p612 = pneg %p292
      $region50: #{model_forward.9} parent=11 // pred_check_branch
        %614 = sbr.rel (%p612) target = $region52
      $region51: #{model_forward.9} parent=11 // pred_region
        _
      $region52: #{model_forward.9} parent=11 // pred_fallthru
        _
      // Predicated region
      $region53: #{model_forward.9} parent=11 // pred_check
        %p615 = pneg %p313
      $region54: #{model_forward.9} parent=11 // pred_check_branch
        %617 = sbr.rel (%p615) target = $region56
      $region55: #{model_forward.9} parent=11 // pred_region
        _
      $region56: #{model_forward.9} parent=11 // pred_fallthru
        _
      // Predicated region
      $region57: #{model_forward.9} parent=11 // pred_check
        %p618 = pneg %p334
      $region58: #{model_forward.9} parent=11 // pred_check_branch
        %620 = sbr.rel (%p618) target = $region60
      $region59: #{model_forward.9} parent=11 // pred_region
        _
      $region60: #{model_forward.9} parent=11 // pred_fallthru
        _
      // Predicated region
      $region61: #{model_forward.9} parent=11 // pred_check
        %p621 = pneg %p355
      $region62: #{model_forward.9} parent=11 // pred_check_branch
        %623 = sbr.rel (%p621) target = $region64
      $region63: #{model_forward.9} parent=11 // pred_region
        _
      $region64: #{model_forward.9} parent=11 // pred_fallthru
        _
      // Predicated region
      $region65: #{model_forward.9} parent=11 // pred_check
        %p624 = pneg %p376
      $region66: #{model_forward.9} parent=11 // pred_check_branch
        %626 = sbr.rel (%p624) target = $region68
      $region67: #{model_forward.9} parent=11 // pred_region
        _
      $region68: #{model_forward.9} parent=11 // pred_fallthru
        _
      // Predicated region
      $region69: #{model_forward.9} parent=11 // pred_check
        %p627 = pneg %p397
      $region70: #{model_forward.9} parent=11 // pred_check_branch
        %629 = sbr.rel (%p627) target = $region72
      $region71: #{model_forward.9} parent=11 // pred_region
        _
      $region72: #{model_forward.9} parent=11 // pred_fallthru
        _
      // Predicated region
      $region73: #{model_forward.9} parent=11 // pred_check
        %p630 = pneg %p418
      $region74: #{model_forward.9} parent=11 // pred_check_branch
        %632 = sbr.rel (%p630) target = $region76
      $region75: #{model_forward.9} parent=11 // pred_region
        _
      $region76: #{model_forward.9} parent=11 // pred_fallthru
        _
      // Predicated region
      $region77: #{model_forward.9} parent=11 // pred_check
        %p633 = pneg %p439
      $region78: #{model_forward.9} parent=11 // pred_check_branch
        %635 = sbr.rel (%p633) target = $region80
      $region79: #{model_forward.9} parent=11 // pred_region
        _
      $region80: #{model_forward.9} parent=11 // pred_fallthru
        _
      // Predicated region
      $region81: #{model_forward.9} parent=11 // pred_check
        %p636 = pneg %p460
      $region82: #{model_forward.9} parent=11 // pred_check_branch
        %638 = sbr.rel (%p636) target = $region84
      $region83: #{model_forward.9} parent=11 // pred_region
        _
      $region84: #{model_forward.9} parent=11 // pred_fallthru
        _
      // Predicated region
      $region85: #{model_forward.9} parent=11 // pred_check
        %p639 = pneg %p481
      $region86: #{model_forward.9} parent=11 // pred_check_branch
        %641 = sbr.rel (%p639) target = $region88
      $region87: #{model_forward.9} parent=11 // pred_region
        _
      $region88: #{model_forward.9} parent=11 // pred_fallthru
        _
      // Predicated region
      $region89: #{model_forward.9} parent=11 // pred_check
        %p642 = pneg %p502
      $region90: #{model_forward.9} parent=11 // pred_check_branch
        %644 = sbr.rel (%p642) target = $region92
      $region91: #{model_forward.9} parent=11 // pred_region
        _
      $region92: #{model_forward.9} parent=11 // pred_fallthru
        _
      // Predicated region
      $region93: #{model_forward.9} parent=11 // pred_check
        %p645 = pneg %p523
      $region94: #{model_forward.9} parent=11 // pred_check_branch
        %647 = sbr.rel (%p645) target = $region96
      $region95: #{model_forward.9} parent=11 // pred_region
        _
      $region96: #{model_forward.9} parent=11 // pred_fallthru
        _
      // Predicated region
      $region97: #{model_forward.9} parent=11 // pred_check
        %p648 = pneg %p544
      $region98: #{model_forward.9} parent=11 // pred_check_branch
        %650 = sbr.rel (%p648) target = $region100
      $region99: #{model_forward.9} parent=11 // pred_region
        _
      $region100: #{model_forward.9} parent=11 // pred_fallthru
        _
    $region12: #{model_forward.9} parent=5 // pred_fallthru
      _
    %p651 = scmp.lt.s32.totalorder %s30, 2
    // Predicated region
    $region101: #{model_forward.9} parent=5 // pred_check
      %p652 = pneg %p651
    $region102: #{model_forward.9} parent=5 // pred_check_branch
      %654 = sbr.rel (%p652) target = $region104
    $region103: #{model_forward.9} parent=5 // pred_region
      // Predicated region
      $region105: #{model_forward.9} parent=103 // pred_check
        %p655 = pneg %p50
      $region106: #{model_forward.9} parent=103 // pred_check_branch
        %657 = sbr.rel (%p655) target = $region108
      $region107: #{model_forward.9} parent=103 // pred_region
        %p658 = scmp.lt.s32.totalorder %s30, 1
        %s659 = scalar_select %p658, %s30, 1
        %s660 = smul.addr %s659, 2
        %s661 = smul.addr %s660, 8
        %s662 = scalar_lea.vmem %s0, %s661
      $region108: #{model_forward.9} parent=103 // pred_fallthru
        _
      // Predicated region
      $region109: #{model_forward.9} parent=103 // pred_check
        %p663 = pneg %p76
      $region110: #{model_forward.9} parent=103 // pred_check_branch
        %665 = sbr.rel (%p663) target = $region112
      $region111: #{model_forward.9} parent=103 // pred_region
        %p666 = scmp.lt.s32.totalorder %s30, 1
        %s667 = scalar_select %p666, %s30, 1
        %s668 = smul.addr %s667, 2
        %s669 = smul.addr %s668, 8
        %s670 = scalar_lea.vmem %s1, %s669
      $region112: #{model_forward.9} parent=103 // pred_fallthru
        _
    $region104: #{model_forward.9} parent=5 // pred_fallthru
      _
    %p671 = scmp.le.s32.totalorder 1, %s30
    %p672 = scmp.lt.s32.totalorder %s30, 3
    %p673 = pnand %p671, %p672
    %p674 = pneg %p673
    // Predicated region
    $region113: #{model_forward.9} parent=5 // pred_check
      _
    $region114: #{model_forward.9} parent=5 // pred_check_branch
      %676 = sbr.rel (%p673) target = $region116
    $region115: #{model_forward.9} parent=5 // pred_region
      %s677 = ssub.s32 %s30, 1
      %p678 = scmp.lt.s32.totalorder %s35, 1
      %s679 = scalar_select %p678, %s35, 1
      %s680 = smul.addr %s679, 2
      %s681 = smul.addr %s680, 8
      %s682 = scalar_lea.vmem %s0, %s681
      %p683 = pneg %p56
      %p684 = pneg %p53
      %p685 = scmp.lt.s32.totalorder %s35, 1
      %s686 = scalar_select %p685, %s35, 1
      %s687 = smul.addr %s686, 2
      %s688 = smul.addr %s687, 8
      %s689 = scalar_lea.vmem %s1, %s688
      %p690 = pneg %p82
      %p691 = pneg %p79
      %p692 = pneg %p103
      %p693 = pneg %p100
      %p694 = pneg %p124
      %p695 = pneg %p121
      %p696 = pneg %p145
      %p697 = pneg %p142
      %p698 = pneg %p166
      %p699 = pneg %p163
      %p700 = pneg %p187
      %p701 = pneg %p184
      %p702 = pneg %p208
      %p703 = pneg %p205
      %p704 = pneg %p229
      %p705 = pneg %p226
      %p706 = pneg %p250
      %p707 = pneg %p247
      %p708 = pneg %p271
      %p709 = pneg %p268
      %p710 = pneg %p292
      %p711 = pneg %p289
      %p712 = pneg %p313
      %p713 = pneg %p310
      %p714 = pneg %p334
      %p715 = pneg %p331
      %p716 = pneg %p355
      %p717 = pneg %p352
      %p718 = pneg %p376
      %p719 = pneg %p373
      %p720 = pneg %p397
      %p721 = pneg %p394
      %p722 = pneg %p418
      %p723 = pneg %p415
      %p724 = pneg %p439
      %p725 = pneg %p436
      %p726 = pneg %p460
      %p727 = pneg %p457
      %p728 = pneg %p481
      %p729 = pneg %p478
      %p730 = pneg %p502
      %p731 = pneg %p499
      %p732 = pneg %p523
      %p733 = pneg %p520
      %p734 = pneg %p544
      %p735 = pneg %p541
      %p736 = pneg %p570
      %p737 = pneg %p567
      %p738 = scmp.lt.s32.totalorder %s35, 1
      %s739 = scalar_select %p738, %s35, 1
      %s740 = smul.addr %s739, 2
      %s741 = smul.addr %s740, 8
      %s742 = scalar_lea.vmem %s24, %s741
      %p743 = scmp.lt.s32.totalorder %s35, 1
      %s744 = scalar_select %p743, %s35, 1
      %s745 = smul.addr %s744, 2
      %s746 = smul.addr %s745, 8
      %s747 = scalar_lea.vmem %s0, %s746
      %p748 = scmp.lt.s32.totalorder %s35, 1
      %s749 = scalar_select %p748, %s35, 1
      %s750 = smul.addr %s749, 2
      %s751 = smul.addr %s750, 8
      %s752 = scalar_lea.vmem %s1, %s751
      %p753 = scmp.lt.s32.totalorder %s35, 1
      %s754 = scalar_select %p753, %s35, 1
      %s755 = smul.addr %s754, 2
      %s756 = smul.addr %s755, 8
      %s757 = scalar_lea.vmem %s24, %s756
      %v758 = vld [vmem:[%s747] sm:$0xff]
      %v759 = vld [vmem:[%s747 + $0x8] sm:$0xff]
      %v760 = vld [vmem:[%s752] sm:$0xff]
      %v761 = vld [vmem:[%s752 + $0x8] sm:$0xff]
      %v762 = vld [vmem:[%s2] sm:$0xff]
      %v763 = vld [vmem:[%s2 + $0x8] sm:$0xff]
      %v764 = vld [vmem:[%s2 + $0x10] sm:$0xff]
      %v765 = vld [vmem:[%s2 + $0x18] sm:$0xff]
      %v766 = vld [vmem:[%s3] sm:$0x1]
      %v768 = vperm.slane %v766, 0
      %vm770 = vcmask 261120
      %v772 = vsel %vm770, %v758, 0
      %v775 = vsel %vm770, %v759, 0
      %777 = vmatpush.msra.mxu0 0.0
      %778 = vmatpush.msra.mxu0 0.0
      %779 = vmatpush.msra.mxu0 0.0
      %780 = vmatpush.msra.mxu0 0.0
      %781 = vmatpush.msra.mxu0 0.0
      %782 = vmatpush.msra.mxu0 0.0
      %783 = vmatpush.msra.mxu0 0.0
      %784 = vmatpush.msra.mxu0 0.0
      %785 = vmatpush.msra.mxu0 0.0
      %786 = vmatpush.msra.mxu0 0.0
      %787 = vmatpush.msra.mxu0 0.0
      %788 = vmatpush.msra.mxu0 0.0
      %789 = vmatpush.msra.mxu0 %v765
      %790 = vmatpush.msra.mxu0 %v764
      %791 = vmatpush.msra.mxu0 %v763
      %792 = vmatpush.msra.mxu0 %v762
      %793 = vmatmul.f32.gmra.mxu0 %v772
      %v794 = vpop.f32.mrf.mxu0
      %v795 = vadd.f32 %v768, %v794
      %796 = vmatmul.f32.gmra.mxu0 %v775
      %v797 = vpop.f32.mrf.mxu0
      %v798 = vadd.f32 %v768, %v797
      %799 = vdwg.mxu0
      %v800 = vld [vmem:[%s4] sm:$0xff]
      %v801 = vld [vmem:[%s4 + $0x8] sm:$0xff]
      %v802 = vld [vmem:[%s4 + $0x10] sm:$0xff]
      %v803 = vld [vmem:[%s4 + $0x18] sm:$0xff]
      %v804 = vld [vmem:[%s5] sm:$0x1]
      %807 = vrot.lane.b32.xlu0 %v795, 96
      %v808 = vpop.permute.xlu0 %807
      %809 = vrot.lane.b32.xlu0 %v798, 96
      %v810 = vpop.permute.xlu0 %809
      %vm811 = vcmask 64512
      %v812 = vsel %vm811, %v795, 0
      %v814 = vsel %vm811, %v798, 0
      %v816 = vsel %vm811, %v808, 0
      %v818 = vsel %vm811, %v810, 0
      %820 = vmatpush.xpose.msra.mxu0 0.0
      %821 = vmatpush.xpose.msra.mxu0 0.0
      %822 = vmatpush.xpose.msra.mxu0 0.0
      %823 = vmatpush.xpose.msra.mxu0 0.0
      %824 = vmatpush.xpose.msra.mxu0 0.0
      %825 = vmatpush.xpose.msra.mxu0 0.0
      %826 = vmatpush.xpose.msra.mxu0 0.0
      %827 = vmatpush.xpose.msra.mxu0 0.0
      %828 = vmatpush.xpose.msra.mxu0 0.0
      %829 = vmatpush.xpose.msra.mxu0 0.0
      %830 = vmatpush.xpose.msra.mxu0 0.0
      %831 = vmatpush.xpose.msra.mxu0 0.0
      %832 = vmatpush.xpose.msra.mxu0 0.0
      %833 = vmatpush.xpose.msra.mxu0 0.0
      %834 = vmatpush.xpose.msra.mxu0 %v818
      %835 = vmatpush.xpose.msra.mxu0 %v816
      %836 = vmatmul.f32.gmra.mxu0 %v812
      %v837 = vpop.f32.mrf.mxu0
      %v838 = vadd.f32 0.0, %v837
      %839 = vmatmul.f32.gmra.mxu0 %v814
      %v840 = vpop.f32.mrf.mxu0
      %v841 = vadd.f32 0.0, %v840
      %842 = vdwg.mxu0
      %v843 = vmul.f32 %v838, 0.35355338
      %v844 = vmul.f32 %v841, 0.35355338
      %v845 = vlaneseq
      %v846 = vshrl.u32 %v845, 7
      %v847 = vadd.s32 %v846, 8
      %v848 = vlaneseq
      %v849 = vand.u32 %v848, 127
      %vm850 = vcmp.gt.s32.totalorder %v849, %v846
      %vm851 = vcmp.gt.s32.totalorder %v849, %v847
      %v852 = vsel %vm850, -1e+30, %v843
      %v853 = vsel %vm851, -1e+30, %v844
      %vm854 = vcmask 130048
      %v855 = vsel %vm854, %v852, -inf
      %856 = vmax.xlane.f32.xlu0 %v855
      %v857 = vpop.xlane.xlu0 %856
      %v858 = vsel %vm854, %v853, -inf
      %859 = vmax.xlane.f32.xlu0 %v858
      %v860 = vpop.xlane.xlu0 %859
      %v861 = vsub.f32 %v852, %v857
      %v862 = vsub.f32 %v853, %v860
      %v863 = vmul.f32 %v861, 1.442695
      %v864 = vpow.pop %v863
      %v865 = vmul.f32 %v862, 1.442695
      %v866 = vpow.pop %v865
      %v867 = vsel %vm854, %v864, 0.0
      %868 = vadd.xlane.f32.xlu0 %v867
      %v869 = vpop.xlane.xlu0 %868
      %v870 = vsel %vm854, %v866, 0.0
      %871 = vadd.xlane.f32.xlu0 %v870
      %v872 = vpop.xlane.xlu0 %871
      %v873 = vrcp.pop %v869
      %v874 = vmul.f32 %v869, %v873
      %v875 = vsub.f32 1.0, %v874
      %v876 = vmul.f32 %v873, %v875
      %v877 = vadd.f32 %v873, %v876
      %vm878 = vweird.f32 %v869
      %vm879 = vweird.f32 %v873
      %vm880 = vmor %vm878, %vm879
      %v881 = vsel %vm880, %v873, %v877
      %v882 = vand.u32 2147483647, %v869
      %vm883 = vcmp.eq.f32.partialorder %v882, 8.507059e+37
      %v884 = vand.u32 %v869, 2147483648
      %v885 = vor.u32 1.1754944e-38, %v884
      %v886 = vsel %vm883, %v885, %v881
      %v887 = vmul.f32 %v864, %v886
      %v888 = vrcp.pop %v872
      %v889 = vmul.f32 %v872, %v888
      %v890 = vsub.f32 1.0, %v889
      %v891 = vmul.f32 %v888, %v890
      %v892 = vadd.f32 %v888, %v891
      %vm893 = vweird.f32 %v872
      %vm894 = vweird.f32 %v888
      %vm895 = vmor %vm893, %vm894
      %v896 = vsel %vm895, %v888, %v892
      %v897 = vand.u32 2147483647, %v872
      %vm898 = vcmp.eq.f32.partialorder %v897, 8.507059e+37
      %v899 = vand.u32 %v872, 2147483648
      %v900 = vor.u32 1.1754944e-38, %v899
      %v901 = vsel %vm898, %v900, %v896
      %v902 = vmul.f32 %v866, %v901
      %903 = vrot.lane.b32.xlu0 %v795, 64
      %v904 = vpop.permute.xlu0 %903
      %905 = vrot.lane.b32.xlu0 %v798, 64
      %v906 = vpop.permute.xlu0 %905
      %v910 = vsel %vm854, %v887, 0
      %v913 = vsel %vm854, %v902, 0
      %915 = vmatpush.msra.mxu0 0.0
      %916 = vmatpush.msra.mxu0 0.0
      %917 = vmatpush.msra.mxu0 0.0
      %918 = vmatpush.msra.mxu0 0.0
      %919 = vmatpush.msra.mxu0 0.0
      %920 = vmatpush.msra.mxu0 0.0
      %921 = vmatpush.msra.mxu0 0.0
      %922 = vmatpush.msra.mxu0 0.0
      %923 = vmatpush.msra.mxu0 0.0
      %924 = vmatpush.msra.mxu0 0.0
      %925 = vmatpush.msra.mxu0 0.0
      %926 = vmatpush.msra.mxu0 0.0
      %927 = vmatpush.msra.mxu0 0.0
      %928 = vmatpush.msra.mxu0 0.0
      %929 = vmatpush.msra.mxu0 %v906
      %930 = vmatpush.msra.mxu0 %v904
      %931 = vmatmul.f32.gmra.mxu0 %v910
      %v932 = vpop.f32.mrf.mxu0
      %v933 = vadd.f32 0.0, %v932
      %934 = vmatmul.f32.gmra.mxu0 %v913
      %v935 = vpop.f32.mrf.mxu0
      %v936 = vadd.f32 0.0, %v935
      %937 = vdwg.mxu0
      %938 = vrot.lane.b32.xlu0 %v795, 120
      %v939 = vpop.permute.xlu0 %938
      %940 = vrot.lane.b32.xlu0 %v798, 120
      %v941 = vpop.permute.xlu0 %940
      %942 = vrot.lane.b32.xlu0 %v795, 88
      %v943 = vpop.permute.xlu0 %942
      %944 = vrot.lane.b32.xlu0 %v798, 88
      %v945 = vpop.permute.xlu0 %944
      %v946 = vsel %vm811, %v939, 0
      %v948 = vsel %vm811, %v941, 0
      %v950 = vsel %vm811, %v943, 0
      %v952 = vsel %vm811, %v945, 0
      %954 = vmatpush.xpose.msra.mxu0 0.0
      %955 = vmatpush.xpose.msra.mxu0 0.0
      %956 = vmatpush.xpose.msra.mxu0 0.0
      %957 = vmatpush.xpose.msra.mxu0 0.0
      %958 = vmatpush.xpose.msra.mxu0 0.0
      %959 = vmatpush.xpose.msra.mxu0 0.0
      %960 = vmatpush.xpose.msra.mxu0 0.0
      %961 = vmatpush.xpose.msra.mxu0 0.0
      %962 = vmatpush.xpose.msra.mxu0 0.0
      %963 = vmatpush.xpose.msra.mxu0 0.0
      %964 = vmatpush.xpose.msra.mxu0 0.0
      %965 = vmatpush.xpose.msra.mxu0 0.0
      %966 = vmatpush.xpose.msra.mxu0 0.0
      %967 = vmatpush.xpose.msra.mxu0 0.0
      %968 = vmatpush.xpose.msra.mxu0 %v952
      %969 = vmatpush.xpose.msra.mxu0 %v950
      %970 = vmatmul.f32.gmra.mxu0 %v946
      %v971 = vpop.f32.mrf.mxu0
      %v972 = vadd.f32 0.0, %v971
      %973 = vmatmul.f32.gmra.mxu0 %v948
      %v974 = vpop.f32.mrf.mxu0
      %v975 = vadd.f32 0.0, %v974
      %976 = vdwg.mxu0
      %v977 = vmul.f32 %v972, 0.35355338
      %v978 = vmul.f32 %v975, 0.35355338
      %v979 = vsel %vm850, -1e+30, %v977
      %v980 = vsel %vm851, -1e+30, %v978
      %v981 = vsel %vm854, %v979, -inf
      %982 = vmax.xlane.f32.xlu0 %v981
      %v983 = vpop.xlane.xlu0 %982
      %v984 = vsel %vm854, %v980, -inf
      %985 = vmax.xlane.f32.xlu0 %v984
      %v986 = vpop.xlane.xlu0 %985
      %v987 = vsub.f32 %v979, %v983
      %v988 = vsub.f32 %v980, %v986
      %v989 = vmul.f32 %v987, 1.442695
      %v990 = vpow.pop %v989
      %v991 = vmul.f32 %v988, 1.442695
      %v992 = vpow.pop %v991
      %v993 = vsel %vm854, %v990, 0.0
      %994 = vadd.xlane.f32.xlu0 %v993
      %v995 = vpop.xlane.xlu0 %994
      %v996 = vsel %vm854, %v992, 0.0
      %997 = vadd.xlane.f32.xlu0 %v996
      %v998 = vpop.xlane.xlu0 %997
      %v999 = vrcp.pop %v995
      %v1000 = vmul.f32 %v995, %v999
      %v1001 = vsub.f32 1.0, %v1000
      %v1002 = vmul.f32 %v999, %v1001
      %v1003 = vadd.f32 %v999, %v1002
      %vm1004 = vweird.f32 %v995
      %vm1005 = vweird.f32 %v999
      %vm1006 = vmor %vm1004, %vm1005
      %v1007 = vsel %vm1006, %v999, %v1003
      %v1008 = vand.u32 2147483647, %v995
      %vm1009 = vcmp.eq.f32.partialorder %v1008, 8.507059e+37
      %v1010 = vand.u32 %v995, 2147483648
      %v1011 = vor.u32 1.1754944e-38, %v1010
      %v1012 = vsel %vm1009, %v1011, %v1007
      %v1013 = vmul.f32 %v990, %v1012
      %v1014 = vrcp.pop %v998
      %v1015 = vmul.f32 %v998, %v1014
      %v1016 = vsub.f32 1.0, %v1015
      %v1017 = vmul.f32 %v1014, %v1016
      %v1018 = vadd.f32 %v1014, %v1017
      %vm1019 = vweird.f32 %v998
      %vm1020 = vweird.f32 %v1014
      %vm1021 = vmor %vm1019, %vm1020
      %v1022 = vsel %vm1021, %v1014, %v1018
      %v1023 = vand.u32 2147483647, %v998
      %vm1024 = vcmp.eq.f32.partialorder %v1023, 8.507059e+37
      %v1025 = vand.u32 %v998, 2147483648
      %v1026 = vor.u32 1.1754944e-38, %v1025
      %v1027 = vsel %vm1024, %v1026, %v1022
      %v1028 = vmul.f32 %v992, %v1027
      %1029 = vrot.lane.b32.xlu0 %v795, 56
      %v1030 = vpop.permute.xlu0 %1029
      %1031 = vrot.lane.b32.xlu0 %v798, 56
      %v1032 = vpop.permute.xlu0 %1031
      %v1036 = vsel %vm854, %v1013, 0
      %v1039 = vsel %vm854, %v1028, 0
      %1041 = vmatpush.msra.mxu0 0.0
      %1042 = vmatpush.msra.mxu0 0.0
      %1043 = vmatpush.msra.mxu0 0.0
      %1044 = vmatpush.msra.mxu0 0.0
      %1045 = vmatpush.msra.mxu0 0.0
      %1046 = vmatpush.msra.mxu0 0.0
      %1047 = vmatpush.msra.mxu0 0.0
      %1048 = vmatpush.msra.mxu0 0.0
      %1049 = vmatpush.msra.mxu0 0.0
      %1050 = vmatpush.msra.mxu0 0.0
      %1051 = vmatpush.msra.mxu0 0.0
      %1052 = vmatpush.msra.mxu0 0.0
      %1053 = vmatpush.msra.mxu0 0.0
      %1054 = vmatpush.msra.mxu0 0.0
      %1055 = vmatpush.msra.mxu0 %v1032
      %1056 = vmatpush.msra.mxu0 %v1030
      %1057 = vmatmul.f32.gmra.mxu0 %v1036
      %v1058 = vpop.f32.mrf.mxu0
      %v1059 = vadd.f32 0.0, %v1058
      %1060 = vmatmul.f32.gmra.mxu0 %v1039
      %v1061 = vpop.f32.mrf.mxu0
      %v1062 = vadd.f32 0.0, %v1061
      %1063 = vdwg.mxu0
      %1064 = vrot.lane.b32.xlu0 %v795, 112
      %v1065 = vpop.permute.xlu0 %1064
      %1066 = vrot.lane.b32.xlu0 %v798, 112
      %v1067 = vpop.permute.xlu0 %1066
      %1068 = vrot.lane.b32.xlu0 %v795, 80
      %v1069 = vpop.permute.xlu0 %1068
      %1070 = vrot.lane.b32.xlu0 %v798, 80
      %v1071 = vpop.permute.xlu0 %1070
      %v1072 = vsel %vm811, %v1065, 0
      %v1074 = vsel %vm811, %v1067, 0
      %v1076 = vsel %vm811, %v1069, 0
      %v1078 = vsel %vm811, %v1071, 0
      %1080 = vmatpush.xpose.msra.mxu0 0.0
      %1081 = vmatpush.xpose.msra.mxu0 0.0
      %1082 = vmatpush.xpose.msra.mxu0 0.0
      %1083 = vmatpush.xpose.msra.mxu0 0.0
      %1084 = vmatpush.xpose.msra.mxu0 0.0
      %1085 = vmatpush.xpose.msra.mxu0 0.0
      %1086 = vmatpush.xpose.msra.mxu0 0.0
      %1087 = vmatpush.xpose.msra.mxu0 0.0
      %1088 = vmatpush.xpose.msra.mxu0 0.0
      %1089 = vmatpush.xpose.msra.mxu0 0.0
      %1090 = vmatpush.xpose.msra.mxu0 0.0
      %1091 = vmatpush.xpose.msra.mxu0 0.0
      %1092 = vmatpush.xpose.msra.mxu0 0.0
      %1093 = vmatpush.xpose.msra.mxu0 0.0
      %1094 = vmatpush.xpose.msra.mxu0 %v1078
      %1095 = vmatpush.xpose.msra.mxu0 %v1076
      %1096 = vmatmul.f32.gmra.mxu0 %v1072
      %v1097 = vpop.f32.mrf.mxu0
      %v1098 = vadd.f32 0.0, %v1097
      %1099 = vmatmul.f32.gmra.mxu0 %v1074
      %v1100 = vpop.f32.mrf.mxu0
      %v1101 = vadd.f32 0.0, %v1100
      %1102 = vdwg.mxu0
      %v1103 = vmul.f32 %v1098, 0.35355338
      %v1104 = vmul.f32 %v1101, 0.35355338
      %v1105 = vsel %vm850, -1e+30, %v1103
      %v1106 = vsel %vm851, -1e+30, %v1104
      %v1107 = vsel %vm854, %v1105, -inf
      %1108 = vmax.xlane.f32.xlu0 %v1107
      %v1109 = vpop.xlane.xlu0 %1108
      %v1110 = vsel %vm854, %v1106, -inf
      %1111 = vmax.xlane.f32.xlu0 %v1110
      %v1112 = vpop.xlane.xlu0 %1111
      %v1113 = vsub.f32 %v1105, %v1109
      %v1114 = vsub.f32 %v1106, %v1112
      %v1115 = vmul.f32 %v1113, 1.442695
      %v1116 = vpow.pop %v1115
      %v1117 = vmul.f32 %v1114, 1.442695
      %v1118 = vpow.pop %v1117
      %v1119 = vsel %vm854, %v1116, 0.0
      %1120 = vadd.xlane.f32.xlu0 %v1119
      %v1121 = vpop.xlane.xlu0 %1120
      %v1122 = vsel %vm854, %v1118, 0.0
      %1123 = vadd.xlane.f32.xlu0 %v1122
      %v1124 = vpop.xlane.xlu0 %1123
      %v1125 = vrcp.pop %v1121
      %v1126 = vmul.f32 %v1121, %v1125
      %v1127 = vsub.f32 1.0, %v1126
      %v1128 = vmul.f32 %v1125, %v1127
      %v1129 = vadd.f32 %v1125, %v1128
      %vm1130 = vweird.f32 %v1121
      %vm1131 = vweird.f32 %v1125
      %vm1132 = vmor %vm1130, %vm1131
      %v1133 = vsel %vm1132, %v1125, %v1129
      %v1134 = vand.u32 2147483647, %v1121
      %vm1135 = vcmp.eq.f32.partialorder %v1134, 8.507059e+37
      %v1136 = vand.u32 %v1121, 2147483648
      %v1137 = vor.u32 1.1754944e-38, %v1136
      %v1138 = vsel %vm1135, %v1137, %v1133
      %v1139 = vmul.f32 %v1116, %v1138
      %v1140 = vrcp.pop %v1124
      %v1141 = vmul.f32 %v1124, %v1140
      %v1142 = vsub.f32 1.0, %v1141
      %v1143 = vmul.f32 %v1140, %v1142
      %v1144 = vadd.f32 %v1140, %v1143
      %vm1145 = vweird.f32 %v1124
      %vm1146 = vweird.f32 %v1140
      %vm1147 = vmor %vm1145, %vm1146
      %v1148 = vsel %vm1147, %v1140, %v1144
      %v1149 = vand.u32 2147483647, %v1124
      %vm1150 = vcmp.eq.f32.partialorder %v1149, 8.507059e+37
      %v1151 = vand.u32 %v1124, 2147483648
      %v1152 = vor.u32 1.1754944e-38, %v1151
      %v1153 = vsel %vm1150, %v1152, %v1148
      %v1154 = vmul.f32 %v1118, %v1153
      %1155 = vrot.lane.b32.xlu0 %v795, 48
      %v1156 = vpop.permute.xlu0 %1155
      %1157 = vrot.lane.b32.xlu0 %v798, 48
      %v1158 = vpop.permute.xlu0 %1157
      %v1162 = vsel %vm854, %v1139, 0
      %v1165 = vsel %vm854, %v1154, 0
      %1167 = vmatpush.msra.mxu0 0.0
      %1168 = vmatpush.msra.mxu0 0.0
      %1169 = vmatpush.msra.mxu0 0.0
      %1170 = vmatpush.msra.mxu0 0.0
      %1171 = vmatpush.msra.mxu0 0.0
      %1172 = vmatpush.msra.mxu0 0.0
      %1173 = vmatpush.msra.mxu0 0.0
      %1174 = vmatpush.msra.mxu0 0.0
      %1175 = vmatpush.msra.mxu0 0.0
      %1176 = vmatpush.msra.mxu0 0.0
      %1177 = vmatpush.msra.mxu0 0.0
      %1178 = vmatpush.msra.mxu0 0.0
      %1179 = vmatpush.msra.mxu0 0.0
      %1180 = vmatpush.msra.mxu0 0.0
      %1181 = vmatpush.msra.mxu0 %v1158
      %1182 = vmatpush.msra.mxu0 %v1156
      %1183 = vmatmul.f32.gmra.mxu0 %v1162
      %v1184 = vpop.f32.mrf.mxu0
      %v1185 = vadd.f32 0.0, %v1184
      %1186 = vmatmul.f32.gmra.mxu0 %v1165
      %v1187 = vpop.f32.mrf.mxu0
      %v1188 = vadd.f32 0.0, %v1187
      %1189 = vdwg.mxu0
      %1190 = vrot.lane.b32.xlu0 %v795, 104
      %v1191 = vpop.permute.xlu0 %1190
      %1192 = vrot.lane.b32.xlu0 %v798, 104
      %v1193 = vpop.permute.xlu0 %1192
      %1194 = vrot.lane.b32.xlu0 %v795, 72
      %v1195 = vpop.permute.xlu0 %1194
      %1196 = vrot.lane.b32.xlu0 %v798, 72
      %v1197 = vpop.permute.xlu0 %1196
      %v1198 = vsel %vm811, %v1191, 0
      %v1200 = vsel %vm811, %v1193, 0
      %v1202 = vsel %vm811, %v1195, 0
      %v1204 = vsel %vm811, %v1197, 0
      %1206 = vmatpush.xpose.msra.mxu0 0.0
      %1207 = vmatpush.xpose.msra.mxu0 0.0
      %1208 = vmatpush.xpose.msra.mxu0 0.0
      %1209 = vmatpush.xpose.msra.mxu0 0.0
      %1210 = vmatpush.xpose.msra.mxu0 0.0
      %1211 = vmatpush.xpose.msra.mxu0 0.0
      %1212 = vmatpush.xpose.msra.mxu0 0.0
      %1213 = vmatpush.xpose.msra.mxu0 0.0
      %1214 = vmatpush.xpose.msra.mxu0 0.0
      %1215 = vmatpush.xpose.msra.mxu0 0.0
      %1216 = vmatpush.xpose.msra.mxu0 0.0
      %1217 = vmatpush.xpose.msra.mxu0 0.0
      %1218 = vmatpush.xpose.msra.mxu0 0.0
      %1219 = vmatpush.xpose.msra.mxu0 0.0
      %1220 = vmatpush.xpose.msra.mxu0 %v1204
      %1221 = vmatpush.xpose.msra.mxu0 %v1202
      %1222 = vmatmul.f32.gmra.mxu0 %v1198
      %v1223 = vpop.f32.mrf.mxu0
      %v1224 = vadd.f32 0.0, %v1223
      %1225 = vmatmul.f32.gmra.mxu0 %v1200
      %v1226 = vpop.f32.mrf.mxu0
      %v1227 = vadd.f32 0.0, %v1226
      %1228 = vdwg.mxu0
      %v1229 = vmul.f32 %v1224, 0.35355338
      %v1230 = vmul.f32 %v1227, 0.35355338
      %v1231 = vsel %vm850, -1e+30, %v1229
      %v1232 = vsel %vm851, -1e+30, %v1230
      %v1233 = vsel %vm854, %v1231, -inf
      %1234 = vmax.xlane.f32.xlu0 %v1233
      %v1235 = vpop.xlane.xlu0 %1234
      %v1236 = vsel %vm854, %v1232, -inf
      %1237 = vmax.xlane.f32.xlu0 %v1236
      %v1238 = vpop.xlane.xlu0 %1237
      %v1239 = vsub.f32 %v1231, %v1235
      %v1240 = vsub.f32 %v1232, %v1238
      %v1241 = vmul.f32 %v1239, 1.442695
      %v1242 = vpow.pop %v1241
      %v1243 = vmul.f32 %v1240, 1.442695
      %v1244 = vpow.pop %v1243
      %v1245 = vsel %vm854, %v1242, 0.0
      %1246 = vadd.xlane.f32.xlu0 %v1245
      %v1247 = vpop.xlane.xlu0 %1246
      %v1248 = vsel %vm854, %v1244, 0.0
      %1249 = vadd.xlane.f32.xlu0 %v1248
      %v1250 = vpop.xlane.xlu0 %1249
      %v1251 = vrcp.pop %v1247
      %v1252 = vmul.f32 %v1247, %v1251
      %v1253 = vsub.f32 1.0, %v1252
      %v1254 = vmul.f32 %v1251, %v1253
      %v1255 = vadd.f32 %v1251, %v1254
      %vm1256 = vweird.f32 %v1247
      %vm1257 = vweird.f32 %v1251
      %vm1258 = vmor %vm1256, %vm1257
      %v1259 = vsel %vm1258, %v1251, %v1255
      %v1260 = vand.u32 2147483647, %v1247
      %vm1261 = vcmp.eq.f32.partialorder %v1260, 8.507059e+37
      %v1262 = vand.u32 %v1247, 2147483648
      %v1263 = vor.u32 1.1754944e-38, %v1262
      %v1264 = vsel %vm1261, %v1263, %v1259
      %v1265 = vmul.f32 %v1242, %v1264
      %v1266 = vrcp.pop %v1250
      %v1267 = vmul.f32 %v1250, %v1266
      %v1268 = vsub.f32 1.0, %v1267
      %v1269 = vmul.f32 %v1266, %v1268
      %v1270 = vadd.f32 %v1266, %v1269
      %vm1271 = vweird.f32 %v1250
      %vm1272 = vweird.f32 %v1266
      %vm1273 = vmor %vm1271, %vm1272
      %v1274 = vsel %vm1273, %v1266, %v1270
      %v1275 = vand.u32 2147483647, %v1250
      %vm1276 = vcmp.eq.f32.partialorder %v1275, 8.507059e+37
      %v1277 = vand.u32 %v1250, 2147483648
      %v1278 = vor.u32 1.1754944e-38, %v1277
      %v1279 = vsel %vm1276, %v1278, %v1274
      %v1280 = vmul.f32 %v1244, %v1279
      %1281 = vrot.lane.b32.xlu0 %v795, 40
      %v1282 = vpop.permute.xlu0 %1281
      %1283 = vrot.lane.b32.xlu0 %v798, 40
      %v1284 = vpop.permute.xlu0 %1283
      %v1288 = vsel %vm854, %v1265, 0
      %v1291 = vsel %vm854, %v1280, 0
      %1293 = vmatpush.msra.mxu0 0.0
      %1294 = vmatpush.msra.mxu0 0.0
      %1295 = vmatpush.msra.mxu0 0.0
      %1296 = vmatpush.msra.mxu0 0.0
      %1297 = vmatpush.msra.mxu0 0.0
      %1298 = vmatpush.msra.mxu0 0.0
      %1299 = vmatpush.msra.mxu0 0.0
      %1300 = vmatpush.msra.mxu0 0.0
      %1301 = vmatpush.msra.mxu0 0.0
      %1302 = vmatpush.msra.mxu0 0.0
      %1303 = vmatpush.msra.mxu0 0.0
      %1304 = vmatpush.msra.mxu0 0.0
      %1305 = vmatpush.msra.mxu0 0.0
      %1306 = vmatpush.msra.mxu0 0.0
      %1307 = vmatpush.msra.mxu0 %v1284
      %1308 = vmatpush.msra.mxu0 %v1282
      %1309 = vmatmul.f32.gmra.mxu0 %v1288
      %v1310 = vpop.f32.mrf.mxu0
      %v1311 = vadd.f32 0.0, %v1310
      %1312 = vmatmul.f32.gmra.mxu0 %v1291
      %v1313 = vpop.f32.mrf.mxu0
      %v1314 = vadd.f32 0.0, %v1313
      %1315 = vdwg.mxu0
      %1318 = vrot.lane.b32.xlu0 %v1059, 8
      %v1319 = vpop.permute.xlu0 %1318
      %1320 = vrot.lane.b32.xlu0 %v1062, 8
      %v1321 = vpop.permute.xlu0 %1320
      %1326 = vrot.lane.b32.xlu0 %v1185, 16
      %v1327 = vpop.permute.xlu0 %1326
      %1328 = vrot.lane.b32.xlu0 %v1188, 16
      %v1329 = vpop.permute.xlu0 %1328
      %1334 = vrot.lane.b32.xlu0 %v1311, 24
      %v1335 = vpop.permute.xlu0 %1334
      %1336 = vrot.lane.b32.xlu0 %v1314, 24
      %v1337 = vpop.permute.xlu0 %1336
      %v1340 = vsel %vm811, %v933, %v1319
      %v1341 = vsel %vm811, %v936, %v1321
      %v1342 = vsel %vm854, %v1340, %v1327
      %v1343 = vsel %vm854, %v1341, %v1329
      %vm1344 = vcmask 195584
      %v1345 = vsel %vm1344, %v1342, %v1335
      %v1346 = vsel %vm1344, %v1343, %v1337
      %v1348 = vperm.slane %v804, 0
      %v1351 = vsel %vm770, %v1345, 0
      %v1354 = vsel %vm770, %v1346, 0
      %1356 = vmatpush.msra.mxu0 0.0
      %1357 = vmatpush.msra.mxu0 0.0
      %1358 = vmatpush.msra.mxu0 0.0
      %1359 = vmatpush.msra.mxu0 0.0
      %1360 = vmatpush.msra.mxu0 0.0
      %1361 = vmatpush.msra.mxu0 0.0
      %1362 = vmatpush.msra.mxu0 0.0
      %1363 = vmatpush.msra.mxu0 0.0
      %1364 = vmatpush.msra.mxu0 0.0
      %1365 = vmatpush.msra.mxu0 0.0
      %1366 = vmatpush.msra.mxu0 0.0
      %1367 = vmatpush.msra.mxu0 0.0
      %1368 = vmatpush.msra.mxu0 %v803
      %1369 = vmatpush.msra.mxu0 %v802
      %1370 = vmatpush.msra.mxu0 %v801
      %1371 = vmatpush.msra.mxu0 %v800
      %1372 = vmatmul.f32.gmra.mxu0 %v1351
      %v1373 = vpop.f32.mrf.mxu0
      %v1374 = vadd.f32 %v1348, %v1373
      %1375 = vmatmul.f32.gmra.mxu0 %v1354
      %v1376 = vpop.f32.mrf.mxu0
      %v1377 = vadd.f32 %v1348, %v1376
      %1378 = vdwg.mxu0
      %v1379 = vadd.f32 %v758, %v1374
      %v1380 = vadd.f32 %v759, %v1377
      %v1381 = vld [vmem:[%s12] sm:$0x1]
      %v1382 = vld [vmem:[%s13] sm:$0x1]
      %v1383 = vsel %vm770, %v1379, 0.0
      %1384 = vadd.xlane.f32.xlu0 %v1383
      %v1385 = vpop.xlane.xlu0 %1384
      %v1386 = vsel %vm770, %v1380, 0.0
      %1387 = vadd.xlane.f32.xlu0 %v1386
      %v1388 = vpop.xlane.xlu0 %1387
      %v1389 = vrcp.pop 32.0
      %v1390 = vmul.f32 32.0, %v1389
      %v1391 = vsub.f32 1.0, %v1390
      %v1392 = vmul.f32 %v1389, %v1391
      %v1393 = vadd.f32 %v1389, %v1392
      %vm1394 = vweird.f32 %v1389
      %v1395 = vsel %vm1394, %v1389, %v1393
      %v1396 = vmul.f32 %v1385, %v1395
      %v1397 = vmul.f32 %v1388, %v1395
      %v1398 = vsub.f32 %v1379, %v1396
      %v1399 = vsub.f32 %v1380, %v1397
      %v1400 = vmul.f32 %v1398, %v1398
      %v1401 = vmul.f32 %v1399, %v1399
      %v1402 = vsel %vm770, %v1400, 0.0
      %1403 = vadd.xlane.f32.xlu0 %v1402
      %v1404 = vpop.xlane.xlu0 %1403
      %v1405 = vsel %vm770, %v1401, 0.0
      %1406 = vadd.xlane.f32.xlu0 %v1405
      %v1407 = vpop.xlane.xlu0 %1406
      %v1408 = vmul.f32 %v1404, %v1395
      %v1409 = vmul.f32 %v1407, %v1395
      %v1410 = vadd.f32 %v1408, 1e-05
      %v1411 = vadd.f32 %v1409, 1e-05
      %v1412 = vrsqrt.pop %v1410
      %v1413 = vmul.f32 %v1412, %v1410
      %v1414 = vmul.f32 %v1413, %v1412
      %v1415 = vmul.f32 0.5, %v1414
      %v1416 = vsub.f32 1.5, %v1415
      %v1417 = vmul.f32 %v1412, %v1416
      %vm1418 = vweird.f32 %v1410
      %vm1419 = vweird.f32 %v1412
      %vm1420 = vmor %vm1418, %vm1419
      %v1421 = vsel %vm1420, %v1412, %v1417
      %v1422 = vrsqrt.pop %v1411
      %v1423 = vmul.f32 %v1422, %v1411
      %v1424 = vmul.f32 %v1423, %v1422
      %v1425 = vmul.f32 0.5, %v1424
      %v1426 = vsub.f32 1.5, %v1425
      %v1427 = vmul.f32 %v1422, %v1426
      %vm1428 = vweird.f32 %v1411
      %vm1429 = vweird.f32 %v1422
      %vm1430 = vmor %vm1428, %vm1429
      %v1431 = vsel %vm1430, %v1422, %v1427
      %v1432 = vmul.f32 %v1398, %v1421
      %v1433 = vmul.f32 %v1399, %v1431
      %v1435 = vperm.slane %v1381, 0
      %v1437 = vmul.f32 %v1432, %v1435
      %v1438 = vmul.f32 %v1433, %v1435
      %v1440 = vperm.slane %v1382, 0
      %v1442 = vadd.f32 %v1437, %v1440
      %v1443 = vadd.f32 %v1438, %v1440
      %v1444 = vld [vmem:[%s6] sm:$0xff]
      %v1445 = vld [vmem:[%s6 + $0x8] sm:$0xff]
      %v1446 = vld [vmem:[%s6 + $0x10] sm:$0xff]
      %v1447 = vld [vmem:[%s6 + $0x18] sm:$0xff]
      %v1448 = vld [vmem:[%s7] sm:$0x1]
      %v1450 = vperm.slane %v1448, 0
      %v1453 = vsel %vm770, %v1442, 0
      %v1456 = vsel %vm770, %v1443, 0
      %1458 = vmatpush.msra.mxu0 0.0
      %1459 = vmatpush.msra.mxu0 0.0
      %1460 = vmatpush.msra.mxu0 0.0
      %1461 = vmatpush.msra.mxu0 0.0
      %1462 = vmatpush.msra.mxu0 0.0
      %1463 = vmatpush.msra.mxu0 0.0
      %1464 = vmatpush.msra.mxu0 0.0
      %1465 = vmatpush.msra.mxu0 0.0
      %1466 = vmatpush.msra.mxu0 0.0
      %1467 = vmatpush.msra.mxu0 0.0
      %1468 = vmatpush.msra.mxu0 0.0
      %1469 = vmatpush.msra.mxu0 0.0
      %1470 = vmatpush.msra.mxu0 %v1447
      %1471 = vmatpush.msra.mxu0 %v1446
      %1472 = vmatpush.msra.mxu0 %v1445
      %1473 = vmatpush.msra.mxu0 %v1444
      %1474 = vmatmul.f32.gmra.mxu0 %v1453
      %v1475 = vpop.f32.mrf.mxu0
      %v1476 = vadd.f32 %v1450, %v1475
      %1477 = vmatmul.f32.gmra.mxu0 %v1456
      %v1478 = vpop.f32.mrf.mxu0
      %v1479 = vadd.f32 %v1450, %v1478
      %1480 = vdwg.mxu0
      %v1481 = vld [vmem:[%s8] sm:$0xff]
      %v1482 = vld [vmem:[%s8 + $0x8] sm:$0xff]
      %v1483 = vld [vmem:[%s8 + $0x10] sm:$0xff]
      %v1484 = vld [vmem:[%s8 + $0x18] sm:$0xff]
      %v1485 = vld [vmem:[%s9] sm:$0x1]
      %v1487 = vperm.slane %v1485, 0
      %v1490 = vsel %vm770, %v760, 0
      %v1493 = vsel %vm770, %v761, 0
      %1495 = vmatpush.msra.mxu0 0.0
      %1496 = vmatpush.msra.mxu0 0.0
      %1497 = vmatpush.msra.mxu0 0.0
      %1498 = vmatpush.msra.mxu0 0.0
      %1499 = vmatpush.msra.mxu0 0.0
      %1500 = vmatpush.msra.mxu0 0.0
      %1501 = vmatpush.msra.mxu0 0.0
      %1502 = vmatpush.msra.mxu0 0.0
      %1503 = vmatpush.msra.mxu0 0.0
      %1504 = vmatpush.msra.mxu0 0.0
      %1505 = vmatpush.msra.mxu0 0.0
      %1506 = vmatpush.msra.mxu0 0.0
      %1507 = vmatpush.msra.mxu0 %v1484
      %1508 = vmatpush.msra.mxu0 %v1483
      %1509 = vmatpush.msra.mxu0 %v1482
      %1510 = vmatpush.msra.mxu0 %v1481
      %1511 = vmatmul.f32.gmra.mxu0 %v1490
      %v1512 = vpop.f32.mrf.mxu0
      %v1513 = vadd.f32 %v1487, %v1512
      %1514 = vmatmul.f32.gmra.mxu0 %v1493
      %v1515 = vpop.f32.mrf.mxu0
      %v1516 = vadd.f32 %v1487, %v1515
      %1517 = vdwg.mxu0
      %v1518 = vld [vmem:[%s10] sm:$0xff]
      %v1519 = vld [vmem:[%s10 + $0x8] sm:$0xff]
      %v1520 = vld [vmem:[%s10 + $0x10] sm:$0xff]
      %v1521 = vld [vmem:[%s10 + $0x18] sm:$0xff]
      %v1522 = vld [vmem:[%s11] sm:$0x1]
      %v1524 = vsel %vm811, %v1476, 0
      %v1527 = vsel %vm811, %v1479, 0
      %v1530 = vsel %vm811, %v1513, 0
      %v1533 = vsel %vm811, %v1516, 0
      %1535 = vmatpush.xpose.msra.mxu0 0.0
      %1536 = vmatpush.xpose.msra.mxu0 0.0
      %1537 = vmatpush.xpose.msra.mxu0 0.0
      %1538 = vmatpush.xpose.msra.mxu0 0.0
      %1539 = vmatpush.xpose.msra.mxu0 0.0
      %1540 = vmatpush.xpose.msra.mxu0 0.0
      %1541 = vmatpush.xpose.msra.mxu0 0.0
      %1542 = vmatpush.xpose.msra.mxu0 0.0
      %1543 = vmatpush.xpose.msra.mxu0 0.0
      %1544 = vmatpush.xpose.msra.mxu0 0.0
      %1545 = vmatpush.xpose.msra.mxu0 0.0
      %1546 = vmatpush.xpose.msra.mxu0 0.0
      %1547 = vmatpush.xpose.msra.mxu0 0.0
      %1548 = vmatpush.xpose.msra.mxu0 0.0
      %1549 = vmatpush.xpose.msra.mxu0 %v1533
      %1550 = vmatpush.xpose.msra.mxu0 %v1530
      %1551 = vmatmul.f32.gmra.mxu0 %v1524
      %v1552 = vpop.f32.mrf.mxu0
      %v1553 = vadd.f32 0.0, %v1552
      %1554 = vmatmul.f32.gmra.mxu0 %v1527
      %v1555 = vpop.f32.mrf.mxu0
      %v1556 = vadd.f32 0.0, %v1555
      %1557 = vdwg.mxu0
      %v1558 = vmul.f32 %v1553, 0.35355338
      %v1559 = vmul.f32 %v1556, 0.35355338
      %v1560 = vsel %vm854, %v1558, -inf
      %1561 = vmax.xlane.f32.xlu0 %v1560
      %v1562 = vpop.xlane.xlu0 %1561
      %v1563 = vsel %vm854, %v1559, -inf
      %1564 = vmax.xlane.f32.xlu0 %v1563
      %v1565 = vpop.xlane.xlu0 %1564
      %v1566 = vsub.f32 %v1558, %v1562
      %v1567 = vsub.f32 %v1559, %v1565
      %v1568 = vmul.f32 %v1566, 1.442695
      %v1569 = vpow.pop %v1568
      %v1570 = vmul.f32 %v1567, 1.442695
      %v1571 = vpow.pop %v1570
      %v1572 = vsel %vm854, %v1569, 0.0
      %1573 = vadd.xlane.f32.xlu0 %v1572
      %v1574 = vpop.xlane.xlu0 %1573
      %v1575 = vsel %vm854, %v1571, 0.0
      %1576 = vadd.xlane.f32.xlu0 %v1575
      %v1577 = vpop.xlane.xlu0 %1576
      %v1578 = vrcp.pop %v1574
      %v1579 = vmul.f32 %v1574, %v1578
      %v1580 = vsub.f32 1.0, %v1579
      %v1581 = vmul.f32 %v1578, %v1580
      %v1582 = vadd.f32 %v1578, %v1581
      %vm1583 = vweird.f32 %v1574
      %vm1584 = vweird.f32 %v1578
      %vm1585 = vmor %vm1583, %vm1584
      %v1586 = vsel %vm1585, %v1578, %v1582
      %v1587 = vand.u32 2147483647, %v1574
      %vm1588 = vcmp.eq.f32.partialorder %v1587, 8.507059e+37
      %v1589 = vand.u32 %v1574, 2147483648
      %v1590 = vor.u32 1.1754944e-38, %v1589
      %v1591 = vsel %vm1588, %v1590, %v1586
      %v1592 = vmul.f32 %v1569, %v1591
      %v1593 = vrcp.pop %v1577
      %v1594 = vmul.f32 %v1577, %v1593
      %v1595 = vsub.f32 1.0, %v1594
      %v1596 = vmul.f32 %v1593, %v1595
      %v1597 = vadd.f32 %v1593, %v1596
      %vm1598 = vweird.f32 %v1577
      %vm1599 = vweird.f32 %v1593
      %vm1600 = vmor %vm1598, %vm1599
      %v1601 = vsel %vm1600, %v1593, %v1597
      %v1602 = vand.u32 2147483647, %v1577
      %vm1603 = vcmp.eq.f32.partialorder %v1602, 8.507059e+37
      %v1604 = vand.u32 %v1577, 2147483648
      %v1605 = vor.u32 1.1754944e-38, %v1604
      %v1606 = vsel %vm1603, %v1605, %v1601
      %v1607 = vmul.f32 %v1571, %v1606
      %1608 = vrot.lane.b32.xlu0 %v1513, 96
      %v1609 = vpop.permute.xlu0 %1608
      %1610 = vrot.lane.b32.xlu0 %v1516, 96
      %v1611 = vpop.permute.xlu0 %1610
      %v1615 = vsel %vm854, %v1592, 0
      %v1618 = vsel %vm854, %v1607, 0
      %1620 = vmatpush.msra.mxu0 0.0
      %1621 = vmatpush.msra.mxu0 0.0
      %1622 = vmatpush.msra.mxu0 0.0
      %1623 = vmatpush.msra.mxu0 0.0
      %1624 = vmatpush.msra.mxu0 0.0
      %1625 = vmatpush.msra.mxu0 0.0
      %1626 = vmatpush.msra.mxu0 0.0
      %1627 = vmatpush.msra.mxu0 0.0
      %1628 = vmatpush.msra.mxu0 0.0
      %1629 = vmatpush.msra.mxu0 0.0
      %1630 = vmatpush.msra.mxu0 0.0
      %1631 = vmatpush.msra.mxu0 0.0
      %1632 = vmatpush.msra.mxu0 0.0
      %1633 = vmatpush.msra.mxu0 0.0
      %1634 = vmatpush.msra.mxu0 %v1611
      %1635 = vmatpush.msra.mxu0 %v1609
      %1636 = vmatmul.f32.gmra.mxu0 %v1615
      %v1637 = vpop.f32.mrf.mxu0
      %v1638 = vadd.f32 0.0, %v1637
      %1639 = vmatmul.f32.gmra.mxu0 %v1618
      %v1640 = vpop.f32.mrf.mxu0
      %v1641 = vadd.f32 0.0, %v1640
      %1642 = vdwg.mxu0
      %1643 = vrot.lane.b32.xlu0 %v1476, 120
      %v1644 = vpop.permute.xlu0 %1643
      %1645 = vrot.lane.b32.xlu0 %v1479, 120
      %v1646 = vpop.permute.xlu0 %1645
      %1647 = vrot.lane.b32.xlu0 %v1513, 120
      %v1648 = vpop.permute.xlu0 %1647
      %1649 = vrot.lane.b32.xlu0 %v1516, 120
      %v1650 = vpop.permute.xlu0 %1649
      %v1651 = vsel %vm811, %v1644, 0
      %v1653 = vsel %vm811, %v1646, 0
      %v1655 = vsel %vm811, %v1648, 0
      %v1657 = vsel %vm811, %v1650, 0
      %1659 = vmatpush.xpose.msra.mxu0 0.0
      %1660 = vmatpush.xpose.msra.mxu0 0.0
      %1661 = vmatpush.xpose.msra.mxu0 0.0
      %1662 = vmatpush.xpose.msra.mxu0 0.0
      %1663 = vmatpush.xpose.msra.mxu0 0.0
      %1664 = vmatpush.xpose.msra.mxu0 0.0
      %1665 = vmatpush.xpose.msra.mxu0 0.0
      %1666 = vmatpush.xpose.msra.mxu0 0.0
      %1667 = vmatpush.xpose.msra.mxu0 0.0
      %1668 = vmatpush.xpose.msra.mxu0 0.0
      %1669 = vmatpush.xpose.msra.mxu0 0.0
      %1670 = vmatpush.xpose.msra.mxu0 0.0
      %1671 = vmatpush.xpose.msra.mxu0 0.0
      %1672 = vmatpush.xpose.msra.mxu0 0.0
      %1673 = vmatpush.xpose.msra.mxu0 %v1657
      %1674 = vmatpush.xpose.msra.mxu0 %v1655
      %1675 = vmatmul.f32.gmra.mxu0 %v1651
      %v1676 = vpop.f32.mrf.mxu0
      %v1677 = vadd.f32 0.0, %v1676
      %1678 = vmatmul.f32.gmra.mxu0 %v1653
      %v1679 = vpop.f32.mrf.mxu0
      %v1680 = vadd.f32 0.0, %v1679
      %1681 = vdwg.mxu0
      %v1682 = vmul.f32 %v1677, 0.35355338
      %v1683 = vmul.f32 %v1680, 0.35355338
      %v1684 = vsel %vm854, %v1682, -inf
      %1685 = vmax.xlane.f32.xlu0 %v1684
      %v1686 = vpop.xlane.xlu0 %1685
      %v1687 = vsel %vm854, %v1683, -inf
      %1688 = vmax.xlane.f32.xlu0 %v1687
      %v1689 = vpop.xlane.xlu0 %1688
      %v1690 = vsub.f32 %v1682, %v1686
      %v1691 = vsub.f32 %v1683, %v1689
      %v1692 = vmul.f32 %v1690, 1.442695
      %v1693 = vpow.pop %v1692
      %v1694 = vmul.f32 %v1691, 1.442695
      %v1695 = vpow.pop %v1694
      %v1696 = vsel %vm854, %v1693, 0.0
      %1697 = vadd.xlane.f32.xlu0 %v1696
      %v1698 = vpop.xlane.xlu0 %1697
      %v1699 = vsel %vm854, %v1695, 0.0
      %1700 = vadd.xlane.f32.xlu0 %v1699
      %v1701 = vpop.xlane.xlu0 %1700
      %v1702 = vrcp.pop %v1698
      %v1703 = vmul.f32 %v1698, %v1702
      %v1704 = vsub.f32 1.0, %v1703
      %v1705 = vmul.f32 %v1702, %v1704
      %v1706 = vadd.f32 %v1702, %v1705
      %vm1707 = vweird.f32 %v1698
      %vm1708 = vweird.f32 %v1702
      %vm1709 = vmor %vm1707, %vm1708
      %v1710 = vsel %vm1709, %v1702, %v1706
      %v1711 = vand.u32 2147483647, %v1698
      %vm1712 = vcmp.eq.f32.partialorder %v1711, 8.507059e+37
      %v1713 = vand.u32 %v1698, 2147483648
      %v1714 = vor.u32 1.1754944e-38, %v1713
      %v1715 = vsel %vm1712, %v1714, %v1710
      %v1716 = vmul.f32 %v1693, %v1715
      %v1717 = vrcp.pop %v1701
      %v1718 = vmul.f32 %v1701, %v1717
      %v1719 = vsub.f32 1.0, %v1718
      %v1720 = vmul.f32 %v1717, %v1719
      %v1721 = vadd.f32 %v1717, %v1720
      %vm1722 = vweird.f32 %v1701
      %vm1723 = vweird.f32 %v1717
      %vm1724 = vmor %vm1722, %vm1723
      %v1725 = vsel %vm1724, %v1717, %v1721
      %v1726 = vand.u32 2147483647, %v1701
      %vm1727 = vcmp.eq.f32.partialorder %v1726, 8.507059e+37
      %v1728 = vand.u32 %v1701, 2147483648
      %v1729 = vor.u32 1.1754944e-38, %v1728
      %v1730 = vsel %vm1727, %v1729, %v1725
      %v1731 = vmul.f32 %v1695, %v1730
      %1732 = vrot.lane.b32.xlu0 %v1513, 88
      %v1733 = vpop.permute.xlu0 %1732
      %1734 = vrot.lane.b32.xlu0 %v1516, 88
      %v1735 = vpop.permute.xlu0 %1734
      %v1739 = vsel %vm854, %v1716, 0
      %v1742 = vsel %vm854, %v1731, 0
      %1744 = vmatpush.msra.mxu0 0.0
      %1745 = vmatpush.msra.mxu0 0.0
      %1746 = vmatpush.msra.mxu0 0.0
      %1747 = vmatpush.msra.mxu0 0.0
      %1748 = vmatpush.msra.mxu0 0.0
      %1749 = vmatpush.msra.mxu0 0.0
      %1750 = vmatpush.msra.mxu0 0.0
      %1751 = vmatpush.msra.mxu0 0.0
      %1752 = vmatpush.msra.mxu0 0.0
      %1753 = vmatpush.msra.mxu0 0.0
      %1754 = vmatpush.msra.mxu0 0.0
      %1755 = vmatpush.msra.mxu0 0.0
      %1756 = vmatpush.msra.mxu0 0.0
      %1757 = vmatpush.msra.mxu0 0.0
      %1758 = vmatpush.msra.mxu0 %v1735
      %1759 = vmatpush.msra.mxu0 %v1733
      %1760 = vmatmul.f32.gmra.mxu0 %v1739
      %v1761 = vpop.f32.mrf.mxu0
      %v1762 = vadd.f32 0.0, %v1761
      %1763 = vmatmul.f32.gmra.mxu0 %v1742
      %v1764 = vpop.f32.mrf.mxu0
      %v1765 = vadd.f32 0.0, %v1764
      %1766 = vdwg.mxu0
      %1767 = vrot.lane.b32.xlu0 %v1476, 112
      %v1768 = vpop.permute.xlu0 %1767
      %1769 = vrot.lane.b32.xlu0 %v1479, 112
      %v1770 = vpop.permute.xlu0 %1769
      %1771 = vrot.lane.b32.xlu0 %v1513, 112
      %v1772 = vpop.permute.xlu0 %1771
      %1773 = vrot.lane.b32.xlu0 %v1516, 112
      %v1774 = vpop.permute.xlu0 %1773
      %v1775 = vsel %vm811, %v1768, 0
      %v1777 = vsel %vm811, %v1770, 0
      %v1779 = vsel %vm811, %v1772, 0
      %v1781 = vsel %vm811, %v1774, 0
      %1783 = vmatpush.xpose.msra.mxu0 0.0
      %1784 = vmatpush.xpose.msra.mxu0 0.0
      %1785 = vmatpush.xpose.msra.mxu0 0.0
      %1786 = vmatpush.xpose.msra.mxu0 0.0
      %1787 = vmatpush.xpose.msra.mxu0 0.0
      %1788 = vmatpush.xpose.msra.mxu0 0.0
      %1789 = vmatpush.xpose.msra.mxu0 0.0
      %1790 = vmatpush.xpose.msra.mxu0 0.0
      %1791 = vmatpush.xpose.msra.mxu0 0.0
      %1792 = vmatpush.xpose.msra.mxu0 0.0
      %1793 = vmatpush.xpose.msra.mxu0 0.0
      %1794 = vmatpush.xpose.msra.mxu0 0.0
      %1795 = vmatpush.xpose.msra.mxu0 0.0
      %1796 = vmatpush.xpose.msra.mxu0 0.0
      %1797 = vmatpush.xpose.msra.mxu0 %v1781
      %1798 = vmatpush.xpose.msra.mxu0 %v1779
      %1799 = vmatmul.f32.gmra.mxu0 %v1775
      %v1800 = vpop.f32.mrf.mxu0
      %v1801 = vadd.f32 0.0, %v1800
      %1802 = vmatmul.f32.gmra.mxu0 %v1777
      %v1803 = vpop.f32.mrf.mxu0
      %v1804 = vadd.f32 0.0, %v1803
      %1805 = vdwg.mxu0
      %v1806 = vmul.f32 %v1801, 0.35355338
      %v1807 = vmul.f32 %v1804, 0.35355338
      %v1808 = vsel %vm854, %v1806, -inf
      %1809 = vmax.xlane.f32.xlu0 %v1808
      %v1810 = vpop.xlane.xlu0 %1809
      %v1811 = vsel %vm854, %v1807, -inf
      %1812 = vmax.xlane.f32.xlu0 %v1811
      %v1813 = vpop.xlane.xlu0 %1812
      %v1814 = vsub.f32 %v1806, %v1810
      %v1815 = vsub.f32 %v1807, %v1813
      %v1816 = vmul.f32 %v1814, 1.442695
      %v1817 = vpow.pop %v1816
      %v1818 = vmul.f32 %v1815, 1.442695
      %v1819 = vpow.pop %v1818
      %v1820 = vsel %vm854, %v1817, 0.0
      %1821 = vadd.xlane.f32.xlu0 %v1820
      %v1822 = vpop.xlane.xlu0 %1821
      %v1823 = vsel %vm854, %v1819, 0.0
      %1824 = vadd.xlane.f32.xlu0 %v1823
      %v1825 = vpop.xlane.xlu0 %1824
      %v1826 = vrcp.pop %v1822
      %v1827 = vmul.f32 %v1822, %v1826
      %v1828 = vsub.f32 1.0, %v1827
      %v1829 = vmul.f32 %v1826, %v1828
      %v1830 = vadd.f32 %v1826, %v1829
      %vm1831 = vweird.f32 %v1822
      %vm1832 = vweird.f32 %v1826
      %vm1833 = vmor %vm1831, %vm1832
      %v1834 = vsel %vm1833, %v1826, %v1830
      %v1835 = vand.u32 2147483647, %v1822
      %vm1836 = vcmp.eq.f32.partialorder %v1835, 8.507059e+37
      %v1837 = vand.u32 %v1822, 2147483648
      %v1838 = vor.u32 1.1754944e-38, %v1837
      %v1839 = vsel %vm1836, %v1838, %v1834
      %v1840 = vmul.f32 %v1817, %v1839
      %v1841 = vrcp.pop %v1825
      %v1842 = vmul.f32 %v1825, %v1841
      %v1843 = vsub.f32 1.0, %v1842
      %v1844 = vmul.f32 %v1841, %v1843
      %v1845 = vadd.f32 %v1841, %v1844
      %vm1846 = vweird.f32 %v1825
      %vm1847 = vweird.f32 %v1841
      %vm1848 = vmor %vm1846, %vm1847
      %v1849 = vsel %vm1848, %v1841, %v1845
      %v1850 = vand.u32 2147483647, %v1825
      %vm1851 = vcmp.eq.f32.partialorder %v1850, 8.507059e+37
      %v1852 = vand.u32 %v1825, 2147483648
      %v1853 = vor.u32 1.1754944e-38, %v1852
      %v1854 = vsel %vm1851, %v1853, %v1849
      %v1855 = vmul.f32 %v1819, %v1854
      %1856 = vrot.lane.b32.xlu0 %v1513, 80
      %v1857 = vpop.permute.xlu0 %1856
      %1858 = vrot.lane.b32.xlu0 %v1516, 80
      %v1859 = vpop.permute.xlu0 %1858
      %v1863 = vsel %vm854, %v1840, 0
      %v1866 = vsel %vm854, %v1855, 0
      %1868 = vmatpush.msra.mxu0 0.0
      %1869 = vmatpush.msra.mxu0 0.0
      %1870 = vmatpush.msra.mxu0 0.0
      %1871 = vmatpush.msra.mxu0 0.0
      %1872 = vmatpush.msra.mxu0 0.0
      %1873 = vmatpush.msra.mxu0 0.0
      %1874 = vmatpush.msra.mxu0 0.0
      %1875 = vmatpush.msra.mxu0 0.0
      %1876 = vmatpush.msra.mxu0 0.0
      %1877 = vmatpush.msra.mxu0 0.0
      %1878 = vmatpush.msra.mxu0 0.0
      %1879 = vmatpush.msra.mxu0 0.0
      %1880 = vmatpush.msra.mxu0 0.0
      %1881 = vmatpush.msra.mxu0 0.0
      %1882 = vmatpush.msra.mxu0 %v1859
      %1883 = vmatpush.msra.mxu0 %v1857
      %1884 = vmatmul.f32.gmra.mxu0 %v1863
      %v1885 = vpop.f32.mrf.mxu0
      %v1886 = vadd.f32 0.0, %v1885
      %1887 = vmatmul.f32.gmra.mxu0 %v1866
      %v1888 = vpop.f32.mrf.mxu0
      %v1889 = vadd.f32 0.0, %v1888
      %1890 = vdwg.mxu0
      %1891 = vrot.lane.b32.xlu0 %v1476, 104
      %v1892 = vpop.permute.xlu0 %1891
      %1893 = vrot.lane.b32.xlu0 %v1479, 104
      %v1894 = vpop.permute.xlu0 %1893
      %1895 = vrot.lane.b32.xlu0 %v1513, 104
      %v1896 = vpop.permute.xlu0 %1895
      %1897 = vrot.lane.b32.xlu0 %v1516, 104
      %v1898 = vpop.permute.xlu0 %1897
      %v1899 = vsel %vm811, %v1892, 0
      %v1901 = vsel %vm811, %v1894, 0
      %v1903 = vsel %vm811, %v1896, 0
      %v1905 = vsel %vm811, %v1898, 0
      %1907 = vmatpush.xpose.msra.mxu0 0.0
      %1908 = vmatpush.xpose.msra.mxu0 0.0
      %1909 = vmatpush.xpose.msra.mxu0 0.0
      %1910 = vmatpush.xpose.msra.mxu0 0.0
      %1911 = vmatpush.xpose.msra.mxu0 0.0
      %1912 = vmatpush.xpose.msra.mxu0 0.0
      %1913 = vmatpush.xpose.msra.mxu0 0.0
      %1914 = vmatpush.xpose.msra.mxu0 0.0
      %1915 = vmatpush.xpose.msra.mxu0 0.0
      %1916 = vmatpush.xpose.msra.mxu0 0.0
      %1917 = vmatpush.xpose.msra.mxu0 0.0
      %1918 = vmatpush.xpose.msra.mxu0 0.0
      %1919 = vmatpush.xpose.msra.mxu0 0.0
      %1920 = vmatpush.xpose.msra.mxu0 0.0
      %1921 = vmatpush.xpose.msra.mxu0 %v1905
      %1922 = vmatpush.xpose.msra.mxu0 %v1903
      %1923 = vmatmul.f32.gmra.mxu0 %v1899
      %v1924 = vpop.f32.mrf.mxu0
      %v1925 = vadd.f32 0.0, %v1924
      %1926 = vmatmul.f32.gmra.mxu0 %v1901
      %v1927 = vpop.f32.mrf.mxu0
      %v1928 = vadd.f32 0.0, %v1927
      %1929 = vdwg.mxu0
      %v1930 = vmul.f32 %v1925, 0.35355338
      %v1931 = vmul.f32 %v1928, 0.35355338
      %v1932 = vsel %vm854, %v1930, -inf
      %1933 = vmax.xlane.f32.xlu0 %v1932
      %v1934 = vpop.xlane.xlu0 %1933
      %v1935 = vsel %vm854, %v1931, -inf
      %1936 = vmax.xlane.f32.xlu0 %v1935
      %v1937 = vpop.xlane.xlu0 %1936
      %v1938 = vsub.f32 %v1930, %v1934
      %v1939 = vsub.f32 %v1931, %v1937
      %v1940 = vmul.f32 %v1938, 1.442695
      %v1941 = vpow.pop %v1940
      %v1942 = vmul.f32 %v1939, 1.442695
      %v1943 = vpow.pop %v1942
      %v1944 = vsel %vm854, %v1941, 0.0
      %1945 = vadd.xlane.f32.xlu0 %v1944
      %v1946 = vpop.xlane.xlu0 %1945
      %v1947 = vsel %vm854, %v1943, 0.0
      %1948 = vadd.xlane.f32.xlu0 %v1947
      %v1949 = vpop.xlane.xlu0 %1948
      %v1950 = vrcp.pop %v1946
      %v1951 = vmul.f32 %v1946, %v1950
      %v1952 = vsub.f32 1.0, %v1951
      %v1953 = vmul.f32 %v1950, %v1952
      %v1954 = vadd.f32 %v1950, %v1953
      %vm1955 = vweird.f32 %v1946
      %vm1956 = vweird.f32 %v1950
      %vm1957 = vmor %vm1955, %vm1956
      %v1958 = vsel %vm1957, %v1950, %v1954
      %v1959 = vand.u32 2147483647, %v1946
      %vm1960 = vcmp.eq.f32.partialorder %v1959, 8.507059e+37
      %v1961 = vand.u32 %v1946, 2147483648
      %v1962 = vor.u32 1.1754944e-38, %v1961
      %v1963 = vsel %vm1960, %v1962, %v1958
      %v1964 = vmul.f32 %v1941, %v1963
      %v1965 = vrcp.pop %v1949
      %v1966 = vmul.f32 %v1949, %v1965
      %v1967 = vsub.f32 1.0, %v1966
      %v1968 = vmul.f32 %v1965, %v1967
      %v1969 = vadd.f32 %v1965, %v1968
      %vm1970 = vweird.f32 %v1949
      %vm1971 = vweird.f32 %v1965
      %vm1972 = vmor %vm1970, %vm1971
      %v1973 = vsel %vm1972, %v1965, %v1969
      %v1974 = vand.u32 2147483647, %v1949
      %vm1975 = vcmp.eq.f32.partialorder %v1974, 8.507059e+37
      %v1976 = vand.u32 %v1949, 2147483648
      %v1977 = vor.u32 1.1754944e-38, %v1976
      %v1978 = vsel %vm1975, %v1977, %v1973
      %v1979 = vmul.f32 %v1943, %v1978
      %1980 = vrot.lane.b32.xlu0 %v1513, 72
      %v1981 = vpop.permute.xlu0 %1980
      %1982 = vrot.lane.b32.xlu0 %v1516, 72
      %v1983 = vpop.permute.xlu0 %1982
      %v1987 = vsel %vm854, %v1964, 0
      %v1990 = vsel %vm854, %v1979, 0
      %1992 = vmatpush.msra.mxu0 0.0
      %1993 = vmatpush.msra.mxu0 0.0
      %1994 = vmatpush.msra.mxu0 0.0
      %1995 = vmatpush.msra.mxu0 0.0
      %1996 = vmatpush.msra.mxu0 0.0
      %1997 = vmatpush.msra.mxu0 0.0
      %1998 = vmatpush.msra.mxu0 0.0
      %1999 = vmatpush.msra.mxu0 0.0
      %2000 = vmatpush.msra.mxu0 0.0
      %2001 = vmatpush.msra.mxu0 0.0
      %2002 = vmatpush.msra.mxu0 0.0
      %2003 = vmatpush.msra.mxu0 0.0
      %2004 = vmatpush.msra.mxu0 0.0
      %2005 = vmatpush.msra.mxu0 0.0
      %2006 = vmatpush.msra.mxu0 %v1983
      %2007 = vmatpush.msra.mxu0 %v1981
      %2008 = vmatmul.f32.gmra.mxu0 %v1987
      %v2009 = vpop.f32.mrf.mxu0
      %v2010 = vadd.f32 0.0, %v2009
      %2011 = vmatmul.f32.gmra.mxu0 %v1990
      %v2012 = vpop.f32.mrf.mxu0
      %v2013 = vadd.f32 0.0, %v2012
      %2014 = vdwg.mxu0
      %2017 = vrot.lane.b32.xlu0 %v1762, 8
      %v2018 = vpop.permute.xlu0 %2017
      %2019 = vrot.lane.b32.xlu0 %v1765, 8
      %v2020 = vpop.permute.xlu0 %2019
      %2025 = vrot.lane.b32.xlu0 %v1886, 16
      %v2026 = vpop.permute.xlu0 %2025
      %2027 = vrot.lane.b32.xlu0 %v1889, 16
      %v2028 = vpop.permute.xlu0 %2027
      %2033 = vrot.lane.b32.xlu0 %v2010, 24
      %v2034 = vpop.permute.xlu0 %2033
      %2035 = vrot.lane.b32.xlu0 %v2013, 24
      %v2036 = vpop.permute.xlu0 %2035
      %v2039 = vsel %vm811, %v1638, %v2018
      %v2040 = vsel %vm811, %v1641, %v2020
      %v2041 = vsel %vm854, %v2039, %v2026
      %v2042 = vsel %vm854, %v2040, %v2028
      %v2043 = vsel %vm1344, %v2041, %v2034
      %v2044 = vsel %vm1344, %v2042, %v2036
      %v2046 = vperm.slane %v1522, 0
      %v2049 = vsel %vm770, %v2043, 0
      %v2052 = vsel %vm770, %v2044, 0
      %2054 = vmatpush.msra.mxu0 0.0
      %2055 = vmatpush.msra.mxu0 0.0
      %2056 = vmatpush.msra.mxu0 0.0
      %2057 = vmatpush.msra.mxu0 0.0
      %2058 = vmatpush.msra.mxu0 0.0
      %2059 = vmatpush.msra.mxu0 0.0
      %2060 = vmatpush.msra.mxu0 0.0
      %2061 = vmatpush.msra.mxu0 0.0
      %2062 = vmatpush.msra.mxu0 0.0
      %2063 = vmatpush.msra.mxu0 0.0
      %2064 = vmatpush.msra.mxu0 0.0
      %2065 = vmatpush.msra.mxu0 0.0
      %2066 = vmatpush.msra.mxu0 %v1521
      %2067 = vmatpush.msra.mxu0 %v1520
      %2068 = vmatpush.msra.mxu0 %v1519
      %2069 = vmatpush.msra.mxu0 %v1518
      %2070 = vmatmul.f32.gmra.mxu0 %v2049
      %v2071 = vpop.f32.mrf.mxu0
      %v2072 = vadd.f32 %v2046, %v2071
      %2073 = vmatmul.f32.gmra.mxu0 %v2052
      %v2074 = vpop.f32.mrf.mxu0
      %v2075 = vadd.f32 %v2046, %v2074
      %2076 = vdwg.mxu0
      %v2077 = vadd.f32 %v1442, %v2072
      %v2078 = vadd.f32 %v1443, %v2075
      %v2079 = vld [vmem:[%s14] sm:$0x1]
      %v2080 = vld [vmem:[%s15] sm:$0x1]
      %v2081 = vsel %vm770, %v2077, 0.0
      %2082 = vadd.xlane.f32.xlu0 %v2081
      %v2083 = vpop.xlane.xlu0 %2082
      %v2084 = vsel %vm770, %v2078, 0.0
      %2085 = vadd.xlane.f32.xlu0 %v2084
      %v2086 = vpop.xlane.xlu0 %2085
      %v2087 = vmul.f32 %v2083, %v1395
      %v2088 = vmul.f32 %v2086, %v1395
      %v2089 = vsub.f32 %v2077, %v2087
      %v2090 = vsub.f32 %v2078, %v2088
      %v2091 = vmul.f32 %v2089, %v2089
      %v2092 = vmul.f32 %v2090, %v2090
      %v2093 = vsel %vm770, %v2091, 0.0
      %2094 = vadd.xlane.f32.xlu0 %v2093
      %v2095 = vpop.xlane.xlu0 %2094
      %v2096 = vsel %vm770, %v2092, 0.0
      %2097 = vadd.xlane.f32.xlu0 %v2096
      %v2098 = vpop.xlane.xlu0 %2097
      %v2099 = vmul.f32 %v2095, %v1395
      %v2100 = vmul.f32 %v2098, %v1395
      %v2101 = vadd.f32 %v2099, 1e-05
      %v2102 = vadd.f32 %v2100, 1e-05
      %v2103 = vrsqrt.pop %v2101
      %v2104 = vmul.f32 %v2103, %v2101
      %v2105 = vmul.f32 %v2104, %v2103
      %v2106 = vmul.f32 0.5, %v2105
      %v2107 = vsub.f32 1.5, %v2106
      %v2108 = vmul.f32 %v2103, %v2107
      %vm2109 = vweird.f32 %v2101
      %vm2110 = vweird.f32 %v2103
      %vm2111 = vmor %vm2109, %vm2110
      %v2112 = vsel %vm2111, %v2103, %v2108
      %v2113 = vrsqrt.pop %v2102
      %v2114 = vmul.f32 %v2113, %v2102
      %v2115 = vmul.f32 %v2114, %v2113
      %v2116 = vmul.f32 0.5, %v2115
      %v2117 = vsub.f32 1.5, %v2116
      %v2118 = vmul.f32 %v2113, %v2117
      %vm2119 = vweird.f32 %v2102
      %vm2120 = vweird.f32 %v2113
      %vm2121 = vmor %vm2119, %vm2120
      %v2122 = vsel %vm2121, %v2113, %v2118
      %v2123 = vmul.f32 %v2089, %v2112
      %v2124 = vmul.f32 %v2090, %v2122
      %v2126 = vperm.slane %v2079, 0
      %v2128 = vmul.f32 %v2123, %v2126
      %v2129 = vmul.f32 %v2124, %v2126
      %v2131 = vperm.slane %v2080, 0
      %v2133 = vadd.f32 %v2128, %v2131
      %v2134 = vadd.f32 %v2129, %v2131
      %v2135 = vld [vmem:[%s16] sm:$0xff]
      %v2136 = vld [vmem:[%s16 + $0x8] sm:$0xff]
      %v2137 = vld [vmem:[%s16 + $0x10] sm:$0xff]
      %v2138 = vld [vmem:[%s16 + $0x18] sm:$0xff]
      %v2139 = vld [vmem:[%s17] sm:$0x1]
      %v2141 = vperm.slane %v2139, 0
      %v2144 = vsel %vm770, %v2133, 0
      %v2147 = vsel %vm770, %v2134, 0
      %2149 = vmatpush.msra.mxu0 0.0
      %2150 = vmatpush.msra.mxu0 0.0
      %2151 = vmatpush.msra.mxu0 0.0
      %2152 = vmatpush.msra.mxu0 0.0
      %2153 = vmatpush.msra.mxu0 0.0
      %2154 = vmatpush.msra.mxu0 0.0
      %2155 = vmatpush.msra.mxu0 0.0
      %2156 = vmatpush.msra.mxu0 0.0
      %2157 = vmatpush.msra.mxu0 0.0
      %2158 = vmatpush.msra.mxu0 0.0
      %2159 = vmatpush.msra.mxu0 0.0
      %2160 = vmatpush.msra.mxu0 0.0
      %2161 = vmatpush.msra.mxu0 %v2138
      %2162 = vmatpush.msra.mxu0 %v2137
      %2163 = vmatpush.msra.mxu0 %v2136
      %2164 = vmatpush.msra.mxu0 %v2135
      %2165 = vmatmul.f32.gmra.mxu0 %v2144
      %v2166 = vpop.f32.mrf.mxu0
      %v2167 = vadd.f32 %v2141, %v2166
      %2168 = vmatmul.f32.gmra.mxu0 %v2147
      %v2169 = vpop.f32.mrf.mxu0
      %v2170 = vadd.f32 %v2141, %v2169
      %2171 = vdwg.mxu0
      %v2172 = vmax.f32 %v2167, 0.0
      %v2173 = vmax.f32 %v2170, 0.0
      %v2174 = vld [vmem:[%s18] sm:$0xff]
      %v2175 = vld [vmem:[%s18 + $0x8] sm:$0xff]
      %v2176 = vld [vmem:[%s18 + $0x10] sm:$0xff]
      %v2177 = vld [vmem:[%s18 + $0x18] sm:$0xff]
      %v2178 = vld [vmem:[%s18 + $0x20] sm:$0xff]
      %v2179 = vld [vmem:[%s18 + $0x28] sm:$0xff]
      %v2180 = vld [vmem:[%s18 + $0x30] sm:$0xff]
      %v2181 = vld [vmem:[%s18 + $0x38] sm:$0xff]
      %v2182 = vld [vmem:[%s19] sm:$0x1]
      %v2184 = vperm.slane %v2182, 0
      %vm2186 = vcmask 523264
      %v2188 = vsel %vm2186, %v2172, 0
      %v2191 = vsel %vm2186, %v2173, 0
      %2193 = vmatpush.msra.mxu0 0.0
      %2194 = vmatpush.msra.mxu0 0.0
      %2195 = vmatpush.msra.mxu0 0.0
      %2196 = vmatpush.msra.mxu0 0.0
      %2197 = vmatpush.msra.mxu0 0.0
      %2198 = vmatpush.msra.mxu0 0.0
      %2199 = vmatpush.msra.mxu0 0.0
      %2200 = vmatpush.msra.mxu0 0.0
      %2201 = vmatpush.msra.mxu0 %v2181
      %2202 = vmatpush.msra.mxu0 %v2180
      %2203 = vmatpush.msra.mxu0 %v2179
      %2204 = vmatpush.msra.mxu0 %v2178
      %2205 = vmatpush.msra.mxu0 %v2177
      %2206 = vmatpush.msra.mxu0 %v2176
      %2207 = vmatpush.msra.mxu0 %v2175
      %2208 = vmatpush.msra.mxu0 %v2174
      %2209 = vmatmul.f32.gmra.mxu0 %v2188
      %v2210 = vpop.f32.mrf.mxu0
      %v2211 = vadd.f32 %v2184, %v2210
      %2212 = vmatmul.f32.gmra.mxu0 %v2191
      %v2213 = vpop.f32.mrf.mxu0
      %v2214 = vadd.f32 %v2184, %v2213
      %2215 = vdwg.mxu0
      %v2216 = vadd.f32 %v2133, %v2211
      %v2217 = vadd.f32 %v2134, %v2214
      %v2218 = vld [vmem:[%s20] sm:$0x1]
      %v2219 = vld [vmem:[%s21] sm:$0x1]
      %v2220 = vsel %vm770, %v2216, 0.0
      %2221 = vadd.xlane.f32.xlu0 %v2220
      %v2222 = vpop.xlane.xlu0 %2221
      %v2223 = vsel %vm770, %v2217, 0.0
      %2224 = vadd.xlane.f32.xlu0 %v2223
      %v2225 = vpop.xlane.xlu0 %2224
      %v2226 = vmul.f32 %v2222, %v1395
      %v2227 = vmul.f32 %v2225, %v1395
      %v2228 = vsub.f32 %v2216, %v2226
      %v2229 = vsub.f32 %v2217, %v2227
      %v2230 = vmul.f32 %v2228, %v2228
      %v2231 = vmul.f32 %v2229, %v2229
      %v2232 = vsel %vm770, %v2230, 0.0
      %2233 = vadd.xlane.f32.xlu0 %v2232
      %v2234 = vpop.xlane.xlu0 %2233
      %v2235 = vsel %vm770, %v2231, 0.0
      %2236 = vadd.xlane.f32.xlu0 %v2235
      %v2237 = vpop.xlane.xlu0 %2236
      %v2238 = vmul.f32 %v2234, %v1395
      %v2239 = vmul.f32 %v2237, %v1395
      %v2240 = vadd.f32 %v2238, 1e-05
      %v2241 = vadd.f32 %v2239, 1e-05
      %v2242 = vrsqrt.pop %v2240
      %v2243 = vmul.f32 %v2242, %v2240
      %v2244 = vmul.f32 %v2243, %v2242
      %v2245 = vmul.f32 0.5, %v2244
      %v2246 = vsub.f32 1.5, %v2245
      %v2247 = vmul.f32 %v2242, %v2246
      %vm2248 = vweird.f32 %v2240
      %vm2249 = vweird.f32 %v2242
      %vm2250 = vmor %vm2248, %vm2249
      %v2251 = vsel %vm2250, %v2242, %v2247
      %v2252 = vrsqrt.pop %v2241
      %v2253 = vmul.f32 %v2252, %v2241
      %v2254 = vmul.f32 %v2253, %v2252
      %v2255 = vmul.f32 0.5, %v2254
      %v2256 = vsub.f32 1.5, %v2255
      %v2257 = vmul.f32 %v2252, %v2256
      %vm2258 = vweird.f32 %v2241
      %vm2259 = vweird.f32 %v2252
      %vm2260 = vmor %vm2258, %vm2259
      %v2261 = vsel %vm2260, %v2252, %v2257
      %v2262 = vmul.f32 %v2228, %v2251
      %v2263 = vmul.f32 %v2229, %v2261
      %v2265 = vperm.slane %v2218, 0
      %v2267 = vmul.f32 %v2262, %v2265
      %v2268 = vmul.f32 %v2263, %v2265
      %v2270 = vperm.slane %v2219, 0
      %v2272 = vadd.f32 %v2267, %v2270
      %v2273 = vadd.f32 %v2268, %v2270
      %v2274 = vld [vmem:[%s22] sm:$0x1]
      %v2275 = vld [vmem:[%s23] sm:$0x1]
      %v2276 = vsel %vm770, %v2272, 0.0
      %2277 = vadd.xlane.f32.xlu0 %v2276
      %v2278 = vpop.xlane.xlu0 %2277
      %v2279 = vsel %vm770, %v2273, 0.0
      %2280 = vadd.xlane.f32.xlu0 %v2279
      %v2281 = vpop.xlane.xlu0 %2280
      %v2282 = vmul.f32 %v2278, %v1395
      %v2283 = vmul.f32 %v2281, %v1395
      %v2284 = vsub.f32 %v2272, %v2282
      %v2285 = vsub.f32 %v2273, %v2283
      %v2286 = vmul.f32 %v2284, %v2284
      %v2287 = vmul.f32 %v2285, %v2285
      %v2288 = vsel %vm770, %v2286, 0.0
      %2289 = vadd.xlane.f32.xlu0 %v2288
      %v2290 = vpop.xlane.xlu0 %2289
      %v2291 = vsel %vm770, %v2287, 0.0
      %2292 = vadd.xlane.f32.xlu0 %v2291
      %v2293 = vpop.xlane.xlu0 %2292
      %v2294 = vmul.f32 %v2290, %v1395
      %v2295 = vmul.f32 %v2293, %v1395
      %v2296 = vadd.f32 %v2294, 1e-05
      %v2297 = vadd.f32 %v2295, 1e-05
      %v2298 = vrsqrt.pop %v2296
      %v2299 = vmul.f32 %v2298, %v2296
      %v2300 = vmul.f32 %v2299, %v2298
      %v2301 = vmul.f32 0.5, %v2300
      %v2302 = vsub.f32 1.5, %v2301
      %v2303 = vmul.f32 %v2298, %v2302
      %vm2304 = vweird.f32 %v2296
      %vm2305 = vweird.f32 %v2298
      %vm2306 = vmor %vm2304, %vm2305
      %v2307 = vsel %vm2306, %v2298, %v2303
      %v2308 = vrsqrt.pop %v2297
      %v2309 = vmul.f32 %v2308, %v2297
      %v2310 = vmul.f32 %v2309, %v2308
      %v2311 = vmul.f32 0.5, %v2310
      %v2312 = vsub.f32 1.5, %v2311
      %v2313 = vmul.f32 %v2308, %v2312
      %vm2314 = vweird.f32 %v2297
      %vm2315 = vweird.f32 %v2308
      %vm2316 = vmor %vm2314, %vm2315
      %v2317 = vsel %vm2316, %v2308, %v2313
      %v2318 = vmul.f32 %v2284, %v2307
      %v2319 = vmul.f32 %v2285, %v2317
      %v2321 = vperm.slane %v2274, 0
      %v2323 = vmul.f32 %v2318, %v2321
      %v2324 = vmul.f32 %v2319, %v2321
      %v2326 = vperm.slane %v2275, 0
      %v2328 = vadd.f32 %v2323, %v2326
      %v2329 = vadd.f32 %v2324, %v2326
      %2330 = vst.msk [vmem:[%s757] sm:$0xff] %vm770, %v2328
      %2331 = vst.msk [vmem:[%s757 + $0x8] sm:$0xff] %vm770, %v2329
      %p2332 = scmp.lt.s32.totalorder %s35, 1
      %s2333 = scalar_select %p2332, %s35, 1
      %s2334 = smul.addr %s2333, 2
      %s2335 = smul.addr %s2334, 8
      %s2336 = scalar_lea.vmem %s24, %s2335
      // Predicated region
      $region117: #{model_forward.9} parent=115 // pred_check
        %p2337 = pneg %p567
      $region118: #{model_forward.9} parent=115 // pred_check_branch
        %2339 = sbr.rel (%p2337) target = $region120
      $region119: #{model_forward.9} parent=115 // pred_region
        _
      $region120: #{model_forward.9} parent=115 // pred_fallthru
        _
    $region116: #{model_forward.9} parent=5 // pred_fallthru
      _
    %p2340 = scmp.le.s32.totalorder 2, %s30
    // Predicated region
    $region121: #{model_forward.9} parent=5 // pred_check
      %p2341 = pneg %p2340
    $region122: #{model_forward.9} parent=5 // pred_check_branch
      %2343 = sbr.rel (%p2341) target = $region124
    $region123: #{model_forward.9} parent=5 // pred_region
      %s2344 = ssub.s32 %s30, 2
      // Predicated region
      $region125: #{model_forward.9} parent=123 // pred_check
        %p2345 = pneg %p573
      $region126: #{model_forward.9} parent=123 // pred_check_branch
        %2347 = sbr.rel (%p2345) target = $region128
      $region127: #{model_forward.9} parent=123 // pred_region
        %p2348 = scmp.lt.s32.totalorder %s36, 1
        %s2349 = scalar_select %p2348, %s36, 1
        %s2350 = smul.addr %s2349, 2
        %s2351 = smul.addr %s2350, 8
        %s2352 = scalar_lea.vmem %s24, %s2351
      $region128: #{model_forward.9} parent=123 // pred_fallthru
        _
    $region124: #{model_forward.9} parent=5 // pred_fallthru
      _
  $region6: #{model_forward.9} parent=0 // loop_footer
    %s34 = sadd.s32 1, %s30
  $region7: #{model_forward.9} parent=0 // loop_footer_branch
    %29 = sbr.rel target = $region3
  $region8: #{model_forward.9} parent=0 // loop_exit
    _

// kernel: model_forward.11
$region0: #{model_forward.11}
  #allocation0 [shape = 'u32[]', space=smem, size = 0x4, offset = 0x4, fixed_abs, tag = 'smem constant byte address 0x4 - core index']
  #allocation1 [shape = 'u32[72,128]{1,0:T(1,128)}', space=vmem, size = 0x9000, scoped, tag = 'internal scratch']
  %s0 = inlined_call_operand.vmem [shape: f32[2,16,32], index: 0, kind: input, shape index: {}]
  %s1 = inlined_call_operand.vmem [shape: f32[32,4], index: 1, kind: input, shape index: {}]
  %s2 = inlined_call_operand.vmem [shape: f32[1,4], index: 2, kind: input, shape index: {}]
  %s3 = inlined_call_operand.vmem [shape: f32[2,8,4], index: 3, kind: input, shape index: {}]
  %s4 = inlined_call_operand.vmem [shape: f32[2,8,4], index: 4, kind: output, shape index: {}]
  %s5 = sld [smem:[#allocation0]]
  $region49: #{model_forward.11} parent=0
    _
  %s7 = ssub.s32 1, %s5
  %s8 = scalar_select 0, %s7, %s5
  loop: start=0, step=1, limit=4
  $region2: #{model_forward.11} parent=0 // loop_pre_header
    _
  $region3: #{model_forward.11} parent=0 // loop_header
    %s10 = sphi 0, %s14
    %p11 = scmp.ge.s32.totalorder %s10, 4
    %s20 = sphi 0, %s22
    %s23 = sphi 0, %s20
    %s24 = sphi 0, %s23
    %s40 = sphi 0, %s24
    %s44 = sphi 0, %s44
    %s46 = sphi 0, %s44
    %s47 = sphi 0, %s46
    %s61 = sphi 0, %s47
    %s65 = sphi 0, %s65
    %s67 = sphi 0, %s65
    %s68 = sphi 0, %s67
    %s82 = sphi 0, %s68
    %s88 = sphi 0, %s90
    %s91 = sphi 0, %s88
    %s92 = sphi 0, %s91
    %s108 = sphi 0, %s92
    %s114 = sphi 0, %s116
    %s117 = sphi 0, %s114
    %s118 = sphi 0, %s117
    %s134 = sphi 0, %s118
  $region4: #{model_forward.11} parent=0 // loop_header_branch
    %13 = sbr.rel (%p11) target = $region8
  $region5: #{model_forward.11} parent=0 // loop_body
    %s15 = ssub.s32 %s10, 1
    %s16 = ssub.s32 %s10, 2
    %s17 = sadd.s32 %s10, 1
    %s18 = ssub.s32 %s10, %s17
    %p19 = scmp.eq.s32.totalorder %s18, 0
    %s21 = sadd.s32 %s20, 1
    %s22 = scalar_select %p19, %s20, %s21
    %p25 = pneg %p19
    %p26 = scmp.eq.s32.totalorder %s10, 1
    %p27 = por %p25, %p26
    %p28 = scmp.ne.s32.totalorder %s20, %s23
    %p29 = scmp.eq.s32.totalorder %s10, 0
    %p30 = por %p28, %p29
    %p31 = scmp.ne.s32.totalorder %s20, %s23
    %p32 = scmp.eq.s32.totalorder %s15, 1
    %p33 = por %p31, %p32
    %p34 = scmp.ne.s32.totalorder %s23, %s24
    %p35 = scmp.eq.s32.totalorder %s15, 0
    %p36 = por %p34, %p35
    %p37 = scmp.ne.s32.totalorder %s23, %s24
    %p38 = scmp.eq.s32.totalorder %s16, 1
    %p39 = por %p37, %p38
    %p41 = scmp.ne.s32.totalorder %s24, %s40
    %p42 = scmp.eq.s32.totalorder %s16, 0
    %p43 = por %p41, %p42
    %s45 = sadd.s32 %s44, 1
    %p48 = scmp.eq.s32.totalorder %s10, 1
    %p49 = scmp.ne.s32.totalorder %s44, %s46
    %p50 = scmp.eq.s32.totalorder %s10, 0
    %p51 = por %p49, %p50
    %p52 = scmp.ne.s32.totalorder %s44, %s46
    %p53 = scmp.eq.s32.totalorder %s15, 1
    %p54 = por %p52, %p53
    %p55 = scmp.ne.s32.totalorder %s46, %s47
    %p56 = scmp.eq.s32.totalorder %s15, 0
    %p57 = por %p55, %p56
    %p58 = scmp.ne.s32.totalorder %s46, %s47
    %p59 = scmp.eq.s32.totalorder %s16, 1
    %p60 = por %p58, %p59
    %p62 = scmp.ne.s32.totalorder %s47, %s61
    %p63 = scmp.eq.s32.totalorder %s16, 0
    %p64 = por %p62, %p63
    %s66 = sadd.s32 %s65, 1
    %p69 = scmp.eq.s32.totalorder %s10, 1
    %p70 = scmp.ne.s32.totalorder %s65, %s67
    %p71 = scmp.eq.s32.totalorder %s10, 0
    %p72 = por %p70, %p71
    %p73 = scmp.ne.s32.totalorder %s65, %s67
    %p74 = scmp.eq.s32.totalorder %s15, 1
    %p75 = por %p73, %p74
    %p76 = scmp.ne.s32.totalorder %s67, %s68
    %p77 = scmp.eq.s32.totalorder %s15, 0
    %p78 = por %p76, %p77
    %p79 = scmp.ne.s32.totalorder %s67, %s68
    %p80 = scmp.eq.s32.totalorder %s16, 1
    %p81 = por %p79, %p80
    %p83 = scmp.ne.s32.totalorder %s68, %s82
    %p84 = scmp.eq.s32.totalorder %s16, 0
    %p85 = por %p83, %p84
    %s86 = ssub.s32 %s10, %s17
    %p87 = scmp.eq.s32.totalorder %s86, 0
    %s89 = sadd.s32 %s88, 1
    %s90 = scalar_select %p87, %s88, %s89
    %p93 = pneg %p87
    %p94 = scmp.eq.s32.totalorder %s10, 1
    %p95 = por %p93, %p94
    %p96 = scmp.ne.s32.totalorder %s88, %s91
    %p97 = scmp.eq.s32.totalorder %s10, 0
    %p98 = por %p96, %p97
    %p99 = scmp.ne.s32.totalorder %s88, %s91
    %p100 = scmp.eq.s32.totalorder %s15, 1
    %p101 = por %p99, %p100
    %p102 = scmp.ne.s32.totalorder %s91, %s92
    %p103 = scmp.eq.s32.totalorder %s15, 0
    %p104 = por %p102, %p103
    %p105 = scmp.ne.s32.totalorder %s91, %s92
    %p106 = scmp.eq.s32.totalorder %s16, 1
    %p107 = por %p105, %p106
    %p109 = scmp.ne.s32.totalorder %s92, %s108
    %p110 = scmp.eq.s32.totalorder %s16, 0
    %p111 = por %p109, %p110
    %s112 = ssub.s32 %s10, %s17
    %p113 = scmp.eq.s32.totalorder %s112, 0
    %s115 = sadd.s32 %s114, 1
    %s116 = scalar_select %p113, %s114, %s115
    %p119 = pneg %p113
    %p120 = scmp.eq.s32.totalorder %s10, 1
    %p121 = por %p119, %p120
    %p122 = scmp.ne.s32.totalorder %s114, %s117
    %p123 = scmp.eq.s32.totalorder %s10, 0
    %p124 = por %p122, %p123
    %p125 = scmp.ne.s32.totalorder %s114, %s117
    %p126 = scmp.eq.s32.totalorder %s15, 1
    %p127 = por %p125, %p126
    %p128 = scmp.ne.s32.totalorder %s117, %s118
    %p129 = scmp.eq.s32.totalorder %s15, 0
    %p130 = por %p128, %p129
    %p131 = scmp.ne.s32.totalorder %s117, %s118
    %p132 = scmp.eq.s32.totalorder %s16, 1
    %p133 = por %p131, %p132
    %p135 = scmp.ne.s32.totalorder %s118, %s134
    %p136 = scmp.eq.s32.totalorder %s16, 0
    %p137 = por %p135, %p136
    %p138 = scmp.le.s32.totalorder 1, %s10
    %p139 = scmp.lt.s32.totalorder %s10, 3
    %p140 = pnand %p138, %p139
    %p141 = pneg %p140
    // Predicated region
    $region9: #{model_forward.11} parent=5 // pred_check
      _
    $region10: #{model_forward.11} parent=5 // pred_check_branch
      %143 = sbr.rel (%p140) target = $region12
    $region11: #{model_forward.11} parent=5 // pred_region
      %s144 = ssub.s32 %s10, 1
      // Predicated region
      $region13: #{model_forward.11} parent=11 // pred_check
        %p145 = pneg %p57
      $region14: #{model_forward.11} parent=11 // pred_check_branch
        %147 = sbr.rel (%p145) target = $region16
      $region15: #{model_forward.11} parent=11 // pred_region
        _
      $region16: #{model_forward.11} parent=11 // pred_fallthru
        _
      // Predicated region
      $region17: #{model_forward.11} parent=11 // pred_check
        %p148 = pneg %p78
      $region18: #{model_forward.11} parent=11 // pred_check_branch
        %150 = sbr.rel (%p148) target = $region20
      $region19: #{model_forward.11} parent=11 // pred_region
        _
      $region20: #{model_forward.11} parent=11 // pred_fallthru
        _
    $region12: #{model_forward.11} parent=5 // pred_fallthru
      _
    %p151 = scmp.lt.s32.totalorder %s10, 2
    // Predicated region
    $region21: #{model_forward.11} parent=5 // pred_check
      %p152 = pneg %p151
    $region22: #{model_forward.11} parent=5 // pred_check_branch
      %154 = sbr.rel (%p152) target = $region24
    $region23: #{model_forward.11} parent=5 // pred_region
      // Predicated region
      $region25: #{model_forward.11} parent=23 // pred_check
        %p155 = pneg %p30
      $region26: #{model_forward.11} parent=23 // pred_check_branch
        %157 = sbr.rel (%p155) target = $region28
      $region27: #{model_forward.11} parent=23 // pred_region
        %p158 = scmp.lt.s32.totalorder %s10, 1
        %s159 = scalar_select %p158, %s10, 1
        %s160 = smul.addr %s159, 2
        %s161 = smul.addr %s160, 8
        %s162 = scalar_lea.vmem %s0, %s161
      $region28: #{model_forward.11} parent=23 // pred_fallthru
        _
      // Predicated region
      $region29: #{model_forward.11} parent=23 // pred_check
        %p163 = pneg %p98
      $region30: #{model_forward.11} parent=23 // pred_check_branch
        %165 = sbr.rel (%p163) target = $region32
      $region31: #{model_forward.11} parent=23 // pred_region
        %p166 = scmp.lt.s32.totalorder %s10, 1
        %s167 = scalar_select %p166, %s10, 1
        %s168 = smul.addr %s167, 8
        %s169 = scalar_lea.vmem %s3, %s168
      $region32: #{model_forward.11} parent=23 // pred_fallthru
        _
    $region24: #{model_forward.11} parent=5 // pred_fallthru
      _
    %p170 = scmp.le.s32.totalorder 1, %s10
    %p171 = scmp.lt.s32.totalorder %s10, 3
    %p172 = pnand %p170, %p171
    %p173 = pneg %p172
    // Predicated region
    $region33: #{model_forward.11} parent=5 // pred_check
      _
    $region34: #{model_forward.11} parent=5 // pred_check_branch
      %175 = sbr.rel (%p172) target = $region36
    $region35: #{model_forward.11} parent=5 // pred_region
      %s176 = ssub.s32 %s10, 1
      %p177 = scmp.lt.s32.totalorder %s15, 1
      %s178 = scalar_select %p177, %s15, 1
      %s179 = smul.addr %s178, 2
      %s180 = smul.addr %s179, 8
      %s181 = scalar_lea.vmem %s0, %s180
      %p182 = pneg %p36
      %p183 = pneg %p33
      %p184 = pneg %p57
      %p185 = pneg %p54
      %p186 = pneg %p78
      %p187 = pneg %p75
      %p188 = scmp.lt.s32.totalorder %s15, 1
      %s189 = scalar_select %p188, %s15, 1
      %s190 = smul.addr %s189, 8
      %s191 = scalar_lea.vmem %s3, %s190
      %p192 = pneg %p104
      %p193 = pneg %p101
      %p194 = pneg %p130
      %p195 = pneg %p127
      %p196 = scmp.lt.s32.totalorder %s15, 1
      %s197 = scalar_select %p196, %s15, 1
      %s198 = smul.addr %s197, 8
      %s199 = scalar_lea.vmem %s4, %s198
      %p200 = scmp.lt.s32.totalorder %s15, 1
      %s201 = scalar_select %p200, %s15, 1
      %s202 = smul.addr %s201, 2
      %s203 = smul.addr %s202, 8
      %s204 = scalar_lea.vmem %s0, %s203
      %p205 = scmp.lt.s32.totalorder %s15, 1
      %s206 = scalar_select %p205, %s15, 1
      %s207 = smul.addr %s206, 8
      %s208 = scalar_lea.vmem %s3, %s207
      %p209 = scmp.lt.s32.totalorder %s15, 1
      %s210 = scalar_select %p209, %s15, 1
      %s211 = smul.addr %s210, 8
      %s212 = scalar_lea.vmem %s4, %s211
      %v213 = vld [vmem:[%s204 + $0x8] sm:$0xff]
      %v214 = vld [vmem:[%s1] sm:$0xff]
      %v215 = vld [vmem:[%s1 + $0x8] sm:$0xff]
      %v216 = vld [vmem:[%s1 + $0x10] sm:$0xff]
      %v217 = vld [vmem:[%s1 + $0x18] sm:$0xff]
      %v218 = vld [vmem:[%s2] sm:$0x1]
      %v220 = vperm.slane %v218, 0
      %vm222 = vcmask 261120
      %v224 = vsel %vm222, %v213, 0
      %226 = vmatpush.msra.mxu0 0.0
      %227 = vmatpush.msra.mxu0 0.0
      %228 = vmatpush.msra.mxu0 0.0
      %229 = vmatpush.msra.mxu0 0.0
      %230 = vmatpush.msra.mxu0 0.0
      %231 = vmatpush.msra.mxu0 0.0
      %232 = vmatpush.msra.mxu0 0.0
      %233 = vmatpush.msra.mxu0 0.0
      %234 = vmatpush.msra.mxu0 0.0
      %235 = vmatpush.msra.mxu0 0.0
      %236 = vmatpush.msra.mxu0 0.0
      %237 = vmatpush.msra.mxu0 0.0
      %238 = vmatpush.msra.mxu0 %v217
      %239 = vmatpush.msra.mxu0 %v216
      %240 = vmatpush.msra.mxu0 %v215
      %241 = vmatpush.msra.mxu0 %v214
      %242 = vmatmul.f32.gmra.mxu0 %v224
      %v243 = vpop.f32.mrf.mxu0
      %v244 = vadd.f32 %v220, %v243
      %245 = vdwg.mxu0
      %v246 = vld [vmem:[%s208] sm:$0xff]
      %v247 = vadd.f32 %v244, %v246
      %vm248 = vcmask 31744
      %249 = vst.msk [vmem:[%s212] sm:$0xff] %vm248, %v247
      %p250 = scmp.lt.s32.totalorder %s15, 1
      %s251 = scalar_select %p250, %s15, 1
      %s252 = smul.addr %s251, 8
      %s253 = scalar_lea.vmem %s4, %s252
      // Predicated region
      $region37: #{model_forward.11} parent=35 // pred_check
        %p254 = pneg %p127
      $region38: #{model_forward.11} parent=35 // pred_check_branch
        %256 = sbr.rel (%p254) target = $region40
      $region39: #{model_forward.11} parent=35 // pred_region
        _
      $region40: #{model_forward.11} parent=35 // pred_fallthru
        _
    $region36: #{model_forward.11} parent=5 // pred_fallthru
      _
    %p257 = scmp.le.s32.totalorder 2, %s10
    // Predicated region
    $region41: #{model_forward.11} parent=5 // pred_check
      %p258 = pneg %p257
    $region42: #{model_forward.11} parent=5 // pred_check_branch
      %260 = sbr.rel (%p258) target = $region44
    $region43: #{model_forward.11} parent=5 // pred_region
      %s261 = ssub.s32 %s10, 2
      // Predicated region
      $region45: #{model_forward.11} parent=43 // pred_check
        %p262 = pneg %p133
      $region46: #{model_forward.11} parent=43 // pred_check_branch
        %264 = sbr.rel (%p262) target = $region48
      $region47: #{model_forward.11} parent=43 // pred_region
        %p265 = scmp.lt.s32.totalorder %s16, 1
        %s266 = scalar_select %p265, %s16, 1
        %s267 = smul.addr %s266, 8
        %s268 = scalar_lea.vmem %s4, %s267
      $region48: #{model_forward.11} parent=43 // pred_fallthru
        _
    $region44: #{model_forward.11} parent=5 // pred_fallthru
      _
  $region6: #{model_forward.11} parent=0 // loop_footer
    %s14 = sadd.s32 1, %s10
  $region7: #{model_forward.11} parent=0 // loop_footer_branch
    %9 = sbr.rel target = $region3
  $region8: #{model_forward.11} parent=0 // loop_exit
    _

// kernel: model_forward.10
$region0: #{model_forward.10}
  #allocation0 [shape = 'u32[]', space=smem, size = 0x4, offset = 0x4, fixed_abs, tag = 'smem constant byte address 0x4 - core index']
  #allocation1 [shape = 'u32[72,128]{1,0:T(1,128)}', space=vmem, size = 0x9000, scoped, tag = 'internal scratch']
  %s0 = inlined_call_operand.vmem [shape: f32[8,16], index: 0, kind: input, shape index: {}]
  %s1 = inlined_call_operand.vmem [shape: f32[8,1], index: 1, kind: input, shape index: {}]
  %s2 = inlined_call_operand.vmem [shape: f32[8,1], index: 2, kind: input, shape index: {}]
  %s3 = inlined_call_operand.vmem [shape: f32[8,1], index: 3, kind: input, shape index: {}]
  %s4 = inlined_call_operand.vmem [shape: f32[16,4], index: 4, kind: input, shape index: {}]
  %s5 = inlined_call_operand.vmem [shape: f32[1,4], index: 5, kind: input, shape index: {}]
  %s6 = inlined_call_operand.vmem [shape: f32[3,16,8], index: 6, kind: input, shape index: {}]
  %s7 = inlined_call_operand.vmem [shape: f32[1,8], index: 7, kind: input, shape index: {}]
  %s8 = inlined_call_operand.vmem [shape: f32[3,16,8], index: 8, kind: input, shape index: {}]
  %s9 = inlined_call_operand.vmem [shape: f32[1,8], index: 9, kind: input, shape index: {}]
  %s10 = inlined_call_operand.vmem [shape: f32[8,16], index: 10, kind: input, shape index: {}]
  %s11 = inlined_call_operand.vmem [shape: f32[8,16], index: 11, kind: input, shape index: {}]
  %s12 = inlined_call_operand.vmem [shape: f32[8,16], index: 12, kind: input, shape index: {}]
  %s13 = inlined_call_operand.vmem [shape: f32[8,16], index: 13, kind: input, shape index: {}]
  %s14 = inlined_call_operand.vmem [shape: f32[8,16], index: 14, kind: input, shape index: {}]
  %s15 = inlined_call_operand.vmem [shape: f32[8,16], index: 15, kind: input, shape index: {}]
  %s16 = inlined_call_operand.vmem [shape: f32[8,8], index: 16, kind: output, shape index: {}]
  %s17 = sld [smem:[#allocation0]]
  $region74: #{model_forward.10} parent=0
    _
  %s19 = ssub.s32 1, %s17
  %s20 = scalar_select 0, %s19, %s17
  // Predicated region
  $region2: #{model_forward.10} parent=0 // pred_check
    _
  $region3: #{model_forward.10} parent=0 // pred_check_branch
    %22 = sbr.rel (0) target = $region5
  $region4: #{model_forward.10} parent=0 // pred_region
    _
  $region5: #{model_forward.10} parent=0 // pred_fallthru
    _
  // Predicated region
  $region6: #{model_forward.10} parent=0 // pred_check
    _
  $region7: #{model_forward.10} parent=0 // pred_check_branch
    %24 = sbr.rel (0) target = $region9
  $region8: #{model_forward.10} parent=0 // pred_region
    _
  $region9: #{model_forward.10} parent=0 // pred_fallthru
    _
  // Predicated region
  $region10: #{model_forward.10} parent=0 // pred_check
    _
  $region11: #{model_forward.10} parent=0 // pred_check_branch
    %26 = sbr.rel (0) target = $region13
  $region12: #{model_forward.10} parent=0 // pred_region
    _
  $region13: #{model_forward.10} parent=0 // pred_fallthru
    _
  // Predicated region
  $region14: #{model_forward.10} parent=0 // pred_check
    _
  $region15: #{model_forward.10} parent=0 // pred_check_branch
    %28 = sbr.rel (0) target = $region17
  $region16: #{model_forward.10} parent=0 // pred_region
    _
  $region17: #{model_forward.10} parent=0 // pred_fallthru
    _
  // Predicated region
  $region18: #{model_forward.10} parent=0 // pred_check
    _
  $region19: #{model_forward.10} parent=0 // pred_check_branch
    %30 = sbr.rel (0) target = $region21
  $region20: #{model_forward.10} parent=0 // pred_region
    _
  $region21: #{model_forward.10} parent=0 // pred_fallthru
    _
  // Predicated region
  $region22: #{model_forward.10} parent=0 // pred_check
    _
  $region23: #{model_forward.10} parent=0 // pred_check_branch
    %32 = sbr.rel (0) target = $region25
  $region24: #{model_forward.10} parent=0 // pred_region
    _
  $region25: #{model_forward.10} parent=0 // pred_fallthru
    _
  // Predicated region
  $region26: #{model_forward.10} parent=0 // pred_check
    _
  $region27: #{model_forward.10} parent=0 // pred_check_branch
    %34 = sbr.rel (0) target = $region29
  $region28: #{model_forward.10} parent=0 // pred_region
    _
  $region29: #{model_forward.10} parent=0 // pred_fallthru
    _
  // Predicated region
  $region30: #{model_forward.10} parent=0 // pred_check
    _
  $region31: #{model_forward.10} parent=0 // pred_check_branch
    %36 = sbr.rel (0) target = $region33
  $region32: #{model_forward.10} parent=0 // pred_region
    _
  $region33: #{model_forward.10} parent=0 // pred_fallthru
    _
  // Predicated region
  $region34: #{model_forward.10} parent=0 // pred_check
    _
  $region35: #{model_forward.10} parent=0 // pred_check_branch
    %38 = sbr.rel (0) target = $region37
  $region36: #{model_forward.10} parent=0 // pred_region
    _
  $region37: #{model_forward.10} parent=0 // pred_fallthru
    _
  // Predicated region
  $region38: #{model_forward.10} parent=0 // pred_check
    _
  $region39: #{model_forward.10} parent=0 // pred_check_branch
    %40 = sbr.rel (0) target = $region41
  $region40: #{model_forward.10} parent=0 // pred_region
    _
  $region41: #{model_forward.10} parent=0 // pred_fallthru
    _
  // Predicated region
  $region42: #{model_forward.10} parent=0 // pred_check
    _
  $region43: #{model_forward.10} parent=0 // pred_check_branch
    %42 = sbr.rel (0) target = $region45
  $region44: #{model_forward.10} parent=0 // pred_region
    _
  $region45: #{model_forward.10} parent=0 // pred_fallthru
    _
  // Predicated region
  $region46: #{model_forward.10} parent=0 // pred_check
    _
  $region47: #{model_forward.10} parent=0 // pred_check_branch
    %44 = sbr.rel (0) target = $region49
  $region48: #{model_forward.10} parent=0 // pred_region
    _
  $region49: #{model_forward.10} parent=0 // pred_fallthru
    _
  // Predicated region
  $region50: #{model_forward.10} parent=0 // pred_check
    _
  $region51: #{model_forward.10} parent=0 // pred_check_branch
    %46 = sbr.rel (0) target = $region53
  $region52: #{model_forward.10} parent=0 // pred_region
    _
  $region53: #{model_forward.10} parent=0 // pred_fallthru
    _
  // Predicated region
  $region54: #{model_forward.10} parent=0 // pred_check
    _
  $region55: #{model_forward.10} parent=0 // pred_check_branch
    %48 = sbr.rel (0) target = $region57
  $region56: #{model_forward.10} parent=0 // pred_region
    _
  $region57: #{model_forward.10} parent=0 // pred_fallthru
    _
  // Predicated region
  $region58: #{model_forward.10} parent=0 // pred_check
    _
  $region59: #{model_forward.10} parent=0 // pred_check_branch
    %50 = sbr.rel (0) target = $region61
  $region60: #{model_forward.10} parent=0 // pred_region
    _
  $region61: #{model_forward.10} parent=0 // pred_fallthru
    _
  // Predicated region
  $region62: #{model_forward.10} parent=0 // pred_check
    _
  $region63: #{model_forward.10} parent=0 // pred_check_branch
    %52 = sbr.rel (0) target = $region65
  $region64: #{model_forward.10} parent=0 // pred_region
    _
  $region65: #{model_forward.10} parent=0 // pred_fallthru
    _
  %v53 = vld [vmem:[%s0] sm:$0xff]
  %vm54 = vcmask 130048
  %v55 = vsel %vm54, %v53, 0.0
  %56 = vadd.xlane.f32.xlu0 %v55
  %v57 = vpop.xlane.xlu0 %56
  %v58 = vrcp.pop 16.0
  %v59 = vmul.f32 16.0, %v58
  %v60 = vsub.f32 1.0, %v59
  %v61 = vmul.f32 %v58, %v60
  %v62 = vadd.f32 %v58, %v61
  %vm63 = vweird.f32 %v58
  %v64 = vsel %vm63, %v58, %v62
  %v65 = vmul.f32 %v57, %v64
  %v66 = vsub.f32 %v53, %v65
  %v67 = vmul.f32 %v66, %v66
  %v68 = vsel %vm54, %v67, 0.0
  %69 = vadd.xlane.f32.xlu0 %v68
  %v70 = vpop.xlane.xlu0 %69
  %v71 = vmul.f32 %v70, %v64
  %v72 = vadd.f32 %v71, 1e-05
  %v73 = vrsqrt.pop %v72
  %v74 = vmul.f32 %v73, %v72
  %v75 = vmul.f32 %v74, %v73
  %v76 = vmul.f32 0.5, %v75
  %v77 = vsub.f32 1.5, %v76
  %v78 = vmul.f32 %v73, %v77
  %v79 = vmul.f32 %v72, %v78
  %vm80 = vcmp.eq.f32.partialorder %v72, inf
  %v81 = vsel %vm80, %v72, %v79
  %vm82 = vcmp.eq.f32.partialorder %v72, 0.0
  %v83 = vand.u32 %v72, 2147483648
  %v84 = vsel %vm82, %v83, %v81
  %v85 = vrcp.pop %v84
  %v86 = vmul.f32 %v84, %v85
  %v87 = vsub.f32 1.0, %v86
  %v88 = vmul.f32 %v85, %v87
  %v89 = vadd.f32 %v85, %v88
  %vm90 = vweird.f32 %v84
  %vm91 = vweird.f32 %v85
  %vm92 = vmor %vm90, %vm91
  %v93 = vsel %vm92, %v85, %v89
  %v94 = vand.u32 2147483647, %v84
  %vm95 = vcmp.eq.f32.partialorder %v94, 8.507059e+37
  %v96 = vand.u32 %v84, 2147483648
  %v97 = vor.u32 1.1754944e-38, %v96
  %v98 = vsel %vm95, %v97, %v93
  %v99 = vmul.f32 %v66, %v98
  %v100 = vld [vmem:[%s1] sm:$0xff]
  %102 = vset.pattern.permute.xlu0 0
  %103 = vperm.xlu0 %102, %v100
  %v104 = vpop.permute.xlu0 %103
  %v106 = vmul.f32 %v99, %v104
  %v107 = vld [vmem:[%s2] sm:$0xff]
  %109 = vset.pattern.permute.xlu0 0
  %110 = vperm.xlu0 %109, %v107
  %v111 = vpop.permute.xlu0 %110
  %v113 = vadd.f32 %v106, %v111
  %v114 = vld [vmem:[%s4] sm:$0xff]
  %v115 = vld [vmem:[%s4 + $0x8] sm:$0xff]
  %v116 = vld [vmem:[%s5] sm:$0x1]
  %v118 = vperm.slane %v116, 0
  %v121 = vsel %vm54, %v113, 0
  %123 = vmatpush.msra.mxu0 0.0
  %124 = vmatpush.msra.mxu0 0.0
  %125 = vmatpush.msra.mxu0 0.0
  %126 = vmatpush.msra.mxu0 0.0
  %127 = vmatpush.msra.mxu0 0.0
  %128 = vmatpush.msra.mxu0 0.0
  %129 = vmatpush.msra.mxu0 0.0
  %130 = vmatpush.msra.mxu0 0.0
  %131 = vmatpush.msra.mxu0 0.0
  %132 = vmatpush.msra.mxu0 0.0
  %133 = vmatpush.msra.mxu0 0.0
  %134 = vmatpush.msra.mxu0 0.0
  %135 = vmatpush.msra.mxu0 0.0
  %136 = vmatpush.msra.mxu0 0.0
  %137 = vmatpush.msra.mxu0 %v115
  %138 = vmatpush.msra.mxu0 %v114
  %139 = vmatmul.f32.gmra.mxu0 %v121
  %v140 = vpop.f32.mrf.mxu0
  %v141 = vadd.f32 %v118, %v140
  %142 = vdwg.mxu0
  %vm143 = vcmask 31744
  %v144 = vsel %vm143, %v141, -inf
  %145 = vmax.xlane.f32.xlu0 %v144
  %v146 = vpop.xlane.xlu0 %145
  %v147 = vsub.f32 %v141, %v146
  %v148 = vmul.f32 %v147, 1.442695
  %v149 = vpow.pop %v148
  %v150 = vsel %vm143, %v149, 0.0
  %151 = vadd.xlane.f32.xlu0 %v150
  %v152 = vpop.xlane.xlu0 %151
  %v153 = vrcp.pop %v152
  %v154 = vmul.f32 %v152, %v153
  %v155 = vsub.f32 1.0, %v154
  %v156 = vmul.f32 %v153, %v155
  %v157 = vadd.f32 %v153, %v156
  %vm158 = vweird.f32 %v152
  %vm159 = vweird.f32 %v153
  %vm160 = vmor %vm158, %vm159
  %v161 = vsel %vm160, %v153, %v157
  %v162 = vand.u32 2147483647, %v152
  %vm163 = vcmp.eq.f32.partialorder %v162, 8.507059e+37
  %v164 = vand.u32 %v152, 2147483648
  %v165 = vor.u32 1.1754944e-38, %v164
  %v166 = vsel %vm163, %v165, %v161
  %v167 = vmul.f32 %v149, %v166
  %v168 = vld [vmem:[%s6] sm:$0xff]
  %v169 = vld [vmem:[%s6 + $0x8] sm:$0xff]
  %vm170 = vcmask 64512
  %v171 = vsel %vm170, %v168, 0.0
  %v172 = vsel %vm170, %v169, 0.0
  %v173 = vadd.f32 %v171, %v172
  %v174 = vrot.slane %v173, 4
  %v175 = vadd.f32 %v173, %v174
  %v176 = vrot.slane %v175, 2
  %v177 = vadd.f32 %v175, %v176
  %v178 = vrot.slane %v177, 1
  %v179 = vadd.f32 %v177, %v178
  %s180 = scalar_lea.vmem %s6, 16
  %v181 = vld [vmem:[%s180] sm:$0xff]
  %v182 = vld [vmem:[%s180 + $0x8] sm:$0xff]
  %183 = vmatpush.msra.mxu0 0.0
  %184 = vmatpush.msra.mxu0 0.0
  %185 = vmatpush.msra.mxu0 0.0
  %186 = vmatpush.msra.mxu0 0.0
  %187 = vmatpush.msra.mxu0 0.0
  %188 = vmatpush.msra.mxu0 0.0
  %189 = vmatpush.msra.mxu0 0.0
  %190 = vmatpush.msra.mxu0 0.0
  %191 = vmatpush.msra.mxu0 0.0
  %192 = vmatpush.msra.mxu0 0.0
  %193 = vmatpush.msra.mxu0 0.0
  %194 = vmatpush.msra.mxu0 0.0
  %195 = vmatpush.msra.mxu0 0.0
  %196 = vmatpush.msra.mxu0 0.0
  %197 = vmatpush.msra.mxu0 %v182
  %198 = vmatpush.msra.mxu0 %v181
  %199 = vmatmul.f32.gmra.mxu0 %v121
  %v200 = vpop.f32.mrf.mxu0
  %v201 = vadd.f32 0.0, %v200
  %202 = vdwg.mxu0
  %v203 = vadd.f32 %v179, %v201
  %v204 = vmul.f32 %v113, %v113
  %s205 = scalar_lea.vmem %s6, 32
  %v206 = vld [vmem:[%s205] sm:$0xff]
  %v207 = vld [vmem:[%s205 + $0x8] sm:$0xff]
  %v209 = vsel %vm54, %v204, 0
  %211 = vmatpush.msra.mxu0 0.0
  %212 = vmatpush.msra.mxu0 0.0
  %213 = vmatpush.msra.mxu0 0.0
  %214 = vmatpush.msra.mxu0 0.0
  %215 = vmatpush.msra.mxu0 0.0
  %216 = vmatpush.msra.mxu0 0.0
  %217 = vmatpush.msra.mxu0 0.0
  %218 = vmatpush.msra.mxu0 0.0
  %219 = vmatpush.msra.mxu0 0.0
  %220 = vmatpush.msra.mxu0 0.0
  %221 = vmatpush.msra.mxu0 0.0
  %222 = vmatpush.msra.mxu0 0.0
  %223 = vmatpush.msra.mxu0 0.0
  %224 = vmatpush.msra.mxu0 0.0
  %225 = vmatpush.msra.mxu0 %v207
  %226 = vmatpush.msra.mxu0 %v206
  %227 = vmatmul.f32.gmra.mxu0 %v209
  %v228 = vpop.f32.mrf.mxu0
  %v229 = vadd.f32 0.0, %v228
  %230 = vdwg.mxu0
  %v231 = vadd.f32 %v203, %v229
  %v232 = vld [vmem:[%s7] sm:$0x1]
  %v234 = vperm.slane %v232, 0
  %v236 = vadd.f32 %v231, %v234
  %v237 = vld [vmem:[%s8] sm:$0xff]
  %v238 = vld [vmem:[%s8 + $0x8] sm:$0xff]
  %v239 = vsel %vm170, %v237, 0.0
  %v240 = vsel %vm170, %v238, 0.0
  %v241 = vadd.f32 %v239, %v240
  %v242 = vrot.slane %v241, 4
  %v243 = vadd.f32 %v241, %v242
  %v244 = vrot.slane %v243, 2
  %v245 = vadd.f32 %v243, %v244
  %v246 = vrot.slane %v245, 1
  %v247 = vadd.f32 %v245, %v246
  %s248 = scalar_lea.vmem %s8, 16
  %v249 = vld [vmem:[%s248] sm:$0xff]
  %v250 = vld [vmem:[%s248 + $0x8] sm:$0xff]
  %251 = vmatpush.msra.mxu0 0.0
  %252 = vmatpush.msra.mxu0 0.0
  %253 = vmatpush.msra.mxu0 0.0
  %254 = vmatpush.msra.mxu0 0.0
  %255 = vmatpush.msra.mxu0 0.0
  %256 = vmatpush.msra.mxu0 0.0
  %257 = vmatpush.msra.mxu0 0.0
  %258 = vmatpush.msra.mxu0 0.0
  %259 = vmatpush.msra.mxu0 0.0
  %260 = vmatpush.msra.mxu0 0.0
  %261 = vmatpush.msra.mxu0 0.0
  %262 = vmatpush.msra.mxu0 0.0
  %263 = vmatpush.msra.mxu0 0.0
  %264 = vmatpush.msra.mxu0 0.0
  %265 = vmatpush.msra.mxu0 %v250
  %266 = vmatpush.msra.mxu0 %v249
  %267 = vmatmul.f32.gmra.mxu0 %v121
  %v268 = vpop.f32.mrf.mxu0
  %v269 = vadd.f32 0.0, %v268
  %270 = vdwg.mxu0
  %v271 = vadd.f32 %v247, %v269
  %s272 = scalar_lea.vmem %s8, 32
  %v273 = vld [vmem:[%s272] sm:$0xff]
  %v274 = vld [vmem:[%s272 + $0x8] sm:$0xff]
  %275 = vmatpush.msra.mxu0 0.0
  %276 = vmatpush.msra.mxu0 0.0
  %277 = vmatpush.msra.mxu0 0.0
  %278 = vmatpush.msra.mxu0 0.0
  %279 = vmatpush.msra.mxu0 0.0
  %280 = vmatpush.msra.mxu0 0.0
  %281 = vmatpush.msra.mxu0 0.0
  %282 = vmatpush.msra.mxu0 0.0
  %283 = vmatpush.msra.mxu0 0.0
  %284 = vmatpush.msra.mxu0 0.0
  %285 = vmatpush.msra.mxu0 0.0
  %286 = vmatpush.msra.mxu0 0.0
  %287 = vmatpush.msra.mxu0 0.0
  %288 = vmatpush.msra.mxu0 0.0
  %289 = vmatpush.msra.mxu0 %v274
  %290 = vmatpush.msra.mxu0 %v273
  %291 = vmatmul.f32.gmra.mxu0 %v209
  %v292 = vpop.f32.mrf.mxu0
  %v293 = vadd.f32 0.0, %v292
  %294 = vdwg.mxu0
  %v295 = vadd.f32 %v271, %v293
  %v296 = vld [vmem:[%s9] sm:$0x1]
  %v298 = vperm.slane %v296, 0
  %v300 = vadd.f32 %v295, %v298
  %v301 = vrot.slane %v113, 1
  %v302 = vrot.slane %v113, 2
  %v303 = vrot.slane %v113, 3
  %v304 = vrot.slane %v113, 4
  %v305 = vrot.slane %v113, 5
  %v306 = vrot.slane %v113, 6
  %v307 = vrot.slane %v113, 7
  %v308 = vld [vmem:[%s11] sm:$0xff]
  %v309 = vperm.slane %v113, 0
  %v310 = vperm.slane %v301, 0
  %v311 = vperm.slane %v302, 0
  %v312 = vperm.slane %v303, 0
  %v313 = vperm.slane %v304, 0
  %v314 = vperm.slane %v305, 0
  %v315 = vperm.slane %v306, 0
  %v316 = vperm.slane %v307, 0
  %v325 = vsub.f32 %v309, %v308
  %v326 = vsub.f32 %v310, %v308
  %v327 = vsub.f32 %v311, %v308
  %v328 = vsub.f32 %v312, %v308
  %v329 = vsub.f32 %v313, %v308
  %v330 = vsub.f32 %v314, %v308
  %v331 = vsub.f32 %v315, %v308
  %v332 = vsub.f32 %v316, %v308
  %v333 = vld [vmem:[%s10] sm:$0xff]
  %v334 = vrcp.pop %v333
  %v335 = vmul.f32 %v333, %v334
  %v336 = vsub.f32 1.0, %v335
  %v337 = vmul.f32 %v334, %v336
  %v338 = vadd.f32 %v334, %v337
  %vm339 = vweird.f32 %v333
  %vm340 = vweird.f32 %v334
  %vm341 = vmor %vm339, %vm340
  %v342 = vsel %vm341, %v334, %v338
  %v343 = vand.u32 2147483647, %v333
  %vm344 = vcmp.eq.f32.partialorder %v343, 8.507059e+37
  %v345 = vand.u32 %v333, 2147483648
  %v346 = vor.u32 1.1754944e-38, %v345
  %v347 = vsel %vm344, %v346, %v342
  %v348 = vmul.f32 %v325, %v347
  %v349 = vmul.f32 %v326, %v347
  %v350 = vmul.f32 %v327, %v347
  %v351 = vmul.f32 %v328, %v347
  %v352 = vmul.f32 %v329, %v347
  %v353 = vmul.f32 %v330, %v347
  %v354 = vmul.f32 %v331, %v347
  %v355 = vmul.f32 %v332, %v347
  %v356 = vmul.f32 %v348, %v348
  %v357 = vmul.f32 %v349, %v349
  %v358 = vmul.f32 %v350, %v350
  %v359 = vmul.f32 %v351, %v351
  %v360 = vmul.f32 %v352, %v352
  %v361 = vmul.f32 %v353, %v353
  %v362 = vmul.f32 %v354, %v354
  %v363 = vmul.f32 %v355, %v355
  %v364 = vsub.f32 %v356, 1.0
  %v365 = vsub.f32 %v357, 1.0
  %v366 = vsub.f32 %v358, 1.0
  %v367 = vsub.f32 %v359, 1.0
  %v368 = vsub.f32 %v360, 1.0
  %v369 = vsub.f32 %v361, 1.0
  %v370 = vsub.f32 %v362, 1.0
  %v371 = vsub.f32 %v363, 1.0
  %v372 = vmul.f32 %v364, 0.86732507
  %v373 = vmul.f32 %v365, 0.86732507
  %v374 = vmul.f32 %v366, 0.86732507
  %v375 = vmul.f32 %v367, 0.86732507
  %v376 = vmul.f32 %v368, 0.86732507
  %v377 = vmul.f32 %v369, 0.86732507
  %v378 = vmul.f32 %v370, 0.86732507
  %v379 = vmul.f32 %v371, 0.86732507
  %v380 = vmul.f32 %v348, -0.5
  %v381 = vmul.f32 %v349, -0.5
  %v382 = vmul.f32 %v350, -0.5
  %v383 = vmul.f32 %v351, -0.5
  %v384 = vmul.f32 %v352, -0.5
  %v385 = vmul.f32 %v353, -0.5
  %v386 = vmul.f32 %v354, -0.5
  %v387 = vmul.f32 %v355, -0.5
  %v388 = vmul.f32 %v380, %v348
  %v389 = vmul.f32 %v381, %v349
  %v390 = vmul.f32 %v382, %v350
  %v391 = vmul.f32 %v383, %v351
  %v392 = vmul.f32 %v384, %v352
  %v393 = vmul.f32 %v385, %v353
  %v394 = vmul.f32 %v386, %v354
  %v395 = vmul.f32 %v387, %v355
  %v396 = vmul.f32 %v388, 1.442695
  %v397 = vpow.pop %v396
  %v398 = vmul.f32 %v389, 1.442695
  %v399 = vpow.pop %v398
  %v400 = vmul.f32 %v390, 1.442695
  %v401 = vpow.pop %v400
  %v402 = vmul.f32 %v391, 1.442695
  %v403 = vpow.pop %v402
  %v404 = vmul.f32 %v392, 1.442695
  %v405 = vpow.pop %v404
  %v406 = vmul.f32 %v393, 1.442695
  %v407 = vpow.pop %v406
  %v408 = vmul.f32 %v394, 1.442695
  %v409 = vpow.pop %v408
  %v410 = vmul.f32 %v395, 1.442695
  %v411 = vpow.pop %v410
  %v412 = vmul.f32 %v372, %v397
  %v413 = vmul.f32 %v373, %v399
  %v414 = vmul.f32 %v374, %v401
  %v415 = vmul.f32 %v375, %v403
  %v416 = vmul.f32 %v376, %v405
  %v417 = vmul.f32 %v377, %v407
  %v418 = vmul.f32 %v378, %v409
  %v419 = vmul.f32 %v379, %v411
  %v420 = vld [vmem:[%s12] sm:$0xff]
  %v421 = vmul.f32 %v412, %v420
  %v422 = vmul.f32 %v413, %v420
  %v423 = vmul.f32 %v414, %v420
  %v424 = vmul.f32 %v415, %v420
  %v425 = vmul.f32 %v416, %v420
  %v426 = vmul.f32 %v417, %v420
  %v427 = vmul.f32 %v418, %v420
  %v428 = vmul.f32 %v419, %v420
  %v429 = vsel %vm54, %v421, 0.0
  %430 = vadd.xlane.f32.xlu0 %v429
  %v431 = vpop.xlane.xlu0 %430
  %v432 = vsel %vm54, %v422, 0.0
  %433 = vadd.xlane.f32.xlu0 %v432
  %v434 = vpop.xlane.xlu0 %433
  %v435 = vsel %vm54, %v423, 0.0
  %436 = vadd.xlane.f32.xlu0 %v435
  %v437 = vpop.xlane.xlu0 %436
  %v438 = vsel %vm54, %v424, 0.0
  %439 = vadd.xlane.f32.xlu0 %v438
  %v440 = vpop.xlane.xlu0 %439
  %v441 = vsel %vm54, %v425, 0.0
  %442 = vadd.xlane.f32.xlu0 %v441
  %v443 = vpop.xlane.xlu0 %442
  %v444 = vsel %vm54, %v426, 0.0
  %445 = vadd.xlane.f32.xlu0 %v444
  %v446 = vpop.xlane.xlu0 %445
  %v447 = vsel %vm54, %v427, 0.0
  %448 = vadd.xlane.f32.xlu0 %v447
  %v449 = vpop.xlane.xlu0 %448
  %v450 = vsel %vm54, %v428, 0.0
  %451 = vadd.xlane.f32.xlu0 %v450
  %v452 = vpop.xlane.xlu0 %451
  %v453 = vmul.f32 %v431, 0.999995
  %v454 = vmul.f32 %v434, 0.999995
  %v455 = vmul.f32 %v437, 0.999995
  %v456 = vmul.f32 %v440, 0.999995
  %v457 = vmul.f32 %v443, 0.999995
  %v458 = vmul.f32 %v446, 0.999995
  %v459 = vmul.f32 %v449, 0.999995
  %v460 = vmul.f32 %v452, 0.999995
  %v461 = vld [vmem:[%s14] sm:$0xff]
  %v462 = vsub.f32 %v309, %v461
  %v463 = vsub.f32 %v310, %v461
  %v464 = vsub.f32 %v311, %v461
  %v465 = vsub.f32 %v312, %v461
  %v466 = vsub.f32 %v313, %v461
  %v467 = vsub.f32 %v314, %v461
  %v468 = vsub.f32 %v315, %v461
  %v469 = vsub.f32 %v316, %v461
  %v470 = vld [vmem:[%s13] sm:$0xff]
  %v471 = vrcp.pop %v470
  %v472 = vmul.f32 %v470, %v471
  %v473 = vsub.f32 1.0, %v472
  %v474 = vmul.f32 %v471, %v473
  %v475 = vadd.f32 %v471, %v474
  %vm476 = vweird.f32 %v470
  %vm477 = vweird.f32 %v471
  %vm478 = vmor %vm476, %vm477
  %v479 = vsel %vm478, %v471, %v475
  %v480 = vand.u32 2147483647, %v470
  %vm481 = vcmp.eq.f32.partialorder %v480, 8.507059e+37
  %v482 = vand.u32 %v470, 2147483648
  %v483 = vor.u32 1.1754944e-38, %v482
  %v484 = vsel %vm481, %v483, %v479
  %v485 = vmul.f32 %v462, %v484
  %v486 = vmul.f32 %v463, %v484
  %v487 = vmul.f32 %v464, %v484
  %v488 = vmul.f32 %v465, %v484
  %v489 = vmul.f32 %v466, %v484
  %v490 = vmul.f32 %v467, %v484
  %v491 = vmul.f32 %v468, %v484
  %v492 = vmul.f32 %v469, %v484
  %v493 = vmul.f32 %v485, %v485
  %v494 = vmul.f32 %v486, %v486
  %v495 = vmul.f32 %v487, %v487
  %v496 = vmul.f32 %v488, %v488
  %v497 = vmul.f32 %v489, %v489
  %v498 = vmul.f32 %v490, %v490
  %v499 = vmul.f32 %v491, %v491
  %v500 = vmul.f32 %v492, %v492
  %v501 = vsub.f32 %v493, 1.0
  %v502 = vsub.f32 %v494, 1.0
  %v503 = vsub.f32 %v495, 1.0
  %v504 = vsub.f32 %v496, 1.0
  %v505 = vsub.f32 %v497, 1.0
  %v506 = vsub.f32 %v498, 1.0
  %v507 = vsub.f32 %v499, 1.0
  %v508 = vsub.f32 %v500, 1.0
  %v509 = vmul.f32 %v501, 0.86732507
  %v510 = vmul.f32 %v502, 0.86732507
  %v511 = vmul.f32 %v503, 0.86732507
  %v512 = vmul.f32 %v504, 0.86732507
  %v513 = vmul.f32 %v505, 0.86732507
  %v514 = vmul.f32 %v506, 0.86732507
  %v515 = vmul.f32 %v507, 0.86732507
  %v516 = vmul.f32 %v508, 0.86732507
  %v517 = vmul.f32 %v485, -0.5
  %v518 = vmul.f32 %v486, -0.5
  %v519 = vmul.f32 %v487, -0.5
  %v520 = vmul.f32 %v488, -0.5
  %v521 = vmul.f32 %v489, -0.5
  %v522 = vmul.f32 %v490, -0.5
  %v523 = vmul.f32 %v491, -0.5
  %v524 = vmul.f32 %v492, -0.5
  %v525 = vmul.f32 %v517, %v485
  %v526 = vmul.f32 %v518, %v486
  %v527 = vmul.f32 %v519, %v487
  %v528 = vmul.f32 %v520, %v488
  %v529 = vmul.f32 %v521, %v489
  %v530 = vmul.f32 %v522, %v490
  %v531 = vmul.f32 %v523, %v491
  %v532 = vmul.f32 %v524, %v492
  %v533 = vmul.f32 %v525, 1.442695
  %v534 = vpow.pop %v533
  %v535 = vmul.f32 %v526, 1.442695
  %v536 = vpow.pop %v535
  %v537 = vmul.f32 %v527, 1.442695
  %v538 = vpow.pop %v537
  %v539 = vmul.f32 %v528, 1.442695
  %v540 = vpow.pop %v539
  %v541 = vmul.f32 %v529, 1.442695
  %v542 = vpow.pop %v541
  %v543 = vmul.f32 %v530, 1.442695
  %v544 = vpow.pop %v543
  %v545 = vmul.f32 %v531, 1.442695
  %v546 = vpow.pop %v545
  %v547 = vmul.f32 %v532, 1.442695
  %v548 = vpow.pop %v547
  %v549 = vmul.f32 %v509, %v534
  %v550 = vmul.f32 %v510, %v536
  %v551 = vmul.f32 %v511, %v538
  %v552 = vmul.f32 %v512, %v540
  %v553 = vmul.f32 %v513, %v542
  %v554 = vmul.f32 %v514, %v544
  %v555 = vmul.f32 %v515, %v546
  %v556 = vmul.f32 %v516, %v548
  %v557 = vld [vmem:[%s15] sm:$0xff]
  %v558 = vmul.f32 %v549, %v557
  %v559 = vmul.f32 %v550, %v557
  %v560 = vmul.f32 %v551, %v557
  %v561 = vmul.f32 %v552, %v557
  %v562 = vmul.f32 %v553, %v557
  %v563 = vmul.f32 %v554, %v557
  %v564 = vmul.f32 %v555, %v557
  %v565 = vmul.f32 %v556, %v557
  %v566 = vsel %vm54, %v558, 0.0
  %567 = vadd.xlane.f32.xlu0 %v566
  %v568 = vpop.xlane.xlu0 %567
  %v569 = vsel %vm54, %v559, 0.0
  %570 = vadd.xlane.f32.xlu0 %v569
  %v571 = vpop.xlane.xlu0 %570
  %v572 = vsel %vm54, %v560, 0.0
  %573 = vadd.xlane.f32.xlu0 %v572
  %v574 = vpop.xlane.xlu0 %573
  %v575 = vsel %vm54, %v561, 0.0
  %576 = vadd.xlane.f32.xlu0 %v575
  %v577 = vpop.xlane.xlu0 %576
  %v578 = vsel %vm54, %v562, 0.0
  %579 = vadd.xlane.f32.xlu0 %v578
  %v580 = vpop.xlane.xlu0 %579
  %v581 = vsel %vm54, %v563, 0.0
  %582 = vadd.xlane.f32.xlu0 %v581
  %v583 = vpop.xlane.xlu0 %582
  %v584 = vsel %vm54, %v564, 0.0
  %585 = vadd.xlane.f32.xlu0 %v584
  %v586 = vpop.xlane.xlu0 %585
  %v587 = vsel %vm54, %v565, 0.0
  %588 = vadd.xlane.f32.xlu0 %v587
  %v589 = vpop.xlane.xlu0 %588
  %v590 = vmul.f32 %v568, 0.999995
  %v591 = vmul.f32 %v571, 0.999995
  %v592 = vmul.f32 %v574, 0.999995
  %v593 = vmul.f32 %v577, 0.999995
  %v594 = vmul.f32 %v580, 0.999995
  %v595 = vmul.f32 %v583, 0.999995
  %v596 = vmul.f32 %v586, 0.999995
  %v597 = vmul.f32 %v589, 0.999995
  %599 = vset.pattern.permute.xlu0 0
  %600 = vperm.xlu0 %599, %v167
  %v601 = vpop.permute.xlu0 %600
  %v603 = vmul.f32 %v236, %v601
  %604 = vset.pattern.permute.xlu0 1
  %605 = vperm.xlu0 %604, %v167
  %v606 = vpop.permute.xlu0 %605
  %v608 = vmul.f32 %v300, %v606
  %v609 = vadd.f32 %v603, %v608
  %610 = vset.pattern.permute.xlu0 2
  %611 = vperm.xlu0 %610, %v167
  %v612 = vpop.permute.xlu0 %611
  %v613 = vperm.slane %v612, 0
  %v614 = vperm.slane %v612, 1
  %v615 = vperm.slane %v612, 2
  %v616 = vperm.slane %v612, 3
  %v617 = vperm.slane %v612, 4
  %v618 = vperm.slane %v612, 5
  %v619 = vperm.slane %v612, 6
  %v620 = vperm.slane %v612, 7
  %v629 = vmul.f32 %v453, %v613
  %v630 = vmul.f32 %v454, %v614
  %v631 = vmul.f32 %v455, %v615
  %v632 = vmul.f32 %v456, %v616
  %v633 = vmul.f32 %v457, %v617
  %v634 = vmul.f32 %v458, %v618
  %v635 = vmul.f32 %v459, %v619
  %v636 = vmul.f32 %v460, %v620
  %645 = vset.pattern.permute.xlu0 0
  %646 = vperm.xlu0 %645, %v629
  %v647 = vpop.permute.xlu0 %646
  %648 = vset.pattern.permute.xlu0 0
  %649 = vperm.xlu0 %648, %v630
  %v650 = vpop.permute.xlu0 %649
  %651 = vset.pattern.permute.xlu0 0
  %652 = vperm.xlu0 %651, %v631
  %v653 = vpop.permute.xlu0 %652
  %654 = vset.pattern.permute.xlu0 0
  %655 = vperm.xlu0 %654, %v632
  %v656 = vpop.permute.xlu0 %655
  %657 = vset.pattern.permute.xlu0 0
  %658 = vperm.xlu0 %657, %v633
  %v659 = vpop.permute.xlu0 %658
  %660 = vset.pattern.permute.xlu0 0
  %661 = vperm.xlu0 %660, %v634
  %v662 = vpop.permute.xlu0 %661
  %663 = vset.pattern.permute.xlu0 0
  %664 = vperm.xlu0 %663, %v635
  %v665 = vpop.permute.xlu0 %664
  %666 = vset.pattern.permute.xlu0 0
  %667 = vperm.xlu0 %666, %v636
  %v668 = vpop.permute.xlu0 %667
  %v669 = vlaneseq
  %v670 = vand.u32 %v669, 127
  %v671 = vperm.slane %v647, %v670
  %v672 = vperm.slane %v650, %v670
  %v673 = vperm.slane %v653, %v670
  %v674 = vperm.slane %v656, %v670
  %v675 = vperm.slane %v659, %v670
  %v676 = vperm.slane %v662, %v670
  %v677 = vperm.slane %v665, %v670
  %v678 = vperm.slane %v668, %v670
  %vm679 = vcmask 1041409
  %v680 = vsel %vm679, %v672, %v671
  %vm681 = vcmask 1042434
  %v682 = vsel %vm681, %v673, %v680
  %vm683 = vcmask 1043459
  %v684 = vsel %vm683, %v674, %v682
  %vm685 = vcmask 1044484
  %v686 = vsel %vm685, %v675, %v684
  %vm687 = vcmask 1045509
  %v688 = vsel %vm687, %v676, %v686
  %vm689 = vcmask 1046534
  %v690 = vsel %vm689, %v677, %v688
  %vm691 = vcmask 1047559
  %v692 = vsel %vm691, %v678, %v690
  %v694 = vadd.f32 %v609, %v692
  %695 = vset.pattern.permute.xlu0 3
  %696 = vperm.xlu0 %695, %v167
  %v697 = vpop.permute.xlu0 %696
  %v698 = vperm.slane %v697, 0
  %v699 = vperm.slane %v697, 1
  %v700 = vperm.slane %v697, 2
  %v701 = vperm.slane %v697, 3
  %v702 = vperm.slane %v697, 4
  %v703 = vperm.slane %v697, 5
  %v704 = vperm.slane %v697, 6
  %v705 = vperm.slane %v697, 7
  %v714 = vmul.f32 %v590, %v698
  %v715 = vmul.f32 %v591, %v699
  %v716 = vmul.f32 %v592, %v700
  %v717 = vmul.f32 %v593, %v701
  %v718 = vmul.f32 %v594, %v702
  %v719 = vmul.f32 %v595, %v703
  %v720 = vmul.f32 %v596, %v704
  %v721 = vmul.f32 %v597, %v705
  %730 = vset.pattern.permute.xlu0 0
  %731 = vperm.xlu0 %730, %v714
  %v732 = vpop.permute.xlu0 %731
  %733 = vset.pattern.permute.xlu0 0
  %734 = vperm.xlu0 %733, %v715
  %v735 = vpop.permute.xlu0 %734
  %736 = vset.pattern.permute.xlu0 0
  %737 = vperm.xlu0 %736, %v716
  %v738 = vpop.permute.xlu0 %737
  %739 = vset.pattern.permute.xlu0 0
  %740 = vperm.xlu0 %739, %v717
  %v741 = vpop.permute.xlu0 %740
  %742 = vset.pattern.permute.xlu0 0
  %743 = vperm.xlu0 %742, %v718
  %v744 = vpop.permute.xlu0 %743
  %745 = vset.pattern.permute.xlu0 0
  %746 = vperm.xlu0 %745, %v719
  %v747 = vpop.permute.xlu0 %746
  %748 = vset.pattern.permute.xlu0 0
  %749 = vperm.xlu0 %748, %v720
  %v750 = vpop.permute.xlu0 %749
  %751 = vset.pattern.permute.xlu0 0
  %752 = vperm.xlu0 %751, %v721
  %v753 = vpop.permute.xlu0 %752
  %v754 = vperm.slane %v732, %v670
  %v755 = vperm.slane %v735, %v670
  %v756 = vperm.slane %v738, %v670
  %v757 = vperm.slane %v741, %v670
  %v758 = vperm.slane %v744, %v670
  %v759 = vperm.slane %v747, %v670
  %v760 = vperm.slane %v750, %v670
  %v761 = vperm.slane %v753, %v670
  %v762 = vsel %vm679, %v755, %v754
  %v763 = vsel %vm681, %v756, %v762
  %v764 = vsel %vm683, %v757, %v763
  %v765 = vsel %vm685, %v758, %v764
  %v766 = vsel %vm687, %v759, %v765
  %v767 = vsel %vm689, %v760, %v766
  %v768 = vsel %vm691, %v761, %v767
  %v770 = vadd.f32 %v694, %v768
  %v771 = vsub.f32 %v770, %v111
  %v772 = vld [vmem:[%s3] sm:$0xff]
  %774 = vset.pattern.permute.xlu0 0
  %775 = vperm.xlu0 %774, %v772
  %v776 = vpop.permute.xlu0 %775
  %v778 = vmul.f32 %v771, %v776
  %v779 = vmul.f32 %v778, %v84
  %v780 = vadd.f32 %v779, %v65
  %781 = vst.msk [vmem:[%s16] sm:$0xff] %vm170, %v780
  // Predicated region
  $region66: #{model_forward.10} parent=0 // pred_check
    _
  $region67: #{model_forward.10} parent=0 // pred_check_branch
    %783 = sbr.rel (0) target = $region69
  $region68: #{model_forward.10} parent=0 // pred_region
    _
  $region69: #{model_forward.10} parent=0 // pred_fallthru
    _
  // Predicated region
  $region70: #{model_forward.10} parent=0 // pred_check
    _
  $region71: #{model_forward.10} parent=0 // pred_check_branch
    %785 = sbr.rel (0) target = $region73
  $region72: #{model_forward.10} parent=0 // pred_region
    _
  $region73: #{model_forward.10} parent=0 // pred_fallthru
    _

</llo_original>
